<compile_context>
chip_gen: v5e
topology: v5e:2x2
jax: 0.10.0
libtpu: 0.0.40
codegen_flags: <defaults>
</compile_context>

<pallas_src>
import jax
import jax.numpy as jnp
import numpy as np
from jax.experimental import pallas as pl
from jax.experimental.pallas import tpu as pltpu

# (name, vocab_size, embedding_dim) -- exactly the nn.Embedding tables in __init__.
EMB_SPECS = [
    ("item_embedding", 981, 8),
    ("first_industry_name", 15, 4),
    ("second_industry_name", 58, 8),
    ("seller_embedding", 685, 8),
    ("category_level_1_name", 47, 8),
    ("category_level_2_name", 146, 8),
    ("detail_industry_id", 59, 8),
    ("industry_id", 16, 4),
    ("big_industry_id", 16, 4),
    ("age_segment_ser", 7, 4),
    ("user_active_degree", 9, 4),
    ("device_brand", 65, 8),
    ("country", 66, 8),
    ("province", 228, 8),
    ("city", 520, 8),
]
NUM_TABLES = len(EMB_SPECS)                       # 15
EMB_DIM_TOTAL = sum(d for _, _, d in EMB_SPECS)   # 100
NUM_NUMERICAL = 5                                 # Linear(105, 1) => 105 - 100 = 5
IN_FEATURES = EMB_DIM_TOTAL + NUM_NUMERICAL       # 105
F_PAD = 128                                       # padded Linear-weight row length
NUM_OFFSET = EMB_DIM_TOTAL                        # numerical features start at col 100
BIAS_COL = IN_FEATURES                            # col 105 of the padded weight = bias

# Feature offset of each table inside the concatenated 105-wide feature vector.
FEAT_OFFSETS = []
_o = 0
for _, _, _d in EMB_SPECS:
    FEAT_OFFSETS.append(_o)
    _o += _d

# Vocab sizes padded up to sublane multiples (8) -- tables are vocab-major.
VOCAB_PAD = [((v + 7) // 8) * 8 for _, v, _ in EMB_SPECS]


def cvr_fused_kernel(idx_ref, num_ref, w_ref, *rest):
    """Fused 15x embedding-lookup + concat + Linear(105,1) + bias for one batch tile.

    Transposed layout: features on sublanes, batch rows on lanes.
      idx_ref : (15, TB)        int32   categorical ids of this tile
      num_ref : (5, TB)         float32 numerical features of this tile
      w_ref   : (1, 128)        float32 padded Linear weight row; col 105 = bias
      rest    : 15 table refs (vocab_pad_j, dim_j) float32, then out_ref (1, 1, TB)
    """
    table_refs = rest[:NUM_TABLES]
    out_ref = rest[NUM_TABLES]
    tb = idx_ref.shape[1]

    w = w_ref[...]                                                  # (1, 128)

    # Bias (folded into w) + numerical part of the Linear (pure VPU).
    acc = jnp.zeros((1, tb), jnp.float32) + w[:, BIAS_COL:BIAS_COL + 1]
    for k in range(NUM_NUMERICAL):
        acc = acc + num_ref[k:k + 1, :] * w[:, NUM_OFFSET + k:NUM_OFFSET + k + 1]

    # Embedding lookups fused with their slice of the Linear weight.
    for j, (_, _, dim) in enumerate(EMB_SPECS):
        vpad = VOCAB_PAD[j]
        off = FEAT_OFFSETS[j]
        table = table_refs[j][...]                                  # (vpad, dim)
        # score[v] = <table[v, :], w[off:off+dim]>   (VPU mul + tiny lane reduce)
        score = jnp.sum(table * w[:, off:off + dim], axis=1, keepdims=True)  # (vpad, 1)
        # Exact gather score[idx] for every row in the tile:
        # iota==idx one-hot select + sublane reduce (VPU/XLU, no MXU, no HBM).
        idx_j = idx_ref[j:j + 1, :]                                 # (1, TB) int32
        iota = jax.lax.broadcasted_iota(jnp.int32, (vpad, tb), 0)   # (vpad, TB)
        picked = jnp.where(iota == idx_j, score, 0.0)               # (vpad, TB)
        acc = acc + jnp.sum(picked, axis=0, keepdims=True)          # (1, TB)

    out_ref[0] = acc                                                # lane-dense store


def cvr_forward(params, x, numerical_feature, *, block_rows=512):
    """x: (B, 15) int32 ids; numerical_feature: (B, 5) float32 -> (B, 1) float32 logit."""
    B = x.shape[0]
    tb = block_rows
    assert tb % 128 == 0
    b_pad = ((B + tb - 1) // tb) * tb
    n_tiles = b_pad // tb

    # Transposed inputs: batch rows on lanes (padded rows use valid id 0 / zeros).
    idx_t = jnp.pad(x.astype(jnp.int32), ((0, b_pad - B), (0, 0))).T            # (15, B_pad)
    num_t = jnp.pad(numerical_feature.astype(jnp.float32),
                    ((0, b_pad - B), (0, 0))).T                                 # (5, B_pad)

    # Linear weight as a padded row; bias folded in at column 105.
    w_row = jnp.concatenate(
        [params["linear_w"].astype(jnp.float32).T,                              # (1, 105)
         params["linear_b"].reshape(1, 1).astype(jnp.float32),                  # (1, 1)
         jnp.zeros((1, F_PAD - IN_FEATURES - 1), jnp.float32)], axis=1)         # (1, 128)

    # Sublane-padded embedding tables (stay resident in VMEM for all grid steps).
    tables = [
        jnp.pad(params[name].astype(jnp.float32), ((0, vpad - vocab), (0, 0)))
        for (name, vocab, _), vpad in zip(EMB_SPECS, VOCAB_PAD)
    ]

    in_specs = (
        [pl.BlockSpec((NUM_TABLES, tb), lambda i: (0, i)),      # indices: batch-tiled
         pl.BlockSpec((NUM_NUMERICAL, tb), lambda i: (0, i)),   # numericals: batch-tiled
         pl.BlockSpec((1, F_PAD), lambda i: (0, 0))]            # weight row: constant
        + [pl.BlockSpec((vpad, dim), lambda i: (0, 0))          # tables: constant (VMEM)
           for (_, _, dim), vpad in zip(EMB_SPECS, VOCAB_PAD)]
    )

    out = pl.pallas_call(
        cvr_fused_kernel,
        grid=(n_tiles,),
        in_specs=in_specs,
        out_specs=pl.BlockSpec((1, 1, tb), lambda i: (i, 0, 0)),
        out_shape=jax.ShapeDtypeStruct((n_tiles, 1, tb), jnp.float32),
        compiler_params=pltpu.CompilerParams(
            dimension_semantics=("parallel",)),   # shards batch tiles over v7x's 2 TCs
    )(idx_t, num_t, w_row, *tables)

    return out.reshape(b_pad, 1)[:B]              # (B, 1) logit


def init_params(key):
    params = {}
    keys = jax.random.split(key, NUM_TABLES + 2)
    for k, (name, vocab, dim) in zip(keys[:NUM_TABLES], EMB_SPECS):
        params[name] = jax.random.normal(k, (vocab, dim), dtype=jnp.float32)
    bound = 1.0 / np.sqrt(IN_FEATURES)
    params["linear_w"] = jax.random.uniform(
        keys[-2], (IN_FEATURES, 1), minval=-bound, maxval=bound, dtype=jnp.float32)
    params["linear_b"] = jax.random.uniform(
        keys[-1], (1, 1), minval=-bound, maxval=bound, dtype=jnp.float32)
    return params


def reference_forward(params, x, numerical_feature):
    embs = [jnp.take(params[name], x[:, i], axis=0)
            for i, (name, _, _) in enumerate(EMB_SPECS)]
    feat = jnp.concatenate(embs + [numerical_feature.astype(jnp.float32)], axis=1)
    return jnp.dot(feat, params["linear_w"],
                   precision=jax.lax.Precision.HIGHEST) + params["linear_b"].reshape(1, 1)


if __name__ == "__main__":
    key = jax.random.PRNGKey(0)
    k_params, k_idx, k_num = jax.random.split(key, 3)

    params = init_params(k_params)

    B = 4
    vocab_sizes = jnp.array([v for _, v, _ in EMB_SPECS], dtype=jnp.int32)       # (15,)
    raw = jax.random.randint(k_idx, (B, NUM_TABLES), minval=0, maxval=10 ** 6)
    x = (raw % vocab_sizes[None, :]).astype(jnp.int32)                            # (B, 15)
    numerical_feature = jax.random.normal(k_num, (B, NUM_NUMERICAL), dtype=jnp.float32)

    fwd = jax.jit(cvr_forward)
    logit = jax.block_until_ready(fwd(params, x, numerical_feature))

    ref = reference_forward(params, x, numerical_feature)
    assert logit.shape == (B, 1)
    np.testing.assert_allclose(np.asarray(logit), np.asarray(ref), rtol=1e-5, atol=1e-5)

    print("KERNEL_OK")
</pallas_src>

<mosaic_0001>
module attributes {stable_mosaic.version = 11 : i64} {
  func.func @cvr_fused_kernel(%arg0: i32, %arg1: memref<15x512xi32, #tpu.memory_space<vmem>>, %arg2: memref<5x512xf32, #tpu.memory_space<vmem>>, %arg3: memref<1x128xf32, #tpu.memory_space<vmem>>, %arg4: memref<984x8xf32, #tpu.memory_space<vmem>>, %arg5: memref<16x4xf32, #tpu.memory_space<vmem>>, %arg6: memref<64x8xf32, #tpu.memory_space<vmem>>, %arg7: memref<688x8xf32, #tpu.memory_space<vmem>>, %arg8: memref<48x8xf32, #tpu.memory_space<vmem>>, %arg9: memref<152x8xf32, #tpu.memory_space<vmem>>, %arg10: memref<64x8xf32, #tpu.memory_space<vmem>>, %arg11: memref<16x4xf32, #tpu.memory_space<vmem>>, %arg12: memref<16x4xf32, #tpu.memory_space<vmem>>, %arg13: memref<8x4xf32, #tpu.memory_space<vmem>>, %arg14: memref<16x4xf32, #tpu.memory_space<vmem>>, %arg15: memref<72x8xf32, #tpu.memory_space<vmem>>, %arg16: memref<72x8xf32, #tpu.memory_space<vmem>>, %arg17: memref<232x8xf32, #tpu.memory_space<vmem>>, %arg18: memref<520x8xf32, #tpu.memory_space<vmem>>, %arg19: memref<1x1x512xf32, #tpu.memory_space<vmem>>) attributes {dimension_semantics = [#tpu.dimension_semantics<parallel>], iteration_bounds = array<i64: 1>, scalar_prefetch = 0 : i64, scratch_operands = 0 : i64, tpu.core_type = #tpu.core_type<tc>, window_params = [{transform_indices = @transform_0, window_bounds = array<i64: 15, 512>}, {transform_indices = @transform_1, window_bounds = array<i64: 5, 512>}, {pipeline_mode = #tpu.pipeline_mode<synchronous>, transform_indices = @transform_2, window_bounds = array<i64: 1, 128>}, {pipeline_mode = #tpu.pipeline_mode<synchronous>, transform_indices = @transform_3, window_bounds = array<i64: 984, 8>}, {pipeline_mode = #tpu.pipeline_mode<synchronous>, transform_indices = @transform_4, window_bounds = array<i64: 16, 4>}, {pipeline_mode = #tpu.pipeline_mode<synchronous>, transform_indices = @transform_5, window_bounds = array<i64: 64, 8>}, {pipeline_mode = #tpu.pipeline_mode<synchronous>, transform_indices = @transform_6, window_bounds = array<i64: 688, 8>}, {pipeline_mode = #tpu.pipeline_mode<synchronous>, transform_indices = @transform_7, window_bounds = array<i64: 48, 8>}, {pipeline_mode = #tpu.pipeline_mode<synchronous>, transform_indices = @transform_8, window_bounds = array<i64: 152, 8>}, {pipeline_mode = #tpu.pipeline_mode<synchronous>, transform_indices = @transform_9, window_bounds = array<i64: 64, 8>}, {pipeline_mode = #tpu.pipeline_mode<synchronous>, transform_indices = @transform_10, window_bounds = array<i64: 16, 4>}, {pipeline_mode = #tpu.pipeline_mode<synchronous>, transform_indices = @transform_11, window_bounds = array<i64: 16, 4>}, {pipeline_mode = #tpu.pipeline_mode<synchronous>, transform_indices = @transform_12, window_bounds = array<i64: 8, 4>}, {pipeline_mode = #tpu.pipeline_mode<synchronous>, transform_indices = @transform_13, window_bounds = array<i64: 16, 4>}, {pipeline_mode = #tpu.pipeline_mode<synchronous>, transform_indices = @transform_14, window_bounds = array<i64: 72, 8>}, {pipeline_mode = #tpu.pipeline_mode<synchronous>, transform_indices = @transform_15, window_bounds = array<i64: 72, 8>}, {pipeline_mode = #tpu.pipeline_mode<synchronous>, transform_indices = @transform_16, window_bounds = array<i64: 232, 8>}, {pipeline_mode = #tpu.pipeline_mode<synchronous>, transform_indices = @transform_17, window_bounds = array<i64: 520, 8>}, {transform_indices = @transform_18, window_bounds = array<i64: 1, 1, 512>}]} {
    %c0 = arith.constant 0 : index
    %c0_0 = arith.constant 0 : index
    %0 = vector.load %arg3[%c0, %c0_0] : memref<1x128xf32, #tpu.memory_space<vmem>>, vector<1x128xf32>
    %cst = arith.constant 0.000000e+00 : f32
    %1 = vector.broadcast %cst : f32 to vector<1x512xf32>
    %2 = vector.extract_strided_slice %0 {offsets = [0, 105], sizes = [1, 1], strides = [1, 1]} : vector<1x128xf32> to vector<1x1xf32>
    %3 = vector.broadcast %2 : vector<1x1xf32> to vector<1x512xf32>
    %4 = arith.addf %1, %3 : vector<1x512xf32>
    %c0_1 = arith.constant 0 : index
    %c0_2 = arith.constant 0 : index
    %5 = vector.load %arg2[%c0_1, %c0_2] : memref<5x512xf32, #tpu.memory_space<vmem>>, vector<1x512xf32>
    %6 = vector.extract_strided_slice %0 {offsets = [0, 100], sizes = [1, 1], strides = [1, 1]} : vector<1x128xf32> to vector<1x1xf32>
    %7 = vector.broadcast %6 : vector<1x1xf32> to vector<1x512xf32>
    %8 = arith.mulf %5, %7 : vector<1x512xf32>
    %9 = arith.addf %4, %8 : vector<1x512xf32>
    %c1 = arith.constant 1 : index
    %c0_3 = arith.constant 0 : index
    %10 = vector.load %arg2[%c1, %c0_3] : memref<5x512xf32, #tpu.memory_space<vmem>>, vector<1x512xf32>
    %11 = vector.extract_strided_slice %0 {offsets = [0, 101], sizes = [1, 1], strides = [1, 1]} : vector<1x128xf32> to vector<1x1xf32>
    %12 = vector.broadcast %11 : vector<1x1xf32> to vector<1x512xf32>
    %13 = arith.mulf %10, %12 : vector<1x512xf32>
    %14 = arith.addf %9, %13 : vector<1x512xf32>
    %c2 = arith.constant 2 : index
    %c0_4 = arith.constant 0 : index
    %15 = vector.load %arg2[%c2, %c0_4] : memref<5x512xf32, #tpu.memory_space<vmem>>, vector<1x512xf32>
    %16 = vector.extract_strided_slice %0 {offsets = [0, 102], sizes = [1, 1], strides = [1, 1]} : vector<1x128xf32> to vector<1x1xf32>
    %17 = vector.broadcast %16 : vector<1x1xf32> to vector<1x512xf32>
    %18 = arith.mulf %15, %17 : vector<1x512xf32>
    %19 = arith.addf %14, %18 : vector<1x512xf32>
    %c3 = arith.constant 3 : index
    %c0_5 = arith.constant 0 : index
    %20 = vector.load %arg2[%c3, %c0_5] : memref<5x512xf32, #tpu.memory_space<vmem>>, vector<1x512xf32>
    %21 = vector.extract_strided_slice %0 {offsets = [0, 103], sizes = [1, 1], strides = [1, 1]} : vector<1x128xf32> to vector<1x1xf32>
    %22 = vector.broadcast %21 : vector<1x1xf32> to vector<1x512xf32>
    %23 = arith.mulf %20, %22 : vector<1x512xf32>
    %24 = arith.addf %19, %23 : vector<1x512xf32>
    %c4 = arith.constant 4 : index
    %c0_6 = arith.constant 0 : index
    %25 = vector.load %arg2[%c4, %c0_6] : memref<5x512xf32, #tpu.memory_space<vmem>>, vector<1x512xf32>
    %26 = vector.extract_strided_slice %0 {offsets = [0, 104], sizes = [1, 1], strides = [1, 1]} : vector<1x128xf32> to vector<1x1xf32>
    %27 = vector.broadcast %26 : vector<1x1xf32> to vector<1x512xf32>
    %28 = arith.mulf %25, %27 : vector<1x512xf32>
    %29 = arith.addf %24, %28 : vector<1x512xf32>
    %c0_7 = arith.constant 0 : index
    %c0_8 = arith.constant 0 : index
    %30 = vector.load %arg4[%c0_7, %c0_8] : memref<984x8xf32, #tpu.memory_space<vmem>>, vector<984x8xf32>
    %31 = vector.extract_strided_slice %0 {offsets = [0, 0], sizes = [1, 8], strides = [1, 1]} : vector<1x128xf32> to vector<1x8xf32>
    %32 = vector.broadcast %31 : vector<1x8xf32> to vector<984x8xf32>
    %33 = arith.mulf %30, %32 : vector<984x8xf32>
    %cst_9 = arith.constant dense<0.000000e+00> : vector<984xf32>
    %34 = vector.multi_reduction <add>, %33, %cst_9 [1] : vector<984x8xf32> to vector<984xf32>
    %35 = vector.shape_cast %34 : vector<984xf32> to vector<984x1xf32>
    %c0_10 = arith.constant 0 : index
    %c0_11 = arith.constant 0 : index
    %36 = vector.load %arg1[%c0_10, %c0_11] : memref<15x512xi32, #tpu.memory_space<vmem>>, vector<1x512xi32>
    %37 = tpu.iota {dimensions = array<i32: 0>} : vector<984x512xi32>
    %38 = vector.broadcast %36 : vector<1x512xi32> to vector<984x512xi32>
    %39 = arith.cmpi eq, %37, %38 : vector<984x512xi32>
    %cst_12 = arith.constant 0.000000e+00 : f32
    %40 = vector.shape_cast %35 : vector<984x1xf32> to vector<984x1xf32>
    %41 = vector.broadcast %40 : vector<984x1xf32> to vector<984x512xf32>
    %42 = vector.broadcast %cst_12 : f32 to vector<984x512xf32>
    %43 = arith.select %39, %41, %42 : vector<984x512xi1>, vector<984x512xf32>
    %cst_13 = arith.constant dense<0.000000e+00> : vector<512xf32>
    %44 = vector.multi_reduction <add>, %43, %cst_13 [0] : vector<984x512xf32> to vector<512xf32>
    %45 = vector.shape_cast %44 : vector<512xf32> to vector<1x512xf32>
    %46 = arith.addf %29, %45 : vector<1x512xf32>
    %c0_14 = arith.constant 0 : index
    %c0_15 = arith.constant 0 : index
    %47 = vector.load %arg5[%c0_14, %c0_15] : memref<16x4xf32, #tpu.memory_space<vmem>>, vector<16x4xf32>
    %48 = vector.extract_strided_slice %0 {offsets = [0, 8], sizes = [1, 4], strides = [1, 1]} : vector<1x128xf32> to vector<1x4xf32>
    %49 = vector.broadcast %48 : vector<1x4xf32> to vector<16x4xf32>
    %50 = arith.mulf %47, %49 : vector<16x4xf32>
    %cst_16 = arith.constant dense<0.000000e+00> : vector<16xf32>
    %51 = vector.multi_reduction <add>, %50, %cst_16 [1] : vector<16x4xf32> to vector<16xf32>
    %52 = vector.shape_cast %51 : vector<16xf32> to vector<16x1xf32>
    %c1_17 = arith.constant 1 : index
    %c0_18 = arith.constant 0 : index
    %53 = vector.load %arg1[%c1_17, %c0_18] : memref<15x512xi32, #tpu.memory_space<vmem>>, vector<1x512xi32>
    %54 = tpu.iota {dimensions = array<i32: 0>} : vector<16x512xi32>
    %55 = vector.broadcast %53 : vector<1x512xi32> to vector<16x512xi32>
    %56 = arith.cmpi eq, %54, %55 : vector<16x512xi32>
    %cst_19 = arith.constant 0.000000e+00 : f32
    %57 = vector.shape_cast %52 : vector<16x1xf32> to vector<16x1xf32>
    %58 = vector.broadcast %57 : vector<16x1xf32> to vector<16x512xf32>
    %59 = vector.broadcast %cst_19 : f32 to vector<16x512xf32>
    %60 = arith.select %56, %58, %59 : vector<16x512xi1>, vector<16x512xf32>
    %cst_20 = arith.constant dense<0.000000e+00> : vector<512xf32>
    %61 = vector.multi_reduction <add>, %60, %cst_20 [0] : vector<16x512xf32> to vector<512xf32>
    %62 = vector.shape_cast %61 : vector<512xf32> to vector<1x512xf32>
    %63 = arith.addf %46, %62 : vector<1x512xf32>
    %c0_21 = arith.constant 0 : index
    %c0_22 = arith.constant 0 : index
    %64 = vector.load %arg6[%c0_21, %c0_22] : memref<64x8xf32, #tpu.memory_space<vmem>>, vector<64x8xf32>
    %65 = vector.extract_strided_slice %0 {offsets = [0, 12], sizes = [1, 8], strides = [1, 1]} : vector<1x128xf32> to vector<1x8xf32>
    %66 = vector.broadcast %65 : vector<1x8xf32> to vector<64x8xf32>
    %67 = arith.mulf %64, %66 : vector<64x8xf32>
    %cst_23 = arith.constant dense<0.000000e+00> : vector<64xf32>
    %68 = vector.multi_reduction <add>, %67, %cst_23 [1] : vector<64x8xf32> to vector<64xf32>
    %69 = vector.shape_cast %68 : vector<64xf32> to vector<64x1xf32>
    %c2_24 = arith.constant 2 : index
    %c0_25 = arith.constant 0 : index
    %70 = vector.load %arg1[%c2_24, %c0_25] : memref<15x512xi32, #tpu.memory_space<vmem>>, vector<1x512xi32>
    %71 = tpu.iota {dimensions = array<i32: 0>} : vector<64x512xi32>
    %72 = vector.broadcast %70 : vector<1x512xi32> to vector<64x512xi32>
    %73 = arith.cmpi eq, %71, %72 : vector<64x512xi32>
    %cst_26 = arith.constant 0.000000e+00 : f32
    %74 = vector.shape_cast %69 : vector<64x1xf32> to vector<64x1xf32>
    %75 = vector.broadcast %74 : vector<64x1xf32> to vector<64x512xf32>
    %76 = vector.broadcast %cst_26 : f32 to vector<64x512xf32>
    %77 = arith.select %73, %75, %76 : vector<64x512xi1>, vector<64x512xf32>
    %cst_27 = arith.constant dense<0.000000e+00> : vector<512xf32>
    %78 = vector.multi_reduction <add>, %77, %cst_27 [0] : vector<64x512xf32> to vector<512xf32>
    %79 = vector.shape_cast %78 : vector<512xf32> to vector<1x512xf32>
    %80 = arith.addf %63, %79 : vector<1x512xf32>
    %c0_28 = arith.constant 0 : index
    %c0_29 = arith.constant 0 : index
    %81 = vector.load %arg7[%c0_28, %c0_29] : memref<688x8xf32, #tpu.memory_space<vmem>>, vector<688x8xf32>
    %82 = vector.extract_strided_slice %0 {offsets = [0, 20], sizes = [1, 8], strides = [1, 1]} : vector<1x128xf32> to vector<1x8xf32>
    %83 = vector.broadcast %82 : vector<1x8xf32> to vector<688x8xf32>
    %84 = arith.mulf %81, %83 : vector<688x8xf32>
    %cst_30 = arith.constant dense<0.000000e+00> : vector<688xf32>
    %85 = vector.multi_reduction <add>, %84, %cst_30 [1] : vector<688x8xf32> to vector<688xf32>
    %86 = vector.shape_cast %85 : vector<688xf32> to vector<688x1xf32>
    %c3_31 = arith.constant 3 : index
    %c0_32 = arith.constant 0 : index
    %87 = vector.load %arg1[%c3_31, %c0_32] : memref<15x512xi32, #tpu.memory_space<vmem>>, vector<1x512xi32>
    %88 = tpu.iota {dimensions = array<i32: 0>} : vector<688x512xi32>
    %89 = vector.broadcast %87 : vector<1x512xi32> to vector<688x512xi32>
    %90 = arith.cmpi eq, %88, %89 : vector<688x512xi32>
    %cst_33 = arith.constant 0.000000e+00 : f32
    %91 = vector.shape_cast %86 : vector<688x1xf32> to vector<688x1xf32>
    %92 = vector.broadcast %91 : vector<688x1xf32> to vector<688x512xf32>
    %93 = vector.broadcast %cst_33 : f32 to vector<688x512xf32>
    %94 = arith.select %90, %92, %93 : vector<688x512xi1>, vector<688x512xf32>
    %cst_34 = arith.constant dense<0.000000e+00> : vector<512xf32>
    %95 = vector.multi_reduction <add>, %94, %cst_34 [0] : vector<688x512xf32> to vector<512xf32>
    %96 = vector.shape_cast %95 : vector<512xf32> to vector<1x512xf32>
    %97 = arith.addf %80, %96 : vector<1x512xf32>
    %c0_35 = arith.constant 0 : index
    %c0_36 = arith.constant 0 : index
    %98 = vector.load %arg8[%c0_35, %c0_36] : memref<48x8xf32, #tpu.memory_space<vmem>>, vector<48x8xf32>
    %99 = vector.extract_strided_slice %0 {offsets = [0, 28], sizes = [1, 8], strides = [1, 1]} : vector<1x128xf32> to vector<1x8xf32>
    %100 = vector.broadcast %99 : vector<1x8xf32> to vector<48x8xf32>
    %101 = arith.mulf %98, %100 : vector<48x8xf32>
    %cst_37 = arith.constant dense<0.000000e+00> : vector<48xf32>
    %102 = vector.multi_reduction <add>, %101, %cst_37 [1] : vector<48x8xf32> to vector<48xf32>
    %103 = vector.shape_cast %102 : vector<48xf32> to vector<48x1xf32>
    %c4_38 = arith.constant 4 : index
    %c0_39 = arith.constant 0 : index
    %104 = vector.load %arg1[%c4_38, %c0_39] : memref<15x512xi32, #tpu.memory_space<vmem>>, vector<1x512xi32>
    %105 = tpu.iota {dimensions = array<i32: 0>} : vector<48x512xi32>
    %106 = vector.broadcast %104 : vector<1x512xi32> to vector<48x512xi32>
    %107 = arith.cmpi eq, %105, %106 : vector<48x512xi32>
    %cst_40 = arith.constant 0.000000e+00 : f32
    %108 = vector.shape_cast %103 : vector<48x1xf32> to vector<48x1xf32>
    %109 = vector.broadcast %108 : vector<48x1xf32> to vector<48x512xf32>
    %110 = vector.broadcast %cst_40 : f32 to vector<48x512xf32>
    %111 = arith.select %107, %109, %110 : vector<48x512xi1>, vector<48x512xf32>
    %cst_41 = arith.constant dense<0.000000e+00> : vector<512xf32>
    %112 = vector.multi_reduction <add>, %111, %cst_41 [0] : vector<48x512xf32> to vector<512xf32>
    %113 = vector.shape_cast %112 : vector<512xf32> to vector<1x512xf32>
    %114 = arith.addf %97, %113 : vector<1x512xf32>
    %c0_42 = arith.constant 0 : index
    %c0_43 = arith.constant 0 : index
    %115 = vector.load %arg9[%c0_42, %c0_43] : memref<152x8xf32, #tpu.memory_space<vmem>>, vector<152x8xf32>
    %116 = vector.extract_strided_slice %0 {offsets = [0, 36], sizes = [1, 8], strides = [1, 1]} : vector<1x128xf32> to vector<1x8xf32>
    %117 = vector.broadcast %116 : vector<1x8xf32> to vector<152x8xf32>
    %118 = arith.mulf %115, %117 : vector<152x8xf32>
    %cst_44 = arith.constant dense<0.000000e+00> : vector<152xf32>
    %119 = vector.multi_reduction <add>, %118, %cst_44 [1] : vector<152x8xf32> to vector<152xf32>
    %120 = vector.shape_cast %119 : vector<152xf32> to vector<152x1xf32>
    %c5 = arith.constant 5 : index
    %c0_45 = arith.constant 0 : index
    %121 = vector.load %arg1[%c5, %c0_45] : memref<15x512xi32, #tpu.memory_space<vmem>>, vector<1x512xi32>
    %122 = tpu.iota {dimensions = array<i32: 0>} : vector<152x512xi32>
    %123 = vector.broadcast %121 : vector<1x512xi32> to vector<152x512xi32>
    %124 = arith.cmpi eq, %122, %123 : vector<152x512xi32>
    %cst_46 = arith.constant 0.000000e+00 : f32
    %125 = vector.shape_cast %120 : vector<152x1xf32> to vector<152x1xf32>
    %126 = vector.broadcast %125 : vector<152x1xf32> to vector<152x512xf32>
    %127 = vector.broadcast %cst_46 : f32 to vector<152x512xf32>
    %128 = arith.select %124, %126, %127 : vector<152x512xi1>, vector<152x512xf32>
    %cst_47 = arith.constant dense<0.000000e+00> : vector<512xf32>
    %129 = vector.multi_reduction <add>, %128, %cst_47 [0] : vector<152x512xf32> to vector<512xf32>
    %130 = vector.shape_cast %129 : vector<512xf32> to vector<1x512xf32>
    %131 = arith.addf %114, %130 : vector<1x512xf32>
    %c0_48 = arith.constant 0 : index
    %c0_49 = arith.constant 0 : index
    %132 = vector.load %arg10[%c0_48, %c0_49] : memref<64x8xf32, #tpu.memory_space<vmem>>, vector<64x8xf32>
    %133 = vector.extract_strided_slice %0 {offsets = [0, 44], sizes = [1, 8], strides = [1, 1]} : vector<1x128xf32> to vector<1x8xf32>
    %134 = vector.broadcast %133 : vector<1x8xf32> to vector<64x8xf32>
    %135 = arith.mulf %132, %134 : vector<64x8xf32>
    %cst_50 = arith.constant dense<0.000000e+00> : vector<64xf32>
    %136 = vector.multi_reduction <add>, %135, %cst_50 [1] : vector<64x8xf32> to vector<64xf32>
    %137 = vector.shape_cast %136 : vector<64xf32> to vector<64x1xf32>
    %c6 = arith.constant 6 : index
    %c0_51 = arith.constant 0 : index
    %138 = vector.load %arg1[%c6, %c0_51] : memref<15x512xi32, #tpu.memory_space<vmem>>, vector<1x512xi32>
    %139 = tpu.iota {dimensions = array<i32: 0>} : vector<64x512xi32>
    %140 = vector.broadcast %138 : vector<1x512xi32> to vector<64x512xi32>
    %141 = arith.cmpi eq, %139, %140 : vector<64x512xi32>
    %cst_52 = arith.constant 0.000000e+00 : f32
    %142 = vector.shape_cast %137 : vector<64x1xf32> to vector<64x1xf32>
    %143 = vector.broadcast %142 : vector<64x1xf32> to vector<64x512xf32>
    %144 = vector.broadcast %cst_52 : f32 to vector<64x512xf32>
    %145 = arith.select %141, %143, %144 : vector<64x512xi1>, vector<64x512xf32>
    %cst_53 = arith.constant dense<0.000000e+00> : vector<512xf32>
    %146 = vector.multi_reduction <add>, %145, %cst_53 [0] : vector<64x512xf32> to vector<512xf32>
    %147 = vector.shape_cast %146 : vector<512xf32> to vector<1x512xf32>
    %148 = arith.addf %131, %147 : vector<1x512xf32>
    %c0_54 = arith.constant 0 : index
    %c0_55 = arith.constant 0 : index
    %149 = vector.load %arg11[%c0_54, %c0_55] : memref<16x4xf32, #tpu.memory_space<vmem>>, vector<16x4xf32>
    %150 = vector.extract_strided_slice %0 {offsets = [0, 52], sizes = [1, 4], strides = [1, 1]} : vector<1x128xf32> to vector<1x4xf32>
    %151 = vector.broadcast %150 : vector<1x4xf32> to vector<16x4xf32>
    %152 = arith.mulf %149, %151 : vector<16x4xf32>
    %cst_56 = arith.constant dense<0.000000e+00> : vector<16xf32>
    %153 = vector.multi_reduction <add>, %152, %cst_56 [1] : vector<16x4xf32> to vector<16xf32>
    %154 = vector.shape_cast %153 : vector<16xf32> to vector<16x1xf32>
    %c7 = arith.constant 7 : index
    %c0_57 = arith.constant 0 : index
    %155 = vector.load %arg1[%c7, %c0_57] : memref<15x512xi32, #tpu.memory_space<vmem>>, vector<1x512xi32>
    %156 = tpu.iota {dimensions = array<i32: 0>} : vector<16x512xi32>
    %157 = vector.broadcast %155 : vector<1x512xi32> to vector<16x512xi32>
    %158 = arith.cmpi eq, %156, %157 : vector<16x512xi32>
    %cst_58 = arith.constant 0.000000e+00 : f32
    %159 = vector.shape_cast %154 : vector<16x1xf32> to vector<16x1xf32>
    %160 = vector.broadcast %159 : vector<16x1xf32> to vector<16x512xf32>
    %161 = vector.broadcast %cst_58 : f32 to vector<16x512xf32>
    %162 = arith.select %158, %160, %161 : vector<16x512xi1>, vector<16x512xf32>
    %cst_59 = arith.constant dense<0.000000e+00> : vector<512xf32>
    %163 = vector.multi_reduction <add>, %162, %cst_59 [0] : vector<16x512xf32> to vector<512xf32>
    %164 = vector.shape_cast %163 : vector<512xf32> to vector<1x512xf32>
    %165 = arith.addf %148, %164 : vector<1x512xf32>
    %c0_60 = arith.constant 0 : index
    %c0_61 = arith.constant 0 : index
    %166 = vector.load %arg12[%c0_60, %c0_61] : memref<16x4xf32, #tpu.memory_space<vmem>>, vector<16x4xf32>
    %167 = vector.extract_strided_slice %0 {offsets = [0, 56], sizes = [1, 4], strides = [1, 1]} : vector<1x128xf32> to vector<1x4xf32>
    %168 = vector.broadcast %167 : vector<1x4xf32> to vector<16x4xf32>
    %169 = arith.mulf %166, %168 : vector<16x4xf32>
    %cst_62 = arith.constant dense<0.000000e+00> : vector<16xf32>
    %170 = vector.multi_reduction <add>, %169, %cst_62 [1] : vector<16x4xf32> to vector<16xf32>
    %171 = vector.shape_cast %170 : vector<16xf32> to vector<16x1xf32>
    %c8 = arith.constant 8 : index
    %c0_63 = arith.constant 0 : index
    %172 = vector.load %arg1[%c8, %c0_63] : memref<15x512xi32, #tpu.memory_space<vmem>>, vector<1x512xi32>
    %173 = tpu.iota {dimensions = array<i32: 0>} : vector<16x512xi32>
    %174 = vector.broadcast %172 : vector<1x512xi32> to vector<16x512xi32>
    %175 = arith.cmpi eq, %173, %174 : vector<16x512xi32>
    %cst_64 = arith.constant 0.000000e+00 : f32
    %176 = vector.shape_cast %171 : vector<16x1xf32> to vector<16x1xf32>
    %177 = vector.broadcast %176 : vector<16x1xf32> to vector<16x512xf32>
    %178 = vector.broadcast %cst_64 : f32 to vector<16x512xf32>
    %179 = arith.select %175, %177, %178 : vector<16x512xi1>, vector<16x512xf32>
    %cst_65 = arith.constant dense<0.000000e+00> : vector<512xf32>
    %180 = vector.multi_reduction <add>, %179, %cst_65 [0] : vector<16x512xf32> to vector<512xf32>
    %181 = vector.shape_cast %180 : vector<512xf32> to vector<1x512xf32>
    %182 = arith.addf %165, %181 : vector<1x512xf32>
    %c0_66 = arith.constant 0 : index
    %c0_67 = arith.constant 0 : index
    %183 = vector.load %arg13[%c0_66, %c0_67] : memref<8x4xf32, #tpu.memory_space<vmem>>, vector<8x4xf32>
    %184 = vector.extract_strided_slice %0 {offsets = [0, 60], sizes = [1, 4], strides = [1, 1]} : vector<1x128xf32> to vector<1x4xf32>
    %185 = vector.broadcast %184 : vector<1x4xf32> to vector<8x4xf32>
    %186 = arith.mulf %183, %185 : vector<8x4xf32>
    %cst_68 = arith.constant dense<0.000000e+00> : vector<8xf32>
    %187 = vector.multi_reduction <add>, %186, %cst_68 [1] : vector<8x4xf32> to vector<8xf32>
    %188 = vector.shape_cast %187 : vector<8xf32> to vector<8x1xf32>
    %c9 = arith.constant 9 : index
    %c0_69 = arith.constant 0 : index
    %189 = vector.load %arg1[%c9, %c0_69] : memref<15x512xi32, #tpu.memory_space<vmem>>, vector<1x512xi32>
    %190 = tpu.iota {dimensions = array<i32: 0>} : vector<8x512xi32>
    %191 = vector.broadcast %189 : vector<1x512xi32> to vector<8x512xi32>
    %192 = arith.cmpi eq, %190, %191 : vector<8x512xi32>
    %cst_70 = arith.constant 0.000000e+00 : f32
    %193 = vector.shape_cast %188 : vector<8x1xf32> to vector<8x1xf32>
    %194 = vector.broadcast %193 : vector<8x1xf32> to vector<8x512xf32>
    %195 = vector.broadcast %cst_70 : f32 to vector<8x512xf32>
    %196 = arith.select %192, %194, %195 : vector<8x512xi1>, vector<8x512xf32>
    %cst_71 = arith.constant dense<0.000000e+00> : vector<512xf32>
    %197 = vector.multi_reduction <add>, %196, %cst_71 [0] : vector<8x512xf32> to vector<512xf32>
    %198 = vector.shape_cast %197 : vector<512xf32> to vector<1x512xf32>
    %199 = arith.addf %182, %198 : vector<1x512xf32>
    %c0_72 = arith.constant 0 : index
    %c0_73 = arith.constant 0 : index
    %200 = vector.load %arg14[%c0_72, %c0_73] : memref<16x4xf32, #tpu.memory_space<vmem>>, vector<16x4xf32>
    %201 = vector.extract_strided_slice %0 {offsets = [0, 64], sizes = [1, 4], strides = [1, 1]} : vector<1x128xf32> to vector<1x4xf32>
    %202 = vector.broadcast %201 : vector<1x4xf32> to vector<16x4xf32>
    %203 = arith.mulf %200, %202 : vector<16x4xf32>
    %cst_74 = arith.constant dense<0.000000e+00> : vector<16xf32>
    %204 = vector.multi_reduction <add>, %203, %cst_74 [1] : vector<16x4xf32> to vector<16xf32>
    %205 = vector.shape_cast %204 : vector<16xf32> to vector<16x1xf32>
    %c10 = arith.constant 10 : index
    %c0_75 = arith.constant 0 : index
    %206 = vector.load %arg1[%c10, %c0_75] : memref<15x512xi32, #tpu.memory_space<vmem>>, vector<1x512xi32>
    %207 = tpu.iota {dimensions = array<i32: 0>} : vector<16x512xi32>
    %208 = vector.broadcast %206 : vector<1x512xi32> to vector<16x512xi32>
    %209 = arith.cmpi eq, %207, %208 : vector<16x512xi32>
    %cst_76 = arith.constant 0.000000e+00 : f32
    %210 = vector.shape_cast %205 : vector<16x1xf32> to vector<16x1xf32>
    %211 = vector.broadcast %210 : vector<16x1xf32> to vector<16x512xf32>
    %212 = vector.broadcast %cst_76 : f32 to vector<16x512xf32>
    %213 = arith.select %209, %211, %212 : vector<16x512xi1>, vector<16x512xf32>
    %cst_77 = arith.constant dense<0.000000e+00> : vector<512xf32>
    %214 = vector.multi_reduction <add>, %213, %cst_77 [0] : vector<16x512xf32> to vector<512xf32>
    %215 = vector.shape_cast %214 : vector<512xf32> to vector<1x512xf32>
    %216 = arith.addf %199, %215 : vector<1x512xf32>
    %c0_78 = arith.constant 0 : index
    %c0_79 = arith.constant 0 : index
    %217 = vector.load %arg15[%c0_78, %c0_79] : memref<72x8xf32, #tpu.memory_space<vmem>>, vector<72x8xf32>
    %218 = vector.extract_strided_slice %0 {offsets = [0, 68], sizes = [1, 8], strides = [1, 1]} : vector<1x128xf32> to vector<1x8xf32>
    %219 = vector.broadcast %218 : vector<1x8xf32> to vector<72x8xf32>
    %220 = arith.mulf %217, %219 : vector<72x8xf32>
    %cst_80 = arith.constant dense<0.000000e+00> : vector<72xf32>
    %221 = vector.multi_reduction <add>, %220, %cst_80 [1] : vector<72x8xf32> to vector<72xf32>
    %222 = vector.shape_cast %221 : vector<72xf32> to vector<72x1xf32>
    %c11 = arith.constant 11 : index
    %c0_81 = arith.constant 0 : index
    %223 = vector.load %arg1[%c11, %c0_81] : memref<15x512xi32, #tpu.memory_space<vmem>>, vector<1x512xi32>
    %224 = tpu.iota {dimensions = array<i32: 0>} : vector<72x512xi32>
    %225 = vector.broadcast %223 : vector<1x512xi32> to vector<72x512xi32>
    %226 = arith.cmpi eq, %224, %225 : vector<72x512xi32>
    %cst_82 = arith.constant 0.000000e+00 : f32
    %227 = vector.shape_cast %222 : vector<72x1xf32> to vector<72x1xf32>
    %228 = vector.broadcast %227 : vector<72x1xf32> to vector<72x512xf32>
    %229 = vector.broadcast %cst_82 : f32 to vector<72x512xf32>
    %230 = arith.select %226, %228, %229 : vector<72x512xi1>, vector<72x512xf32>
    %cst_83 = arith.constant dense<0.000000e+00> : vector<512xf32>
    %231 = vector.multi_reduction <add>, %230, %cst_83 [0] : vector<72x512xf32> to vector<512xf32>
    %232 = vector.shape_cast %231 : vector<512xf32> to vector<1x512xf32>
    %233 = arith.addf %216, %232 : vector<1x512xf32>
    %c0_84 = arith.constant 0 : index
    %c0_85 = arith.constant 0 : index
    %234 = vector.load %arg16[%c0_84, %c0_85] : memref<72x8xf32, #tpu.memory_space<vmem>>, vector<72x8xf32>
    %235 = vector.extract_strided_slice %0 {offsets = [0, 76], sizes = [1, 8], strides = [1, 1]} : vector<1x128xf32> to vector<1x8xf32>
    %236 = vector.broadcast %235 : vector<1x8xf32> to vector<72x8xf32>
    %237 = arith.mulf %234, %236 : vector<72x8xf32>
    %cst_86 = arith.constant dense<0.000000e+00> : vector<72xf32>
    %238 = vector.multi_reduction <add>, %237, %cst_86 [1] : vector<72x8xf32> to vector<72xf32>
    %239 = vector.shape_cast %238 : vector<72xf32> to vector<72x1xf32>
    %c12 = arith.constant 12 : index
    %c0_87 = arith.constant 0 : index
    %240 = vector.load %arg1[%c12, %c0_87] : memref<15x512xi32, #tpu.memory_space<vmem>>, vector<1x512xi32>
    %241 = tpu.iota {dimensions = array<i32: 0>} : vector<72x512xi32>
    %242 = vector.broadcast %240 : vector<1x512xi32> to vector<72x512xi32>
    %243 = arith.cmpi eq, %241, %242 : vector<72x512xi32>
    %cst_88 = arith.constant 0.000000e+00 : f32
    %244 = vector.shape_cast %239 : vector<72x1xf32> to vector<72x1xf32>
    %245 = vector.broadcast %244 : vector<72x1xf32> to vector<72x512xf32>
    %246 = vector.broadcast %cst_88 : f32 to vector<72x512xf32>
    %247 = arith.select %243, %245, %246 : vector<72x512xi1>, vector<72x512xf32>
    %cst_89 = arith.constant dense<0.000000e+00> : vector<512xf32>
    %248 = vector.multi_reduction <add>, %247, %cst_89 [0] : vector<72x512xf32> to vector<512xf32>
    %249 = vector.shape_cast %248 : vector<512xf32> to vector<1x512xf32>
    %250 = arith.addf %233, %249 : vector<1x512xf32>
    %c0_90 = arith.constant 0 : index
    %c0_91 = arith.constant 0 : index
    %251 = vector.load %arg17[%c0_90, %c0_91] : memref<232x8xf32, #tpu.memory_space<vmem>>, vector<232x8xf32>
    %252 = vector.extract_strided_slice %0 {offsets = [0, 84], sizes = [1, 8], strides = [1, 1]} : vector<1x128xf32> to vector<1x8xf32>
    %253 = vector.broadcast %252 : vector<1x8xf32> to vector<232x8xf32>
    %254 = arith.mulf %251, %253 : vector<232x8xf32>
    %cst_92 = arith.constant dense<0.000000e+00> : vector<232xf32>
    %255 = vector.multi_reduction <add>, %254, %cst_92 [1] : vector<232x8xf32> to vector<232xf32>
    %256 = vector.shape_cast %255 : vector<232xf32> to vector<232x1xf32>
    %c13 = arith.constant 13 : index
    %c0_93 = arith.constant 0 : index
    %257 = vector.load %arg1[%c13, %c0_93] : memref<15x512xi32, #tpu.memory_space<vmem>>, vector<1x512xi32>
    %258 = tpu.iota {dimensions = array<i32: 0>} : vector<232x512xi32>
    %259 = vector.broadcast %257 : vector<1x512xi32> to vector<232x512xi32>
    %260 = arith.cmpi eq, %258, %259 : vector<232x512xi32>
    %cst_94 = arith.constant 0.000000e+00 : f32
    %261 = vector.shape_cast %256 : vector<232x1xf32> to vector<232x1xf32>
    %262 = vector.broadcast %261 : vector<232x1xf32> to vector<232x512xf32>
    %263 = vector.broadcast %cst_94 : f32 to vector<232x512xf32>
    %264 = arith.select %260, %262, %263 : vector<232x512xi1>, vector<232x512xf32>
    %cst_95 = arith.constant dense<0.000000e+00> : vector<512xf32>
    %265 = vector.multi_reduction <add>, %264, %cst_95 [0] : vector<232x512xf32> to vector<512xf32>
    %266 = vector.shape_cast %265 : vector<512xf32> to vector<1x512xf32>
    %267 = arith.addf %250, %266 : vector<1x512xf32>
    %c0_96 = arith.constant 0 : index
    %c0_97 = arith.constant 0 : index
    %268 = vector.load %arg18[%c0_96, %c0_97] : memref<520x8xf32, #tpu.memory_space<vmem>>, vector<520x8xf32>
    %269 = vector.extract_strided_slice %0 {offsets = [0, 92], sizes = [1, 8], strides = [1, 1]} : vector<1x128xf32> to vector<1x8xf32>
    %270 = vector.broadcast %269 : vector<1x8xf32> to vector<520x8xf32>
    %271 = arith.mulf %268, %270 : vector<520x8xf32>
    %cst_98 = arith.constant dense<0.000000e+00> : vector<520xf32>
    %272 = vector.multi_reduction <add>, %271, %cst_98 [1] : vector<520x8xf32> to vector<520xf32>
    %273 = vector.shape_cast %272 : vector<520xf32> to vector<520x1xf32>
    %c14 = arith.constant 14 : index
    %c0_99 = arith.constant 0 : index
    %274 = vector.load %arg1[%c14, %c0_99] : memref<15x512xi32, #tpu.memory_space<vmem>>, vector<1x512xi32>
    %275 = tpu.iota {dimensions = array<i32: 0>} : vector<520x512xi32>
    %276 = vector.broadcast %274 : vector<1x512xi32> to vector<520x512xi32>
    %277 = arith.cmpi eq, %275, %276 : vector<520x512xi32>
    %cst_100 = arith.constant 0.000000e+00 : f32
    %278 = vector.shape_cast %273 : vector<520x1xf32> to vector<520x1xf32>
    %279 = vector.broadcast %278 : vector<520x1xf32> to vector<520x512xf32>
    %280 = vector.broadcast %cst_100 : f32 to vector<520x512xf32>
    %281 = arith.select %277, %279, %280 : vector<520x512xi1>, vector<520x512xf32>
    %cst_101 = arith.constant dense<0.000000e+00> : vector<512xf32>
    %282 = vector.multi_reduction <add>, %281, %cst_101 [0] : vector<520x512xf32> to vector<512xf32>
    %283 = vector.shape_cast %282 : vector<512xf32> to vector<1x512xf32>
    %284 = arith.addf %267, %283 : vector<1x512xf32>
    %c0_102 = arith.constant 0 : index
    %c0_103 = arith.constant 0 : index
    %c0_104 = arith.constant 0 : index
    %285 = vector.load %arg19[%c0_102, %c0_103, %c0_104] : memref<1x1x512xf32, #tpu.memory_space<vmem>>, vector<1x1x512xf32>
    %286 = vector.shape_cast %285 : vector<1x1x512xf32> to vector<1x512xf32>
    %287 = vector.shape_cast %284 : vector<1x512xf32> to vector<1x1x512xf32>
    tpu.vector_store %arg19[%c0_102, %c0_103, %c0_104], %287 {strides = array<i32>} : memref<1x1x512xf32, #tpu.memory_space<vmem>>, vector<1x1x512xf32>,
    return
  }
  func.func @transform_0(%arg0: i32) -> (i32, i32) {
    %c0_i32 = arith.constant 0 : i32
    %c0_i32_0 = arith.constant 0 : i32
    return %c0_i32, %arg0 : i32, i32
  }
  func.func @transform_1(%arg0: i32) -> (i32, i32) {
    %c0_i32 = arith.constant 0 : i32
    %c0_i32_0 = arith.constant 0 : i32
    return %c0_i32, %arg0 : i32, i32
  }
  func.func @transform_2(%arg0: i32) -> (i32, i32) {
    %c0_i32 = arith.constant 0 : i32
    %c0_i32_0 = arith.constant 0 : i32
    %c0_i32_1 = arith.constant 0 : i32
    return %c0_i32, %c0_i32_0 : i32, i32
  }
  func.func @transform_3(%arg0: i32) -> (i32, i32) {
    %c0_i32 = arith.constant 0 : i32
    %c0_i32_0 = arith.constant 0 : i32
    %c0_i32_1 = arith.constant 0 : i32
    return %c0_i32, %c0_i32_0 : i32, i32
  }
  func.func @transform_4(%arg0: i32) -> (i32, i32) {
    %c0_i32 = arith.constant 0 : i32
    %c0_i32_0 = arith.constant 0 : i32
    %c0_i32_1 = arith.constant 0 : i32
    return %c0_i32, %c0_i32_0 : i32, i32
  }
  func.func @transform_5(%arg0: i32) -> (i32, i32) {
    %c0_i32 = arith.constant 0 : i32
    %c0_i32_0 = arith.constant 0 : i32
    %c0_i32_1 = arith.constant 0 : i32
    return %c0_i32, %c0_i32_0 : i32, i32
  }
  func.func @transform_6(%arg0: i32) -> (i32, i32) {
    %c0_i32 = arith.constant 0 : i32
    %c0_i32_0 = arith.constant 0 : i32
    %c0_i32_1 = arith.constant 0 : i32
    return %c0_i32, %c0_i32_0 : i32, i32
  }
  func.func @transform_7(%arg0: i32) -> (i32, i32) {
    %c0_i32 = arith.constant 0 : i32
    %c0_i32_0 = arith.constant 0 : i32
    %c0_i32_1 = arith.constant 0 : i32
    return %c0_i32, %c0_i32_0 : i32, i32
  }
  func.func @transform_8(%arg0: i32) -> (i32, i32) {
    %c0_i32 = arith.constant 0 : i32
    %c0_i32_0 = arith.constant 0 : i32
    %c0_i32_1 = arith.constant 0 : i32
    return %c0_i32, %c0_i32_0 : i32, i32
  }
  func.func @transform_9(%arg0: i32) -> (i32, i32) {
    %c0_i32 = arith.constant 0 : i32
    %c0_i32_0 = arith.constant 0 : i32
    %c0_i32_1 = arith.constant 0 : i32
    return %c0_i32, %c0_i32_0 : i32, i32
  }
  func.func @transform_10(%arg0: i32) -> (i32, i32) {
    %c0_i32 = arith.constant 0 : i32
    %c0_i32_0 = arith.constant 0 : i32
    %c0_i32_1 = arith.constant 0 : i32
    return %c0_i32, %c0_i32_0 : i32, i32
  }
  func.func @transform_11(%arg0: i32) -> (i32, i32) {
    %c0_i32 = arith.constant 0 : i32
    %c0_i32_0 = arith.constant 0 : i32
    %c0_i32_1 = arith.constant 0 : i32
    return %c0_i32, %c0_i32_0 : i32, i32
  }
  func.func @transform_12(%arg0: i32) -> (i32, i32) {
    %c0_i32 = arith.constant 0 : i32
    %c0_i32_0 = arith.constant 0 : i32
    %c0_i32_1 = arith.constant 0 : i32
    return %c0_i32, %c0_i32_0 : i32, i32
  }
  func.func @transform_13(%arg0: i32) -> (i32, i32) {
    %c0_i32 = arith.constant 0 : i32
    %c0_i32_0 = arith.constant 0 : i32
    %c0_i32_1 = arith.constant 0 : i32
    return %c0_i32, %c0_i32_0 : i32, i32
  }
  func.func @transform_14(%arg0: i32) -> (i32, i32) {
    %c0_i32 = arith.constant 0 : i32
    %c0_i32_0 = arith.constant 0 : i32
    %c0_i32_1 = arith.constant 0 : i32
    return %c0_i32, %c0_i32_0 : i32, i32
  }
  func.func @transform_15(%arg0: i32) -> (i32, i32) {
    %c0_i32 = arith.constant 0 : i32
    %c0_i32_0 = arith.constant 0 : i32
    %c0_i32_1 = arith.constant 0 : i32
    return %c0_i32, %c0_i32_0 : i32, i32
  }
  func.func @transform_16(%arg0: i32) -> (i32, i32) {
    %c0_i32 = arith.constant 0 : i32
    %c0_i32_0 = arith.constant 0 : i32
    %c0_i32_1 = arith.constant 0 : i32
    return %c0_i32, %c0_i32_0 : i32, i32
  }
  func.func @transform_17(%arg0: i32) -> (i32, i32) {
    %c0_i32 = arith.constant 0 : i32
    %c0_i32_0 = arith.constant 0 : i32
    %c0_i32_1 = arith.constant 0 : i32
    return %c0_i32, %c0_i32_0 : i32, i32
  }
  func.func @transform_18(%arg0: i32) -> (i32, i32, i32) {
    %c0_i32 = arith.constant 0 : i32
    %c0_i32_0 = arith.constant 0 : i32
    %c0_i32_1 = arith.constant 0 : i32
    return %arg0, %c0_i32, %c0_i32_0 : i32, i32, i32
  }
}

</mosaic_0001>

<llo_original>
// kernel: cvr_forward.1
$region0: #{cvr_forward.1}
  #allocation0 [shape = 'u32[]', space=smem, size = 0x4, offset = 0x4, fixed_abs, tag = 'smem constant byte address 0x4 - core index']
  #allocation1 [shape = 'u32[72,128]{1,0:T(1,128)}', space=vmem, size = 0x9000, scoped, tag = 'internal scratch']
  %s0 = inlined_call_operand.vmem [shape: s32[15,512], index: 0, kind: input, shape index: {}]
  %s1 = inlined_call_operand.vmem [shape: f32[5,512], index: 1, kind: input, shape index: {}]
  %s2 = inlined_call_operand.vmem [shape: f32[1,128], index: 2, kind: input, shape index: {}]
  %s3 = inlined_call_operand.vmem [shape: f32[984,8], index: 3, kind: input, shape index: {}]
  %s4 = inlined_call_operand.vmem [shape: f32[16,4], index: 4, kind: input, shape index: {}]
  %s5 = inlined_call_operand.vmem [shape: f32[64,8], index: 5, kind: input, shape index: {}]
  %s6 = inlined_call_operand.vmem [shape: f32[688,8], index: 6, kind: input, shape index: {}]
  %s7 = inlined_call_operand.vmem [shape: f32[48,8], index: 7, kind: input, shape index: {}]
  %s8 = inlined_call_operand.vmem [shape: f32[152,8], index: 8, kind: input, shape index: {}]
  %s9 = inlined_call_operand.vmem [shape: f32[64,8], index: 9, kind: input, shape index: {}]
  %s10 = inlined_call_operand.vmem [shape: f32[16,4], index: 10, kind: input, shape index: {}]
  %s11 = inlined_call_operand.vmem [shape: f32[16,4], index: 11, kind: input, shape index: {}]
  %s12 = inlined_call_operand.vmem [shape: f32[8,4], index: 12, kind: input, shape index: {}]
  %s13 = inlined_call_operand.vmem [shape: f32[16,4], index: 13, kind: input, shape index: {}]
  %s14 = inlined_call_operand.vmem [shape: f32[72,8], index: 14, kind: input, shape index: {}]
  %s15 = inlined_call_operand.vmem [shape: f32[72,8], index: 15, kind: input, shape index: {}]
  %s16 = inlined_call_operand.vmem [shape: f32[232,8], index: 16, kind: input, shape index: {}]
  %s17 = inlined_call_operand.vmem [shape: f32[520,8], index: 17, kind: input, shape index: {}]
  %s18 = inlined_call_operand.vmem [shape: f32[1,1,512], index: 18, kind: output, shape index: {}]
  %s19 = sld [smem:[#allocation0]]
  $region82: #{cvr_forward.1} parent=0
    _
  %s21 = ssub.s32 1, %s19
  %s22 = scalar_select 0, %s21, %s19
  // Predicated region
  $region2: #{cvr_forward.1} parent=0 // pred_check
    _
  $region3: #{cvr_forward.1} parent=0 // pred_check_branch
    %24 = sbr.rel (0) target = $region5
  $region4: #{cvr_forward.1} parent=0 // pred_region
    _
  $region5: #{cvr_forward.1} parent=0 // pred_fallthru
    _
  // Predicated region
  $region6: #{cvr_forward.1} parent=0 // pred_check
    _
  $region7: #{cvr_forward.1} parent=0 // pred_check_branch
    %26 = sbr.rel (0) target = $region9
  $region8: #{cvr_forward.1} parent=0 // pred_region
    _
  $region9: #{cvr_forward.1} parent=0 // pred_fallthru
    _
  // Predicated region
  $region10: #{cvr_forward.1} parent=0 // pred_check
    _
  $region11: #{cvr_forward.1} parent=0 // pred_check_branch
    %28 = sbr.rel (0) target = $region13
  $region12: #{cvr_forward.1} parent=0 // pred_region
    _
  $region13: #{cvr_forward.1} parent=0 // pred_fallthru
    _
  // Predicated region
  $region14: #{cvr_forward.1} parent=0 // pred_check
    _
  $region15: #{cvr_forward.1} parent=0 // pred_check_branch
    %30 = sbr.rel (0) target = $region17
  $region16: #{cvr_forward.1} parent=0 // pred_region
    _
  $region17: #{cvr_forward.1} parent=0 // pred_fallthru
    _
  // Predicated region
  $region18: #{cvr_forward.1} parent=0 // pred_check
    _
  $region19: #{cvr_forward.1} parent=0 // pred_check_branch
    %32 = sbr.rel (0) target = $region21
  $region20: #{cvr_forward.1} parent=0 // pred_region
    _
  $region21: #{cvr_forward.1} parent=0 // pred_fallthru
    _
  // Predicated region
  $region22: #{cvr_forward.1} parent=0 // pred_check
    _
  $region23: #{cvr_forward.1} parent=0 // pred_check_branch
    %34 = sbr.rel (0) target = $region25
  $region24: #{cvr_forward.1} parent=0 // pred_region
    _
  $region25: #{cvr_forward.1} parent=0 // pred_fallthru
    _
  // Predicated region
  $region26: #{cvr_forward.1} parent=0 // pred_check
    _
  $region27: #{cvr_forward.1} parent=0 // pred_check_branch
    %36 = sbr.rel (0) target = $region29
  $region28: #{cvr_forward.1} parent=0 // pred_region
    _
  $region29: #{cvr_forward.1} parent=0 // pred_fallthru
    _
  // Predicated region
  $region30: #{cvr_forward.1} parent=0 // pred_check
    _
  $region31: #{cvr_forward.1} parent=0 // pred_check_branch
    %38 = sbr.rel (0) target = $region33
  $region32: #{cvr_forward.1} parent=0 // pred_region
    _
  $region33: #{cvr_forward.1} parent=0 // pred_fallthru
    _
  // Predicated region
  $region34: #{cvr_forward.1} parent=0 // pred_check
    _
  $region35: #{cvr_forward.1} parent=0 // pred_check_branch
    %40 = sbr.rel (0) target = $region37
  $region36: #{cvr_forward.1} parent=0 // pred_region
    _
  $region37: #{cvr_forward.1} parent=0 // pred_fallthru
    _
  // Predicated region
  $region38: #{cvr_forward.1} parent=0 // pred_check
    _
  $region39: #{cvr_forward.1} parent=0 // pred_check_branch
    %42 = sbr.rel (0) target = $region41
  $region40: #{cvr_forward.1} parent=0 // pred_region
    _
  $region41: #{cvr_forward.1} parent=0 // pred_fallthru
    _
  // Predicated region
  $region42: #{cvr_forward.1} parent=0 // pred_check
    _
  $region43: #{cvr_forward.1} parent=0 // pred_check_branch
    %44 = sbr.rel (0) target = $region45
  $region44: #{cvr_forward.1} parent=0 // pred_region
    _
  $region45: #{cvr_forward.1} parent=0 // pred_fallthru
    _
  // Predicated region
  $region46: #{cvr_forward.1} parent=0 // pred_check
    _
  $region47: #{cvr_forward.1} parent=0 // pred_check_branch
    %46 = sbr.rel (0) target = $region49
  $region48: #{cvr_forward.1} parent=0 // pred_region
    _
  $region49: #{cvr_forward.1} parent=0 // pred_fallthru
    _
  // Predicated region
  $region50: #{cvr_forward.1} parent=0 // pred_check
    _
  $region51: #{cvr_forward.1} parent=0 // pred_check_branch
    %48 = sbr.rel (0) target = $region53
  $region52: #{cvr_forward.1} parent=0 // pred_region
    _
  $region53: #{cvr_forward.1} parent=0 // pred_fallthru
    _
  // Predicated region
  $region54: #{cvr_forward.1} parent=0 // pred_check
    _
  $region55: #{cvr_forward.1} parent=0 // pred_check_branch
    %50 = sbr.rel (0) target = $region57
  $region56: #{cvr_forward.1} parent=0 // pred_region
    _
  $region57: #{cvr_forward.1} parent=0 // pred_fallthru
    _
  // Predicated region
  $region58: #{cvr_forward.1} parent=0 // pred_check
    _
  $region59: #{cvr_forward.1} parent=0 // pred_check_branch
    %52 = sbr.rel (0) target = $region61
  $region60: #{cvr_forward.1} parent=0 // pred_region
    _
  $region61: #{cvr_forward.1} parent=0 // pred_fallthru
    _
  // Predicated region
  $region62: #{cvr_forward.1} parent=0 // pred_check
    _
  $region63: #{cvr_forward.1} parent=0 // pred_check_branch
    %54 = sbr.rel (0) target = $region65
  $region64: #{cvr_forward.1} parent=0 // pred_region
    _
  $region65: #{cvr_forward.1} parent=0 // pred_fallthru
    _
  // Predicated region
  $region66: #{cvr_forward.1} parent=0 // pred_check
    _
  $region67: #{cvr_forward.1} parent=0 // pred_check_branch
    %56 = sbr.rel (0) target = $region69
  $region68: #{cvr_forward.1} parent=0 // pred_region
    _
  $region69: #{cvr_forward.1} parent=0 // pred_fallthru
    _
  // Predicated region
  $region70: #{cvr_forward.1} parent=0 // pred_check
    _
  $region71: #{cvr_forward.1} parent=0 // pred_check_branch
    %58 = sbr.rel (0) target = $region73
  $region72: #{cvr_forward.1} parent=0 // pred_region
    _
  $region73: #{cvr_forward.1} parent=0 // pred_fallthru
    _
  %v59 = vld [vmem:[%s2] sm:$0x1]
  %61 = vset.pattern.permute.xlu0 105
  %62 = vperm.xlu0 %61, %v59
  %v63 = vpop.permute.xlu0 %62
  %v65 = vperm.slane %v63, 0
  %v66 = vadd.f32 %v65, 0.0
  %v67 = vld [vmem:[%s1] ss:$8 sm:$0xf]
  %68 = vset.pattern.permute.xlu0 100
  %69 = vperm.xlu0 %68, %v59
  %v70 = vpop.permute.xlu0 %69
  %v72 = vperm.slane %v70, 0
  %v73 = vmul.f32 %v67, %v72
  %v74 = vadd.f32 %v66, %v73
  %s75 = scalar_lea.vmem %s1, 1
  %v76 = vld [vmem:[%s75] ss:$8 sm:$0xf]
  %77 = vset.pattern.permute.xlu0 101
  %78 = vperm.xlu0 %77, %v59
  %v79 = vpop.permute.xlu0 %78
  %v81 = vperm.slane %v79, 0
  %v82 = vmul.f32 %v76, %v81
  %v83 = vadd.f32 %v74, %v82
  %s84 = scalar_lea.vmem %s1, 2
  %v85 = vld [vmem:[%s84] ss:$8 sm:$0xf]
  %86 = vset.pattern.permute.xlu0 102
  %87 = vperm.xlu0 %86, %v59
  %v88 = vpop.permute.xlu0 %87
  %v90 = vperm.slane %v88, 0
  %v91 = vmul.f32 %v85, %v90
  %v92 = vadd.f32 %v83, %v91
  %s93 = scalar_lea.vmem %s1, 3
  %v94 = vld [vmem:[%s93] ss:$8 sm:$0xf]
  %95 = vset.pattern.permute.xlu0 103
  %96 = vperm.xlu0 %95, %v59
  %v97 = vpop.permute.xlu0 %96
  %v99 = vperm.slane %v97, 0
  %v100 = vmul.f32 %v94, %v99
  %v101 = vadd.f32 %v92, %v100
  %s102 = scalar_lea.vmem %s1, 4
  %v103 = vld [vmem:[%s102] ss:$8 sm:$0xf]
  %104 = vset.pattern.permute.xlu0 104
  %105 = vperm.xlu0 %104, %v59
  %v106 = vpop.permute.xlu0 %105
  %v108 = vperm.slane %v106, 0
  %v109 = vmul.f32 %v103, %v108
  %v110 = vadd.f32 %v101, %v109
  %v111 = vld [vmem:[%s3] sm:$0xff]
  %v112 = vld [vmem:[%s3 + $0x8] sm:$0xff]
  %v113 = vld [vmem:[%s3 + $0x10] sm:$0xff]
  %v114 = vld [vmem:[%s3 + $0x18] sm:$0xff]
  %v115 = vld [vmem:[%s3 + $0x20] sm:$0xff]
  %v116 = vld [vmem:[%s3 + $0x28] sm:$0xff]
  %v117 = vld [vmem:[%s3 + $0x30] sm:$0xff]
  %v118 = vld [vmem:[%s3 + $0x38] sm:$0xff]
  %v119 = vld [vmem:[%s3 + $0x40] sm:$0xff]
  %v120 = vld [vmem:[%s3 + $0x48] sm:$0xff]
  %v121 = vld [vmem:[%s3 + $0x50] sm:$0xff]
  %v122 = vld [vmem:[%s3 + $0x58] sm:$0xff]
  %v123 = vld [vmem:[%s3 + $0x60] sm:$0xff]
  %v124 = vld [vmem:[%s3 + $0x68] sm:$0xff]
  %v125 = vld [vmem:[%s3 + $0x70] sm:$0xff]
  %v126 = vld [vmem:[%s3 + $0x78] sm:$0xff]
  %v127 = vld [vmem:[%s3 + $0x80] sm:$0xff]
  %v128 = vld [vmem:[%s3 + $0x88] sm:$0xff]
  %v129 = vld [vmem:[%s3 + $0x90] sm:$0xff]
  %v130 = vld [vmem:[%s3 + $0x98] sm:$0xff]
  %v131 = vld [vmem:[%s3 + $0xa0] sm:$0xff]
  %v132 = vld [vmem:[%s3 + $0xa8] sm:$0xff]
  %v133 = vld [vmem:[%s3 + $0xb0] sm:$0xff]
  %v134 = vld [vmem:[%s3 + $0xb8] sm:$0xff]
  %v135 = vld [vmem:[%s3 + $0xc0] sm:$0xff]
  %v136 = vld [vmem:[%s3 + $0xc8] sm:$0xff]
  %v137 = vld [vmem:[%s3 + $0xd0] sm:$0xff]
  %v138 = vld [vmem:[%s3 + $0xd8] sm:$0xff]
  %v139 = vld [vmem:[%s3 + $0xe0] sm:$0xff]
  %v140 = vld [vmem:[%s3 + $0xe8] sm:$0xff]
  %v141 = vld [vmem:[%s3 + $0xf0] sm:$0xff]
  %v142 = vld [vmem:[%s3 + $0xf8] sm:$0xff]
  %v143 = vld [vmem:[%s3 + $0x100] sm:$0xff]
  %v144 = vld [vmem:[%s3 + $0x108] sm:$0xff]
  %v145 = vld [vmem:[%s3 + $0x110] sm:$0xff]
  %v146 = vld [vmem:[%s3 + $0x118] sm:$0xff]
  %v147 = vld [vmem:[%s3 + $0x120] sm:$0xff]
  %v148 = vld [vmem:[%s3 + $0x128] sm:$0xff]
  %v149 = vld [vmem:[%s3 + $0x130] sm:$0xff]
  %v150 = vld [vmem:[%s3 + $0x138] sm:$0xff]
  %v151 = vld [vmem:[%s3 + $0x140] sm:$0xff]
  %v152 = vld [vmem:[%s3 + $0x148] sm:$0xff]
  %v153 = vld [vmem:[%s3 + $0x150] sm:$0xff]
  %v154 = vld [vmem:[%s3 + $0x158] sm:$0xff]
  %v155 = vld [vmem:[%s3 + $0x160] sm:$0xff]
  %v156 = vld [vmem:[%s3 + $0x168] sm:$0xff]
  %v157 = vld [vmem:[%s3 + $0x170] sm:$0xff]
  %v158 = vld [vmem:[%s3 + $0x178] sm:$0xff]
  %v159 = vld [vmem:[%s3 + $0x180] sm:$0xff]
  %v160 = vld [vmem:[%s3 + $0x188] sm:$0xff]
  %v161 = vld [vmem:[%s3 + $0x190] sm:$0xff]
  %v162 = vld [vmem:[%s3 + $0x198] sm:$0xff]
  %v163 = vld [vmem:[%s3 + $0x1a0] sm:$0xff]
  %v164 = vld [vmem:[%s3 + $0x1a8] sm:$0xff]
  %v165 = vld [vmem:[%s3 + $0x1b0] sm:$0xff]
  %v166 = vld [vmem:[%s3 + $0x1b8] sm:$0xff]
  %v167 = vld [vmem:[%s3 + $0x1c0] sm:$0xff]
  %v168 = vld [vmem:[%s3 + $0x1c8] sm:$0xff]
  %v169 = vld [vmem:[%s3 + $0x1d0] sm:$0xff]
  %v170 = vld [vmem:[%s3 + $0x1d8] sm:$0xff]
  %v171 = vld [vmem:[%s3 + $0x1e0] sm:$0xff]
  %v172 = vld [vmem:[%s3 + $0x1e8] sm:$0xff]
  %v173 = vld [vmem:[%s3 + $0x1f0] sm:$0xff]
  %v174 = vld [vmem:[%s3 + $0x1f8] sm:$0xff]
  %v175 = vld [vmem:[%s3 + $0x200] sm:$0xff]
  %v176 = vld [vmem:[%s3 + $0x208] sm:$0xff]
  %v177 = vld [vmem:[%s3 + $0x210] sm:$0xff]
  %v178 = vld [vmem:[%s3 + $0x218] sm:$0xff]
  %v179 = vld [vmem:[%s3 + $0x220] sm:$0xff]
  %v180 = vld [vmem:[%s3 + $0x228] sm:$0xff]
  %v181 = vld [vmem:[%s3 + $0x230] sm:$0xff]
  %v182 = vld [vmem:[%s3 + $0x238] sm:$0xff]
  %v183 = vld [vmem:[%s3 + $0x240] sm:$0xff]
  %v184 = vld [vmem:[%s3 + $0x248] sm:$0xff]
  %v185 = vld [vmem:[%s3 + $0x250] sm:$0xff]
  %v186 = vld [vmem:[%s3 + $0x258] sm:$0xff]
  %v187 = vld [vmem:[%s3 + $0x260] sm:$0xff]
  %v188 = vld [vmem:[%s3 + $0x268] sm:$0xff]
  %v189 = vld [vmem:[%s3 + $0x270] sm:$0xff]
  %v190 = vld [vmem:[%s3 + $0x278] sm:$0xff]
  %v191 = vld [vmem:[%s3 + $0x280] sm:$0xff]
  %v192 = vld [vmem:[%s3 + $0x288] sm:$0xff]
  %v193 = vld [vmem:[%s3 + $0x290] sm:$0xff]
  %v194 = vld [vmem:[%s3 + $0x298] sm:$0xff]
  %v195 = vld [vmem:[%s3 + $0x2a0] sm:$0xff]
  %v196 = vld [vmem:[%s3 + $0x2a8] sm:$0xff]
  %v197 = vld [vmem:[%s3 + $0x2b0] sm:$0xff]
  %v198 = vld [vmem:[%s3 + $0x2b8] sm:$0xff]
  %v199 = vld [vmem:[%s3 + $0x2c0] sm:$0xff]
  %v200 = vld [vmem:[%s3 + $0x2c8] sm:$0xff]
  %v201 = vld [vmem:[%s3 + $0x2d0] sm:$0xff]
  %v202 = vld [vmem:[%s3 + $0x2d8] sm:$0xff]
  %v203 = vld [vmem:[%s3 + $0x2e0] sm:$0xff]
  %v204 = vld [vmem:[%s3 + $0x2e8] sm:$0xff]
  %v205 = vld [vmem:[%s3 + $0x2f0] sm:$0xff]
  %v206 = vld [vmem:[%s3 + $0x2f8] sm:$0xff]
  %v207 = vld [vmem:[%s3 + $0x300] sm:$0xff]
  %v208 = vld [vmem:[%s3 + $0x308] sm:$0xff]
  %v209 = vld [vmem:[%s3 + $0x310] sm:$0xff]
  %v210 = vld [vmem:[%s3 + $0x318] sm:$0xff]
  %v211 = vld [vmem:[%s3 + $0x320] sm:$0xff]
  %v212 = vld [vmem:[%s3 + $0x328] sm:$0xff]
  %v213 = vld [vmem:[%s3 + $0x330] sm:$0xff]
  %v214 = vld [vmem:[%s3 + $0x338] sm:$0xff]
  %v215 = vld [vmem:[%s3 + $0x340] sm:$0xff]
  %v216 = vld [vmem:[%s3 + $0x348] sm:$0xff]
  %v217 = vld [vmem:[%s3 + $0x350] sm:$0xff]
  %v218 = vld [vmem:[%s3 + $0x358] sm:$0xff]
  %v219 = vld [vmem:[%s3 + $0x360] sm:$0xff]
  %v220 = vld [vmem:[%s3 + $0x368] sm:$0xff]
  %v221 = vld [vmem:[%s3 + $0x370] sm:$0xff]
  %v222 = vld [vmem:[%s3 + $0x378] sm:$0xff]
  %v223 = vld [vmem:[%s3 + $0x380] sm:$0xff]
  %v224 = vld [vmem:[%s3 + $0x388] sm:$0xff]
  %v225 = vld [vmem:[%s3 + $0x390] sm:$0xff]
  %v226 = vld [vmem:[%s3 + $0x398] sm:$0xff]
  %v227 = vld [vmem:[%s3 + $0x3a0] sm:$0xff]
  %v228 = vld [vmem:[%s3 + $0x3a8] sm:$0xff]
  %v229 = vld [vmem:[%s3 + $0x3b0] sm:$0xff]
  %v230 = vld [vmem:[%s3 + $0x3b8] sm:$0xff]
  %v231 = vld [vmem:[%s3 + $0x3c0] sm:$0xff]
  %v232 = vld [vmem:[%s3 + $0x3c8] sm:$0xff]
  %v233 = vld [vmem:[%s3 + $0x3d0] sm:$0xff]
  %v234 = vperm.slane %v59, 0
  %v236 = vmul.f32 %v111, %v234
  %v237 = vmul.f32 %v112, %v234
  %v238 = vmul.f32 %v113, %v234
  %v239 = vmul.f32 %v114, %v234
  %v240 = vmul.f32 %v115, %v234
  %v241 = vmul.f32 %v116, %v234
  %v242 = vmul.f32 %v117, %v234
  %v243 = vmul.f32 %v118, %v234
  %v244 = vmul.f32 %v119, %v234
  %v245 = vmul.f32 %v120, %v234
  %v246 = vmul.f32 %v121, %v234
  %v247 = vmul.f32 %v122, %v234
  %v248 = vmul.f32 %v123, %v234
  %v249 = vmul.f32 %v124, %v234
  %v250 = vmul.f32 %v125, %v234
  %v251 = vmul.f32 %v126, %v234
  %v252 = vmul.f32 %v127, %v234
  %v253 = vmul.f32 %v128, %v234
  %v254 = vmul.f32 %v129, %v234
  %v255 = vmul.f32 %v130, %v234
  %v256 = vmul.f32 %v131, %v234
  %v257 = vmul.f32 %v132, %v234
  %v258 = vmul.f32 %v133, %v234
  %v259 = vmul.f32 %v134, %v234
  %v260 = vmul.f32 %v135, %v234
  %v261 = vmul.f32 %v136, %v234
  %v262 = vmul.f32 %v137, %v234
  %v263 = vmul.f32 %v138, %v234
  %v264 = vmul.f32 %v139, %v234
  %v265 = vmul.f32 %v140, %v234
  %v266 = vmul.f32 %v141, %v234
  %v267 = vmul.f32 %v142, %v234
  %v268 = vmul.f32 %v143, %v234
  %v269 = vmul.f32 %v144, %v234
  %v270 = vmul.f32 %v145, %v234
  %v271 = vmul.f32 %v146, %v234
  %v272 = vmul.f32 %v147, %v234
  %v273 = vmul.f32 %v148, %v234
  %v274 = vmul.f32 %v149, %v234
  %v275 = vmul.f32 %v150, %v234
  %v276 = vmul.f32 %v151, %v234
  %v277 = vmul.f32 %v152, %v234
  %v278 = vmul.f32 %v153, %v234
  %v279 = vmul.f32 %v154, %v234
  %v280 = vmul.f32 %v155, %v234
  %v281 = vmul.f32 %v156, %v234
  %v282 = vmul.f32 %v157, %v234
  %v283 = vmul.f32 %v158, %v234
  %v284 = vmul.f32 %v159, %v234
  %v285 = vmul.f32 %v160, %v234
  %v286 = vmul.f32 %v161, %v234
  %v287 = vmul.f32 %v162, %v234
  %v288 = vmul.f32 %v163, %v234
  %v289 = vmul.f32 %v164, %v234
  %v290 = vmul.f32 %v165, %v234
  %v291 = vmul.f32 %v166, %v234
  %v292 = vmul.f32 %v167, %v234
  %v293 = vmul.f32 %v168, %v234
  %v294 = vmul.f32 %v169, %v234
  %v295 = vmul.f32 %v170, %v234
  %v296 = vmul.f32 %v171, %v234
  %v297 = vmul.f32 %v172, %v234
  %v298 = vmul.f32 %v173, %v234
  %v299 = vmul.f32 %v174, %v234
  %v300 = vmul.f32 %v175, %v234
  %v301 = vmul.f32 %v176, %v234
  %v302 = vmul.f32 %v177, %v234
  %v303 = vmul.f32 %v178, %v234
  %v304 = vmul.f32 %v179, %v234
  %v305 = vmul.f32 %v180, %v234
  %v306 = vmul.f32 %v181, %v234
  %v307 = vmul.f32 %v182, %v234
  %v308 = vmul.f32 %v183, %v234
  %v309 = vmul.f32 %v184, %v234
  %v310 = vmul.f32 %v185, %v234
  %v311 = vmul.f32 %v186, %v234
  %v312 = vmul.f32 %v187, %v234
  %v313 = vmul.f32 %v188, %v234
  %v314 = vmul.f32 %v189, %v234
  %v315 = vmul.f32 %v190, %v234
  %v316 = vmul.f32 %v191, %v234
  %v317 = vmul.f32 %v192, %v234
  %v318 = vmul.f32 %v193, %v234
  %v319 = vmul.f32 %v194, %v234
  %v320 = vmul.f32 %v195, %v234
  %v321 = vmul.f32 %v196, %v234
  %v322 = vmul.f32 %v197, %v234
  %v323 = vmul.f32 %v198, %v234
  %v324 = vmul.f32 %v199, %v234
  %v325 = vmul.f32 %v200, %v234
  %v326 = vmul.f32 %v201, %v234
  %v327 = vmul.f32 %v202, %v234
  %v328 = vmul.f32 %v203, %v234
  %v329 = vmul.f32 %v204, %v234
  %v330 = vmul.f32 %v205, %v234
  %v331 = vmul.f32 %v206, %v234
  %v332 = vmul.f32 %v207, %v234
  %v333 = vmul.f32 %v208, %v234
  %v334 = vmul.f32 %v209, %v234
  %v335 = vmul.f32 %v210, %v234
  %v336 = vmul.f32 %v211, %v234
  %v337 = vmul.f32 %v212, %v234
  %v338 = vmul.f32 %v213, %v234
  %v339 = vmul.f32 %v214, %v234
  %v340 = vmul.f32 %v215, %v234
  %v341 = vmul.f32 %v216, %v234
  %v342 = vmul.f32 %v217, %v234
  %v343 = vmul.f32 %v218, %v234
  %v344 = vmul.f32 %v219, %v234
  %v345 = vmul.f32 %v220, %v234
  %v346 = vmul.f32 %v221, %v234
  %v347 = vmul.f32 %v222, %v234
  %v348 = vmul.f32 %v223, %v234
  %v349 = vmul.f32 %v224, %v234
  %v350 = vmul.f32 %v225, %v234
  %v351 = vmul.f32 %v226, %v234
  %v352 = vmul.f32 %v227, %v234
  %v353 = vmul.f32 %v228, %v234
  %v354 = vmul.f32 %v229, %v234
  %v355 = vmul.f32 %v230, %v234
  %v356 = vmul.f32 %v231, %v234
  %v357 = vmul.f32 %v232, %v234
  %v358 = vmul.f32 %v233, %v234
  %vm359 = vcmask 64512
  %v360 = vsel %vm359, %v236, 0.0
  %361 = vadd.xlane.f32.xlu0 %v360
  %v362 = vpop.xlane.xlu0 %361
  %v363 = vsel %vm359, %v237, 0.0
  %364 = vadd.xlane.f32.xlu0 %v363
  %v365 = vpop.xlane.xlu0 %364
  %v366 = vsel %vm359, %v238, 0.0
  %367 = vadd.xlane.f32.xlu0 %v366
  %v368 = vpop.xlane.xlu0 %367
  %v369 = vsel %vm359, %v239, 0.0
  %370 = vadd.xlane.f32.xlu0 %v369
  %v371 = vpop.xlane.xlu0 %370
  %v372 = vsel %vm359, %v240, 0.0
  %373 = vadd.xlane.f32.xlu0 %v372
  %v374 = vpop.xlane.xlu0 %373
  %v375 = vsel %vm359, %v241, 0.0
  %376 = vadd.xlane.f32.xlu0 %v375
  %v377 = vpop.xlane.xlu0 %376
  %v378 = vsel %vm359, %v242, 0.0
  %379 = vadd.xlane.f32.xlu0 %v378
  %v380 = vpop.xlane.xlu0 %379
  %v381 = vsel %vm359, %v243, 0.0
  %382 = vadd.xlane.f32.xlu0 %v381
  %v383 = vpop.xlane.xlu0 %382
  %v384 = vsel %vm359, %v244, 0.0
  %385 = vadd.xlane.f32.xlu0 %v384
  %v386 = vpop.xlane.xlu0 %385
  %v387 = vsel %vm359, %v245, 0.0
  %388 = vadd.xlane.f32.xlu0 %v387
  %v389 = vpop.xlane.xlu0 %388
  %v390 = vsel %vm359, %v246, 0.0
  %391 = vadd.xlane.f32.xlu0 %v390
  %v392 = vpop.xlane.xlu0 %391
  %v393 = vsel %vm359, %v247, 0.0
  %394 = vadd.xlane.f32.xlu0 %v393
  %v395 = vpop.xlane.xlu0 %394
  %v396 = vsel %vm359, %v248, 0.0
  %397 = vadd.xlane.f32.xlu0 %v396
  %v398 = vpop.xlane.xlu0 %397
  %v399 = vsel %vm359, %v249, 0.0
  %400 = vadd.xlane.f32.xlu0 %v399
  %v401 = vpop.xlane.xlu0 %400
  %v402 = vsel %vm359, %v250, 0.0
  %403 = vadd.xlane.f32.xlu0 %v402
  %v404 = vpop.xlane.xlu0 %403
  %v405 = vsel %vm359, %v251, 0.0
  %406 = vadd.xlane.f32.xlu0 %v405
  %v407 = vpop.xlane.xlu0 %406
  %v408 = vsel %vm359, %v252, 0.0
  %409 = vadd.xlane.f32.xlu0 %v408
  %v410 = vpop.xlane.xlu0 %409
  %v411 = vsel %vm359, %v253, 0.0
  %412 = vadd.xlane.f32.xlu0 %v411
  %v413 = vpop.xlane.xlu0 %412
  %v414 = vsel %vm359, %v254, 0.0
  %415 = vadd.xlane.f32.xlu0 %v414
  %v416 = vpop.xlane.xlu0 %415
  %v417 = vsel %vm359, %v255, 0.0
  %418 = vadd.xlane.f32.xlu0 %v417
  %v419 = vpop.xlane.xlu0 %418
  %v420 = vsel %vm359, %v256, 0.0
  %421 = vadd.xlane.f32.xlu0 %v420
  %v422 = vpop.xlane.xlu0 %421
  %v423 = vsel %vm359, %v257, 0.0
  %424 = vadd.xlane.f32.xlu0 %v423
  %v425 = vpop.xlane.xlu0 %424
  %v426 = vsel %vm359, %v258, 0.0
  %427 = vadd.xlane.f32.xlu0 %v426
  %v428 = vpop.xlane.xlu0 %427
  %v429 = vsel %vm359, %v259, 0.0
  %430 = vadd.xlane.f32.xlu0 %v429
  %v431 = vpop.xlane.xlu0 %430
  %v432 = vsel %vm359, %v260, 0.0
  %433 = vadd.xlane.f32.xlu0 %v432
  %v434 = vpop.xlane.xlu0 %433
  %v435 = vsel %vm359, %v261, 0.0
  %436 = vadd.xlane.f32.xlu0 %v435
  %v437 = vpop.xlane.xlu0 %436
  %v438 = vsel %vm359, %v262, 0.0
  %439 = vadd.xlane.f32.xlu0 %v438
  %v440 = vpop.xlane.xlu0 %439
  %v441 = vsel %vm359, %v263, 0.0
  %442 = vadd.xlane.f32.xlu0 %v441
  %v443 = vpop.xlane.xlu0 %442
  %v444 = vsel %vm359, %v264, 0.0
  %445 = vadd.xlane.f32.xlu0 %v444
  %v446 = vpop.xlane.xlu0 %445
  %v447 = vsel %vm359, %v265, 0.0
  %448 = vadd.xlane.f32.xlu0 %v447
  %v449 = vpop.xlane.xlu0 %448
  %v450 = vsel %vm359, %v266, 0.0
  %451 = vadd.xlane.f32.xlu0 %v450
  %v452 = vpop.xlane.xlu0 %451
  %v453 = vsel %vm359, %v267, 0.0
  %454 = vadd.xlane.f32.xlu0 %v453
  %v455 = vpop.xlane.xlu0 %454
  %v456 = vsel %vm359, %v268, 0.0
  %457 = vadd.xlane.f32.xlu0 %v456
  %v458 = vpop.xlane.xlu0 %457
  %v459 = vsel %vm359, %v269, 0.0
  %460 = vadd.xlane.f32.xlu0 %v459
  %v461 = vpop.xlane.xlu0 %460
  %v462 = vsel %vm359, %v270, 0.0
  %463 = vadd.xlane.f32.xlu0 %v462
  %v464 = vpop.xlane.xlu0 %463
  %v465 = vsel %vm359, %v271, 0.0
  %466 = vadd.xlane.f32.xlu0 %v465
  %v467 = vpop.xlane.xlu0 %466
  %v468 = vsel %vm359, %v272, 0.0
  %469 = vadd.xlane.f32.xlu0 %v468
  %v470 = vpop.xlane.xlu0 %469
  %v471 = vsel %vm359, %v273, 0.0
  %472 = vadd.xlane.f32.xlu0 %v471
  %v473 = vpop.xlane.xlu0 %472
  %v474 = vsel %vm359, %v274, 0.0
  %475 = vadd.xlane.f32.xlu0 %v474
  %v476 = vpop.xlane.xlu0 %475
  %v477 = vsel %vm359, %v275, 0.0
  %478 = vadd.xlane.f32.xlu0 %v477
  %v479 = vpop.xlane.xlu0 %478
  %v480 = vsel %vm359, %v276, 0.0
  %481 = vadd.xlane.f32.xlu0 %v480
  %v482 = vpop.xlane.xlu0 %481
  %v483 = vsel %vm359, %v277, 0.0
  %484 = vadd.xlane.f32.xlu0 %v483
  %v485 = vpop.xlane.xlu0 %484
  %v486 = vsel %vm359, %v278, 0.0
  %487 = vadd.xlane.f32.xlu0 %v486
  %v488 = vpop.xlane.xlu0 %487
  %v489 = vsel %vm359, %v279, 0.0
  %490 = vadd.xlane.f32.xlu0 %v489
  %v491 = vpop.xlane.xlu0 %490
  %v492 = vsel %vm359, %v280, 0.0
  %493 = vadd.xlane.f32.xlu0 %v492
  %v494 = vpop.xlane.xlu0 %493
  %v495 = vsel %vm359, %v281, 0.0
  %496 = vadd.xlane.f32.xlu0 %v495
  %v497 = vpop.xlane.xlu0 %496
  %v498 = vsel %vm359, %v282, 0.0
  %499 = vadd.xlane.f32.xlu0 %v498
  %v500 = vpop.xlane.xlu0 %499
  %v501 = vsel %vm359, %v283, 0.0
  %502 = vadd.xlane.f32.xlu0 %v501
  %v503 = vpop.xlane.xlu0 %502
  %v504 = vsel %vm359, %v284, 0.0
  %505 = vadd.xlane.f32.xlu0 %v504
  %v506 = vpop.xlane.xlu0 %505
  %v507 = vsel %vm359, %v285, 0.0
  %508 = vadd.xlane.f32.xlu0 %v507
  %v509 = vpop.xlane.xlu0 %508
  %v510 = vsel %vm359, %v286, 0.0
  %511 = vadd.xlane.f32.xlu0 %v510
  %v512 = vpop.xlane.xlu0 %511
  %v513 = vsel %vm359, %v287, 0.0
  %514 = vadd.xlane.f32.xlu0 %v513
  %v515 = vpop.xlane.xlu0 %514
  %v516 = vsel %vm359, %v288, 0.0
  %517 = vadd.xlane.f32.xlu0 %v516
  %v518 = vpop.xlane.xlu0 %517
  %v519 = vsel %vm359, %v289, 0.0
  %520 = vadd.xlane.f32.xlu0 %v519
  %v521 = vpop.xlane.xlu0 %520
  %v522 = vsel %vm359, %v290, 0.0
  %523 = vadd.xlane.f32.xlu0 %v522
  %v524 = vpop.xlane.xlu0 %523
  %v525 = vsel %vm359, %v291, 0.0
  %526 = vadd.xlane.f32.xlu0 %v525
  %v527 = vpop.xlane.xlu0 %526
  %v528 = vsel %vm359, %v292, 0.0
  %529 = vadd.xlane.f32.xlu0 %v528
  %v530 = vpop.xlane.xlu0 %529
  %v531 = vsel %vm359, %v293, 0.0
  %532 = vadd.xlane.f32.xlu0 %v531
  %v533 = vpop.xlane.xlu0 %532
  %v534 = vsel %vm359, %v294, 0.0
  %535 = vadd.xlane.f32.xlu0 %v534
  %v536 = vpop.xlane.xlu0 %535
  %v537 = vsel %vm359, %v295, 0.0
  %538 = vadd.xlane.f32.xlu0 %v537
  %v539 = vpop.xlane.xlu0 %538
  %v540 = vsel %vm359, %v296, 0.0
  %541 = vadd.xlane.f32.xlu0 %v540
  %v542 = vpop.xlane.xlu0 %541
  %v543 = vsel %vm359, %v297, 0.0
  %544 = vadd.xlane.f32.xlu0 %v543
  %v545 = vpop.xlane.xlu0 %544
  %v546 = vsel %vm359, %v298, 0.0
  %547 = vadd.xlane.f32.xlu0 %v546
  %v548 = vpop.xlane.xlu0 %547
  %v549 = vsel %vm359, %v299, 0.0
  %550 = vadd.xlane.f32.xlu0 %v549
  %v551 = vpop.xlane.xlu0 %550
  %v552 = vsel %vm359, %v300, 0.0
  %553 = vadd.xlane.f32.xlu0 %v552
  %v554 = vpop.xlane.xlu0 %553
  %v555 = vsel %vm359, %v301, 0.0
  %556 = vadd.xlane.f32.xlu0 %v555
  %v557 = vpop.xlane.xlu0 %556
  %v558 = vsel %vm359, %v302, 0.0
  %559 = vadd.xlane.f32.xlu0 %v558
  %v560 = vpop.xlane.xlu0 %559
  %v561 = vsel %vm359, %v303, 0.0
  %562 = vadd.xlane.f32.xlu0 %v561
  %v563 = vpop.xlane.xlu0 %562
  %v564 = vsel %vm359, %v304, 0.0
  %565 = vadd.xlane.f32.xlu0 %v564
  %v566 = vpop.xlane.xlu0 %565
  %v567 = vsel %vm359, %v305, 0.0
  %568 = vadd.xlane.f32.xlu0 %v567
  %v569 = vpop.xlane.xlu0 %568
  %v570 = vsel %vm359, %v306, 0.0
  %571 = vadd.xlane.f32.xlu0 %v570
  %v572 = vpop.xlane.xlu0 %571
  %v573 = vsel %vm359, %v307, 0.0
  %574 = vadd.xlane.f32.xlu0 %v573
  %v575 = vpop.xlane.xlu0 %574
  %v576 = vsel %vm359, %v308, 0.0
  %577 = vadd.xlane.f32.xlu0 %v576
  %v578 = vpop.xlane.xlu0 %577
  %v579 = vsel %vm359, %v309, 0.0
  %580 = vadd.xlane.f32.xlu0 %v579
  %v581 = vpop.xlane.xlu0 %580
  %v582 = vsel %vm359, %v310, 0.0
  %583 = vadd.xlane.f32.xlu0 %v582
  %v584 = vpop.xlane.xlu0 %583
  %v585 = vsel %vm359, %v311, 0.0
  %586 = vadd.xlane.f32.xlu0 %v585
  %v587 = vpop.xlane.xlu0 %586
  %v588 = vsel %vm359, %v312, 0.0
  %589 = vadd.xlane.f32.xlu0 %v588
  %v590 = vpop.xlane.xlu0 %589
  %v591 = vsel %vm359, %v313, 0.0
  %592 = vadd.xlane.f32.xlu0 %v591
  %v593 = vpop.xlane.xlu0 %592
  %v594 = vsel %vm359, %v314, 0.0
  %595 = vadd.xlane.f32.xlu0 %v594
  %v596 = vpop.xlane.xlu0 %595
  %v597 = vsel %vm359, %v315, 0.0
  %598 = vadd.xlane.f32.xlu0 %v597
  %v599 = vpop.xlane.xlu0 %598
  %v600 = vsel %vm359, %v316, 0.0
  %601 = vadd.xlane.f32.xlu0 %v600
  %v602 = vpop.xlane.xlu0 %601
  %v603 = vsel %vm359, %v317, 0.0
  %604 = vadd.xlane.f32.xlu0 %v603
  %v605 = vpop.xlane.xlu0 %604
  %v606 = vsel %vm359, %v318, 0.0
  %607 = vadd.xlane.f32.xlu0 %v606
  %v608 = vpop.xlane.xlu0 %607
  %v609 = vsel %vm359, %v319, 0.0
  %610 = vadd.xlane.f32.xlu0 %v609
  %v611 = vpop.xlane.xlu0 %610
  %v612 = vsel %vm359, %v320, 0.0
  %613 = vadd.xlane.f32.xlu0 %v612
  %v614 = vpop.xlane.xlu0 %613
  %v615 = vsel %vm359, %v321, 0.0
  %616 = vadd.xlane.f32.xlu0 %v615
  %v617 = vpop.xlane.xlu0 %616
  %v618 = vsel %vm359, %v322, 0.0
  %619 = vadd.xlane.f32.xlu0 %v618
  %v620 = vpop.xlane.xlu0 %619
  %v621 = vsel %vm359, %v323, 0.0
  %622 = vadd.xlane.f32.xlu0 %v621
  %v623 = vpop.xlane.xlu0 %622
  %v624 = vsel %vm359, %v324, 0.0
  %625 = vadd.xlane.f32.xlu0 %v624
  %v626 = vpop.xlane.xlu0 %625
  %v627 = vsel %vm359, %v325, 0.0
  %628 = vadd.xlane.f32.xlu0 %v627
  %v629 = vpop.xlane.xlu0 %628
  %v630 = vsel %vm359, %v326, 0.0
  %631 = vadd.xlane.f32.xlu0 %v630
  %v632 = vpop.xlane.xlu0 %631
  %v633 = vsel %vm359, %v327, 0.0
  %634 = vadd.xlane.f32.xlu0 %v633
  %v635 = vpop.xlane.xlu0 %634
  %v636 = vsel %vm359, %v328, 0.0
  %637 = vadd.xlane.f32.xlu0 %v636
  %v638 = vpop.xlane.xlu0 %637
  %v639 = vsel %vm359, %v329, 0.0
  %640 = vadd.xlane.f32.xlu0 %v639
  %v641 = vpop.xlane.xlu0 %640
  %v642 = vsel %vm359, %v330, 0.0
  %643 = vadd.xlane.f32.xlu0 %v642
  %v644 = vpop.xlane.xlu0 %643
  %v645 = vsel %vm359, %v331, 0.0
  %646 = vadd.xlane.f32.xlu0 %v645
  %v647 = vpop.xlane.xlu0 %646
  %v648 = vsel %vm359, %v332, 0.0
  %649 = vadd.xlane.f32.xlu0 %v648
  %v650 = vpop.xlane.xlu0 %649
  %v651 = vsel %vm359, %v333, 0.0
  %652 = vadd.xlane.f32.xlu0 %v651
  %v653 = vpop.xlane.xlu0 %652
  %v654 = vsel %vm359, %v334, 0.0
  %655 = vadd.xlane.f32.xlu0 %v654
  %v656 = vpop.xlane.xlu0 %655
  %v657 = vsel %vm359, %v335, 0.0
  %658 = vadd.xlane.f32.xlu0 %v657
  %v659 = vpop.xlane.xlu0 %658
  %v660 = vsel %vm359, %v336, 0.0
  %661 = vadd.xlane.f32.xlu0 %v660
  %v662 = vpop.xlane.xlu0 %661
  %v663 = vsel %vm359, %v337, 0.0
  %664 = vadd.xlane.f32.xlu0 %v663
  %v665 = vpop.xlane.xlu0 %664
  %v666 = vsel %vm359, %v338, 0.0
  %667 = vadd.xlane.f32.xlu0 %v666
  %v668 = vpop.xlane.xlu0 %667
  %v669 = vsel %vm359, %v339, 0.0
  %670 = vadd.xlane.f32.xlu0 %v669
  %v671 = vpop.xlane.xlu0 %670
  %v672 = vsel %vm359, %v340, 0.0
  %673 = vadd.xlane.f32.xlu0 %v672
  %v674 = vpop.xlane.xlu0 %673
  %v675 = vsel %vm359, %v341, 0.0
  %676 = vadd.xlane.f32.xlu0 %v675
  %v677 = vpop.xlane.xlu0 %676
  %v678 = vsel %vm359, %v342, 0.0
  %679 = vadd.xlane.f32.xlu0 %v678
  %v680 = vpop.xlane.xlu0 %679
  %v681 = vsel %vm359, %v343, 0.0
  %682 = vadd.xlane.f32.xlu0 %v681
  %v683 = vpop.xlane.xlu0 %682
  %v684 = vsel %vm359, %v344, 0.0
  %685 = vadd.xlane.f32.xlu0 %v684
  %v686 = vpop.xlane.xlu0 %685
  %v687 = vsel %vm359, %v345, 0.0
  %688 = vadd.xlane.f32.xlu0 %v687
  %v689 = vpop.xlane.xlu0 %688
  %v690 = vsel %vm359, %v346, 0.0
  %691 = vadd.xlane.f32.xlu0 %v690
  %v692 = vpop.xlane.xlu0 %691
  %v693 = vsel %vm359, %v347, 0.0
  %694 = vadd.xlane.f32.xlu0 %v693
  %v695 = vpop.xlane.xlu0 %694
  %v696 = vsel %vm359, %v348, 0.0
  %697 = vadd.xlane.f32.xlu0 %v696
  %v698 = vpop.xlane.xlu0 %697
  %v699 = vsel %vm359, %v349, 0.0
  %700 = vadd.xlane.f32.xlu0 %v699
  %v701 = vpop.xlane.xlu0 %700
  %v702 = vsel %vm359, %v350, 0.0
  %703 = vadd.xlane.f32.xlu0 %v702
  %v704 = vpop.xlane.xlu0 %703
  %v705 = vsel %vm359, %v351, 0.0
  %706 = vadd.xlane.f32.xlu0 %v705
  %v707 = vpop.xlane.xlu0 %706
  %v708 = vsel %vm359, %v352, 0.0
  %709 = vadd.xlane.f32.xlu0 %v708
  %v710 = vpop.xlane.xlu0 %709
  %v711 = vsel %vm359, %v353, 0.0
  %712 = vadd.xlane.f32.xlu0 %v711
  %v713 = vpop.xlane.xlu0 %712
  %v714 = vsel %vm359, %v354, 0.0
  %715 = vadd.xlane.f32.xlu0 %v714
  %v716 = vpop.xlane.xlu0 %715
  %v717 = vsel %vm359, %v355, 0.0
  %718 = vadd.xlane.f32.xlu0 %v717
  %v719 = vpop.xlane.xlu0 %718
  %v720 = vsel %vm359, %v356, 0.0
  %721 = vadd.xlane.f32.xlu0 %v720
  %v722 = vpop.xlane.xlu0 %721
  %v723 = vsel %vm359, %v357, 0.0
  %724 = vadd.xlane.f32.xlu0 %v723
  %v725 = vpop.xlane.xlu0 %724
  %v726 = vsel %vm359, %v358, 0.0
  %727 = vadd.xlane.f32.xlu0 %v726
  %v728 = vpop.xlane.xlu0 %727
  %v729 = vld [vmem:[%s0] ss:$8 sm:$0xf]
  %v730 = vlaneseq
  %v731 = vshrl.u32 %v730, 7
  %v732 = vadd.s32 %v731, 8
  %v733 = vadd.s32 %v731, 16
  %v734 = vadd.s32 %v731, 24
  %v735 = vadd.s32 %v731, 32
  %v736 = vadd.s32 %v731, 40
  %v737 = vadd.s32 %v731, 48
  %v738 = vadd.s32 %v731, 56
  %v739 = vadd.s32 %v731, 64
  %v740 = vadd.s32 %v731, 72
  %v741 = vadd.s32 %v731, 80
  %v742 = vadd.s32 %v731, 88
  %v743 = vadd.s32 %v731, 96
  %v744 = vadd.s32 %v731, 104
  %v745 = vadd.s32 %v731, 112
  %v746 = vadd.s32 %v731, 120
  %v747 = vadd.s32 %v731, 128
  %v748 = vadd.s32 %v731, 136
  %v749 = vadd.s32 %v731, 144
  %v750 = vadd.s32 %v731, 152
  %v751 = vadd.s32 %v731, 160
  %v752 = vadd.s32 %v731, 168
  %v753 = vadd.s32 %v731, 176
  %v754 = vadd.s32 %v731, 184
  %v755 = vadd.s32 %v731, 192
  %v756 = vadd.s32 %v731, 200
  %v757 = vadd.s32 %v731, 208
  %v758 = vadd.s32 %v731, 216
  %v759 = vadd.s32 %v731, 224
  %v760 = vadd.s32 %v731, 232
  %v761 = vadd.s32 %v731, 240
  %v762 = vadd.s32 %v731, 248
  %v763 = vadd.s32 %v731, 256
  %v764 = vadd.s32 %v731, 264
  %v765 = vadd.s32 %v731, 272
  %v766 = vadd.s32 %v731, 280
  %v767 = vadd.s32 %v731, 288
  %v768 = vadd.s32 %v731, 296
  %v769 = vadd.s32 %v731, 304
  %v770 = vadd.s32 %v731, 312
  %v771 = vadd.s32 %v731, 320
  %v772 = vadd.s32 %v731, 328
  %v773 = vadd.s32 %v731, 336
  %v774 = vadd.s32 %v731, 344
  %v775 = vadd.s32 %v731, 352
  %v776 = vadd.s32 %v731, 360
  %v777 = vadd.s32 %v731, 368
  %v778 = vadd.s32 %v731, 376
  %v779 = vadd.s32 %v731, 384
  %v780 = vadd.s32 %v731, 392
  %v781 = vadd.s32 %v731, 400
  %v782 = vadd.s32 %v731, 408
  %v783 = vadd.s32 %v731, 416
  %v784 = vadd.s32 %v731, 424
  %v785 = vadd.s32 %v731, 432
  %v786 = vadd.s32 %v731, 440
  %v787 = vadd.s32 %v731, 448
  %v788 = vadd.s32 %v731, 456
  %v789 = vadd.s32 %v731, 464
  %v790 = vadd.s32 %v731, 472
  %v791 = vadd.s32 %v731, 480
  %v792 = vadd.s32 %v731, 488
  %v793 = vadd.s32 %v731, 496
  %v794 = vadd.s32 %v731, 504
  %v795 = vadd.s32 %v731, 512
  %v796 = vadd.s32 %v731, 520
  %v797 = vadd.s32 %v731, 528
  %v798 = vadd.s32 %v731, 536
  %v799 = vadd.s32 %v731, 544
  %v800 = vadd.s32 %v731, 552
  %v801 = vadd.s32 %v731, 560
  %v802 = vadd.s32 %v731, 568
  %v803 = vadd.s32 %v731, 576
  %v804 = vadd.s32 %v731, 584
  %v805 = vadd.s32 %v731, 592
  %v806 = vadd.s32 %v731, 600
  %v807 = vadd.s32 %v731, 608
  %v808 = vadd.s32 %v731, 616
  %v809 = vadd.s32 %v731, 624
  %v810 = vadd.s32 %v731, 632
  %v811 = vadd.s32 %v731, 640
  %v812 = vadd.s32 %v731, 648
  %v813 = vadd.s32 %v731, 656
  %v814 = vadd.s32 %v731, 664
  %v815 = vadd.s32 %v731, 672
  %v816 = vadd.s32 %v731, 680
  %v817 = vadd.s32 %v731, 688
  %v818 = vadd.s32 %v731, 696
  %v819 = vadd.s32 %v731, 704
  %v820 = vadd.s32 %v731, 712
  %v821 = vadd.s32 %v731, 720
  %v822 = vadd.s32 %v731, 728
  %v823 = vadd.s32 %v731, 736
  %v824 = vadd.s32 %v731, 744
  %v825 = vadd.s32 %v731, 752
  %v826 = vadd.s32 %v731, 760
  %v827 = vadd.s32 %v731, 768
  %v828 = vadd.s32 %v731, 776
  %v829 = vadd.s32 %v731, 784
  %v830 = vadd.s32 %v731, 792
  %v831 = vadd.s32 %v731, 800
  %v832 = vadd.s32 %v731, 808
  %v833 = vadd.s32 %v731, 816
  %v834 = vadd.s32 %v731, 824
  %v835 = vadd.s32 %v731, 832
  %v836 = vadd.s32 %v731, 840
  %v837 = vadd.s32 %v731, 848
  %v838 = vadd.s32 %v731, 856
  %v839 = vadd.s32 %v731, 864
  %v840 = vadd.s32 %v731, 872
  %v841 = vadd.s32 %v731, 880
  %v842 = vadd.s32 %v731, 888
  %v843 = vadd.s32 %v731, 896
  %v844 = vadd.s32 %v731, 904
  %v845 = vadd.s32 %v731, 912
  %v846 = vadd.s32 %v731, 920
  %v847 = vadd.s32 %v731, 928
  %v848 = vadd.s32 %v731, 936
  %v849 = vadd.s32 %v731, 944
  %v850 = vadd.s32 %v731, 952
  %v851 = vadd.s32 %v731, 960
  %v852 = vadd.s32 %v731, 968
  %v853 = vadd.s32 %v731, 976
  %v854 = vperm.slane %v729, 0
  %v855 = vperm.slane %v729, 1
  %v856 = vperm.slane %v729, 2
  %v857 = vperm.slane %v729, 3
  %vm858 = vcmp.eq.s32.totalorder %v731, %v854
  %vm859 = vcmp.eq.s32.totalorder %v731, %v855
  %vm860 = vcmp.eq.s32.totalorder %v731, %v856
  %vm861 = vcmp.eq.s32.totalorder %v731, %v857
  %vm862 = vcmp.eq.s32.totalorder %v732, %v854
  %vm863 = vcmp.eq.s32.totalorder %v732, %v855
  %vm864 = vcmp.eq.s32.totalorder %v732, %v856
  %vm865 = vcmp.eq.s32.totalorder %v732, %v857
  %vm866 = vcmp.eq.s32.totalorder %v733, %v854
  %vm867 = vcmp.eq.s32.totalorder %v733, %v855
  %vm868 = vcmp.eq.s32.totalorder %v733, %v856
  %vm869 = vcmp.eq.s32.totalorder %v733, %v857
  %vm870 = vcmp.eq.s32.totalorder %v734, %v854
  %vm871 = vcmp.eq.s32.totalorder %v734, %v855
  %vm872 = vcmp.eq.s32.totalorder %v734, %v856
  %vm873 = vcmp.eq.s32.totalorder %v734, %v857
  %vm874 = vcmp.eq.s32.totalorder %v735, %v854
  %vm875 = vcmp.eq.s32.totalorder %v735, %v855
  %vm876 = vcmp.eq.s32.totalorder %v735, %v856
  %vm877 = vcmp.eq.s32.totalorder %v735, %v857
  %vm878 = vcmp.eq.s32.totalorder %v736, %v854
  %vm879 = vcmp.eq.s32.totalorder %v736, %v855
  %vm880 = vcmp.eq.s32.totalorder %v736, %v856
  %vm881 = vcmp.eq.s32.totalorder %v736, %v857
  %vm882 = vcmp.eq.s32.totalorder %v737, %v854
  %vm883 = vcmp.eq.s32.totalorder %v737, %v855
  %vm884 = vcmp.eq.s32.totalorder %v737, %v856
  %vm885 = vcmp.eq.s32.totalorder %v737, %v857
  %vm886 = vcmp.eq.s32.totalorder %v738, %v854
  %vm887 = vcmp.eq.s32.totalorder %v738, %v855
  %vm888 = vcmp.eq.s32.totalorder %v738, %v856
  %vm889 = vcmp.eq.s32.totalorder %v738, %v857
  %vm890 = vcmp.eq.s32.totalorder %v739, %v854
  %vm891 = vcmp.eq.s32.totalorder %v739, %v855
  %vm892 = vcmp.eq.s32.totalorder %v739, %v856
  %vm893 = vcmp.eq.s32.totalorder %v739, %v857
  %vm894 = vcmp.eq.s32.totalorder %v740, %v854
  %vm895 = vcmp.eq.s32.totalorder %v740, %v855
  %vm896 = vcmp.eq.s32.totalorder %v740, %v856
  %vm897 = vcmp.eq.s32.totalorder %v740, %v857
  %vm898 = vcmp.eq.s32.totalorder %v741, %v854
  %vm899 = vcmp.eq.s32.totalorder %v741, %v855
  %vm900 = vcmp.eq.s32.totalorder %v741, %v856
  %vm901 = vcmp.eq.s32.totalorder %v741, %v857
  %vm902 = vcmp.eq.s32.totalorder %v742, %v854
  %vm903 = vcmp.eq.s32.totalorder %v742, %v855
  %vm904 = vcmp.eq.s32.totalorder %v742, %v856
  %vm905 = vcmp.eq.s32.totalorder %v742, %v857
  %vm906 = vcmp.eq.s32.totalorder %v743, %v854
  %vm907 = vcmp.eq.s32.totalorder %v743, %v855
  %vm908 = vcmp.eq.s32.totalorder %v743, %v856
  %vm909 = vcmp.eq.s32.totalorder %v743, %v857
  %vm910 = vcmp.eq.s32.totalorder %v744, %v854
  %vm911 = vcmp.eq.s32.totalorder %v744, %v855
  %vm912 = vcmp.eq.s32.totalorder %v744, %v856
  %vm913 = vcmp.eq.s32.totalorder %v744, %v857
  %vm914 = vcmp.eq.s32.totalorder %v745, %v854
  %vm915 = vcmp.eq.s32.totalorder %v745, %v855
  %vm916 = vcmp.eq.s32.totalorder %v745, %v856
  %vm917 = vcmp.eq.s32.totalorder %v745, %v857
  %vm918 = vcmp.eq.s32.totalorder %v746, %v854
  %vm919 = vcmp.eq.s32.totalorder %v746, %v855
  %vm920 = vcmp.eq.s32.totalorder %v746, %v856
  %vm921 = vcmp.eq.s32.totalorder %v746, %v857
  %vm922 = vcmp.eq.s32.totalorder %v747, %v854
  %vm923 = vcmp.eq.s32.totalorder %v747, %v855
  %vm924 = vcmp.eq.s32.totalorder %v747, %v856
  %vm925 = vcmp.eq.s32.totalorder %v747, %v857
  %vm926 = vcmp.eq.s32.totalorder %v748, %v854
  %vm927 = vcmp.eq.s32.totalorder %v748, %v855
  %vm928 = vcmp.eq.s32.totalorder %v748, %v856
  %vm929 = vcmp.eq.s32.totalorder %v748, %v857
  %vm930 = vcmp.eq.s32.totalorder %v749, %v854
  %vm931 = vcmp.eq.s32.totalorder %v749, %v855
  %vm932 = vcmp.eq.s32.totalorder %v749, %v856
  %vm933 = vcmp.eq.s32.totalorder %v749, %v857
  %vm934 = vcmp.eq.s32.totalorder %v750, %v854
  %vm935 = vcmp.eq.s32.totalorder %v750, %v855
  %vm936 = vcmp.eq.s32.totalorder %v750, %v856
  %vm937 = vcmp.eq.s32.totalorder %v750, %v857
  %vm938 = vcmp.eq.s32.totalorder %v751, %v854
  %vm939 = vcmp.eq.s32.totalorder %v751, %v855
  %vm940 = vcmp.eq.s32.totalorder %v751, %v856
  %vm941 = vcmp.eq.s32.totalorder %v751, %v857
  %vm942 = vcmp.eq.s32.totalorder %v752, %v854
  %vm943 = vcmp.eq.s32.totalorder %v752, %v855
  %vm944 = vcmp.eq.s32.totalorder %v752, %v856
  %vm945 = vcmp.eq.s32.totalorder %v752, %v857
  %vm946 = vcmp.eq.s32.totalorder %v753, %v854
  %vm947 = vcmp.eq.s32.totalorder %v753, %v855
  %vm948 = vcmp.eq.s32.totalorder %v753, %v856
  %vm949 = vcmp.eq.s32.totalorder %v753, %v857
  %vm950 = vcmp.eq.s32.totalorder %v754, %v854
  %vm951 = vcmp.eq.s32.totalorder %v754, %v855
  %vm952 = vcmp.eq.s32.totalorder %v754, %v856
  %vm953 = vcmp.eq.s32.totalorder %v754, %v857
  %vm954 = vcmp.eq.s32.totalorder %v755, %v854
  %vm955 = vcmp.eq.s32.totalorder %v755, %v855
  %vm956 = vcmp.eq.s32.totalorder %v755, %v856
  %vm957 = vcmp.eq.s32.totalorder %v755, %v857
  %vm958 = vcmp.eq.s32.totalorder %v756, %v854
  %vm959 = vcmp.eq.s32.totalorder %v756, %v855
  %vm960 = vcmp.eq.s32.totalorder %v756, %v856
  %vm961 = vcmp.eq.s32.totalorder %v756, %v857
  %vm962 = vcmp.eq.s32.totalorder %v757, %v854
  %vm963 = vcmp.eq.s32.totalorder %v757, %v855
  %vm964 = vcmp.eq.s32.totalorder %v757, %v856
  %vm965 = vcmp.eq.s32.totalorder %v757, %v857
  %vm966 = vcmp.eq.s32.totalorder %v758, %v854
  %vm967 = vcmp.eq.s32.totalorder %v758, %v855
  %vm968 = vcmp.eq.s32.totalorder %v758, %v856
  %vm969 = vcmp.eq.s32.totalorder %v758, %v857
  %vm970 = vcmp.eq.s32.totalorder %v759, %v854
  %vm971 = vcmp.eq.s32.totalorder %v759, %v855
  %vm972 = vcmp.eq.s32.totalorder %v759, %v856
  %vm973 = vcmp.eq.s32.totalorder %v759, %v857
  %vm974 = vcmp.eq.s32.totalorder %v760, %v854
  %vm975 = vcmp.eq.s32.totalorder %v760, %v855
  %vm976 = vcmp.eq.s32.totalorder %v760, %v856
  %vm977 = vcmp.eq.s32.totalorder %v760, %v857
  %vm978 = vcmp.eq.s32.totalorder %v761, %v854
  %vm979 = vcmp.eq.s32.totalorder %v761, %v855
  %vm980 = vcmp.eq.s32.totalorder %v761, %v856
  %vm981 = vcmp.eq.s32.totalorder %v761, %v857
  %vm982 = vcmp.eq.s32.totalorder %v762, %v854
  %vm983 = vcmp.eq.s32.totalorder %v762, %v855
  %vm984 = vcmp.eq.s32.totalorder %v762, %v856
  %vm985 = vcmp.eq.s32.totalorder %v762, %v857
  %vm986 = vcmp.eq.s32.totalorder %v763, %v854
  %vm987 = vcmp.eq.s32.totalorder %v763, %v855
  %vm988 = vcmp.eq.s32.totalorder %v763, %v856
  %vm989 = vcmp.eq.s32.totalorder %v763, %v857
  %vm990 = vcmp.eq.s32.totalorder %v764, %v854
  %vm991 = vcmp.eq.s32.totalorder %v764, %v855
  %vm992 = vcmp.eq.s32.totalorder %v764, %v856
  %vm993 = vcmp.eq.s32.totalorder %v764, %v857
  %vm994 = vcmp.eq.s32.totalorder %v765, %v854
  %vm995 = vcmp.eq.s32.totalorder %v765, %v855
  %vm996 = vcmp.eq.s32.totalorder %v765, %v856
  %vm997 = vcmp.eq.s32.totalorder %v765, %v857
  %vm998 = vcmp.eq.s32.totalorder %v766, %v854
  %vm999 = vcmp.eq.s32.totalorder %v766, %v855
  %vm1000 = vcmp.eq.s32.totalorder %v766, %v856
  %vm1001 = vcmp.eq.s32.totalorder %v766, %v857
  %vm1002 = vcmp.eq.s32.totalorder %v767, %v854
  %vm1003 = vcmp.eq.s32.totalorder %v767, %v855
  %vm1004 = vcmp.eq.s32.totalorder %v767, %v856
  %vm1005 = vcmp.eq.s32.totalorder %v767, %v857
  %vm1006 = vcmp.eq.s32.totalorder %v768, %v854
  %vm1007 = vcmp.eq.s32.totalorder %v768, %v855
  %vm1008 = vcmp.eq.s32.totalorder %v768, %v856
  %vm1009 = vcmp.eq.s32.totalorder %v768, %v857
  %vm1010 = vcmp.eq.s32.totalorder %v769, %v854
  %vm1011 = vcmp.eq.s32.totalorder %v769, %v855
  %vm1012 = vcmp.eq.s32.totalorder %v769, %v856
  %vm1013 = vcmp.eq.s32.totalorder %v769, %v857
  %vm1014 = vcmp.eq.s32.totalorder %v770, %v854
  %vm1015 = vcmp.eq.s32.totalorder %v770, %v855
  %vm1016 = vcmp.eq.s32.totalorder %v770, %v856
  %vm1017 = vcmp.eq.s32.totalorder %v770, %v857
  %vm1018 = vcmp.eq.s32.totalorder %v771, %v854
  %vm1019 = vcmp.eq.s32.totalorder %v771, %v855
  %vm1020 = vcmp.eq.s32.totalorder %v771, %v856
  %vm1021 = vcmp.eq.s32.totalorder %v771, %v857
  %vm1022 = vcmp.eq.s32.totalorder %v772, %v854
  %vm1023 = vcmp.eq.s32.totalorder %v772, %v855
  %vm1024 = vcmp.eq.s32.totalorder %v772, %v856
  %vm1025 = vcmp.eq.s32.totalorder %v772, %v857
  %vm1026 = vcmp.eq.s32.totalorder %v773, %v854
  %vm1027 = vcmp.eq.s32.totalorder %v773, %v855
  %vm1028 = vcmp.eq.s32.totalorder %v773, %v856
  %vm1029 = vcmp.eq.s32.totalorder %v773, %v857
  %vm1030 = vcmp.eq.s32.totalorder %v774, %v854
  %vm1031 = vcmp.eq.s32.totalorder %v774, %v855
  %vm1032 = vcmp.eq.s32.totalorder %v774, %v856
  %vm1033 = vcmp.eq.s32.totalorder %v774, %v857
  %vm1034 = vcmp.eq.s32.totalorder %v775, %v854
  %vm1035 = vcmp.eq.s32.totalorder %v775, %v855
  %vm1036 = vcmp.eq.s32.totalorder %v775, %v856
  %vm1037 = vcmp.eq.s32.totalorder %v775, %v857
  %vm1038 = vcmp.eq.s32.totalorder %v776, %v854
  %vm1039 = vcmp.eq.s32.totalorder %v776, %v855
  %vm1040 = vcmp.eq.s32.totalorder %v776, %v856
  %vm1041 = vcmp.eq.s32.totalorder %v776, %v857
  %vm1042 = vcmp.eq.s32.totalorder %v777, %v854
  %vm1043 = vcmp.eq.s32.totalorder %v777, %v855
  %vm1044 = vcmp.eq.s32.totalorder %v777, %v856
  %vm1045 = vcmp.eq.s32.totalorder %v777, %v857
  %vm1046 = vcmp.eq.s32.totalorder %v778, %v854
  %vm1047 = vcmp.eq.s32.totalorder %v778, %v855
  %vm1048 = vcmp.eq.s32.totalorder %v778, %v856
  %vm1049 = vcmp.eq.s32.totalorder %v778, %v857
  %vm1050 = vcmp.eq.s32.totalorder %v779, %v854
  %vm1051 = vcmp.eq.s32.totalorder %v779, %v855
  %vm1052 = vcmp.eq.s32.totalorder %v779, %v856
  %vm1053 = vcmp.eq.s32.totalorder %v779, %v857
  %vm1054 = vcmp.eq.s32.totalorder %v780, %v854
  %vm1055 = vcmp.eq.s32.totalorder %v780, %v855
  %vm1056 = vcmp.eq.s32.totalorder %v780, %v856
  %vm1057 = vcmp.eq.s32.totalorder %v780, %v857
  %vm1058 = vcmp.eq.s32.totalorder %v781, %v854
  %vm1059 = vcmp.eq.s32.totalorder %v781, %v855
  %vm1060 = vcmp.eq.s32.totalorder %v781, %v856
  %vm1061 = vcmp.eq.s32.totalorder %v781, %v857
  %vm1062 = vcmp.eq.s32.totalorder %v782, %v854
  %vm1063 = vcmp.eq.s32.totalorder %v782, %v855
  %vm1064 = vcmp.eq.s32.totalorder %v782, %v856
  %vm1065 = vcmp.eq.s32.totalorder %v782, %v857
  %vm1066 = vcmp.eq.s32.totalorder %v783, %v854
  %vm1067 = vcmp.eq.s32.totalorder %v783, %v855
  %vm1068 = vcmp.eq.s32.totalorder %v783, %v856
  %vm1069 = vcmp.eq.s32.totalorder %v783, %v857
  %vm1070 = vcmp.eq.s32.totalorder %v784, %v854
  %vm1071 = vcmp.eq.s32.totalorder %v784, %v855
  %vm1072 = vcmp.eq.s32.totalorder %v784, %v856
  %vm1073 = vcmp.eq.s32.totalorder %v784, %v857
  %vm1074 = vcmp.eq.s32.totalorder %v785, %v854
  %vm1075 = vcmp.eq.s32.totalorder %v785, %v855
  %vm1076 = vcmp.eq.s32.totalorder %v785, %v856
  %vm1077 = vcmp.eq.s32.totalorder %v785, %v857
  %vm1078 = vcmp.eq.s32.totalorder %v786, %v854
  %vm1079 = vcmp.eq.s32.totalorder %v786, %v855
  %vm1080 = vcmp.eq.s32.totalorder %v786, %v856
  %vm1081 = vcmp.eq.s32.totalorder %v786, %v857
  %vm1082 = vcmp.eq.s32.totalorder %v787, %v854
  %vm1083 = vcmp.eq.s32.totalorder %v787, %v855
  %vm1084 = vcmp.eq.s32.totalorder %v787, %v856
  %vm1085 = vcmp.eq.s32.totalorder %v787, %v857
  %vm1086 = vcmp.eq.s32.totalorder %v788, %v854
  %vm1087 = vcmp.eq.s32.totalorder %v788, %v855
  %vm1088 = vcmp.eq.s32.totalorder %v788, %v856
  %vm1089 = vcmp.eq.s32.totalorder %v788, %v857
  %vm1090 = vcmp.eq.s32.totalorder %v789, %v854
  %vm1091 = vcmp.eq.s32.totalorder %v789, %v855
  %vm1092 = vcmp.eq.s32.totalorder %v789, %v856
  %vm1093 = vcmp.eq.s32.totalorder %v789, %v857
  %vm1094 = vcmp.eq.s32.totalorder %v790, %v854
  %vm1095 = vcmp.eq.s32.totalorder %v790, %v855
  %vm1096 = vcmp.eq.s32.totalorder %v790, %v856
  %vm1097 = vcmp.eq.s32.totalorder %v790, %v857
  %vm1098 = vcmp.eq.s32.totalorder %v791, %v854
  %vm1099 = vcmp.eq.s32.totalorder %v791, %v855
  %vm1100 = vcmp.eq.s32.totalorder %v791, %v856
  %vm1101 = vcmp.eq.s32.totalorder %v791, %v857
  %vm1102 = vcmp.eq.s32.totalorder %v792, %v854
  %vm1103 = vcmp.eq.s32.totalorder %v792, %v855
  %vm1104 = vcmp.eq.s32.totalorder %v792, %v856
  %vm1105 = vcmp.eq.s32.totalorder %v792, %v857
  %vm1106 = vcmp.eq.s32.totalorder %v793, %v854
  %vm1107 = vcmp.eq.s32.totalorder %v793, %v855
  %vm1108 = vcmp.eq.s32.totalorder %v793, %v856
  %vm1109 = vcmp.eq.s32.totalorder %v793, %v857
  %vm1110 = vcmp.eq.s32.totalorder %v794, %v854
  %vm1111 = vcmp.eq.s32.totalorder %v794, %v855
  %vm1112 = vcmp.eq.s32.totalorder %v794, %v856
  %vm1113 = vcmp.eq.s32.totalorder %v794, %v857
  %vm1114 = vcmp.eq.s32.totalorder %v795, %v854
  %vm1115 = vcmp.eq.s32.totalorder %v795, %v855
  %vm1116 = vcmp.eq.s32.totalorder %v795, %v856
  %vm1117 = vcmp.eq.s32.totalorder %v795, %v857
  %vm1118 = vcmp.eq.s32.totalorder %v796, %v854
  %vm1119 = vcmp.eq.s32.totalorder %v796, %v855
  %vm1120 = vcmp.eq.s32.totalorder %v796, %v856
  %vm1121 = vcmp.eq.s32.totalorder %v796, %v857
  %vm1122 = vcmp.eq.s32.totalorder %v797, %v854
  %vm1123 = vcmp.eq.s32.totalorder %v797, %v855
  %vm1124 = vcmp.eq.s32.totalorder %v797, %v856
  %vm1125 = vcmp.eq.s32.totalorder %v797, %v857
  %vm1126 = vcmp.eq.s32.totalorder %v798, %v854
  %vm1127 = vcmp.eq.s32.totalorder %v798, %v855
  %vm1128 = vcmp.eq.s32.totalorder %v798, %v856
  %vm1129 = vcmp.eq.s32.totalorder %v798, %v857
  %vm1130 = vcmp.eq.s32.totalorder %v799, %v854
  %vm1131 = vcmp.eq.s32.totalorder %v799, %v855
  %vm1132 = vcmp.eq.s32.totalorder %v799, %v856
  %vm1133 = vcmp.eq.s32.totalorder %v799, %v857
  %vm1134 = vcmp.eq.s32.totalorder %v800, %v854
  %vm1135 = vcmp.eq.s32.totalorder %v800, %v855
  %vm1136 = vcmp.eq.s32.totalorder %v800, %v856
  %vm1137 = vcmp.eq.s32.totalorder %v800, %v857
  %vm1138 = vcmp.eq.s32.totalorder %v801, %v854
  %vm1139 = vcmp.eq.s32.totalorder %v801, %v855
  %vm1140 = vcmp.eq.s32.totalorder %v801, %v856
  %vm1141 = vcmp.eq.s32.totalorder %v801, %v857
  %vm1142 = vcmp.eq.s32.totalorder %v802, %v854
  %vm1143 = vcmp.eq.s32.totalorder %v802, %v855
  %vm1144 = vcmp.eq.s32.totalorder %v802, %v856
  %vm1145 = vcmp.eq.s32.totalorder %v802, %v857
  %vm1146 = vcmp.eq.s32.totalorder %v803, %v854
  %vm1147 = vcmp.eq.s32.totalorder %v803, %v855
  %vm1148 = vcmp.eq.s32.totalorder %v803, %v856
  %vm1149 = vcmp.eq.s32.totalorder %v803, %v857
  %vm1150 = vcmp.eq.s32.totalorder %v804, %v854
  %vm1151 = vcmp.eq.s32.totalorder %v804, %v855
  %vm1152 = vcmp.eq.s32.totalorder %v804, %v856
  %vm1153 = vcmp.eq.s32.totalorder %v804, %v857
  %vm1154 = vcmp.eq.s32.totalorder %v805, %v854
  %vm1155 = vcmp.eq.s32.totalorder %v805, %v855
  %vm1156 = vcmp.eq.s32.totalorder %v805, %v856
  %vm1157 = vcmp.eq.s32.totalorder %v805, %v857
  %vm1158 = vcmp.eq.s32.totalorder %v806, %v854
  %vm1159 = vcmp.eq.s32.totalorder %v806, %v855
  %vm1160 = vcmp.eq.s32.totalorder %v806, %v856
  %vm1161 = vcmp.eq.s32.totalorder %v806, %v857
  %vm1162 = vcmp.eq.s32.totalorder %v807, %v854
  %vm1163 = vcmp.eq.s32.totalorder %v807, %v855
  %vm1164 = vcmp.eq.s32.totalorder %v807, %v856
  %vm1165 = vcmp.eq.s32.totalorder %v807, %v857
  %vm1166 = vcmp.eq.s32.totalorder %v808, %v854
  %vm1167 = vcmp.eq.s32.totalorder %v808, %v855
  %vm1168 = vcmp.eq.s32.totalorder %v808, %v856
  %vm1169 = vcmp.eq.s32.totalorder %v808, %v857
  %vm1170 = vcmp.eq.s32.totalorder %v809, %v854
  %vm1171 = vcmp.eq.s32.totalorder %v809, %v855
  %vm1172 = vcmp.eq.s32.totalorder %v809, %v856
  %vm1173 = vcmp.eq.s32.totalorder %v809, %v857
  %vm1174 = vcmp.eq.s32.totalorder %v810, %v854
  %vm1175 = vcmp.eq.s32.totalorder %v810, %v855
  %vm1176 = vcmp.eq.s32.totalorder %v810, %v856
  %vm1177 = vcmp.eq.s32.totalorder %v810, %v857
  %vm1178 = vcmp.eq.s32.totalorder %v811, %v854
  %vm1179 = vcmp.eq.s32.totalorder %v811, %v855
  %vm1180 = vcmp.eq.s32.totalorder %v811, %v856
  %vm1181 = vcmp.eq.s32.totalorder %v811, %v857
  %vm1182 = vcmp.eq.s32.totalorder %v812, %v854
  %vm1183 = vcmp.eq.s32.totalorder %v812, %v855
  %vm1184 = vcmp.eq.s32.totalorder %v812, %v856
  %vm1185 = vcmp.eq.s32.totalorder %v812, %v857
  %vm1186 = vcmp.eq.s32.totalorder %v813, %v854
  %vm1187 = vcmp.eq.s32.totalorder %v813, %v855
  %vm1188 = vcmp.eq.s32.totalorder %v813, %v856
  %vm1189 = vcmp.eq.s32.totalorder %v813, %v857
  %vm1190 = vcmp.eq.s32.totalorder %v814, %v854
  %vm1191 = vcmp.eq.s32.totalorder %v814, %v855
  %vm1192 = vcmp.eq.s32.totalorder %v814, %v856
  %vm1193 = vcmp.eq.s32.totalorder %v814, %v857
  %vm1194 = vcmp.eq.s32.totalorder %v815, %v854
  %vm1195 = vcmp.eq.s32.totalorder %v815, %v855
  %vm1196 = vcmp.eq.s32.totalorder %v815, %v856
  %vm1197 = vcmp.eq.s32.totalorder %v815, %v857
  %vm1198 = vcmp.eq.s32.totalorder %v816, %v854
  %vm1199 = vcmp.eq.s32.totalorder %v816, %v855
  %vm1200 = vcmp.eq.s32.totalorder %v816, %v856
  %vm1201 = vcmp.eq.s32.totalorder %v816, %v857
  %vm1202 = vcmp.eq.s32.totalorder %v817, %v854
  %vm1203 = vcmp.eq.s32.totalorder %v817, %v855
  %vm1204 = vcmp.eq.s32.totalorder %v817, %v856
  %vm1205 = vcmp.eq.s32.totalorder %v817, %v857
  %vm1206 = vcmp.eq.s32.totalorder %v818, %v854
  %vm1207 = vcmp.eq.s32.totalorder %v818, %v855
  %vm1208 = vcmp.eq.s32.totalorder %v818, %v856
  %vm1209 = vcmp.eq.s32.totalorder %v818, %v857
  %vm1210 = vcmp.eq.s32.totalorder %v819, %v854
  %vm1211 = vcmp.eq.s32.totalorder %v819, %v855
  %vm1212 = vcmp.eq.s32.totalorder %v819, %v856
  %vm1213 = vcmp.eq.s32.totalorder %v819, %v857
  %vm1214 = vcmp.eq.s32.totalorder %v820, %v854
  %vm1215 = vcmp.eq.s32.totalorder %v820, %v855
  %vm1216 = vcmp.eq.s32.totalorder %v820, %v856
  %vm1217 = vcmp.eq.s32.totalorder %v820, %v857
  %vm1218 = vcmp.eq.s32.totalorder %v821, %v854
  %vm1219 = vcmp.eq.s32.totalorder %v821, %v855
  %vm1220 = vcmp.eq.s32.totalorder %v821, %v856
  %vm1221 = vcmp.eq.s32.totalorder %v821, %v857
  %vm1222 = vcmp.eq.s32.totalorder %v822, %v854
  %vm1223 = vcmp.eq.s32.totalorder %v822, %v855
  %vm1224 = vcmp.eq.s32.totalorder %v822, %v856
  %vm1225 = vcmp.eq.s32.totalorder %v822, %v857
  %vm1226 = vcmp.eq.s32.totalorder %v823, %v854
  %vm1227 = vcmp.eq.s32.totalorder %v823, %v855
  %vm1228 = vcmp.eq.s32.totalorder %v823, %v856
  %vm1229 = vcmp.eq.s32.totalorder %v823, %v857
  %vm1230 = vcmp.eq.s32.totalorder %v824, %v854
  %vm1231 = vcmp.eq.s32.totalorder %v824, %v855
  %vm1232 = vcmp.eq.s32.totalorder %v824, %v856
  %vm1233 = vcmp.eq.s32.totalorder %v824, %v857
  %vm1234 = vcmp.eq.s32.totalorder %v825, %v854
  %vm1235 = vcmp.eq.s32.totalorder %v825, %v855
  %vm1236 = vcmp.eq.s32.totalorder %v825, %v856
  %vm1237 = vcmp.eq.s32.totalorder %v825, %v857
  %vm1238 = vcmp.eq.s32.totalorder %v826, %v854
  %vm1239 = vcmp.eq.s32.totalorder %v826, %v855
  %vm1240 = vcmp.eq.s32.totalorder %v826, %v856
  %vm1241 = vcmp.eq.s32.totalorder %v826, %v857
  %vm1242 = vcmp.eq.s32.totalorder %v827, %v854
  %vm1243 = vcmp.eq.s32.totalorder %v827, %v855
  %vm1244 = vcmp.eq.s32.totalorder %v827, %v856
  %vm1245 = vcmp.eq.s32.totalorder %v827, %v857
  %vm1246 = vcmp.eq.s32.totalorder %v828, %v854
  %vm1247 = vcmp.eq.s32.totalorder %v828, %v855
  %vm1248 = vcmp.eq.s32.totalorder %v828, %v856
  %vm1249 = vcmp.eq.s32.totalorder %v828, %v857
  %vm1250 = vcmp.eq.s32.totalorder %v829, %v854
  %vm1251 = vcmp.eq.s32.totalorder %v829, %v855
  %vm1252 = vcmp.eq.s32.totalorder %v829, %v856
  %vm1253 = vcmp.eq.s32.totalorder %v829, %v857
  %vm1254 = vcmp.eq.s32.totalorder %v830, %v854
  %vm1255 = vcmp.eq.s32.totalorder %v830, %v855
  %vm1256 = vcmp.eq.s32.totalorder %v830, %v856
  %vm1257 = vcmp.eq.s32.totalorder %v830, %v857
  %vm1258 = vcmp.eq.s32.totalorder %v831, %v854
  %vm1259 = vcmp.eq.s32.totalorder %v831, %v855
  %vm1260 = vcmp.eq.s32.totalorder %v831, %v856
  %vm1261 = vcmp.eq.s32.totalorder %v831, %v857
  %vm1262 = vcmp.eq.s32.totalorder %v832, %v854
  %vm1263 = vcmp.eq.s32.totalorder %v832, %v855
  %vm1264 = vcmp.eq.s32.totalorder %v832, %v856
  %vm1265 = vcmp.eq.s32.totalorder %v832, %v857
  %vm1266 = vcmp.eq.s32.totalorder %v833, %v854
  %vm1267 = vcmp.eq.s32.totalorder %v833, %v855
  %vm1268 = vcmp.eq.s32.totalorder %v833, %v856
  %vm1269 = vcmp.eq.s32.totalorder %v833, %v857
  %vm1270 = vcmp.eq.s32.totalorder %v834, %v854
  %vm1271 = vcmp.eq.s32.totalorder %v834, %v855
  %vm1272 = vcmp.eq.s32.totalorder %v834, %v856
  %vm1273 = vcmp.eq.s32.totalorder %v834, %v857
  %vm1274 = vcmp.eq.s32.totalorder %v835, %v854
  %vm1275 = vcmp.eq.s32.totalorder %v835, %v855
  %vm1276 = vcmp.eq.s32.totalorder %v835, %v856
  %vm1277 = vcmp.eq.s32.totalorder %v835, %v857
  %vm1278 = vcmp.eq.s32.totalorder %v836, %v854
  %vm1279 = vcmp.eq.s32.totalorder %v836, %v855
  %vm1280 = vcmp.eq.s32.totalorder %v836, %v856
  %vm1281 = vcmp.eq.s32.totalorder %v836, %v857
  %vm1282 = vcmp.eq.s32.totalorder %v837, %v854
  %vm1283 = vcmp.eq.s32.totalorder %v837, %v855
  %vm1284 = vcmp.eq.s32.totalorder %v837, %v856
  %vm1285 = vcmp.eq.s32.totalorder %v837, %v857
  %vm1286 = vcmp.eq.s32.totalorder %v838, %v854
  %vm1287 = vcmp.eq.s32.totalorder %v838, %v855
  %vm1288 = vcmp.eq.s32.totalorder %v838, %v856
  %vm1289 = vcmp.eq.s32.totalorder %v838, %v857
  %vm1290 = vcmp.eq.s32.totalorder %v839, %v854
  %vm1291 = vcmp.eq.s32.totalorder %v839, %v855
  %vm1292 = vcmp.eq.s32.totalorder %v839, %v856
  %vm1293 = vcmp.eq.s32.totalorder %v839, %v857
  %vm1294 = vcmp.eq.s32.totalorder %v840, %v854
  %vm1295 = vcmp.eq.s32.totalorder %v840, %v855
  %vm1296 = vcmp.eq.s32.totalorder %v840, %v856
  %vm1297 = vcmp.eq.s32.totalorder %v840, %v857
  %vm1298 = vcmp.eq.s32.totalorder %v841, %v854
  %vm1299 = vcmp.eq.s32.totalorder %v841, %v855
  %vm1300 = vcmp.eq.s32.totalorder %v841, %v856
  %vm1301 = vcmp.eq.s32.totalorder %v841, %v857
  %vm1302 = vcmp.eq.s32.totalorder %v842, %v854
  %vm1303 = vcmp.eq.s32.totalorder %v842, %v855
  %vm1304 = vcmp.eq.s32.totalorder %v842, %v856
  %vm1305 = vcmp.eq.s32.totalorder %v842, %v857
  %vm1306 = vcmp.eq.s32.totalorder %v843, %v854
  %vm1307 = vcmp.eq.s32.totalorder %v843, %v855
  %vm1308 = vcmp.eq.s32.totalorder %v843, %v856
  %vm1309 = vcmp.eq.s32.totalorder %v843, %v857
  %vm1310 = vcmp.eq.s32.totalorder %v844, %v854
  %vm1311 = vcmp.eq.s32.totalorder %v844, %v855
  %vm1312 = vcmp.eq.s32.totalorder %v844, %v856
  %vm1313 = vcmp.eq.s32.totalorder %v844, %v857
  %vm1314 = vcmp.eq.s32.totalorder %v845, %v854
  %vm1315 = vcmp.eq.s32.totalorder %v845, %v855
  %vm1316 = vcmp.eq.s32.totalorder %v845, %v856
  %vm1317 = vcmp.eq.s32.totalorder %v845, %v857
  %vm1318 = vcmp.eq.s32.totalorder %v846, %v854
  %vm1319 = vcmp.eq.s32.totalorder %v846, %v855
  %vm1320 = vcmp.eq.s32.totalorder %v846, %v856
  %vm1321 = vcmp.eq.s32.totalorder %v846, %v857
  %vm1322 = vcmp.eq.s32.totalorder %v847, %v854
  %vm1323 = vcmp.eq.s32.totalorder %v847, %v855
  %vm1324 = vcmp.eq.s32.totalorder %v847, %v856
  %vm1325 = vcmp.eq.s32.totalorder %v847, %v857
  %vm1326 = vcmp.eq.s32.totalorder %v848, %v854
  %vm1327 = vcmp.eq.s32.totalorder %v848, %v855
  %vm1328 = vcmp.eq.s32.totalorder %v848, %v856
  %vm1329 = vcmp.eq.s32.totalorder %v848, %v857
  %vm1330 = vcmp.eq.s32.totalorder %v849, %v854
  %vm1331 = vcmp.eq.s32.totalorder %v849, %v855
  %vm1332 = vcmp.eq.s32.totalorder %v849, %v856
  %vm1333 = vcmp.eq.s32.totalorder %v849, %v857
  %vm1334 = vcmp.eq.s32.totalorder %v850, %v854
  %vm1335 = vcmp.eq.s32.totalorder %v850, %v855
  %vm1336 = vcmp.eq.s32.totalorder %v850, %v856
  %vm1337 = vcmp.eq.s32.totalorder %v850, %v857
  %vm1338 = vcmp.eq.s32.totalorder %v851, %v854
  %vm1339 = vcmp.eq.s32.totalorder %v851, %v855
  %vm1340 = vcmp.eq.s32.totalorder %v851, %v856
  %vm1341 = vcmp.eq.s32.totalorder %v851, %v857
  %vm1342 = vcmp.eq.s32.totalorder %v852, %v854
  %vm1343 = vcmp.eq.s32.totalorder %v852, %v855
  %vm1344 = vcmp.eq.s32.totalorder %v852, %v856
  %vm1345 = vcmp.eq.s32.totalorder %v852, %v857
  %vm1346 = vcmp.eq.s32.totalorder %v853, %v854
  %vm1347 = vcmp.eq.s32.totalorder %v853, %v855
  %vm1348 = vcmp.eq.s32.totalorder %v853, %v856
  %vm1349 = vcmp.eq.s32.totalorder %v853, %v857
  %v1350 = vsel %vm858, %v362, 0.0
  %v1351 = vsel %vm859, %v362, 0.0
  %v1352 = vsel %vm860, %v362, 0.0
  %v1353 = vsel %vm861, %v362, 0.0
  %v1354 = vsel %vm862, %v365, 0.0
  %v1355 = vsel %vm863, %v365, 0.0
  %v1356 = vsel %vm864, %v365, 0.0
  %v1357 = vsel %vm865, %v365, 0.0
  %v1358 = vsel %vm866, %v368, 0.0
  %v1359 = vsel %vm867, %v368, 0.0
  %v1360 = vsel %vm868, %v368, 0.0
  %v1361 = vsel %vm869, %v368, 0.0
  %v1362 = vsel %vm870, %v371, 0.0
  %v1363 = vsel %vm871, %v371, 0.0
  %v1364 = vsel %vm872, %v371, 0.0
  %v1365 = vsel %vm873, %v371, 0.0
  %v1366 = vsel %vm874, %v374, 0.0
  %v1367 = vsel %vm875, %v374, 0.0
  %v1368 = vsel %vm876, %v374, 0.0
  %v1369 = vsel %vm877, %v374, 0.0
  %v1370 = vsel %vm878, %v377, 0.0
  %v1371 = vsel %vm879, %v377, 0.0
  %v1372 = vsel %vm880, %v377, 0.0
  %v1373 = vsel %vm881, %v377, 0.0
  %v1374 = vsel %vm882, %v380, 0.0
  %v1375 = vsel %vm883, %v380, 0.0
  %v1376 = vsel %vm884, %v380, 0.0
  %v1377 = vsel %vm885, %v380, 0.0
  %v1378 = vsel %vm886, %v383, 0.0
  %v1379 = vsel %vm887, %v383, 0.0
  %v1380 = vsel %vm888, %v383, 0.0
  %v1381 = vsel %vm889, %v383, 0.0
  %v1382 = vsel %vm890, %v386, 0.0
  %v1383 = vsel %vm891, %v386, 0.0
  %v1384 = vsel %vm892, %v386, 0.0
  %v1385 = vsel %vm893, %v386, 0.0
  %v1386 = vsel %vm894, %v389, 0.0
  %v1387 = vsel %vm895, %v389, 0.0
  %v1388 = vsel %vm896, %v389, 0.0
  %v1389 = vsel %vm897, %v389, 0.0
  %v1390 = vsel %vm898, %v392, 0.0
  %v1391 = vsel %vm899, %v392, 0.0
  %v1392 = vsel %vm900, %v392, 0.0
  %v1393 = vsel %vm901, %v392, 0.0
  %v1394 = vsel %vm902, %v395, 0.0
  %v1395 = vsel %vm903, %v395, 0.0
  %v1396 = vsel %vm904, %v395, 0.0
  %v1397 = vsel %vm905, %v395, 0.0
  %v1398 = vsel %vm906, %v398, 0.0
  %v1399 = vsel %vm907, %v398, 0.0
  %v1400 = vsel %vm908, %v398, 0.0
  %v1401 = vsel %vm909, %v398, 0.0
  %v1402 = vsel %vm910, %v401, 0.0
  %v1403 = vsel %vm911, %v401, 0.0
  %v1404 = vsel %vm912, %v401, 0.0
  %v1405 = vsel %vm913, %v401, 0.0
  %v1406 = vsel %vm914, %v404, 0.0
  %v1407 = vsel %vm915, %v404, 0.0
  %v1408 = vsel %vm916, %v404, 0.0
  %v1409 = vsel %vm917, %v404, 0.0
  %v1410 = vsel %vm918, %v407, 0.0
  %v1411 = vsel %vm919, %v407, 0.0
  %v1412 = vsel %vm920, %v407, 0.0
  %v1413 = vsel %vm921, %v407, 0.0
  %v1414 = vsel %vm922, %v410, 0.0
  %v1415 = vsel %vm923, %v410, 0.0
  %v1416 = vsel %vm924, %v410, 0.0
  %v1417 = vsel %vm925, %v410, 0.0
  %v1418 = vsel %vm926, %v413, 0.0
  %v1419 = vsel %vm927, %v413, 0.0
  %v1420 = vsel %vm928, %v413, 0.0
  %v1421 = vsel %vm929, %v413, 0.0
  %v1422 = vsel %vm930, %v416, 0.0
  %v1423 = vsel %vm931, %v416, 0.0
  %v1424 = vsel %vm932, %v416, 0.0
  %v1425 = vsel %vm933, %v416, 0.0
  %v1426 = vsel %vm934, %v419, 0.0
  %v1427 = vsel %vm935, %v419, 0.0
  %v1428 = vsel %vm936, %v419, 0.0
  %v1429 = vsel %vm937, %v419, 0.0
  %v1430 = vsel %vm938, %v422, 0.0
  %v1431 = vsel %vm939, %v422, 0.0
  %v1432 = vsel %vm940, %v422, 0.0
  %v1433 = vsel %vm941, %v422, 0.0
  %v1434 = vsel %vm942, %v425, 0.0
  %v1435 = vsel %vm943, %v425, 0.0
  %v1436 = vsel %vm944, %v425, 0.0
  %v1437 = vsel %vm945, %v425, 0.0
  %v1438 = vsel %vm946, %v428, 0.0
  %v1439 = vsel %vm947, %v428, 0.0
  %v1440 = vsel %vm948, %v428, 0.0
  %v1441 = vsel %vm949, %v428, 0.0
  %v1442 = vsel %vm950, %v431, 0.0
  %v1443 = vsel %vm951, %v431, 0.0
  %v1444 = vsel %vm952, %v431, 0.0
  %v1445 = vsel %vm953, %v431, 0.0
  %v1446 = vsel %vm954, %v434, 0.0
  %v1447 = vsel %vm955, %v434, 0.0
  %v1448 = vsel %vm956, %v434, 0.0
  %v1449 = vsel %vm957, %v434, 0.0
  %v1450 = vsel %vm958, %v437, 0.0
  %v1451 = vsel %vm959, %v437, 0.0
  %v1452 = vsel %vm960, %v437, 0.0
  %v1453 = vsel %vm961, %v437, 0.0
  %v1454 = vsel %vm962, %v440, 0.0
  %v1455 = vsel %vm963, %v440, 0.0
  %v1456 = vsel %vm964, %v440, 0.0
  %v1457 = vsel %vm965, %v440, 0.0
  %v1458 = vsel %vm966, %v443, 0.0
  %v1459 = vsel %vm967, %v443, 0.0
  %v1460 = vsel %vm968, %v443, 0.0
  %v1461 = vsel %vm969, %v443, 0.0
  %v1462 = vsel %vm970, %v446, 0.0
  %v1463 = vsel %vm971, %v446, 0.0
  %v1464 = vsel %vm972, %v446, 0.0
  %v1465 = vsel %vm973, %v446, 0.0
  %v1466 = vsel %vm974, %v449, 0.0
  %v1467 = vsel %vm975, %v449, 0.0
  %v1468 = vsel %vm976, %v449, 0.0
  %v1469 = vsel %vm977, %v449, 0.0
  %v1470 = vsel %vm978, %v452, 0.0
  %v1471 = vsel %vm979, %v452, 0.0
  %v1472 = vsel %vm980, %v452, 0.0
  %v1473 = vsel %vm981, %v452, 0.0
  %v1474 = vsel %vm982, %v455, 0.0
  %v1475 = vsel %vm983, %v455, 0.0
  %v1476 = vsel %vm984, %v455, 0.0
  %v1477 = vsel %vm985, %v455, 0.0
  %v1478 = vsel %vm986, %v458, 0.0
  %v1479 = vsel %vm987, %v458, 0.0
  %v1480 = vsel %vm988, %v458, 0.0
  %v1481 = vsel %vm989, %v458, 0.0
  %v1482 = vsel %vm990, %v461, 0.0
  %v1483 = vsel %vm991, %v461, 0.0
  %v1484 = vsel %vm992, %v461, 0.0
  %v1485 = vsel %vm993, %v461, 0.0
  %v1486 = vsel %vm994, %v464, 0.0
  %v1487 = vsel %vm995, %v464, 0.0
  %v1488 = vsel %vm996, %v464, 0.0
  %v1489 = vsel %vm997, %v464, 0.0
  %v1490 = vsel %vm998, %v467, 0.0
  %v1491 = vsel %vm999, %v467, 0.0
  %v1492 = vsel %vm1000, %v467, 0.0
  %v1493 = vsel %vm1001, %v467, 0.0
  %v1494 = vsel %vm1002, %v470, 0.0
  %v1495 = vsel %vm1003, %v470, 0.0
  %v1496 = vsel %vm1004, %v470, 0.0
  %v1497 = vsel %vm1005, %v470, 0.0
  %v1498 = vsel %vm1006, %v473, 0.0
  %v1499 = vsel %vm1007, %v473, 0.0
  %v1500 = vsel %vm1008, %v473, 0.0
  %v1501 = vsel %vm1009, %v473, 0.0
  %v1502 = vsel %vm1010, %v476, 0.0
  %v1503 = vsel %vm1011, %v476, 0.0
  %v1504 = vsel %vm1012, %v476, 0.0
  %v1505 = vsel %vm1013, %v476, 0.0
  %v1506 = vsel %vm1014, %v479, 0.0
  %v1507 = vsel %vm1015, %v479, 0.0
  %v1508 = vsel %vm1016, %v479, 0.0
  %v1509 = vsel %vm1017, %v479, 0.0
  %v1510 = vsel %vm1018, %v482, 0.0
  %v1511 = vsel %vm1019, %v482, 0.0
  %v1512 = vsel %vm1020, %v482, 0.0
  %v1513 = vsel %vm1021, %v482, 0.0
  %v1514 = vsel %vm1022, %v485, 0.0
  %v1515 = vsel %vm1023, %v485, 0.0
  %v1516 = vsel %vm1024, %v485, 0.0
  %v1517 = vsel %vm1025, %v485, 0.0
  %v1518 = vsel %vm1026, %v488, 0.0
  %v1519 = vsel %vm1027, %v488, 0.0
  %v1520 = vsel %vm1028, %v488, 0.0
  %v1521 = vsel %vm1029, %v488, 0.0
  %v1522 = vsel %vm1030, %v491, 0.0
  %v1523 = vsel %vm1031, %v491, 0.0
  %v1524 = vsel %vm1032, %v491, 0.0
  %v1525 = vsel %vm1033, %v491, 0.0
  %v1526 = vsel %vm1034, %v494, 0.0
  %v1527 = vsel %vm1035, %v494, 0.0
  %v1528 = vsel %vm1036, %v494, 0.0
  %v1529 = vsel %vm1037, %v494, 0.0
  %v1530 = vsel %vm1038, %v497, 0.0
  %v1531 = vsel %vm1039, %v497, 0.0
  %v1532 = vsel %vm1040, %v497, 0.0
  %v1533 = vsel %vm1041, %v497, 0.0
  %v1534 = vsel %vm1042, %v500, 0.0
  %v1535 = vsel %vm1043, %v500, 0.0
  %v1536 = vsel %vm1044, %v500, 0.0
  %v1537 = vsel %vm1045, %v500, 0.0
  %v1538 = vsel %vm1046, %v503, 0.0
  %v1539 = vsel %vm1047, %v503, 0.0
  %v1540 = vsel %vm1048, %v503, 0.0
  %v1541 = vsel %vm1049, %v503, 0.0
  %v1542 = vsel %vm1050, %v506, 0.0
  %v1543 = vsel %vm1051, %v506, 0.0
  %v1544 = vsel %vm1052, %v506, 0.0
  %v1545 = vsel %vm1053, %v506, 0.0
  %v1546 = vsel %vm1054, %v509, 0.0
  %v1547 = vsel %vm1055, %v509, 0.0
  %v1548 = vsel %vm1056, %v509, 0.0
  %v1549 = vsel %vm1057, %v509, 0.0
  %v1550 = vsel %vm1058, %v512, 0.0
  %v1551 = vsel %vm1059, %v512, 0.0
  %v1552 = vsel %vm1060, %v512, 0.0
  %v1553 = vsel %vm1061, %v512, 0.0
  %v1554 = vsel %vm1062, %v515, 0.0
  %v1555 = vsel %vm1063, %v515, 0.0
  %v1556 = vsel %vm1064, %v515, 0.0
  %v1557 = vsel %vm1065, %v515, 0.0
  %v1558 = vsel %vm1066, %v518, 0.0
  %v1559 = vsel %vm1067, %v518, 0.0
  %v1560 = vsel %vm1068, %v518, 0.0
  %v1561 = vsel %vm1069, %v518, 0.0
  %v1562 = vsel %vm1070, %v521, 0.0
  %v1563 = vsel %vm1071, %v521, 0.0
  %v1564 = vsel %vm1072, %v521, 0.0
  %v1565 = vsel %vm1073, %v521, 0.0
  %v1566 = vsel %vm1074, %v524, 0.0
  %v1567 = vsel %vm1075, %v524, 0.0
  %v1568 = vsel %vm1076, %v524, 0.0
  %v1569 = vsel %vm1077, %v524, 0.0
  %v1570 = vsel %vm1078, %v527, 0.0
  %v1571 = vsel %vm1079, %v527, 0.0
  %v1572 = vsel %vm1080, %v527, 0.0
  %v1573 = vsel %vm1081, %v527, 0.0
  %v1574 = vsel %vm1082, %v530, 0.0
  %v1575 = vsel %vm1083, %v530, 0.0
  %v1576 = vsel %vm1084, %v530, 0.0
  %v1577 = vsel %vm1085, %v530, 0.0
  %v1578 = vsel %vm1086, %v533, 0.0
  %v1579 = vsel %vm1087, %v533, 0.0
  %v1580 = vsel %vm1088, %v533, 0.0
  %v1581 = vsel %vm1089, %v533, 0.0
  %v1582 = vsel %vm1090, %v536, 0.0
  %v1583 = vsel %vm1091, %v536, 0.0
  %v1584 = vsel %vm1092, %v536, 0.0
  %v1585 = vsel %vm1093, %v536, 0.0
  %v1586 = vsel %vm1094, %v539, 0.0
  %v1587 = vsel %vm1095, %v539, 0.0
  %v1588 = vsel %vm1096, %v539, 0.0
  %v1589 = vsel %vm1097, %v539, 0.0
  %v1590 = vsel %vm1098, %v542, 0.0
  %v1591 = vsel %vm1099, %v542, 0.0
  %v1592 = vsel %vm1100, %v542, 0.0
  %v1593 = vsel %vm1101, %v542, 0.0
  %v1594 = vsel %vm1102, %v545, 0.0
  %v1595 = vsel %vm1103, %v545, 0.0
  %v1596 = vsel %vm1104, %v545, 0.0
  %v1597 = vsel %vm1105, %v545, 0.0
  %v1598 = vsel %vm1106, %v548, 0.0
  %v1599 = vsel %vm1107, %v548, 0.0
  %v1600 = vsel %vm1108, %v548, 0.0
  %v1601 = vsel %vm1109, %v548, 0.0
  %v1602 = vsel %vm1110, %v551, 0.0
  %v1603 = vsel %vm1111, %v551, 0.0
  %v1604 = vsel %vm1112, %v551, 0.0
  %v1605 = vsel %vm1113, %v551, 0.0
  %v1606 = vsel %vm1114, %v554, 0.0
  %v1607 = vsel %vm1115, %v554, 0.0
  %v1608 = vsel %vm1116, %v554, 0.0
  %v1609 = vsel %vm1117, %v554, 0.0
  %v1610 = vsel %vm1118, %v557, 0.0
  %v1611 = vsel %vm1119, %v557, 0.0
  %v1612 = vsel %vm1120, %v557, 0.0
  %v1613 = vsel %vm1121, %v557, 0.0
  %v1614 = vsel %vm1122, %v560, 0.0
  %v1615 = vsel %vm1123, %v560, 0.0
  %v1616 = vsel %vm1124, %v560, 0.0
  %v1617 = vsel %vm1125, %v560, 0.0
  %v1618 = vsel %vm1126, %v563, 0.0
  %v1619 = vsel %vm1127, %v563, 0.0
  %v1620 = vsel %vm1128, %v563, 0.0
  %v1621 = vsel %vm1129, %v563, 0.0
  %v1622 = vsel %vm1130, %v566, 0.0
  %v1623 = vsel %vm1131, %v566, 0.0
  %v1624 = vsel %vm1132, %v566, 0.0
  %v1625 = vsel %vm1133, %v566, 0.0
  %v1626 = vsel %vm1134, %v569, 0.0
  %v1627 = vsel %vm1135, %v569, 0.0
  %v1628 = vsel %vm1136, %v569, 0.0
  %v1629 = vsel %vm1137, %v569, 0.0
  %v1630 = vsel %vm1138, %v572, 0.0
  %v1631 = vsel %vm1139, %v572, 0.0
  %v1632 = vsel %vm1140, %v572, 0.0
  %v1633 = vsel %vm1141, %v572, 0.0
  %v1634 = vsel %vm1142, %v575, 0.0
  %v1635 = vsel %vm1143, %v575, 0.0
  %v1636 = vsel %vm1144, %v575, 0.0
  %v1637 = vsel %vm1145, %v575, 0.0
  %v1638 = vsel %vm1146, %v578, 0.0
  %v1639 = vsel %vm1147, %v578, 0.0
  %v1640 = vsel %vm1148, %v578, 0.0
  %v1641 = vsel %vm1149, %v578, 0.0
  %v1642 = vsel %vm1150, %v581, 0.0
  %v1643 = vsel %vm1151, %v581, 0.0
  %v1644 = vsel %vm1152, %v581, 0.0
  %v1645 = vsel %vm1153, %v581, 0.0
  %v1646 = vsel %vm1154, %v584, 0.0
  %v1647 = vsel %vm1155, %v584, 0.0
  %v1648 = vsel %vm1156, %v584, 0.0
  %v1649 = vsel %vm1157, %v584, 0.0
  %v1650 = vsel %vm1158, %v587, 0.0
  %v1651 = vsel %vm1159, %v587, 0.0
  %v1652 = vsel %vm1160, %v587, 0.0
  %v1653 = vsel %vm1161, %v587, 0.0
  %v1654 = vsel %vm1162, %v590, 0.0
  %v1655 = vsel %vm1163, %v590, 0.0
  %v1656 = vsel %vm1164, %v590, 0.0
  %v1657 = vsel %vm1165, %v590, 0.0
  %v1658 = vsel %vm1166, %v593, 0.0
  %v1659 = vsel %vm1167, %v593, 0.0
  %v1660 = vsel %vm1168, %v593, 0.0
  %v1661 = vsel %vm1169, %v593, 0.0
  %v1662 = vsel %vm1170, %v596, 0.0
  %v1663 = vsel %vm1171, %v596, 0.0
  %v1664 = vsel %vm1172, %v596, 0.0
  %v1665 = vsel %vm1173, %v596, 0.0
  %v1666 = vsel %vm1174, %v599, 0.0
  %v1667 = vsel %vm1175, %v599, 0.0
  %v1668 = vsel %vm1176, %v599, 0.0
  %v1669 = vsel %vm1177, %v599, 0.0
  %v1670 = vsel %vm1178, %v602, 0.0
  %v1671 = vsel %vm1179, %v602, 0.0
  %v1672 = vsel %vm1180, %v602, 0.0
  %v1673 = vsel %vm1181, %v602, 0.0
  %v1674 = vsel %vm1182, %v605, 0.0
  %v1675 = vsel %vm1183, %v605, 0.0
  %v1676 = vsel %vm1184, %v605, 0.0
  %v1677 = vsel %vm1185, %v605, 0.0
  %v1678 = vsel %vm1186, %v608, 0.0
  %v1679 = vsel %vm1187, %v608, 0.0
  %v1680 = vsel %vm1188, %v608, 0.0
  %v1681 = vsel %vm1189, %v608, 0.0
  %v1682 = vsel %vm1190, %v611, 0.0
  %v1683 = vsel %vm1191, %v611, 0.0
  %v1684 = vsel %vm1192, %v611, 0.0
  %v1685 = vsel %vm1193, %v611, 0.0
  %v1686 = vsel %vm1194, %v614, 0.0
  %v1687 = vsel %vm1195, %v614, 0.0
  %v1688 = vsel %vm1196, %v614, 0.0
  %v1689 = vsel %vm1197, %v614, 0.0
  %v1690 = vsel %vm1198, %v617, 0.0
  %v1691 = vsel %vm1199, %v617, 0.0
  %v1692 = vsel %vm1200, %v617, 0.0
  %v1693 = vsel %vm1201, %v617, 0.0
  %v1694 = vsel %vm1202, %v620, 0.0
  %v1695 = vsel %vm1203, %v620, 0.0
  %v1696 = vsel %vm1204, %v620, 0.0
  %v1697 = vsel %vm1205, %v620, 0.0
  %v1698 = vsel %vm1206, %v623, 0.0
  %v1699 = vsel %vm1207, %v623, 0.0
  %v1700 = vsel %vm1208, %v623, 0.0
  %v1701 = vsel %vm1209, %v623, 0.0
  %v1702 = vsel %vm1210, %v626, 0.0
  %v1703 = vsel %vm1211, %v626, 0.0
  %v1704 = vsel %vm1212, %v626, 0.0
  %v1705 = vsel %vm1213, %v626, 0.0
  %v1706 = vsel %vm1214, %v629, 0.0
  %v1707 = vsel %vm1215, %v629, 0.0
  %v1708 = vsel %vm1216, %v629, 0.0
  %v1709 = vsel %vm1217, %v629, 0.0
  %v1710 = vsel %vm1218, %v632, 0.0
  %v1711 = vsel %vm1219, %v632, 0.0
  %v1712 = vsel %vm1220, %v632, 0.0
  %v1713 = vsel %vm1221, %v632, 0.0
  %v1714 = vsel %vm1222, %v635, 0.0
  %v1715 = vsel %vm1223, %v635, 0.0
  %v1716 = vsel %vm1224, %v635, 0.0
  %v1717 = vsel %vm1225, %v635, 0.0
  %v1718 = vsel %vm1226, %v638, 0.0
  %v1719 = vsel %vm1227, %v638, 0.0
  %v1720 = vsel %vm1228, %v638, 0.0
  %v1721 = vsel %vm1229, %v638, 0.0
  %v1722 = vsel %vm1230, %v641, 0.0
  %v1723 = vsel %vm1231, %v641, 0.0
  %v1724 = vsel %vm1232, %v641, 0.0
  %v1725 = vsel %vm1233, %v641, 0.0
  %v1726 = vsel %vm1234, %v644, 0.0
  %v1727 = vsel %vm1235, %v644, 0.0
  %v1728 = vsel %vm1236, %v644, 0.0
  %v1729 = vsel %vm1237, %v644, 0.0
  %v1730 = vsel %vm1238, %v647, 0.0
  %v1731 = vsel %vm1239, %v647, 0.0
  %v1732 = vsel %vm1240, %v647, 0.0
  %v1733 = vsel %vm1241, %v647, 0.0
  %v1734 = vsel %vm1242, %v650, 0.0
  %v1735 = vsel %vm1243, %v650, 0.0
  %v1736 = vsel %vm1244, %v650, 0.0
  %v1737 = vsel %vm1245, %v650, 0.0
  %v1738 = vsel %vm1246, %v653, 0.0
  %v1739 = vsel %vm1247, %v653, 0.0
  %v1740 = vsel %vm1248, %v653, 0.0
  %v1741 = vsel %vm1249, %v653, 0.0
  %v1742 = vsel %vm1250, %v656, 0.0
  %v1743 = vsel %vm1251, %v656, 0.0
  %v1744 = vsel %vm1252, %v656, 0.0
  %v1745 = vsel %vm1253, %v656, 0.0
  %v1746 = vsel %vm1254, %v659, 0.0
  %v1747 = vsel %vm1255, %v659, 0.0
  %v1748 = vsel %vm1256, %v659, 0.0
  %v1749 = vsel %vm1257, %v659, 0.0
  %v1750 = vsel %vm1258, %v662, 0.0
  %v1751 = vsel %vm1259, %v662, 0.0
  %v1752 = vsel %vm1260, %v662, 0.0
  %v1753 = vsel %vm1261, %v662, 0.0
  %v1754 = vsel %vm1262, %v665, 0.0
  %v1755 = vsel %vm1263, %v665, 0.0
  %v1756 = vsel %vm1264, %v665, 0.0
  %v1757 = vsel %vm1265, %v665, 0.0
  %v1758 = vsel %vm1266, %v668, 0.0
  %v1759 = vsel %vm1267, %v668, 0.0
  %v1760 = vsel %vm1268, %v668, 0.0
  %v1761 = vsel %vm1269, %v668, 0.0
  %v1762 = vsel %vm1270, %v671, 0.0
  %v1763 = vsel %vm1271, %v671, 0.0
  %v1764 = vsel %vm1272, %v671, 0.0
  %v1765 = vsel %vm1273, %v671, 0.0
  %v1766 = vsel %vm1274, %v674, 0.0
  %v1767 = vsel %vm1275, %v674, 0.0
  %v1768 = vsel %vm1276, %v674, 0.0
  %v1769 = vsel %vm1277, %v674, 0.0
  %v1770 = vsel %vm1278, %v677, 0.0
  %v1771 = vsel %vm1279, %v677, 0.0
  %v1772 = vsel %vm1280, %v677, 0.0
  %v1773 = vsel %vm1281, %v677, 0.0
  %v1774 = vsel %vm1282, %v680, 0.0
  %v1775 = vsel %vm1283, %v680, 0.0
  %v1776 = vsel %vm1284, %v680, 0.0
  %v1777 = vsel %vm1285, %v680, 0.0
  %v1778 = vsel %vm1286, %v683, 0.0
  %v1779 = vsel %vm1287, %v683, 0.0
  %v1780 = vsel %vm1288, %v683, 0.0
  %v1781 = vsel %vm1289, %v683, 0.0
  %v1782 = vsel %vm1290, %v686, 0.0
  %v1783 = vsel %vm1291, %v686, 0.0
  %v1784 = vsel %vm1292, %v686, 0.0
  %v1785 = vsel %vm1293, %v686, 0.0
  %v1786 = vsel %vm1294, %v689, 0.0
  %v1787 = vsel %vm1295, %v689, 0.0
  %v1788 = vsel %vm1296, %v689, 0.0
  %v1789 = vsel %vm1297, %v689, 0.0
  %v1790 = vsel %vm1298, %v692, 0.0
  %v1791 = vsel %vm1299, %v692, 0.0
  %v1792 = vsel %vm1300, %v692, 0.0
  %v1793 = vsel %vm1301, %v692, 0.0
  %v1794 = vsel %vm1302, %v695, 0.0
  %v1795 = vsel %vm1303, %v695, 0.0
  %v1796 = vsel %vm1304, %v695, 0.0
  %v1797 = vsel %vm1305, %v695, 0.0
  %v1798 = vsel %vm1306, %v698, 0.0
  %v1799 = vsel %vm1307, %v698, 0.0
  %v1800 = vsel %vm1308, %v698, 0.0
  %v1801 = vsel %vm1309, %v698, 0.0
  %v1802 = vsel %vm1310, %v701, 0.0
  %v1803 = vsel %vm1311, %v701, 0.0
  %v1804 = vsel %vm1312, %v701, 0.0
  %v1805 = vsel %vm1313, %v701, 0.0
  %v1806 = vsel %vm1314, %v704, 0.0
  %v1807 = vsel %vm1315, %v704, 0.0
  %v1808 = vsel %vm1316, %v704, 0.0
  %v1809 = vsel %vm1317, %v704, 0.0
  %v1810 = vsel %vm1318, %v707, 0.0
  %v1811 = vsel %vm1319, %v707, 0.0
  %v1812 = vsel %vm1320, %v707, 0.0
  %v1813 = vsel %vm1321, %v707, 0.0
  %v1814 = vsel %vm1322, %v710, 0.0
  %v1815 = vsel %vm1323, %v710, 0.0
  %v1816 = vsel %vm1324, %v710, 0.0
  %v1817 = vsel %vm1325, %v710, 0.0
  %v1818 = vsel %vm1326, %v713, 0.0
  %v1819 = vsel %vm1327, %v713, 0.0
  %v1820 = vsel %vm1328, %v713, 0.0
  %v1821 = vsel %vm1329, %v713, 0.0
  %v1822 = vsel %vm1330, %v716, 0.0
  %v1823 = vsel %vm1331, %v716, 0.0
  %v1824 = vsel %vm1332, %v716, 0.0
  %v1825 = vsel %vm1333, %v716, 0.0
  %v1826 = vsel %vm1334, %v719, 0.0
  %v1827 = vsel %vm1335, %v719, 0.0
  %v1828 = vsel %vm1336, %v719, 0.0
  %v1829 = vsel %vm1337, %v719, 0.0
  %v1830 = vsel %vm1338, %v722, 0.0
  %v1831 = vsel %vm1339, %v722, 0.0
  %v1832 = vsel %vm1340, %v722, 0.0
  %v1833 = vsel %vm1341, %v722, 0.0
  %v1834 = vsel %vm1342, %v725, 0.0
  %v1835 = vsel %vm1343, %v725, 0.0
  %v1836 = vsel %vm1344, %v725, 0.0
  %v1837 = vsel %vm1345, %v725, 0.0
  %v1838 = vsel %vm1346, %v728, 0.0
  %v1839 = vsel %vm1347, %v728, 0.0
  %v1840 = vsel %vm1348, %v728, 0.0
  %v1841 = vsel %vm1349, %v728, 0.0
  %v1842 = vadd.f32 %v1350, %v1354
  %v1843 = vadd.f32 %v1842, %v1358
  %v1844 = vadd.f32 %v1843, %v1362
  %v1845 = vadd.f32 %v1844, %v1366
  %v1846 = vadd.f32 %v1845, %v1370
  %v1847 = vadd.f32 %v1846, %v1374
  %v1848 = vadd.f32 %v1847, %v1378
  %v1849 = vadd.f32 %v1848, %v1382
  %v1850 = vadd.f32 %v1849, %v1386
  %v1851 = vadd.f32 %v1850, %v1390
  %v1852 = vadd.f32 %v1851, %v1394
  %v1853 = vadd.f32 %v1852, %v1398
  %v1854 = vadd.f32 %v1853, %v1402
  %v1855 = vadd.f32 %v1854, %v1406
  %v1856 = vadd.f32 %v1855, %v1410
  %v1857 = vadd.f32 %v1856, %v1414
  %v1858 = vadd.f32 %v1857, %v1418
  %v1859 = vadd.f32 %v1858, %v1422
  %v1860 = vadd.f32 %v1859, %v1426
  %v1861 = vadd.f32 %v1860, %v1430
  %v1862 = vadd.f32 %v1861, %v1434
  %v1863 = vadd.f32 %v1862, %v1438
  %v1864 = vadd.f32 %v1863, %v1442
  %v1865 = vadd.f32 %v1864, %v1446
  %v1866 = vadd.f32 %v1865, %v1450
  %v1867 = vadd.f32 %v1866, %v1454
  %v1868 = vadd.f32 %v1867, %v1458
  %v1869 = vadd.f32 %v1868, %v1462
  %v1870 = vadd.f32 %v1869, %v1466
  %v1871 = vadd.f32 %v1870, %v1470
  %v1872 = vadd.f32 %v1871, %v1474
  %v1873 = vadd.f32 %v1872, %v1478
  %v1874 = vadd.f32 %v1873, %v1482
  %v1875 = vadd.f32 %v1874, %v1486
  %v1876 = vadd.f32 %v1875, %v1490
  %v1877 = vadd.f32 %v1876, %v1494
  %v1878 = vadd.f32 %v1877, %v1498
  %v1879 = vadd.f32 %v1878, %v1502
  %v1880 = vadd.f32 %v1879, %v1506
  %v1881 = vadd.f32 %v1880, %v1510
  %v1882 = vadd.f32 %v1881, %v1514
  %v1883 = vadd.f32 %v1882, %v1518
  %v1884 = vadd.f32 %v1883, %v1522
  %v1885 = vadd.f32 %v1884, %v1526
  %v1886 = vadd.f32 %v1885, %v1530
  %v1887 = vadd.f32 %v1886, %v1534
  %v1888 = vadd.f32 %v1887, %v1538
  %v1889 = vadd.f32 %v1888, %v1542
  %v1890 = vadd.f32 %v1889, %v1546
  %v1891 = vadd.f32 %v1890, %v1550
  %v1892 = vadd.f32 %v1891, %v1554
  %v1893 = vadd.f32 %v1892, %v1558
  %v1894 = vadd.f32 %v1893, %v1562
  %v1895 = vadd.f32 %v1894, %v1566
  %v1896 = vadd.f32 %v1895, %v1570
  %v1897 = vadd.f32 %v1896, %v1574
  %v1898 = vadd.f32 %v1897, %v1578
  %v1899 = vadd.f32 %v1898, %v1582
  %v1900 = vadd.f32 %v1899, %v1586
  %v1901 = vadd.f32 %v1900, %v1590
  %v1902 = vadd.f32 %v1901, %v1594
  %v1903 = vadd.f32 %v1902, %v1598
  %v1904 = vadd.f32 %v1903, %v1602
  %v1905 = vadd.f32 %v1904, %v1606
  %v1906 = vadd.f32 %v1905, %v1610
  %v1907 = vadd.f32 %v1906, %v1614
  %v1908 = vadd.f32 %v1907, %v1618
  %v1909 = vadd.f32 %v1908, %v1622
  %v1910 = vadd.f32 %v1909, %v1626
  %v1911 = vadd.f32 %v1910, %v1630
  %v1912 = vadd.f32 %v1911, %v1634
  %v1913 = vadd.f32 %v1912, %v1638
  %v1914 = vadd.f32 %v1913, %v1642
  %v1915 = vadd.f32 %v1914, %v1646
  %v1916 = vadd.f32 %v1915, %v1650
  %v1917 = vadd.f32 %v1916, %v1654
  %v1918 = vadd.f32 %v1917, %v1658
  %v1919 = vadd.f32 %v1918, %v1662
  %v1920 = vadd.f32 %v1919, %v1666
  %v1921 = vadd.f32 %v1920, %v1670
  %v1922 = vadd.f32 %v1921, %v1674
  %v1923 = vadd.f32 %v1922, %v1678
  %v1924 = vadd.f32 %v1923, %v1682
  %v1925 = vadd.f32 %v1924, %v1686
  %v1926 = vadd.f32 %v1925, %v1690
  %v1927 = vadd.f32 %v1926, %v1694
  %v1928 = vadd.f32 %v1927, %v1698
  %v1929 = vadd.f32 %v1928, %v1702
  %v1930 = vadd.f32 %v1929, %v1706
  %v1931 = vadd.f32 %v1930, %v1710
  %v1932 = vadd.f32 %v1931, %v1714
  %v1933 = vadd.f32 %v1932, %v1718
  %v1934 = vadd.f32 %v1933, %v1722
  %v1935 = vadd.f32 %v1934, %v1726
  %v1936 = vadd.f32 %v1935, %v1730
  %v1937 = vadd.f32 %v1936, %v1734
  %v1938 = vadd.f32 %v1937, %v1738
  %v1939 = vadd.f32 %v1938, %v1742
  %v1940 = vadd.f32 %v1939, %v1746
  %v1941 = vadd.f32 %v1940, %v1750
  %v1942 = vadd.f32 %v1941, %v1754
  %v1943 = vadd.f32 %v1942, %v1758
  %v1944 = vadd.f32 %v1943, %v1762
  %v1945 = vadd.f32 %v1944, %v1766
  %v1946 = vadd.f32 %v1945, %v1770
  %v1947 = vadd.f32 %v1946, %v1774
  %v1948 = vadd.f32 %v1947, %v1778
  %v1949 = vadd.f32 %v1948, %v1782
  %v1950 = vadd.f32 %v1949, %v1786
  %v1951 = vadd.f32 %v1950, %v1790
  %v1952 = vadd.f32 %v1951, %v1794
  %v1953 = vadd.f32 %v1952, %v1798
  %v1954 = vadd.f32 %v1953, %v1802
  %v1955 = vadd.f32 %v1954, %v1806
  %v1956 = vadd.f32 %v1955, %v1810
  %v1957 = vadd.f32 %v1956, %v1814
  %v1958 = vadd.f32 %v1957, %v1818
  %v1959 = vadd.f32 %v1958, %v1822
  %v1960 = vadd.f32 %v1959, %v1826
  %v1961 = vadd.f32 %v1960, %v1830
  %v1962 = vadd.f32 %v1961, %v1834
  %v1963 = vadd.f32 %v1962, %v1838
  %v1964 = vrot.slane %v1963, 4
  %v1965 = vadd.f32 %v1963, %v1964
  %v1966 = vrot.slane %v1965, 2
  %v1967 = vadd.f32 %v1965, %v1966
  %v1968 = vrot.slane %v1967, 1
  %v1969 = vadd.f32 %v1967, %v1968
  %v1970 = vadd.f32 %v1351, %v1355
  %v1971 = vadd.f32 %v1970, %v1359
  %v1972 = vadd.f32 %v1971, %v1363
  %v1973 = vadd.f32 %v1972, %v1367
  %v1974 = vadd.f32 %v1973, %v1371
  %v1975 = vadd.f32 %v1974, %v1375
  %v1976 = vadd.f32 %v1975, %v1379
  %v1977 = vadd.f32 %v1976, %v1383
  %v1978 = vadd.f32 %v1977, %v1387
  %v1979 = vadd.f32 %v1978, %v1391
  %v1980 = vadd.f32 %v1979, %v1395
  %v1981 = vadd.f32 %v1980, %v1399
  %v1982 = vadd.f32 %v1981, %v1403
  %v1983 = vadd.f32 %v1982, %v1407
  %v1984 = vadd.f32 %v1983, %v1411
  %v1985 = vadd.f32 %v1984, %v1415
  %v1986 = vadd.f32 %v1985, %v1419
  %v1987 = vadd.f32 %v1986, %v1423
  %v1988 = vadd.f32 %v1987, %v1427
  %v1989 = vadd.f32 %v1988, %v1431
  %v1990 = vadd.f32 %v1989, %v1435
  %v1991 = vadd.f32 %v1990, %v1439
  %v1992 = vadd.f32 %v1991, %v1443
  %v1993 = vadd.f32 %v1992, %v1447
  %v1994 = vadd.f32 %v1993, %v1451
  %v1995 = vadd.f32 %v1994, %v1455
  %v1996 = vadd.f32 %v1995, %v1459
  %v1997 = vadd.f32 %v1996, %v1463
  %v1998 = vadd.f32 %v1997, %v1467
  %v1999 = vadd.f32 %v1998, %v1471
  %v2000 = vadd.f32 %v1999, %v1475
  %v2001 = vadd.f32 %v2000, %v1479
  %v2002 = vadd.f32 %v2001, %v1483
  %v2003 = vadd.f32 %v2002, %v1487
  %v2004 = vadd.f32 %v2003, %v1491
  %v2005 = vadd.f32 %v2004, %v1495
  %v2006 = vadd.f32 %v2005, %v1499
  %v2007 = vadd.f32 %v2006, %v1503
  %v2008 = vadd.f32 %v2007, %v1507
  %v2009 = vadd.f32 %v2008, %v1511
  %v2010 = vadd.f32 %v2009, %v1515
  %v2011 = vadd.f32 %v2010, %v1519
  %v2012 = vadd.f32 %v2011, %v1523
  %v2013 = vadd.f32 %v2012, %v1527
  %v2014 = vadd.f32 %v2013, %v1531
  %v2015 = vadd.f32 %v2014, %v1535
  %v2016 = vadd.f32 %v2015, %v1539
  %v2017 = vadd.f32 %v2016, %v1543
  %v2018 = vadd.f32 %v2017, %v1547
  %v2019 = vadd.f32 %v2018, %v1551
  %v2020 = vadd.f32 %v2019, %v1555
  %v2021 = vadd.f32 %v2020, %v1559
  %v2022 = vadd.f32 %v2021, %v1563
  %v2023 = vadd.f32 %v2022, %v1567
  %v2024 = vadd.f32 %v2023, %v1571
  %v2025 = vadd.f32 %v2024, %v1575
  %v2026 = vadd.f32 %v2025, %v1579
  %v2027 = vadd.f32 %v2026, %v1583
  %v2028 = vadd.f32 %v2027, %v1587
  %v2029 = vadd.f32 %v2028, %v1591
  %v2030 = vadd.f32 %v2029, %v1595
  %v2031 = vadd.f32 %v2030, %v1599
  %v2032 = vadd.f32 %v2031, %v1603
  %v2033 = vadd.f32 %v2032, %v1607
  %v2034 = vadd.f32 %v2033, %v1611
  %v2035 = vadd.f32 %v2034, %v1615
  %v2036 = vadd.f32 %v2035, %v1619
  %v2037 = vadd.f32 %v2036, %v1623
  %v2038 = vadd.f32 %v2037, %v1627
  %v2039 = vadd.f32 %v2038, %v1631
  %v2040 = vadd.f32 %v2039, %v1635
  %v2041 = vadd.f32 %v2040, %v1639
  %v2042 = vadd.f32 %v2041, %v1643
  %v2043 = vadd.f32 %v2042, %v1647
  %v2044 = vadd.f32 %v2043, %v1651
  %v2045 = vadd.f32 %v2044, %v1655
  %v2046 = vadd.f32 %v2045, %v1659
  %v2047 = vadd.f32 %v2046, %v1663
  %v2048 = vadd.f32 %v2047, %v1667
  %v2049 = vadd.f32 %v2048, %v1671
  %v2050 = vadd.f32 %v2049, %v1675
  %v2051 = vadd.f32 %v2050, %v1679
  %v2052 = vadd.f32 %v2051, %v1683
  %v2053 = vadd.f32 %v2052, %v1687
  %v2054 = vadd.f32 %v2053, %v1691
  %v2055 = vadd.f32 %v2054, %v1695
  %v2056 = vadd.f32 %v2055, %v1699
  %v2057 = vadd.f32 %v2056, %v1703
  %v2058 = vadd.f32 %v2057, %v1707
  %v2059 = vadd.f32 %v2058, %v1711
  %v2060 = vadd.f32 %v2059, %v1715
  %v2061 = vadd.f32 %v2060, %v1719
  %v2062 = vadd.f32 %v2061, %v1723
  %v2063 = vadd.f32 %v2062, %v1727
  %v2064 = vadd.f32 %v2063, %v1731
  %v2065 = vadd.f32 %v2064, %v1735
  %v2066 = vadd.f32 %v2065, %v1739
  %v2067 = vadd.f32 %v2066, %v1743
  %v2068 = vadd.f32 %v2067, %v1747
  %v2069 = vadd.f32 %v2068, %v1751
  %v2070 = vadd.f32 %v2069, %v1755
  %v2071 = vadd.f32 %v2070, %v1759
  %v2072 = vadd.f32 %v2071, %v1763
  %v2073 = vadd.f32 %v2072, %v1767
  %v2074 = vadd.f32 %v2073, %v1771
  %v2075 = vadd.f32 %v2074, %v1775
  %v2076 = vadd.f32 %v2075, %v1779
  %v2077 = vadd.f32 %v2076, %v1783
  %v2078 = vadd.f32 %v2077, %v1787
  %v2079 = vadd.f32 %v2078, %v1791
  %v2080 = vadd.f32 %v2079, %v1795
  %v2081 = vadd.f32 %v2080, %v1799
  %v2082 = vadd.f32 %v2081, %v1803
  %v2083 = vadd.f32 %v2082, %v1807
  %v2084 = vadd.f32 %v2083, %v1811
  %v2085 = vadd.f32 %v2084, %v1815
  %v2086 = vadd.f32 %v2085, %v1819
  %v2087 = vadd.f32 %v2086, %v1823
  %v2088 = vadd.f32 %v2087, %v1827
  %v2089 = vadd.f32 %v2088, %v1831
  %v2090 = vadd.f32 %v2089, %v1835
  %v2091 = vadd.f32 %v2090, %v1839
  %v2092 = vrot.slane %v2091, 4
  %v2093 = vadd.f32 %v2091, %v2092
  %v2094 = vrot.slane %v2093, 2
  %v2095 = vadd.f32 %v2093, %v2094
  %v2096 = vrot.slane %v2095, 1
  %v2097 = vadd.f32 %v2095, %v2096
  %v2098 = vadd.f32 %v1352, %v1356
  %v2099 = vadd.f32 %v2098, %v1360
  %v2100 = vadd.f32 %v2099, %v1364
  %v2101 = vadd.f32 %v2100, %v1368
  %v2102 = vadd.f32 %v2101, %v1372
  %v2103 = vadd.f32 %v2102, %v1376
  %v2104 = vadd.f32 %v2103, %v1380
  %v2105 = vadd.f32 %v2104, %v1384
  %v2106 = vadd.f32 %v2105, %v1388
  %v2107 = vadd.f32 %v2106, %v1392
  %v2108 = vadd.f32 %v2107, %v1396
  %v2109 = vadd.f32 %v2108, %v1400
  %v2110 = vadd.f32 %v2109, %v1404
  %v2111 = vadd.f32 %v2110, %v1408
  %v2112 = vadd.f32 %v2111, %v1412
  %v2113 = vadd.f32 %v2112, %v1416
  %v2114 = vadd.f32 %v2113, %v1420
  %v2115 = vadd.f32 %v2114, %v1424
  %v2116 = vadd.f32 %v2115, %v1428
  %v2117 = vadd.f32 %v2116, %v1432
  %v2118 = vadd.f32 %v2117, %v1436
  %v2119 = vadd.f32 %v2118, %v1440
  %v2120 = vadd.f32 %v2119, %v1444
  %v2121 = vadd.f32 %v2120, %v1448
  %v2122 = vadd.f32 %v2121, %v1452
  %v2123 = vadd.f32 %v2122, %v1456
  %v2124 = vadd.f32 %v2123, %v1460
  %v2125 = vadd.f32 %v2124, %v1464
  %v2126 = vadd.f32 %v2125, %v1468
  %v2127 = vadd.f32 %v2126, %v1472
  %v2128 = vadd.f32 %v2127, %v1476
  %v2129 = vadd.f32 %v2128, %v1480
  %v2130 = vadd.f32 %v2129, %v1484
  %v2131 = vadd.f32 %v2130, %v1488
  %v2132 = vadd.f32 %v2131, %v1492
  %v2133 = vadd.f32 %v2132, %v1496
  %v2134 = vadd.f32 %v2133, %v1500
  %v2135 = vadd.f32 %v2134, %v1504
  %v2136 = vadd.f32 %v2135, %v1508
  %v2137 = vadd.f32 %v2136, %v1512
  %v2138 = vadd.f32 %v2137, %v1516
  %v2139 = vadd.f32 %v2138, %v1520
  %v2140 = vadd.f32 %v2139, %v1524
  %v2141 = vadd.f32 %v2140, %v1528
  %v2142 = vadd.f32 %v2141, %v1532
  %v2143 = vadd.f32 %v2142, %v1536
  %v2144 = vadd.f32 %v2143, %v1540
  %v2145 = vadd.f32 %v2144, %v1544
  %v2146 = vadd.f32 %v2145, %v1548
  %v2147 = vadd.f32 %v2146, %v1552
  %v2148 = vadd.f32 %v2147, %v1556
  %v2149 = vadd.f32 %v2148, %v1560
  %v2150 = vadd.f32 %v2149, %v1564
  %v2151 = vadd.f32 %v2150, %v1568
  %v2152 = vadd.f32 %v2151, %v1572
  %v2153 = vadd.f32 %v2152, %v1576
  %v2154 = vadd.f32 %v2153, %v1580
  %v2155 = vadd.f32 %v2154, %v1584
  %v2156 = vadd.f32 %v2155, %v1588
  %v2157 = vadd.f32 %v2156, %v1592
  %v2158 = vadd.f32 %v2157, %v1596
  %v2159 = vadd.f32 %v2158, %v1600
  %v2160 = vadd.f32 %v2159, %v1604
  %v2161 = vadd.f32 %v2160, %v1608
  %v2162 = vadd.f32 %v2161, %v1612
  %v2163 = vadd.f32 %v2162, %v1616
  %v2164 = vadd.f32 %v2163, %v1620
  %v2165 = vadd.f32 %v2164, %v1624
  %v2166 = vadd.f32 %v2165, %v1628
  %v2167 = vadd.f32 %v2166, %v1632
  %v2168 = vadd.f32 %v2167, %v1636
  %v2169 = vadd.f32 %v2168, %v1640
  %v2170 = vadd.f32 %v2169, %v1644
  %v2171 = vadd.f32 %v2170, %v1648
  %v2172 = vadd.f32 %v2171, %v1652
  %v2173 = vadd.f32 %v2172, %v1656
  %v2174 = vadd.f32 %v2173, %v1660
  %v2175 = vadd.f32 %v2174, %v1664
  %v2176 = vadd.f32 %v2175, %v1668
  %v2177 = vadd.f32 %v2176, %v1672
  %v2178 = vadd.f32 %v2177, %v1676
  %v2179 = vadd.f32 %v2178, %v1680
  %v2180 = vadd.f32 %v2179, %v1684
  %v2181 = vadd.f32 %v2180, %v1688
  %v2182 = vadd.f32 %v2181, %v1692
  %v2183 = vadd.f32 %v2182, %v1696
  %v2184 = vadd.f32 %v2183, %v1700
  %v2185 = vadd.f32 %v2184, %v1704
  %v2186 = vadd.f32 %v2185, %v1708
  %v2187 = vadd.f32 %v2186, %v1712
  %v2188 = vadd.f32 %v2187, %v1716
  %v2189 = vadd.f32 %v2188, %v1720
  %v2190 = vadd.f32 %v2189, %v1724
  %v2191 = vadd.f32 %v2190, %v1728
  %v2192 = vadd.f32 %v2191, %v1732
  %v2193 = vadd.f32 %v2192, %v1736
  %v2194 = vadd.f32 %v2193, %v1740
  %v2195 = vadd.f32 %v2194, %v1744
  %v2196 = vadd.f32 %v2195, %v1748
  %v2197 = vadd.f32 %v2196, %v1752
  %v2198 = vadd.f32 %v2197, %v1756
  %v2199 = vadd.f32 %v2198, %v1760
  %v2200 = vadd.f32 %v2199, %v1764
  %v2201 = vadd.f32 %v2200, %v1768
  %v2202 = vadd.f32 %v2201, %v1772
  %v2203 = vadd.f32 %v2202, %v1776
  %v2204 = vadd.f32 %v2203, %v1780
  %v2205 = vadd.f32 %v2204, %v1784
  %v2206 = vadd.f32 %v2205, %v1788
  %v2207 = vadd.f32 %v2206, %v1792
  %v2208 = vadd.f32 %v2207, %v1796
  %v2209 = vadd.f32 %v2208, %v1800
  %v2210 = vadd.f32 %v2209, %v1804
  %v2211 = vadd.f32 %v2210, %v1808
  %v2212 = vadd.f32 %v2211, %v1812
  %v2213 = vadd.f32 %v2212, %v1816
  %v2214 = vadd.f32 %v2213, %v1820
  %v2215 = vadd.f32 %v2214, %v1824
  %v2216 = vadd.f32 %v2215, %v1828
  %v2217 = vadd.f32 %v2216, %v1832
  %v2218 = vadd.f32 %v2217, %v1836
  %v2219 = vadd.f32 %v2218, %v1840
  %v2220 = vrot.slane %v2219, 4
  %v2221 = vadd.f32 %v2219, %v2220
  %v2222 = vrot.slane %v2221, 2
  %v2223 = vadd.f32 %v2221, %v2222
  %v2224 = vrot.slane %v2223, 1
  %v2225 = vadd.f32 %v2223, %v2224
  %v2226 = vadd.f32 %v1353, %v1357
  %v2227 = vadd.f32 %v2226, %v1361
  %v2228 = vadd.f32 %v2227, %v1365
  %v2229 = vadd.f32 %v2228, %v1369
  %v2230 = vadd.f32 %v2229, %v1373
  %v2231 = vadd.f32 %v2230, %v1377
  %v2232 = vadd.f32 %v2231, %v1381
  %v2233 = vadd.f32 %v2232, %v1385
  %v2234 = vadd.f32 %v2233, %v1389
  %v2235 = vadd.f32 %v2234, %v1393
  %v2236 = vadd.f32 %v2235, %v1397
  %v2237 = vadd.f32 %v2236, %v1401
  %v2238 = vadd.f32 %v2237, %v1405
  %v2239 = vadd.f32 %v2238, %v1409
  %v2240 = vadd.f32 %v2239, %v1413
  %v2241 = vadd.f32 %v2240, %v1417
  %v2242 = vadd.f32 %v2241, %v1421
  %v2243 = vadd.f32 %v2242, %v1425
  %v2244 = vadd.f32 %v2243, %v1429
  %v2245 = vadd.f32 %v2244, %v1433
  %v2246 = vadd.f32 %v2245, %v1437
  %v2247 = vadd.f32 %v2246, %v1441
  %v2248 = vadd.f32 %v2247, %v1445
  %v2249 = vadd.f32 %v2248, %v1449
  %v2250 = vadd.f32 %v2249, %v1453
  %v2251 = vadd.f32 %v2250, %v1457
  %v2252 = vadd.f32 %v2251, %v1461
  %v2253 = vadd.f32 %v2252, %v1465
  %v2254 = vadd.f32 %v2253, %v1469
  %v2255 = vadd.f32 %v2254, %v1473
  %v2256 = vadd.f32 %v2255, %v1477
  %v2257 = vadd.f32 %v2256, %v1481
  %v2258 = vadd.f32 %v2257, %v1485
  %v2259 = vadd.f32 %v2258, %v1489
  %v2260 = vadd.f32 %v2259, %v1493
  %v2261 = vadd.f32 %v2260, %v1497
  %v2262 = vadd.f32 %v2261, %v1501
  %v2263 = vadd.f32 %v2262, %v1505
  %v2264 = vadd.f32 %v2263, %v1509
  %v2265 = vadd.f32 %v2264, %v1513
  %v2266 = vadd.f32 %v2265, %v1517
  %v2267 = vadd.f32 %v2266, %v1521
  %v2268 = vadd.f32 %v2267, %v1525
  %v2269 = vadd.f32 %v2268, %v1529
  %v2270 = vadd.f32 %v2269, %v1533
  %v2271 = vadd.f32 %v2270, %v1537
  %v2272 = vadd.f32 %v2271, %v1541
  %v2273 = vadd.f32 %v2272, %v1545
  %v2274 = vadd.f32 %v2273, %v1549
  %v2275 = vadd.f32 %v2274, %v1553
  %v2276 = vadd.f32 %v2275, %v1557
  %v2277 = vadd.f32 %v2276, %v1561
  %v2278 = vadd.f32 %v2277, %v1565
  %v2279 = vadd.f32 %v2278, %v1569
  %v2280 = vadd.f32 %v2279, %v1573
  %v2281 = vadd.f32 %v2280, %v1577
  %v2282 = vadd.f32 %v2281, %v1581
  %v2283 = vadd.f32 %v2282, %v1585
  %v2284 = vadd.f32 %v2283, %v1589
  %v2285 = vadd.f32 %v2284, %v1593
  %v2286 = vadd.f32 %v2285, %v1597
  %v2287 = vadd.f32 %v2286, %v1601
  %v2288 = vadd.f32 %v2287, %v1605
  %v2289 = vadd.f32 %v2288, %v1609
  %v2290 = vadd.f32 %v2289, %v1613
  %v2291 = vadd.f32 %v2290, %v1617
  %v2292 = vadd.f32 %v2291, %v1621
  %v2293 = vadd.f32 %v2292, %v1625
  %v2294 = vadd.f32 %v2293, %v1629
  %v2295 = vadd.f32 %v2294, %v1633
  %v2296 = vadd.f32 %v2295, %v1637
  %v2297 = vadd.f32 %v2296, %v1641
  %v2298 = vadd.f32 %v2297, %v1645
  %v2299 = vadd.f32 %v2298, %v1649
  %v2300 = vadd.f32 %v2299, %v1653
  %v2301 = vadd.f32 %v2300, %v1657
  %v2302 = vadd.f32 %v2301, %v1661
  %v2303 = vadd.f32 %v2302, %v1665
  %v2304 = vadd.f32 %v2303, %v1669
  %v2305 = vadd.f32 %v2304, %v1673
  %v2306 = vadd.f32 %v2305, %v1677
  %v2307 = vadd.f32 %v2306, %v1681
  %v2308 = vadd.f32 %v2307, %v1685
  %v2309 = vadd.f32 %v2308, %v1689
  %v2310 = vadd.f32 %v2309, %v1693
  %v2311 = vadd.f32 %v2310, %v1697
  %v2312 = vadd.f32 %v2311, %v1701
  %v2313 = vadd.f32 %v2312, %v1705
  %v2314 = vadd.f32 %v2313, %v1709
  %v2315 = vadd.f32 %v2314, %v1713
  %v2316 = vadd.f32 %v2315, %v1717
  %v2317 = vadd.f32 %v2316, %v1721
  %v2318 = vadd.f32 %v2317, %v1725
  %v2319 = vadd.f32 %v2318, %v1729
  %v2320 = vadd.f32 %v2319, %v1733
  %v2321 = vadd.f32 %v2320, %v1737
  %v2322 = vadd.f32 %v2321, %v1741
  %v2323 = vadd.f32 %v2322, %v1745
  %v2324 = vadd.f32 %v2323, %v1749
  %v2325 = vadd.f32 %v2324, %v1753
  %v2326 = vadd.f32 %v2325, %v1757
  %v2327 = vadd.f32 %v2326, %v1761
  %v2328 = vadd.f32 %v2327, %v1765
  %v2329 = vadd.f32 %v2328, %v1769
  %v2330 = vadd.f32 %v2329, %v1773
  %v2331 = vadd.f32 %v2330, %v1777
  %v2332 = vadd.f32 %v2331, %v1781
  %v2333 = vadd.f32 %v2332, %v1785
  %v2334 = vadd.f32 %v2333, %v1789
  %v2335 = vadd.f32 %v2334, %v1793
  %v2336 = vadd.f32 %v2335, %v1797
  %v2337 = vadd.f32 %v2336, %v1801
  %v2338 = vadd.f32 %v2337, %v1805
  %v2339 = vadd.f32 %v2338, %v1809
  %v2340 = vadd.f32 %v2339, %v1813
  %v2341 = vadd.f32 %v2340, %v1817
  %v2342 = vadd.f32 %v2341, %v1821
  %v2343 = vadd.f32 %v2342, %v1825
  %v2344 = vadd.f32 %v2343, %v1829
  %v2345 = vadd.f32 %v2344, %v1833
  %v2346 = vadd.f32 %v2345, %v1837
  %v2347 = vadd.f32 %v2346, %v1841
  %v2348 = vrot.slane %v2347, 4
  %v2349 = vadd.f32 %v2347, %v2348
  %v2350 = vrot.slane %v2349, 2
  %v2351 = vadd.f32 %v2349, %v2350
  %v2352 = vrot.slane %v2351, 1
  %v2353 = vadd.f32 %v2351, %v2352
  %v2358 = vrot.slane %v2097, 7
  %v2359 = vrot.slane %v2225, 6
  %v2360 = vrot.slane %v2353, 5
  %vm2361 = vcmask 1040384
  %v2362 = vsel %vm2361, %v1969, %v2358
  %vm2363 = vcmask 1042434
  %v2364 = vsel %vm2363, %v2359, %v2360
  %vm2365 = vcmask 1041408
  %v2366 = vsel %vm2365, %v2362, %v2364
  %v2368 = vadd.f32 %v110, %v2366
  %v2369 = vld [vmem:[%s4] sm:$0xff]
  %v2370 = vld [vmem:[%s4 + $0x8] sm:$0xff]
  %2371 = vrot.lane.b32.xlu0 %v234, 120
  %v2372 = vpop.permute.xlu0 %2371
  %v2374 = vmul.f32 %v2369, %v2372
  %v2375 = vmul.f32 %v2370, %v2372
  %vm2376 = vcmask 31744
  %v2377 = vsel %vm2376, %v2374, 0.0
  %2378 = vadd.xlane.f32.xlu0 %v2377
  %v2379 = vpop.xlane.xlu0 %2378
  %v2380 = vsel %vm2376, %v2375, 0.0
  %2381 = vadd.xlane.f32.xlu0 %v2380
  %v2382 = vpop.xlane.xlu0 %2381
  %s2383 = scalar_lea.vmem %s0, 1
  %v2384 = vld [vmem:[%s2383] ss:$8 sm:$0xf]
  %v2385 = vperm.slane %v2384, 0
  %v2386 = vperm.slane %v2384, 1
  %v2387 = vperm.slane %v2384, 2
  %v2388 = vperm.slane %v2384, 3
  %vm2389 = vcmp.eq.s32.totalorder %v731, %v2385
  %vm2390 = vcmp.eq.s32.totalorder %v731, %v2386
  %vm2391 = vcmp.eq.s32.totalorder %v731, %v2387
  %vm2392 = vcmp.eq.s32.totalorder %v731, %v2388
  %vm2393 = vcmp.eq.s32.totalorder %v732, %v2385
  %vm2394 = vcmp.eq.s32.totalorder %v732, %v2386
  %vm2395 = vcmp.eq.s32.totalorder %v732, %v2387
  %vm2396 = vcmp.eq.s32.totalorder %v732, %v2388
  %v2397 = vsel %vm2389, %v2379, 0.0
  %v2398 = vsel %vm2390, %v2379, 0.0
  %v2399 = vsel %vm2391, %v2379, 0.0
  %v2400 = vsel %vm2392, %v2379, 0.0
  %v2401 = vsel %vm2393, %v2382, 0.0
  %v2402 = vsel %vm2394, %v2382, 0.0
  %v2403 = vsel %vm2395, %v2382, 0.0
  %v2404 = vsel %vm2396, %v2382, 0.0
  %v2405 = vadd.f32 %v2397, %v2401
  %v2406 = vrot.slane %v2405, 4
  %v2407 = vadd.f32 %v2405, %v2406
  %v2408 = vrot.slane %v2407, 2
  %v2409 = vadd.f32 %v2407, %v2408
  %v2410 = vrot.slane %v2409, 1
  %v2411 = vadd.f32 %v2409, %v2410
  %v2412 = vadd.f32 %v2398, %v2402
  %v2413 = vrot.slane %v2412, 4
  %v2414 = vadd.f32 %v2412, %v2413
  %v2415 = vrot.slane %v2414, 2
  %v2416 = vadd.f32 %v2414, %v2415
  %v2417 = vrot.slane %v2416, 1
  %v2418 = vadd.f32 %v2416, %v2417
  %v2419 = vadd.f32 %v2399, %v2403
  %v2420 = vrot.slane %v2419, 4
  %v2421 = vadd.f32 %v2419, %v2420
  %v2422 = vrot.slane %v2421, 2
  %v2423 = vadd.f32 %v2421, %v2422
  %v2424 = vrot.slane %v2423, 1
  %v2425 = vadd.f32 %v2423, %v2424
  %v2426 = vadd.f32 %v2400, %v2404
  %v2427 = vrot.slane %v2426, 4
  %v2428 = vadd.f32 %v2426, %v2427
  %v2429 = vrot.slane %v2428, 2
  %v2430 = vadd.f32 %v2428, %v2429
  %v2431 = vrot.slane %v2430, 1
  %v2432 = vadd.f32 %v2430, %v2431
  %v2437 = vrot.slane %v2418, 7
  %v2438 = vrot.slane %v2425, 6
  %v2439 = vrot.slane %v2432, 5
  %v2440 = vsel %vm2361, %v2411, %v2437
  %v2441 = vsel %vm2363, %v2438, %v2439
  %v2442 = vsel %vm2365, %v2440, %v2441
  %v2444 = vadd.f32 %v2368, %v2442
  %v2445 = vld [vmem:[%s5] sm:$0xff]
  %v2446 = vld [vmem:[%s5 + $0x8] sm:$0xff]
  %v2447 = vld [vmem:[%s5 + $0x10] sm:$0xff]
  %v2448 = vld [vmem:[%s5 + $0x18] sm:$0xff]
  %v2449 = vld [vmem:[%s5 + $0x20] sm:$0xff]
  %v2450 = vld [vmem:[%s5 + $0x28] sm:$0xff]
  %v2451 = vld [vmem:[%s5 + $0x30] sm:$0xff]
  %v2452 = vld [vmem:[%s5 + $0x38] sm:$0xff]
  %2453 = vrot.lane.b32.xlu0 %v234, 116
  %v2454 = vpop.permute.xlu0 %2453
  %v2456 = vmul.f32 %v2445, %v2454
  %v2457 = vmul.f32 %v2446, %v2454
  %v2458 = vmul.f32 %v2447, %v2454
  %v2459 = vmul.f32 %v2448, %v2454
  %v2460 = vmul.f32 %v2449, %v2454
  %v2461 = vmul.f32 %v2450, %v2454
  %v2462 = vmul.f32 %v2451, %v2454
  %v2463 = vmul.f32 %v2452, %v2454
  %v2464 = vsel %vm359, %v2456, 0.0
  %2465 = vadd.xlane.f32.xlu0 %v2464
  %v2466 = vpop.xlane.xlu0 %2465
  %v2467 = vsel %vm359, %v2457, 0.0
  %2468 = vadd.xlane.f32.xlu0 %v2467
  %v2469 = vpop.xlane.xlu0 %2468
  %v2470 = vsel %vm359, %v2458, 0.0
  %2471 = vadd.xlane.f32.xlu0 %v2470
  %v2472 = vpop.xlane.xlu0 %2471
  %v2473 = vsel %vm359, %v2459, 0.0
  %2474 = vadd.xlane.f32.xlu0 %v2473
  %v2475 = vpop.xlane.xlu0 %2474
  %v2476 = vsel %vm359, %v2460, 0.0
  %2477 = vadd.xlane.f32.xlu0 %v2476
  %v2478 = vpop.xlane.xlu0 %2477
  %v2479 = vsel %vm359, %v2461, 0.0
  %2480 = vadd.xlane.f32.xlu0 %v2479
  %v2481 = vpop.xlane.xlu0 %2480
  %v2482 = vsel %vm359, %v2462, 0.0
  %2483 = vadd.xlane.f32.xlu0 %v2482
  %v2484 = vpop.xlane.xlu0 %2483
  %v2485 = vsel %vm359, %v2463, 0.0
  %2486 = vadd.xlane.f32.xlu0 %v2485
  %v2487 = vpop.xlane.xlu0 %2486
  %s2488 = scalar_lea.vmem %s0, 2
  %v2489 = vld [vmem:[%s2488] ss:$8 sm:$0xf]
  %v2490 = vperm.slane %v2489, 0
  %v2491 = vperm.slane %v2489, 1
  %v2492 = vperm.slane %v2489, 2
  %v2493 = vperm.slane %v2489, 3
  %vm2494 = vcmp.eq.s32.totalorder %v731, %v2490
  %vm2495 = vcmp.eq.s32.totalorder %v731, %v2491
  %vm2496 = vcmp.eq.s32.totalorder %v731, %v2492
  %vm2497 = vcmp.eq.s32.totalorder %v731, %v2493
  %vm2498 = vcmp.eq.s32.totalorder %v732, %v2490
  %vm2499 = vcmp.eq.s32.totalorder %v732, %v2491
  %vm2500 = vcmp.eq.s32.totalorder %v732, %v2492
  %vm2501 = vcmp.eq.s32.totalorder %v732, %v2493
  %vm2502 = vcmp.eq.s32.totalorder %v733, %v2490
  %vm2503 = vcmp.eq.s32.totalorder %v733, %v2491
  %vm2504 = vcmp.eq.s32.totalorder %v733, %v2492
  %vm2505 = vcmp.eq.s32.totalorder %v733, %v2493
  %vm2506 = vcmp.eq.s32.totalorder %v734, %v2490
  %vm2507 = vcmp.eq.s32.totalorder %v734, %v2491
  %vm2508 = vcmp.eq.s32.totalorder %v734, %v2492
  %vm2509 = vcmp.eq.s32.totalorder %v734, %v2493
  %vm2510 = vcmp.eq.s32.totalorder %v735, %v2490
  %vm2511 = vcmp.eq.s32.totalorder %v735, %v2491
  %vm2512 = vcmp.eq.s32.totalorder %v735, %v2492
  %vm2513 = vcmp.eq.s32.totalorder %v735, %v2493
  %vm2514 = vcmp.eq.s32.totalorder %v736, %v2490
  %vm2515 = vcmp.eq.s32.totalorder %v736, %v2491
  %vm2516 = vcmp.eq.s32.totalorder %v736, %v2492
  %vm2517 = vcmp.eq.s32.totalorder %v736, %v2493
  %vm2518 = vcmp.eq.s32.totalorder %v737, %v2490
  %vm2519 = vcmp.eq.s32.totalorder %v737, %v2491
  %vm2520 = vcmp.eq.s32.totalorder %v737, %v2492
  %vm2521 = vcmp.eq.s32.totalorder %v737, %v2493
  %vm2522 = vcmp.eq.s32.totalorder %v738, %v2490
  %vm2523 = vcmp.eq.s32.totalorder %v738, %v2491
  %vm2524 = vcmp.eq.s32.totalorder %v738, %v2492
  %vm2525 = vcmp.eq.s32.totalorder %v738, %v2493
  %v2526 = vsel %vm2494, %v2466, 0.0
  %v2527 = vsel %vm2495, %v2466, 0.0
  %v2528 = vsel %vm2496, %v2466, 0.0
  %v2529 = vsel %vm2497, %v2466, 0.0
  %v2530 = vsel %vm2498, %v2469, 0.0
  %v2531 = vsel %vm2499, %v2469, 0.0
  %v2532 = vsel %vm2500, %v2469, 0.0
  %v2533 = vsel %vm2501, %v2469, 0.0
  %v2534 = vsel %vm2502, %v2472, 0.0
  %v2535 = vsel %vm2503, %v2472, 0.0
  %v2536 = vsel %vm2504, %v2472, 0.0
  %v2537 = vsel %vm2505, %v2472, 0.0
  %v2538 = vsel %vm2506, %v2475, 0.0
  %v2539 = vsel %vm2507, %v2475, 0.0
  %v2540 = vsel %vm2508, %v2475, 0.0
  %v2541 = vsel %vm2509, %v2475, 0.0
  %v2542 = vsel %vm2510, %v2478, 0.0
  %v2543 = vsel %vm2511, %v2478, 0.0
  %v2544 = vsel %vm2512, %v2478, 0.0
  %v2545 = vsel %vm2513, %v2478, 0.0
  %v2546 = vsel %vm2514, %v2481, 0.0
  %v2547 = vsel %vm2515, %v2481, 0.0
  %v2548 = vsel %vm2516, %v2481, 0.0
  %v2549 = vsel %vm2517, %v2481, 0.0
  %v2550 = vsel %vm2518, %v2484, 0.0
  %v2551 = vsel %vm2519, %v2484, 0.0
  %v2552 = vsel %vm2520, %v2484, 0.0
  %v2553 = vsel %vm2521, %v2484, 0.0
  %v2554 = vsel %vm2522, %v2487, 0.0
  %v2555 = vsel %vm2523, %v2487, 0.0
  %v2556 = vsel %vm2524, %v2487, 0.0
  %v2557 = vsel %vm2525, %v2487, 0.0
  %v2558 = vadd.f32 %v2526, %v2530
  %v2559 = vadd.f32 %v2558, %v2534
  %v2560 = vadd.f32 %v2559, %v2538
  %v2561 = vadd.f32 %v2560, %v2542
  %v2562 = vadd.f32 %v2561, %v2546
  %v2563 = vadd.f32 %v2562, %v2550
  %v2564 = vadd.f32 %v2563, %v2554
  %v2565 = vrot.slane %v2564, 4
  %v2566 = vadd.f32 %v2564, %v2565
  %v2567 = vrot.slane %v2566, 2
  %v2568 = vadd.f32 %v2566, %v2567
  %v2569 = vrot.slane %v2568, 1
  %v2570 = vadd.f32 %v2568, %v2569
  %v2571 = vadd.f32 %v2527, %v2531
  %v2572 = vadd.f32 %v2571, %v2535
  %v2573 = vadd.f32 %v2572, %v2539
  %v2574 = vadd.f32 %v2573, %v2543
  %v2575 = vadd.f32 %v2574, %v2547
  %v2576 = vadd.f32 %v2575, %v2551
  %v2577 = vadd.f32 %v2576, %v2555
  %v2578 = vrot.slane %v2577, 4
  %v2579 = vadd.f32 %v2577, %v2578
  %v2580 = vrot.slane %v2579, 2
  %v2581 = vadd.f32 %v2579, %v2580
  %v2582 = vrot.slane %v2581, 1
  %v2583 = vadd.f32 %v2581, %v2582
  %v2584 = vadd.f32 %v2528, %v2532
  %v2585 = vadd.f32 %v2584, %v2536
  %v2586 = vadd.f32 %v2585, %v2540
  %v2587 = vadd.f32 %v2586, %v2544
  %v2588 = vadd.f32 %v2587, %v2548
  %v2589 = vadd.f32 %v2588, %v2552
  %v2590 = vadd.f32 %v2589, %v2556
  %v2591 = vrot.slane %v2590, 4
  %v2592 = vadd.f32 %v2590, %v2591
  %v2593 = vrot.slane %v2592, 2
  %v2594 = vadd.f32 %v2592, %v2593
  %v2595 = vrot.slane %v2594, 1
  %v2596 = vadd.f32 %v2594, %v2595
  %v2597 = vadd.f32 %v2529, %v2533
  %v2598 = vadd.f32 %v2597, %v2537
  %v2599 = vadd.f32 %v2598, %v2541
  %v2600 = vadd.f32 %v2599, %v2545
  %v2601 = vadd.f32 %v2600, %v2549
  %v2602 = vadd.f32 %v2601, %v2553
  %v2603 = vadd.f32 %v2602, %v2557
  %v2604 = vrot.slane %v2603, 4
  %v2605 = vadd.f32 %v2603, %v2604
  %v2606 = vrot.slane %v2605, 2
  %v2607 = vadd.f32 %v2605, %v2606
  %v2608 = vrot.slane %v2607, 1
  %v2609 = vadd.f32 %v2607, %v2608
  %v2614 = vrot.slane %v2583, 7
  %v2615 = vrot.slane %v2596, 6
  %v2616 = vrot.slane %v2609, 5
  %v2617 = vsel %vm2361, %v2570, %v2614
  %v2618 = vsel %vm2363, %v2615, %v2616
  %v2619 = vsel %vm2365, %v2617, %v2618
  %v2621 = vadd.f32 %v2444, %v2619
  %v2622 = vld [vmem:[%s6] sm:$0xff]
  %v2623 = vld [vmem:[%s6 + $0x8] sm:$0xff]
  %v2624 = vld [vmem:[%s6 + $0x10] sm:$0xff]
  %v2625 = vld [vmem:[%s6 + $0x18] sm:$0xff]
  %v2626 = vld [vmem:[%s6 + $0x20] sm:$0xff]
  %v2627 = vld [vmem:[%s6 + $0x28] sm:$0xff]
  %v2628 = vld [vmem:[%s6 + $0x30] sm:$0xff]
  %v2629 = vld [vmem:[%s6 + $0x38] sm:$0xff]
  %v2630 = vld [vmem:[%s6 + $0x40] sm:$0xff]
  %v2631 = vld [vmem:[%s6 + $0x48] sm:$0xff]
  %v2632 = vld [vmem:[%s6 + $0x50] sm:$0xff]
  %v2633 = vld [vmem:[%s6 + $0x58] sm:$0xff]
  %v2634 = vld [vmem:[%s6 + $0x60] sm:$0xff]
  %v2635 = vld [vmem:[%s6 + $0x68] sm:$0xff]
  %v2636 = vld [vmem:[%s6 + $0x70] sm:$0xff]
  %v2637 = vld [vmem:[%s6 + $0x78] sm:$0xff]
  %v2638 = vld [vmem:[%s6 + $0x80] sm:$0xff]
  %v2639 = vld [vmem:[%s6 + $0x88] sm:$0xff]
  %v2640 = vld [vmem:[%s6 + $0x90] sm:$0xff]
  %v2641 = vld [vmem:[%s6 + $0x98] sm:$0xff]
  %v2642 = vld [vmem:[%s6 + $0xa0] sm:$0xff]
  %v2643 = vld [vmem:[%s6 + $0xa8] sm:$0xff]
  %v2644 = vld [vmem:[%s6 + $0xb0] sm:$0xff]
  %v2645 = vld [vmem:[%s6 + $0xb8] sm:$0xff]
  %v2646 = vld [vmem:[%s6 + $0xc0] sm:$0xff]
  %v2647 = vld [vmem:[%s6 + $0xc8] sm:$0xff]
  %v2648 = vld [vmem:[%s6 + $0xd0] sm:$0xff]
  %v2649 = vld [vmem:[%s6 + $0xd8] sm:$0xff]
  %v2650 = vld [vmem:[%s6 + $0xe0] sm:$0xff]
  %v2651 = vld [vmem:[%s6 + $0xe8] sm:$0xff]
  %v2652 = vld [vmem:[%s6 + $0xf0] sm:$0xff]
  %v2653 = vld [vmem:[%s6 + $0xf8] sm:$0xff]
  %v2654 = vld [vmem:[%s6 + $0x100] sm:$0xff]
  %v2655 = vld [vmem:[%s6 + $0x108] sm:$0xff]
  %v2656 = vld [vmem:[%s6 + $0x110] sm:$0xff]
  %v2657 = vld [vmem:[%s6 + $0x118] sm:$0xff]
  %v2658 = vld [vmem:[%s6 + $0x120] sm:$0xff]
  %v2659 = vld [vmem:[%s6 + $0x128] sm:$0xff]
  %v2660 = vld [vmem:[%s6 + $0x130] sm:$0xff]
  %v2661 = vld [vmem:[%s6 + $0x138] sm:$0xff]
  %v2662 = vld [vmem:[%s6 + $0x140] sm:$0xff]
  %v2663 = vld [vmem:[%s6 + $0x148] sm:$0xff]
  %v2664 = vld [vmem:[%s6 + $0x150] sm:$0xff]
  %v2665 = vld [vmem:[%s6 + $0x158] sm:$0xff]
  %v2666 = vld [vmem:[%s6 + $0x160] sm:$0xff]
  %v2667 = vld [vmem:[%s6 + $0x168] sm:$0xff]
  %v2668 = vld [vmem:[%s6 + $0x170] sm:$0xff]
  %v2669 = vld [vmem:[%s6 + $0x178] sm:$0xff]
  %v2670 = vld [vmem:[%s6 + $0x180] sm:$0xff]
  %v2671 = vld [vmem:[%s6 + $0x188] sm:$0xff]
  %v2672 = vld [vmem:[%s6 + $0x190] sm:$0xff]
  %v2673 = vld [vmem:[%s6 + $0x198] sm:$0xff]
  %v2674 = vld [vmem:[%s6 + $0x1a0] sm:$0xff]
  %v2675 = vld [vmem:[%s6 + $0x1a8] sm:$0xff]
  %v2676 = vld [vmem:[%s6 + $0x1b0] sm:$0xff]
  %v2677 = vld [vmem:[%s6 + $0x1b8] sm:$0xff]
  %v2678 = vld [vmem:[%s6 + $0x1c0] sm:$0xff]
  %v2679 = vld [vmem:[%s6 + $0x1c8] sm:$0xff]
  %v2680 = vld [vmem:[%s6 + $0x1d0] sm:$0xff]
  %v2681 = vld [vmem:[%s6 + $0x1d8] sm:$0xff]
  %v2682 = vld [vmem:[%s6 + $0x1e0] sm:$0xff]
  %v2683 = vld [vmem:[%s6 + $0x1e8] sm:$0xff]
  %v2684 = vld [vmem:[%s6 + $0x1f0] sm:$0xff]
  %v2685 = vld [vmem:[%s6 + $0x1f8] sm:$0xff]
  %v2686 = vld [vmem:[%s6 + $0x200] sm:$0xff]
  %v2687 = vld [vmem:[%s6 + $0x208] sm:$0xff]
  %v2688 = vld [vmem:[%s6 + $0x210] sm:$0xff]
  %v2689 = vld [vmem:[%s6 + $0x218] sm:$0xff]
  %v2690 = vld [vmem:[%s6 + $0x220] sm:$0xff]
  %v2691 = vld [vmem:[%s6 + $0x228] sm:$0xff]
  %v2692 = vld [vmem:[%s6 + $0x230] sm:$0xff]
  %v2693 = vld [vmem:[%s6 + $0x238] sm:$0xff]
  %v2694 = vld [vmem:[%s6 + $0x240] sm:$0xff]
  %v2695 = vld [vmem:[%s6 + $0x248] sm:$0xff]
  %v2696 = vld [vmem:[%s6 + $0x250] sm:$0xff]
  %v2697 = vld [vmem:[%s6 + $0x258] sm:$0xff]
  %v2698 = vld [vmem:[%s6 + $0x260] sm:$0xff]
  %v2699 = vld [vmem:[%s6 + $0x268] sm:$0xff]
  %v2700 = vld [vmem:[%s6 + $0x270] sm:$0xff]
  %v2701 = vld [vmem:[%s6 + $0x278] sm:$0xff]
  %v2702 = vld [vmem:[%s6 + $0x280] sm:$0xff]
  %v2703 = vld [vmem:[%s6 + $0x288] sm:$0xff]
  %v2704 = vld [vmem:[%s6 + $0x290] sm:$0xff]
  %v2705 = vld [vmem:[%s6 + $0x298] sm:$0xff]
  %v2706 = vld [vmem:[%s6 + $0x2a0] sm:$0xff]
  %v2707 = vld [vmem:[%s6 + $0x2a8] sm:$0xff]
  %2708 = vrot.lane.b32.xlu0 %v234, 108
  %v2709 = vpop.permute.xlu0 %2708
  %v2711 = vmul.f32 %v2622, %v2709
  %v2712 = vmul.f32 %v2623, %v2709
  %v2713 = vmul.f32 %v2624, %v2709
  %v2714 = vmul.f32 %v2625, %v2709
  %v2715 = vmul.f32 %v2626, %v2709
  %v2716 = vmul.f32 %v2627, %v2709
  %v2717 = vmul.f32 %v2628, %v2709
  %v2718 = vmul.f32 %v2629, %v2709
  %v2719 = vmul.f32 %v2630, %v2709
  %v2720 = vmul.f32 %v2631, %v2709
  %v2721 = vmul.f32 %v2632, %v2709
  %v2722 = vmul.f32 %v2633, %v2709
  %v2723 = vmul.f32 %v2634, %v2709
  %v2724 = vmul.f32 %v2635, %v2709
  %v2725 = vmul.f32 %v2636, %v2709
  %v2726 = vmul.f32 %v2637, %v2709
  %v2727 = vmul.f32 %v2638, %v2709
  %v2728 = vmul.f32 %v2639, %v2709
  %v2729 = vmul.f32 %v2640, %v2709
  %v2730 = vmul.f32 %v2641, %v2709
  %v2731 = vmul.f32 %v2642, %v2709
  %v2732 = vmul.f32 %v2643, %v2709
  %v2733 = vmul.f32 %v2644, %v2709
  %v2734 = vmul.f32 %v2645, %v2709
  %v2735 = vmul.f32 %v2646, %v2709
  %v2736 = vmul.f32 %v2647, %v2709
  %v2737 = vmul.f32 %v2648, %v2709
  %v2738 = vmul.f32 %v2649, %v2709
  %v2739 = vmul.f32 %v2650, %v2709
  %v2740 = vmul.f32 %v2651, %v2709
  %v2741 = vmul.f32 %v2652, %v2709
  %v2742 = vmul.f32 %v2653, %v2709
  %v2743 = vmul.f32 %v2654, %v2709
  %v2744 = vmul.f32 %v2655, %v2709
  %v2745 = vmul.f32 %v2656, %v2709
  %v2746 = vmul.f32 %v2657, %v2709
  %v2747 = vmul.f32 %v2658, %v2709
  %v2748 = vmul.f32 %v2659, %v2709
  %v2749 = vmul.f32 %v2660, %v2709
  %v2750 = vmul.f32 %v2661, %v2709
  %v2751 = vmul.f32 %v2662, %v2709
  %v2752 = vmul.f32 %v2663, %v2709
  %v2753 = vmul.f32 %v2664, %v2709
  %v2754 = vmul.f32 %v2665, %v2709
  %v2755 = vmul.f32 %v2666, %v2709
  %v2756 = vmul.f32 %v2667, %v2709
  %v2757 = vmul.f32 %v2668, %v2709
  %v2758 = vmul.f32 %v2669, %v2709
  %v2759 = vmul.f32 %v2670, %v2709
  %v2760 = vmul.f32 %v2671, %v2709
  %v2761 = vmul.f32 %v2672, %v2709
  %v2762 = vmul.f32 %v2673, %v2709
  %v2763 = vmul.f32 %v2674, %v2709
  %v2764 = vmul.f32 %v2675, %v2709
  %v2765 = vmul.f32 %v2676, %v2709
  %v2766 = vmul.f32 %v2677, %v2709
  %v2767 = vmul.f32 %v2678, %v2709
  %v2768 = vmul.f32 %v2679, %v2709
  %v2769 = vmul.f32 %v2680, %v2709
  %v2770 = vmul.f32 %v2681, %v2709
  %v2771 = vmul.f32 %v2682, %v2709
  %v2772 = vmul.f32 %v2683, %v2709
  %v2773 = vmul.f32 %v2684, %v2709
  %v2774 = vmul.f32 %v2685, %v2709
  %v2775 = vmul.f32 %v2686, %v2709
  %v2776 = vmul.f32 %v2687, %v2709
  %v2777 = vmul.f32 %v2688, %v2709
  %v2778 = vmul.f32 %v2689, %v2709
  %v2779 = vmul.f32 %v2690, %v2709
  %v2780 = vmul.f32 %v2691, %v2709
  %v2781 = vmul.f32 %v2692, %v2709
  %v2782 = vmul.f32 %v2693, %v2709
  %v2783 = vmul.f32 %v2694, %v2709
  %v2784 = vmul.f32 %v2695, %v2709
  %v2785 = vmul.f32 %v2696, %v2709
  %v2786 = vmul.f32 %v2697, %v2709
  %v2787 = vmul.f32 %v2698, %v2709
  %v2788 = vmul.f32 %v2699, %v2709
  %v2789 = vmul.f32 %v2700, %v2709
  %v2790 = vmul.f32 %v2701, %v2709
  %v2791 = vmul.f32 %v2702, %v2709
  %v2792 = vmul.f32 %v2703, %v2709
  %v2793 = vmul.f32 %v2704, %v2709
  %v2794 = vmul.f32 %v2705, %v2709
  %v2795 = vmul.f32 %v2706, %v2709
  %v2796 = vmul.f32 %v2707, %v2709
  %v2797 = vsel %vm359, %v2711, 0.0
  %2798 = vadd.xlane.f32.xlu0 %v2797
  %v2799 = vpop.xlane.xlu0 %2798
  %v2800 = vsel %vm359, %v2712, 0.0
  %2801 = vadd.xlane.f32.xlu0 %v2800
  %v2802 = vpop.xlane.xlu0 %2801
  %v2803 = vsel %vm359, %v2713, 0.0
  %2804 = vadd.xlane.f32.xlu0 %v2803
  %v2805 = vpop.xlane.xlu0 %2804
  %v2806 = vsel %vm359, %v2714, 0.0
  %2807 = vadd.xlane.f32.xlu0 %v2806
  %v2808 = vpop.xlane.xlu0 %2807
  %v2809 = vsel %vm359, %v2715, 0.0
  %2810 = vadd.xlane.f32.xlu0 %v2809
  %v2811 = vpop.xlane.xlu0 %2810
  %v2812 = vsel %vm359, %v2716, 0.0
  %2813 = vadd.xlane.f32.xlu0 %v2812
  %v2814 = vpop.xlane.xlu0 %2813
  %v2815 = vsel %vm359, %v2717, 0.0
  %2816 = vadd.xlane.f32.xlu0 %v2815
  %v2817 = vpop.xlane.xlu0 %2816
  %v2818 = vsel %vm359, %v2718, 0.0
  %2819 = vadd.xlane.f32.xlu0 %v2818
  %v2820 = vpop.xlane.xlu0 %2819
  %v2821 = vsel %vm359, %v2719, 0.0
  %2822 = vadd.xlane.f32.xlu0 %v2821
  %v2823 = vpop.xlane.xlu0 %2822
  %v2824 = vsel %vm359, %v2720, 0.0
  %2825 = vadd.xlane.f32.xlu0 %v2824
  %v2826 = vpop.xlane.xlu0 %2825
  %v2827 = vsel %vm359, %v2721, 0.0
  %2828 = vadd.xlane.f32.xlu0 %v2827
  %v2829 = vpop.xlane.xlu0 %2828
  %v2830 = vsel %vm359, %v2722, 0.0
  %2831 = vadd.xlane.f32.xlu0 %v2830
  %v2832 = vpop.xlane.xlu0 %2831
  %v2833 = vsel %vm359, %v2723, 0.0
  %2834 = vadd.xlane.f32.xlu0 %v2833
  %v2835 = vpop.xlane.xlu0 %2834
  %v2836 = vsel %vm359, %v2724, 0.0
  %2837 = vadd.xlane.f32.xlu0 %v2836
  %v2838 = vpop.xlane.xlu0 %2837
  %v2839 = vsel %vm359, %v2725, 0.0
  %2840 = vadd.xlane.f32.xlu0 %v2839
  %v2841 = vpop.xlane.xlu0 %2840
  %v2842 = vsel %vm359, %v2726, 0.0
  %2843 = vadd.xlane.f32.xlu0 %v2842
  %v2844 = vpop.xlane.xlu0 %2843
  %v2845 = vsel %vm359, %v2727, 0.0
  %2846 = vadd.xlane.f32.xlu0 %v2845
  %v2847 = vpop.xlane.xlu0 %2846
  %v2848 = vsel %vm359, %v2728, 0.0
  %2849 = vadd.xlane.f32.xlu0 %v2848
  %v2850 = vpop.xlane.xlu0 %2849
  %v2851 = vsel %vm359, %v2729, 0.0
  %2852 = vadd.xlane.f32.xlu0 %v2851
  %v2853 = vpop.xlane.xlu0 %2852
  %v2854 = vsel %vm359, %v2730, 0.0
  %2855 = vadd.xlane.f32.xlu0 %v2854
  %v2856 = vpop.xlane.xlu0 %2855
  %v2857 = vsel %vm359, %v2731, 0.0
  %2858 = vadd.xlane.f32.xlu0 %v2857
  %v2859 = vpop.xlane.xlu0 %2858
  %v2860 = vsel %vm359, %v2732, 0.0
  %2861 = vadd.xlane.f32.xlu0 %v2860
  %v2862 = vpop.xlane.xlu0 %2861
  %v2863 = vsel %vm359, %v2733, 0.0
  %2864 = vadd.xlane.f32.xlu0 %v2863
  %v2865 = vpop.xlane.xlu0 %2864
  %v2866 = vsel %vm359, %v2734, 0.0
  %2867 = vadd.xlane.f32.xlu0 %v2866
  %v2868 = vpop.xlane.xlu0 %2867
  %v2869 = vsel %vm359, %v2735, 0.0
  %2870 = vadd.xlane.f32.xlu0 %v2869
  %v2871 = vpop.xlane.xlu0 %2870
  %v2872 = vsel %vm359, %v2736, 0.0
  %2873 = vadd.xlane.f32.xlu0 %v2872
  %v2874 = vpop.xlane.xlu0 %2873
  %v2875 = vsel %vm359, %v2737, 0.0
  %2876 = vadd.xlane.f32.xlu0 %v2875
  %v2877 = vpop.xlane.xlu0 %2876
  %v2878 = vsel %vm359, %v2738, 0.0
  %2879 = vadd.xlane.f32.xlu0 %v2878
  %v2880 = vpop.xlane.xlu0 %2879
  %v2881 = vsel %vm359, %v2739, 0.0
  %2882 = vadd.xlane.f32.xlu0 %v2881
  %v2883 = vpop.xlane.xlu0 %2882
  %v2884 = vsel %vm359, %v2740, 0.0
  %2885 = vadd.xlane.f32.xlu0 %v2884
  %v2886 = vpop.xlane.xlu0 %2885
  %v2887 = vsel %vm359, %v2741, 0.0
  %2888 = vadd.xlane.f32.xlu0 %v2887
  %v2889 = vpop.xlane.xlu0 %2888
  %v2890 = vsel %vm359, %v2742, 0.0
  %2891 = vadd.xlane.f32.xlu0 %v2890
  %v2892 = vpop.xlane.xlu0 %2891
  %v2893 = vsel %vm359, %v2743, 0.0
  %2894 = vadd.xlane.f32.xlu0 %v2893
  %v2895 = vpop.xlane.xlu0 %2894
  %v2896 = vsel %vm359, %v2744, 0.0
  %2897 = vadd.xlane.f32.xlu0 %v2896
  %v2898 = vpop.xlane.xlu0 %2897
  %v2899 = vsel %vm359, %v2745, 0.0
  %2900 = vadd.xlane.f32.xlu0 %v2899
  %v2901 = vpop.xlane.xlu0 %2900
  %v2902 = vsel %vm359, %v2746, 0.0
  %2903 = vadd.xlane.f32.xlu0 %v2902
  %v2904 = vpop.xlane.xlu0 %2903
  %v2905 = vsel %vm359, %v2747, 0.0
  %2906 = vadd.xlane.f32.xlu0 %v2905
  %v2907 = vpop.xlane.xlu0 %2906
  %v2908 = vsel %vm359, %v2748, 0.0
  %2909 = vadd.xlane.f32.xlu0 %v2908
  %v2910 = vpop.xlane.xlu0 %2909
  %v2911 = vsel %vm359, %v2749, 0.0
  %2912 = vadd.xlane.f32.xlu0 %v2911
  %v2913 = vpop.xlane.xlu0 %2912
  %v2914 = vsel %vm359, %v2750, 0.0
  %2915 = vadd.xlane.f32.xlu0 %v2914
  %v2916 = vpop.xlane.xlu0 %2915
  %v2917 = vsel %vm359, %v2751, 0.0
  %2918 = vadd.xlane.f32.xlu0 %v2917
  %v2919 = vpop.xlane.xlu0 %2918
  %v2920 = vsel %vm359, %v2752, 0.0
  %2921 = vadd.xlane.f32.xlu0 %v2920
  %v2922 = vpop.xlane.xlu0 %2921
  %v2923 = vsel %vm359, %v2753, 0.0
  %2924 = vadd.xlane.f32.xlu0 %v2923
  %v2925 = vpop.xlane.xlu0 %2924
  %v2926 = vsel %vm359, %v2754, 0.0
  %2927 = vadd.xlane.f32.xlu0 %v2926
  %v2928 = vpop.xlane.xlu0 %2927
  %v2929 = vsel %vm359, %v2755, 0.0
  %2930 = vadd.xlane.f32.xlu0 %v2929
  %v2931 = vpop.xlane.xlu0 %2930
  %v2932 = vsel %vm359, %v2756, 0.0
  %2933 = vadd.xlane.f32.xlu0 %v2932
  %v2934 = vpop.xlane.xlu0 %2933
  %v2935 = vsel %vm359, %v2757, 0.0
  %2936 = vadd.xlane.f32.xlu0 %v2935
  %v2937 = vpop.xlane.xlu0 %2936
  %v2938 = vsel %vm359, %v2758, 0.0
  %2939 = vadd.xlane.f32.xlu0 %v2938
  %v2940 = vpop.xlane.xlu0 %2939
  %v2941 = vsel %vm359, %v2759, 0.0
  %2942 = vadd.xlane.f32.xlu0 %v2941
  %v2943 = vpop.xlane.xlu0 %2942
  %v2944 = vsel %vm359, %v2760, 0.0
  %2945 = vadd.xlane.f32.xlu0 %v2944
  %v2946 = vpop.xlane.xlu0 %2945
  %v2947 = vsel %vm359, %v2761, 0.0
  %2948 = vadd.xlane.f32.xlu0 %v2947
  %v2949 = vpop.xlane.xlu0 %2948
  %v2950 = vsel %vm359, %v2762, 0.0
  %2951 = vadd.xlane.f32.xlu0 %v2950
  %v2952 = vpop.xlane.xlu0 %2951
  %v2953 = vsel %vm359, %v2763, 0.0
  %2954 = vadd.xlane.f32.xlu0 %v2953
  %v2955 = vpop.xlane.xlu0 %2954
  %v2956 = vsel %vm359, %v2764, 0.0
  %2957 = vadd.xlane.f32.xlu0 %v2956
  %v2958 = vpop.xlane.xlu0 %2957
  %v2959 = vsel %vm359, %v2765, 0.0
  %2960 = vadd.xlane.f32.xlu0 %v2959
  %v2961 = vpop.xlane.xlu0 %2960
  %v2962 = vsel %vm359, %v2766, 0.0
  %2963 = vadd.xlane.f32.xlu0 %v2962
  %v2964 = vpop.xlane.xlu0 %2963
  %v2965 = vsel %vm359, %v2767, 0.0
  %2966 = vadd.xlane.f32.xlu0 %v2965
  %v2967 = vpop.xlane.xlu0 %2966
  %v2968 = vsel %vm359, %v2768, 0.0
  %2969 = vadd.xlane.f32.xlu0 %v2968
  %v2970 = vpop.xlane.xlu0 %2969
  %v2971 = vsel %vm359, %v2769, 0.0
  %2972 = vadd.xlane.f32.xlu0 %v2971
  %v2973 = vpop.xlane.xlu0 %2972
  %v2974 = vsel %vm359, %v2770, 0.0
  %2975 = vadd.xlane.f32.xlu0 %v2974
  %v2976 = vpop.xlane.xlu0 %2975
  %v2977 = vsel %vm359, %v2771, 0.0
  %2978 = vadd.xlane.f32.xlu0 %v2977
  %v2979 = vpop.xlane.xlu0 %2978
  %v2980 = vsel %vm359, %v2772, 0.0
  %2981 = vadd.xlane.f32.xlu0 %v2980
  %v2982 = vpop.xlane.xlu0 %2981
  %v2983 = vsel %vm359, %v2773, 0.0
  %2984 = vadd.xlane.f32.xlu0 %v2983
  %v2985 = vpop.xlane.xlu0 %2984
  %v2986 = vsel %vm359, %v2774, 0.0
  %2987 = vadd.xlane.f32.xlu0 %v2986
  %v2988 = vpop.xlane.xlu0 %2987
  %v2989 = vsel %vm359, %v2775, 0.0
  %2990 = vadd.xlane.f32.xlu0 %v2989
  %v2991 = vpop.xlane.xlu0 %2990
  %v2992 = vsel %vm359, %v2776, 0.0
  %2993 = vadd.xlane.f32.xlu0 %v2992
  %v2994 = vpop.xlane.xlu0 %2993
  %v2995 = vsel %vm359, %v2777, 0.0
  %2996 = vadd.xlane.f32.xlu0 %v2995
  %v2997 = vpop.xlane.xlu0 %2996
  %v2998 = vsel %vm359, %v2778, 0.0
  %2999 = vadd.xlane.f32.xlu0 %v2998
  %v3000 = vpop.xlane.xlu0 %2999
  %v3001 = vsel %vm359, %v2779, 0.0
  %3002 = vadd.xlane.f32.xlu0 %v3001
  %v3003 = vpop.xlane.xlu0 %3002
  %v3004 = vsel %vm359, %v2780, 0.0
  %3005 = vadd.xlane.f32.xlu0 %v3004
  %v3006 = vpop.xlane.xlu0 %3005
  %v3007 = vsel %vm359, %v2781, 0.0
  %3008 = vadd.xlane.f32.xlu0 %v3007
  %v3009 = vpop.xlane.xlu0 %3008
  %v3010 = vsel %vm359, %v2782, 0.0
  %3011 = vadd.xlane.f32.xlu0 %v3010
  %v3012 = vpop.xlane.xlu0 %3011
  %v3013 = vsel %vm359, %v2783, 0.0
  %3014 = vadd.xlane.f32.xlu0 %v3013
  %v3015 = vpop.xlane.xlu0 %3014
  %v3016 = vsel %vm359, %v2784, 0.0
  %3017 = vadd.xlane.f32.xlu0 %v3016
  %v3018 = vpop.xlane.xlu0 %3017
  %v3019 = vsel %vm359, %v2785, 0.0
  %3020 = vadd.xlane.f32.xlu0 %v3019
  %v3021 = vpop.xlane.xlu0 %3020
  %v3022 = vsel %vm359, %v2786, 0.0
  %3023 = vadd.xlane.f32.xlu0 %v3022
  %v3024 = vpop.xlane.xlu0 %3023
  %v3025 = vsel %vm359, %v2787, 0.0
  %3026 = vadd.xlane.f32.xlu0 %v3025
  %v3027 = vpop.xlane.xlu0 %3026
  %v3028 = vsel %vm359, %v2788, 0.0
  %3029 = vadd.xlane.f32.xlu0 %v3028
  %v3030 = vpop.xlane.xlu0 %3029
  %v3031 = vsel %vm359, %v2789, 0.0
  %3032 = vadd.xlane.f32.xlu0 %v3031
  %v3033 = vpop.xlane.xlu0 %3032
  %v3034 = vsel %vm359, %v2790, 0.0
  %3035 = vadd.xlane.f32.xlu0 %v3034
  %v3036 = vpop.xlane.xlu0 %3035
  %v3037 = vsel %vm359, %v2791, 0.0
  %3038 = vadd.xlane.f32.xlu0 %v3037
  %v3039 = vpop.xlane.xlu0 %3038
  %v3040 = vsel %vm359, %v2792, 0.0
  %3041 = vadd.xlane.f32.xlu0 %v3040
  %v3042 = vpop.xlane.xlu0 %3041
  %v3043 = vsel %vm359, %v2793, 0.0
  %3044 = vadd.xlane.f32.xlu0 %v3043
  %v3045 = vpop.xlane.xlu0 %3044
  %v3046 = vsel %vm359, %v2794, 0.0
  %3047 = vadd.xlane.f32.xlu0 %v3046
  %v3048 = vpop.xlane.xlu0 %3047
  %v3049 = vsel %vm359, %v2795, 0.0
  %3050 = vadd.xlane.f32.xlu0 %v3049
  %v3051 = vpop.xlane.xlu0 %3050
  %v3052 = vsel %vm359, %v2796, 0.0
  %3053 = vadd.xlane.f32.xlu0 %v3052
  %v3054 = vpop.xlane.xlu0 %3053
  %s3055 = scalar_lea.vmem %s0, 3
  %v3056 = vld [vmem:[%s3055] ss:$8 sm:$0xf]
  %v3057 = vperm.slane %v3056, 0
  %v3058 = vperm.slane %v3056, 1
  %v3059 = vperm.slane %v3056, 2
  %v3060 = vperm.slane %v3056, 3
  %vm3061 = vcmp.eq.s32.totalorder %v731, %v3057
  %vm3062 = vcmp.eq.s32.totalorder %v731, %v3058
  %vm3063 = vcmp.eq.s32.totalorder %v731, %v3059
  %vm3064 = vcmp.eq.s32.totalorder %v731, %v3060
  %vm3065 = vcmp.eq.s32.totalorder %v732, %v3057
  %vm3066 = vcmp.eq.s32.totalorder %v732, %v3058
  %vm3067 = vcmp.eq.s32.totalorder %v732, %v3059
  %vm3068 = vcmp.eq.s32.totalorder %v732, %v3060
  %vm3069 = vcmp.eq.s32.totalorder %v733, %v3057
  %vm3070 = vcmp.eq.s32.totalorder %v733, %v3058
  %vm3071 = vcmp.eq.s32.totalorder %v733, %v3059
  %vm3072 = vcmp.eq.s32.totalorder %v733, %v3060
  %vm3073 = vcmp.eq.s32.totalorder %v734, %v3057
  %vm3074 = vcmp.eq.s32.totalorder %v734, %v3058
  %vm3075 = vcmp.eq.s32.totalorder %v734, %v3059
  %vm3076 = vcmp.eq.s32.totalorder %v734, %v3060
  %vm3077 = vcmp.eq.s32.totalorder %v735, %v3057
  %vm3078 = vcmp.eq.s32.totalorder %v735, %v3058
  %vm3079 = vcmp.eq.s32.totalorder %v735, %v3059
  %vm3080 = vcmp.eq.s32.totalorder %v735, %v3060
  %vm3081 = vcmp.eq.s32.totalorder %v736, %v3057
  %vm3082 = vcmp.eq.s32.totalorder %v736, %v3058
  %vm3083 = vcmp.eq.s32.totalorder %v736, %v3059
  %vm3084 = vcmp.eq.s32.totalorder %v736, %v3060
  %vm3085 = vcmp.eq.s32.totalorder %v737, %v3057
  %vm3086 = vcmp.eq.s32.totalorder %v737, %v3058
  %vm3087 = vcmp.eq.s32.totalorder %v737, %v3059
  %vm3088 = vcmp.eq.s32.totalorder %v737, %v3060
  %vm3089 = vcmp.eq.s32.totalorder %v738, %v3057
  %vm3090 = vcmp.eq.s32.totalorder %v738, %v3058
  %vm3091 = vcmp.eq.s32.totalorder %v738, %v3059
  %vm3092 = vcmp.eq.s32.totalorder %v738, %v3060
  %vm3093 = vcmp.eq.s32.totalorder %v739, %v3057
  %vm3094 = vcmp.eq.s32.totalorder %v739, %v3058
  %vm3095 = vcmp.eq.s32.totalorder %v739, %v3059
  %vm3096 = vcmp.eq.s32.totalorder %v739, %v3060
  %vm3097 = vcmp.eq.s32.totalorder %v740, %v3057
  %vm3098 = vcmp.eq.s32.totalorder %v740, %v3058
  %vm3099 = vcmp.eq.s32.totalorder %v740, %v3059
  %vm3100 = vcmp.eq.s32.totalorder %v740, %v3060
  %vm3101 = vcmp.eq.s32.totalorder %v741, %v3057
  %vm3102 = vcmp.eq.s32.totalorder %v741, %v3058
  %vm3103 = vcmp.eq.s32.totalorder %v741, %v3059
  %vm3104 = vcmp.eq.s32.totalorder %v741, %v3060
  %vm3105 = vcmp.eq.s32.totalorder %v742, %v3057
  %vm3106 = vcmp.eq.s32.totalorder %v742, %v3058
  %vm3107 = vcmp.eq.s32.totalorder %v742, %v3059
  %vm3108 = vcmp.eq.s32.totalorder %v742, %v3060
  %vm3109 = vcmp.eq.s32.totalorder %v743, %v3057
  %vm3110 = vcmp.eq.s32.totalorder %v743, %v3058
  %vm3111 = vcmp.eq.s32.totalorder %v743, %v3059
  %vm3112 = vcmp.eq.s32.totalorder %v743, %v3060
  %vm3113 = vcmp.eq.s32.totalorder %v744, %v3057
  %vm3114 = vcmp.eq.s32.totalorder %v744, %v3058
  %vm3115 = vcmp.eq.s32.totalorder %v744, %v3059
  %vm3116 = vcmp.eq.s32.totalorder %v744, %v3060
  %vm3117 = vcmp.eq.s32.totalorder %v745, %v3057
  %vm3118 = vcmp.eq.s32.totalorder %v745, %v3058
  %vm3119 = vcmp.eq.s32.totalorder %v745, %v3059
  %vm3120 = vcmp.eq.s32.totalorder %v745, %v3060
  %vm3121 = vcmp.eq.s32.totalorder %v746, %v3057
  %vm3122 = vcmp.eq.s32.totalorder %v746, %v3058
  %vm3123 = vcmp.eq.s32.totalorder %v746, %v3059
  %vm3124 = vcmp.eq.s32.totalorder %v746, %v3060
  %vm3125 = vcmp.eq.s32.totalorder %v747, %v3057
  %vm3126 = vcmp.eq.s32.totalorder %v747, %v3058
  %vm3127 = vcmp.eq.s32.totalorder %v747, %v3059
  %vm3128 = vcmp.eq.s32.totalorder %v747, %v3060
  %vm3129 = vcmp.eq.s32.totalorder %v748, %v3057
  %vm3130 = vcmp.eq.s32.totalorder %v748, %v3058
  %vm3131 = vcmp.eq.s32.totalorder %v748, %v3059
  %vm3132 = vcmp.eq.s32.totalorder %v748, %v3060
  %vm3133 = vcmp.eq.s32.totalorder %v749, %v3057
  %vm3134 = vcmp.eq.s32.totalorder %v749, %v3058
  %vm3135 = vcmp.eq.s32.totalorder %v749, %v3059
  %vm3136 = vcmp.eq.s32.totalorder %v749, %v3060
  %vm3137 = vcmp.eq.s32.totalorder %v750, %v3057
  %vm3138 = vcmp.eq.s32.totalorder %v750, %v3058
  %vm3139 = vcmp.eq.s32.totalorder %v750, %v3059
  %vm3140 = vcmp.eq.s32.totalorder %v750, %v3060
  %vm3141 = vcmp.eq.s32.totalorder %v751, %v3057
  %vm3142 = vcmp.eq.s32.totalorder %v751, %v3058
  %vm3143 = vcmp.eq.s32.totalorder %v751, %v3059
  %vm3144 = vcmp.eq.s32.totalorder %v751, %v3060
  %vm3145 = vcmp.eq.s32.totalorder %v752, %v3057
  %vm3146 = vcmp.eq.s32.totalorder %v752, %v3058
  %vm3147 = vcmp.eq.s32.totalorder %v752, %v3059
  %vm3148 = vcmp.eq.s32.totalorder %v752, %v3060
  %vm3149 = vcmp.eq.s32.totalorder %v753, %v3057
  %vm3150 = vcmp.eq.s32.totalorder %v753, %v3058
  %vm3151 = vcmp.eq.s32.totalorder %v753, %v3059
  %vm3152 = vcmp.eq.s32.totalorder %v753, %v3060
  %vm3153 = vcmp.eq.s32.totalorder %v754, %v3057
  %vm3154 = vcmp.eq.s32.totalorder %v754, %v3058
  %vm3155 = vcmp.eq.s32.totalorder %v754, %v3059
  %vm3156 = vcmp.eq.s32.totalorder %v754, %v3060
  %vm3157 = vcmp.eq.s32.totalorder %v755, %v3057
  %vm3158 = vcmp.eq.s32.totalorder %v755, %v3058
  %vm3159 = vcmp.eq.s32.totalorder %v755, %v3059
  %vm3160 = vcmp.eq.s32.totalorder %v755, %v3060
  %vm3161 = vcmp.eq.s32.totalorder %v756, %v3057
  %vm3162 = vcmp.eq.s32.totalorder %v756, %v3058
  %vm3163 = vcmp.eq.s32.totalorder %v756, %v3059
  %vm3164 = vcmp.eq.s32.totalorder %v756, %v3060
  %vm3165 = vcmp.eq.s32.totalorder %v757, %v3057
  %vm3166 = vcmp.eq.s32.totalorder %v757, %v3058
  %vm3167 = vcmp.eq.s32.totalorder %v757, %v3059
  %vm3168 = vcmp.eq.s32.totalorder %v757, %v3060
  %vm3169 = vcmp.eq.s32.totalorder %v758, %v3057
  %vm3170 = vcmp.eq.s32.totalorder %v758, %v3058
  %vm3171 = vcmp.eq.s32.totalorder %v758, %v3059
  %vm3172 = vcmp.eq.s32.totalorder %v758, %v3060
  %vm3173 = vcmp.eq.s32.totalorder %v759, %v3057
  %vm3174 = vcmp.eq.s32.totalorder %v759, %v3058
  %vm3175 = vcmp.eq.s32.totalorder %v759, %v3059
  %vm3176 = vcmp.eq.s32.totalorder %v759, %v3060
  %vm3177 = vcmp.eq.s32.totalorder %v760, %v3057
  %vm3178 = vcmp.eq.s32.totalorder %v760, %v3058
  %vm3179 = vcmp.eq.s32.totalorder %v760, %v3059
  %vm3180 = vcmp.eq.s32.totalorder %v760, %v3060
  %vm3181 = vcmp.eq.s32.totalorder %v761, %v3057
  %vm3182 = vcmp.eq.s32.totalorder %v761, %v3058
  %vm3183 = vcmp.eq.s32.totalorder %v761, %v3059
  %vm3184 = vcmp.eq.s32.totalorder %v761, %v3060
  %vm3185 = vcmp.eq.s32.totalorder %v762, %v3057
  %vm3186 = vcmp.eq.s32.totalorder %v762, %v3058
  %vm3187 = vcmp.eq.s32.totalorder %v762, %v3059
  %vm3188 = vcmp.eq.s32.totalorder %v762, %v3060
  %vm3189 = vcmp.eq.s32.totalorder %v763, %v3057
  %vm3190 = vcmp.eq.s32.totalorder %v763, %v3058
  %vm3191 = vcmp.eq.s32.totalorder %v763, %v3059
  %vm3192 = vcmp.eq.s32.totalorder %v763, %v3060
  %vm3193 = vcmp.eq.s32.totalorder %v764, %v3057
  %vm3194 = vcmp.eq.s32.totalorder %v764, %v3058
  %vm3195 = vcmp.eq.s32.totalorder %v764, %v3059
  %vm3196 = vcmp.eq.s32.totalorder %v764, %v3060
  %vm3197 = vcmp.eq.s32.totalorder %v765, %v3057
  %vm3198 = vcmp.eq.s32.totalorder %v765, %v3058
  %vm3199 = vcmp.eq.s32.totalorder %v765, %v3059
  %vm3200 = vcmp.eq.s32.totalorder %v765, %v3060
  %vm3201 = vcmp.eq.s32.totalorder %v766, %v3057
  %vm3202 = vcmp.eq.s32.totalorder %v766, %v3058
  %vm3203 = vcmp.eq.s32.totalorder %v766, %v3059
  %vm3204 = vcmp.eq.s32.totalorder %v766, %v3060
  %vm3205 = vcmp.eq.s32.totalorder %v767, %v3057
  %vm3206 = vcmp.eq.s32.totalorder %v767, %v3058
  %vm3207 = vcmp.eq.s32.totalorder %v767, %v3059
  %vm3208 = vcmp.eq.s32.totalorder %v767, %v3060
  %vm3209 = vcmp.eq.s32.totalorder %v768, %v3057
  %vm3210 = vcmp.eq.s32.totalorder %v768, %v3058
  %vm3211 = vcmp.eq.s32.totalorder %v768, %v3059
  %vm3212 = vcmp.eq.s32.totalorder %v768, %v3060
  %vm3213 = vcmp.eq.s32.totalorder %v769, %v3057
  %vm3214 = vcmp.eq.s32.totalorder %v769, %v3058
  %vm3215 = vcmp.eq.s32.totalorder %v769, %v3059
  %vm3216 = vcmp.eq.s32.totalorder %v769, %v3060
  %vm3217 = vcmp.eq.s32.totalorder %v770, %v3057
  %vm3218 = vcmp.eq.s32.totalorder %v770, %v3058
  %vm3219 = vcmp.eq.s32.totalorder %v770, %v3059
  %vm3220 = vcmp.eq.s32.totalorder %v770, %v3060
  %vm3221 = vcmp.eq.s32.totalorder %v771, %v3057
  %vm3222 = vcmp.eq.s32.totalorder %v771, %v3058
  %vm3223 = vcmp.eq.s32.totalorder %v771, %v3059
  %vm3224 = vcmp.eq.s32.totalorder %v771, %v3060
  %vm3225 = vcmp.eq.s32.totalorder %v772, %v3057
  %vm3226 = vcmp.eq.s32.totalorder %v772, %v3058
  %vm3227 = vcmp.eq.s32.totalorder %v772, %v3059
  %vm3228 = vcmp.eq.s32.totalorder %v772, %v3060
  %vm3229 = vcmp.eq.s32.totalorder %v773, %v3057
  %vm3230 = vcmp.eq.s32.totalorder %v773, %v3058
  %vm3231 = vcmp.eq.s32.totalorder %v773, %v3059
  %vm3232 = vcmp.eq.s32.totalorder %v773, %v3060
  %vm3233 = vcmp.eq.s32.totalorder %v774, %v3057
  %vm3234 = vcmp.eq.s32.totalorder %v774, %v3058
  %vm3235 = vcmp.eq.s32.totalorder %v774, %v3059
  %vm3236 = vcmp.eq.s32.totalorder %v774, %v3060
  %vm3237 = vcmp.eq.s32.totalorder %v775, %v3057
  %vm3238 = vcmp.eq.s32.totalorder %v775, %v3058
  %vm3239 = vcmp.eq.s32.totalorder %v775, %v3059
  %vm3240 = vcmp.eq.s32.totalorder %v775, %v3060
  %vm3241 = vcmp.eq.s32.totalorder %v776, %v3057
  %vm3242 = vcmp.eq.s32.totalorder %v776, %v3058
  %vm3243 = vcmp.eq.s32.totalorder %v776, %v3059
  %vm3244 = vcmp.eq.s32.totalorder %v776, %v3060
  %vm3245 = vcmp.eq.s32.totalorder %v777, %v3057
  %vm3246 = vcmp.eq.s32.totalorder %v777, %v3058
  %vm3247 = vcmp.eq.s32.totalorder %v777, %v3059
  %vm3248 = vcmp.eq.s32.totalorder %v777, %v3060
  %vm3249 = vcmp.eq.s32.totalorder %v778, %v3057
  %vm3250 = vcmp.eq.s32.totalorder %v778, %v3058
  %vm3251 = vcmp.eq.s32.totalorder %v778, %v3059
  %vm3252 = vcmp.eq.s32.totalorder %v778, %v3060
  %vm3253 = vcmp.eq.s32.totalorder %v779, %v3057
  %vm3254 = vcmp.eq.s32.totalorder %v779, %v3058
  %vm3255 = vcmp.eq.s32.totalorder %v779, %v3059
  %vm3256 = vcmp.eq.s32.totalorder %v779, %v3060
  %vm3257 = vcmp.eq.s32.totalorder %v780, %v3057
  %vm3258 = vcmp.eq.s32.totalorder %v780, %v3058
  %vm3259 = vcmp.eq.s32.totalorder %v780, %v3059
  %vm3260 = vcmp.eq.s32.totalorder %v780, %v3060
  %vm3261 = vcmp.eq.s32.totalorder %v781, %v3057
  %vm3262 = vcmp.eq.s32.totalorder %v781, %v3058
  %vm3263 = vcmp.eq.s32.totalorder %v781, %v3059
  %vm3264 = vcmp.eq.s32.totalorder %v781, %v3060
  %vm3265 = vcmp.eq.s32.totalorder %v782, %v3057
  %vm3266 = vcmp.eq.s32.totalorder %v782, %v3058
  %vm3267 = vcmp.eq.s32.totalorder %v782, %v3059
  %vm3268 = vcmp.eq.s32.totalorder %v782, %v3060
  %vm3269 = vcmp.eq.s32.totalorder %v783, %v3057
  %vm3270 = vcmp.eq.s32.totalorder %v783, %v3058
  %vm3271 = vcmp.eq.s32.totalorder %v783, %v3059
  %vm3272 = vcmp.eq.s32.totalorder %v783, %v3060
  %vm3273 = vcmp.eq.s32.totalorder %v784, %v3057
  %vm3274 = vcmp.eq.s32.totalorder %v784, %v3058
  %vm3275 = vcmp.eq.s32.totalorder %v784, %v3059
  %vm3276 = vcmp.eq.s32.totalorder %v784, %v3060
  %vm3277 = vcmp.eq.s32.totalorder %v785, %v3057
  %vm3278 = vcmp.eq.s32.totalorder %v785, %v3058
  %vm3279 = vcmp.eq.s32.totalorder %v785, %v3059
  %vm3280 = vcmp.eq.s32.totalorder %v785, %v3060
  %vm3281 = vcmp.eq.s32.totalorder %v786, %v3057
  %vm3282 = vcmp.eq.s32.totalorder %v786, %v3058
  %vm3283 = vcmp.eq.s32.totalorder %v786, %v3059
  %vm3284 = vcmp.eq.s32.totalorder %v786, %v3060
  %vm3285 = vcmp.eq.s32.totalorder %v787, %v3057
  %vm3286 = vcmp.eq.s32.totalorder %v787, %v3058
  %vm3287 = vcmp.eq.s32.totalorder %v787, %v3059
  %vm3288 = vcmp.eq.s32.totalorder %v787, %v3060
  %vm3289 = vcmp.eq.s32.totalorder %v788, %v3057
  %vm3290 = vcmp.eq.s32.totalorder %v788, %v3058
  %vm3291 = vcmp.eq.s32.totalorder %v788, %v3059
  %vm3292 = vcmp.eq.s32.totalorder %v788, %v3060
  %vm3293 = vcmp.eq.s32.totalorder %v789, %v3057
  %vm3294 = vcmp.eq.s32.totalorder %v789, %v3058
  %vm3295 = vcmp.eq.s32.totalorder %v789, %v3059
  %vm3296 = vcmp.eq.s32.totalorder %v789, %v3060
  %vm3297 = vcmp.eq.s32.totalorder %v790, %v3057
  %vm3298 = vcmp.eq.s32.totalorder %v790, %v3058
  %vm3299 = vcmp.eq.s32.totalorder %v790, %v3059
  %vm3300 = vcmp.eq.s32.totalorder %v790, %v3060
  %vm3301 = vcmp.eq.s32.totalorder %v791, %v3057
  %vm3302 = vcmp.eq.s32.totalorder %v791, %v3058
  %vm3303 = vcmp.eq.s32.totalorder %v791, %v3059
  %vm3304 = vcmp.eq.s32.totalorder %v791, %v3060
  %vm3305 = vcmp.eq.s32.totalorder %v792, %v3057
  %vm3306 = vcmp.eq.s32.totalorder %v792, %v3058
  %vm3307 = vcmp.eq.s32.totalorder %v792, %v3059
  %vm3308 = vcmp.eq.s32.totalorder %v792, %v3060
  %vm3309 = vcmp.eq.s32.totalorder %v793, %v3057
  %vm3310 = vcmp.eq.s32.totalorder %v793, %v3058
  %vm3311 = vcmp.eq.s32.totalorder %v793, %v3059
  %vm3312 = vcmp.eq.s32.totalorder %v793, %v3060
  %vm3313 = vcmp.eq.s32.totalorder %v794, %v3057
  %vm3314 = vcmp.eq.s32.totalorder %v794, %v3058
  %vm3315 = vcmp.eq.s32.totalorder %v794, %v3059
  %vm3316 = vcmp.eq.s32.totalorder %v794, %v3060
  %vm3317 = vcmp.eq.s32.totalorder %v795, %v3057
  %vm3318 = vcmp.eq.s32.totalorder %v795, %v3058
  %vm3319 = vcmp.eq.s32.totalorder %v795, %v3059
  %vm3320 = vcmp.eq.s32.totalorder %v795, %v3060
  %vm3321 = vcmp.eq.s32.totalorder %v796, %v3057
  %vm3322 = vcmp.eq.s32.totalorder %v796, %v3058
  %vm3323 = vcmp.eq.s32.totalorder %v796, %v3059
  %vm3324 = vcmp.eq.s32.totalorder %v796, %v3060
  %vm3325 = vcmp.eq.s32.totalorder %v797, %v3057
  %vm3326 = vcmp.eq.s32.totalorder %v797, %v3058
  %vm3327 = vcmp.eq.s32.totalorder %v797, %v3059
  %vm3328 = vcmp.eq.s32.totalorder %v797, %v3060
  %vm3329 = vcmp.eq.s32.totalorder %v798, %v3057
  %vm3330 = vcmp.eq.s32.totalorder %v798, %v3058
  %vm3331 = vcmp.eq.s32.totalorder %v798, %v3059
  %vm3332 = vcmp.eq.s32.totalorder %v798, %v3060
  %vm3333 = vcmp.eq.s32.totalorder %v799, %v3057
  %vm3334 = vcmp.eq.s32.totalorder %v799, %v3058
  %vm3335 = vcmp.eq.s32.totalorder %v799, %v3059
  %vm3336 = vcmp.eq.s32.totalorder %v799, %v3060
  %vm3337 = vcmp.eq.s32.totalorder %v800, %v3057
  %vm3338 = vcmp.eq.s32.totalorder %v800, %v3058
  %vm3339 = vcmp.eq.s32.totalorder %v800, %v3059
  %vm3340 = vcmp.eq.s32.totalorder %v800, %v3060
  %vm3341 = vcmp.eq.s32.totalorder %v801, %v3057
  %vm3342 = vcmp.eq.s32.totalorder %v801, %v3058
  %vm3343 = vcmp.eq.s32.totalorder %v801, %v3059
  %vm3344 = vcmp.eq.s32.totalorder %v801, %v3060
  %vm3345 = vcmp.eq.s32.totalorder %v802, %v3057
  %vm3346 = vcmp.eq.s32.totalorder %v802, %v3058
  %vm3347 = vcmp.eq.s32.totalorder %v802, %v3059
  %vm3348 = vcmp.eq.s32.totalorder %v802, %v3060
  %vm3349 = vcmp.eq.s32.totalorder %v803, %v3057
  %vm3350 = vcmp.eq.s32.totalorder %v803, %v3058
  %vm3351 = vcmp.eq.s32.totalorder %v803, %v3059
  %vm3352 = vcmp.eq.s32.totalorder %v803, %v3060
  %vm3353 = vcmp.eq.s32.totalorder %v804, %v3057
  %vm3354 = vcmp.eq.s32.totalorder %v804, %v3058
  %vm3355 = vcmp.eq.s32.totalorder %v804, %v3059
  %vm3356 = vcmp.eq.s32.totalorder %v804, %v3060
  %vm3357 = vcmp.eq.s32.totalorder %v805, %v3057
  %vm3358 = vcmp.eq.s32.totalorder %v805, %v3058
  %vm3359 = vcmp.eq.s32.totalorder %v805, %v3059
  %vm3360 = vcmp.eq.s32.totalorder %v805, %v3060
  %vm3361 = vcmp.eq.s32.totalorder %v806, %v3057
  %vm3362 = vcmp.eq.s32.totalorder %v806, %v3058
  %vm3363 = vcmp.eq.s32.totalorder %v806, %v3059
  %vm3364 = vcmp.eq.s32.totalorder %v806, %v3060
  %vm3365 = vcmp.eq.s32.totalorder %v807, %v3057
  %vm3366 = vcmp.eq.s32.totalorder %v807, %v3058
  %vm3367 = vcmp.eq.s32.totalorder %v807, %v3059
  %vm3368 = vcmp.eq.s32.totalorder %v807, %v3060
  %vm3369 = vcmp.eq.s32.totalorder %v808, %v3057
  %vm3370 = vcmp.eq.s32.totalorder %v808, %v3058
  %vm3371 = vcmp.eq.s32.totalorder %v808, %v3059
  %vm3372 = vcmp.eq.s32.totalorder %v808, %v3060
  %vm3373 = vcmp.eq.s32.totalorder %v809, %v3057
  %vm3374 = vcmp.eq.s32.totalorder %v809, %v3058
  %vm3375 = vcmp.eq.s32.totalorder %v809, %v3059
  %vm3376 = vcmp.eq.s32.totalorder %v809, %v3060
  %vm3377 = vcmp.eq.s32.totalorder %v810, %v3057
  %vm3378 = vcmp.eq.s32.totalorder %v810, %v3058
  %vm3379 = vcmp.eq.s32.totalorder %v810, %v3059
  %vm3380 = vcmp.eq.s32.totalorder %v810, %v3060
  %vm3381 = vcmp.eq.s32.totalorder %v811, %v3057
  %vm3382 = vcmp.eq.s32.totalorder %v811, %v3058
  %vm3383 = vcmp.eq.s32.totalorder %v811, %v3059
  %vm3384 = vcmp.eq.s32.totalorder %v811, %v3060
  %vm3385 = vcmp.eq.s32.totalorder %v812, %v3057
  %vm3386 = vcmp.eq.s32.totalorder %v812, %v3058
  %vm3387 = vcmp.eq.s32.totalorder %v812, %v3059
  %vm3388 = vcmp.eq.s32.totalorder %v812, %v3060
  %vm3389 = vcmp.eq.s32.totalorder %v813, %v3057
  %vm3390 = vcmp.eq.s32.totalorder %v813, %v3058
  %vm3391 = vcmp.eq.s32.totalorder %v813, %v3059
  %vm3392 = vcmp.eq.s32.totalorder %v813, %v3060
  %vm3393 = vcmp.eq.s32.totalorder %v814, %v3057
  %vm3394 = vcmp.eq.s32.totalorder %v814, %v3058
  %vm3395 = vcmp.eq.s32.totalorder %v814, %v3059
  %vm3396 = vcmp.eq.s32.totalorder %v814, %v3060
  %vm3397 = vcmp.eq.s32.totalorder %v815, %v3057
  %vm3398 = vcmp.eq.s32.totalorder %v815, %v3058
  %vm3399 = vcmp.eq.s32.totalorder %v815, %v3059
  %vm3400 = vcmp.eq.s32.totalorder %v815, %v3060
  %vm3401 = vcmp.eq.s32.totalorder %v816, %v3057
  %vm3402 = vcmp.eq.s32.totalorder %v816, %v3058
  %vm3403 = vcmp.eq.s32.totalorder %v816, %v3059
  %vm3404 = vcmp.eq.s32.totalorder %v816, %v3060
  %v3405 = vsel %vm3061, %v2799, 0.0
  %v3406 = vsel %vm3062, %v2799, 0.0
  %v3407 = vsel %vm3063, %v2799, 0.0
  %v3408 = vsel %vm3064, %v2799, 0.0
  %v3409 = vsel %vm3065, %v2802, 0.0
  %v3410 = vsel %vm3066, %v2802, 0.0
  %v3411 = vsel %vm3067, %v2802, 0.0
  %v3412 = vsel %vm3068, %v2802, 0.0
  %v3413 = vsel %vm3069, %v2805, 0.0
  %v3414 = vsel %vm3070, %v2805, 0.0
  %v3415 = vsel %vm3071, %v2805, 0.0
  %v3416 = vsel %vm3072, %v2805, 0.0
  %v3417 = vsel %vm3073, %v2808, 0.0
  %v3418 = vsel %vm3074, %v2808, 0.0
  %v3419 = vsel %vm3075, %v2808, 0.0
  %v3420 = vsel %vm3076, %v2808, 0.0
  %v3421 = vsel %vm3077, %v2811, 0.0
  %v3422 = vsel %vm3078, %v2811, 0.0
  %v3423 = vsel %vm3079, %v2811, 0.0
  %v3424 = vsel %vm3080, %v2811, 0.0
  %v3425 = vsel %vm3081, %v2814, 0.0
  %v3426 = vsel %vm3082, %v2814, 0.0
  %v3427 = vsel %vm3083, %v2814, 0.0
  %v3428 = vsel %vm3084, %v2814, 0.0
  %v3429 = vsel %vm3085, %v2817, 0.0
  %v3430 = vsel %vm3086, %v2817, 0.0
  %v3431 = vsel %vm3087, %v2817, 0.0
  %v3432 = vsel %vm3088, %v2817, 0.0
  %v3433 = vsel %vm3089, %v2820, 0.0
  %v3434 = vsel %vm3090, %v2820, 0.0
  %v3435 = vsel %vm3091, %v2820, 0.0
  %v3436 = vsel %vm3092, %v2820, 0.0
  %v3437 = vsel %vm3093, %v2823, 0.0
  %v3438 = vsel %vm3094, %v2823, 0.0
  %v3439 = vsel %vm3095, %v2823, 0.0
  %v3440 = vsel %vm3096, %v2823, 0.0
  %v3441 = vsel %vm3097, %v2826, 0.0
  %v3442 = vsel %vm3098, %v2826, 0.0
  %v3443 = vsel %vm3099, %v2826, 0.0
  %v3444 = vsel %vm3100, %v2826, 0.0
  %v3445 = vsel %vm3101, %v2829, 0.0
  %v3446 = vsel %vm3102, %v2829, 0.0
  %v3447 = vsel %vm3103, %v2829, 0.0
  %v3448 = vsel %vm3104, %v2829, 0.0
  %v3449 = vsel %vm3105, %v2832, 0.0
  %v3450 = vsel %vm3106, %v2832, 0.0
  %v3451 = vsel %vm3107, %v2832, 0.0
  %v3452 = vsel %vm3108, %v2832, 0.0
  %v3453 = vsel %vm3109, %v2835, 0.0
  %v3454 = vsel %vm3110, %v2835, 0.0
  %v3455 = vsel %vm3111, %v2835, 0.0
  %v3456 = vsel %vm3112, %v2835, 0.0
  %v3457 = vsel %vm3113, %v2838, 0.0
  %v3458 = vsel %vm3114, %v2838, 0.0
  %v3459 = vsel %vm3115, %v2838, 0.0
  %v3460 = vsel %vm3116, %v2838, 0.0
  %v3461 = vsel %vm3117, %v2841, 0.0
  %v3462 = vsel %vm3118, %v2841, 0.0
  %v3463 = vsel %vm3119, %v2841, 0.0
  %v3464 = vsel %vm3120, %v2841, 0.0
  %v3465 = vsel %vm3121, %v2844, 0.0
  %v3466 = vsel %vm3122, %v2844, 0.0
  %v3467 = vsel %vm3123, %v2844, 0.0
  %v3468 = vsel %vm3124, %v2844, 0.0
  %v3469 = vsel %vm3125, %v2847, 0.0
  %v3470 = vsel %vm3126, %v2847, 0.0
  %v3471 = vsel %vm3127, %v2847, 0.0
  %v3472 = vsel %vm3128, %v2847, 0.0
  %v3473 = vsel %vm3129, %v2850, 0.0
  %v3474 = vsel %vm3130, %v2850, 0.0
  %v3475 = vsel %vm3131, %v2850, 0.0
  %v3476 = vsel %vm3132, %v2850, 0.0
  %v3477 = vsel %vm3133, %v2853, 0.0
  %v3478 = vsel %vm3134, %v2853, 0.0
  %v3479 = vsel %vm3135, %v2853, 0.0
  %v3480 = vsel %vm3136, %v2853, 0.0
  %v3481 = vsel %vm3137, %v2856, 0.0
  %v3482 = vsel %vm3138, %v2856, 0.0
  %v3483 = vsel %vm3139, %v2856, 0.0
  %v3484 = vsel %vm3140, %v2856, 0.0
  %v3485 = vsel %vm3141, %v2859, 0.0
  %v3486 = vsel %vm3142, %v2859, 0.0
  %v3487 = vsel %vm3143, %v2859, 0.0
  %v3488 = vsel %vm3144, %v2859, 0.0
  %v3489 = vsel %vm3145, %v2862, 0.0
  %v3490 = vsel %vm3146, %v2862, 0.0
  %v3491 = vsel %vm3147, %v2862, 0.0
  %v3492 = vsel %vm3148, %v2862, 0.0
  %v3493 = vsel %vm3149, %v2865, 0.0
  %v3494 = vsel %vm3150, %v2865, 0.0
  %v3495 = vsel %vm3151, %v2865, 0.0
  %v3496 = vsel %vm3152, %v2865, 0.0
  %v3497 = vsel %vm3153, %v2868, 0.0
  %v3498 = vsel %vm3154, %v2868, 0.0
  %v3499 = vsel %vm3155, %v2868, 0.0
  %v3500 = vsel %vm3156, %v2868, 0.0
  %v3501 = vsel %vm3157, %v2871, 0.0
  %v3502 = vsel %vm3158, %v2871, 0.0
  %v3503 = vsel %vm3159, %v2871, 0.0
  %v3504 = vsel %vm3160, %v2871, 0.0
  %v3505 = vsel %vm3161, %v2874, 0.0
  %v3506 = vsel %vm3162, %v2874, 0.0
  %v3507 = vsel %vm3163, %v2874, 0.0
  %v3508 = vsel %vm3164, %v2874, 0.0
  %v3509 = vsel %vm3165, %v2877, 0.0
  %v3510 = vsel %vm3166, %v2877, 0.0
  %v3511 = vsel %vm3167, %v2877, 0.0
  %v3512 = vsel %vm3168, %v2877, 0.0
  %v3513 = vsel %vm3169, %v2880, 0.0
  %v3514 = vsel %vm3170, %v2880, 0.0
  %v3515 = vsel %vm3171, %v2880, 0.0
  %v3516 = vsel %vm3172, %v2880, 0.0
  %v3517 = vsel %vm3173, %v2883, 0.0
  %v3518 = vsel %vm3174, %v2883, 0.0
  %v3519 = vsel %vm3175, %v2883, 0.0
  %v3520 = vsel %vm3176, %v2883, 0.0
  %v3521 = vsel %vm3177, %v2886, 0.0
  %v3522 = vsel %vm3178, %v2886, 0.0
  %v3523 = vsel %vm3179, %v2886, 0.0
  %v3524 = vsel %vm3180, %v2886, 0.0
  %v3525 = vsel %vm3181, %v2889, 0.0
  %v3526 = vsel %vm3182, %v2889, 0.0
  %v3527 = vsel %vm3183, %v2889, 0.0
  %v3528 = vsel %vm3184, %v2889, 0.0
  %v3529 = vsel %vm3185, %v2892, 0.0
  %v3530 = vsel %vm3186, %v2892, 0.0
  %v3531 = vsel %vm3187, %v2892, 0.0
  %v3532 = vsel %vm3188, %v2892, 0.0
  %v3533 = vsel %vm3189, %v2895, 0.0
  %v3534 = vsel %vm3190, %v2895, 0.0
  %v3535 = vsel %vm3191, %v2895, 0.0
  %v3536 = vsel %vm3192, %v2895, 0.0
  %v3537 = vsel %vm3193, %v2898, 0.0
  %v3538 = vsel %vm3194, %v2898, 0.0
  %v3539 = vsel %vm3195, %v2898, 0.0
  %v3540 = vsel %vm3196, %v2898, 0.0
  %v3541 = vsel %vm3197, %v2901, 0.0
  %v3542 = vsel %vm3198, %v2901, 0.0
  %v3543 = vsel %vm3199, %v2901, 0.0
  %v3544 = vsel %vm3200, %v2901, 0.0
  %v3545 = vsel %vm3201, %v2904, 0.0
  %v3546 = vsel %vm3202, %v2904, 0.0
  %v3547 = vsel %vm3203, %v2904, 0.0
  %v3548 = vsel %vm3204, %v2904, 0.0
  %v3549 = vsel %vm3205, %v2907, 0.0
  %v3550 = vsel %vm3206, %v2907, 0.0
  %v3551 = vsel %vm3207, %v2907, 0.0
  %v3552 = vsel %vm3208, %v2907, 0.0
  %v3553 = vsel %vm3209, %v2910, 0.0
  %v3554 = vsel %vm3210, %v2910, 0.0
  %v3555 = vsel %vm3211, %v2910, 0.0
  %v3556 = vsel %vm3212, %v2910, 0.0
  %v3557 = vsel %vm3213, %v2913, 0.0
  %v3558 = vsel %vm3214, %v2913, 0.0
  %v3559 = vsel %vm3215, %v2913, 0.0
  %v3560 = vsel %vm3216, %v2913, 0.0
  %v3561 = vsel %vm3217, %v2916, 0.0
  %v3562 = vsel %vm3218, %v2916, 0.0
  %v3563 = vsel %vm3219, %v2916, 0.0
  %v3564 = vsel %vm3220, %v2916, 0.0
  %v3565 = vsel %vm3221, %v2919, 0.0
  %v3566 = vsel %vm3222, %v2919, 0.0
  %v3567 = vsel %vm3223, %v2919, 0.0
  %v3568 = vsel %vm3224, %v2919, 0.0
  %v3569 = vsel %vm3225, %v2922, 0.0
  %v3570 = vsel %vm3226, %v2922, 0.0
  %v3571 = vsel %vm3227, %v2922, 0.0
  %v3572 = vsel %vm3228, %v2922, 0.0
  %v3573 = vsel %vm3229, %v2925, 0.0
  %v3574 = vsel %vm3230, %v2925, 0.0
  %v3575 = vsel %vm3231, %v2925, 0.0
  %v3576 = vsel %vm3232, %v2925, 0.0
  %v3577 = vsel %vm3233, %v2928, 0.0
  %v3578 = vsel %vm3234, %v2928, 0.0
  %v3579 = vsel %vm3235, %v2928, 0.0
  %v3580 = vsel %vm3236, %v2928, 0.0
  %v3581 = vsel %vm3237, %v2931, 0.0
  %v3582 = vsel %vm3238, %v2931, 0.0
  %v3583 = vsel %vm3239, %v2931, 0.0
  %v3584 = vsel %vm3240, %v2931, 0.0
  %v3585 = vsel %vm3241, %v2934, 0.0
  %v3586 = vsel %vm3242, %v2934, 0.0
  %v3587 = vsel %vm3243, %v2934, 0.0
  %v3588 = vsel %vm3244, %v2934, 0.0
  %v3589 = vsel %vm3245, %v2937, 0.0
  %v3590 = vsel %vm3246, %v2937, 0.0
  %v3591 = vsel %vm3247, %v2937, 0.0
  %v3592 = vsel %vm3248, %v2937, 0.0
  %v3593 = vsel %vm3249, %v2940, 0.0
  %v3594 = vsel %vm3250, %v2940, 0.0
  %v3595 = vsel %vm3251, %v2940, 0.0
  %v3596 = vsel %vm3252, %v2940, 0.0
  %v3597 = vsel %vm3253, %v2943, 0.0
  %v3598 = vsel %vm3254, %v2943, 0.0
  %v3599 = vsel %vm3255, %v2943, 0.0
  %v3600 = vsel %vm3256, %v2943, 0.0
  %v3601 = vsel %vm3257, %v2946, 0.0
  %v3602 = vsel %vm3258, %v2946, 0.0
  %v3603 = vsel %vm3259, %v2946, 0.0
  %v3604 = vsel %vm3260, %v2946, 0.0
  %v3605 = vsel %vm3261, %v2949, 0.0
  %v3606 = vsel %vm3262, %v2949, 0.0
  %v3607 = vsel %vm3263, %v2949, 0.0
  %v3608 = vsel %vm3264, %v2949, 0.0
  %v3609 = vsel %vm3265, %v2952, 0.0
  %v3610 = vsel %vm3266, %v2952, 0.0
  %v3611 = vsel %vm3267, %v2952, 0.0
  %v3612 = vsel %vm3268, %v2952, 0.0
  %v3613 = vsel %vm3269, %v2955, 0.0
  %v3614 = vsel %vm3270, %v2955, 0.0
  %v3615 = vsel %vm3271, %v2955, 0.0
  %v3616 = vsel %vm3272, %v2955, 0.0
  %v3617 = vsel %vm3273, %v2958, 0.0
  %v3618 = vsel %vm3274, %v2958, 0.0
  %v3619 = vsel %vm3275, %v2958, 0.0
  %v3620 = vsel %vm3276, %v2958, 0.0
  %v3621 = vsel %vm3277, %v2961, 0.0
  %v3622 = vsel %vm3278, %v2961, 0.0
  %v3623 = vsel %vm3279, %v2961, 0.0
  %v3624 = vsel %vm3280, %v2961, 0.0
  %v3625 = vsel %vm3281, %v2964, 0.0
  %v3626 = vsel %vm3282, %v2964, 0.0
  %v3627 = vsel %vm3283, %v2964, 0.0
  %v3628 = vsel %vm3284, %v2964, 0.0
  %v3629 = vsel %vm3285, %v2967, 0.0
  %v3630 = vsel %vm3286, %v2967, 0.0
  %v3631 = vsel %vm3287, %v2967, 0.0
  %v3632 = vsel %vm3288, %v2967, 0.0
  %v3633 = vsel %vm3289, %v2970, 0.0
  %v3634 = vsel %vm3290, %v2970, 0.0
  %v3635 = vsel %vm3291, %v2970, 0.0
  %v3636 = vsel %vm3292, %v2970, 0.0
  %v3637 = vsel %vm3293, %v2973, 0.0
  %v3638 = vsel %vm3294, %v2973, 0.0
  %v3639 = vsel %vm3295, %v2973, 0.0
  %v3640 = vsel %vm3296, %v2973, 0.0
  %v3641 = vsel %vm3297, %v2976, 0.0
  %v3642 = vsel %vm3298, %v2976, 0.0
  %v3643 = vsel %vm3299, %v2976, 0.0
  %v3644 = vsel %vm3300, %v2976, 0.0
  %v3645 = vsel %vm3301, %v2979, 0.0
  %v3646 = vsel %vm3302, %v2979, 0.0
  %v3647 = vsel %vm3303, %v2979, 0.0
  %v3648 = vsel %vm3304, %v2979, 0.0
  %v3649 = vsel %vm3305, %v2982, 0.0
  %v3650 = vsel %vm3306, %v2982, 0.0
  %v3651 = vsel %vm3307, %v2982, 0.0
  %v3652 = vsel %vm3308, %v2982, 0.0
  %v3653 = vsel %vm3309, %v2985, 0.0
  %v3654 = vsel %vm3310, %v2985, 0.0
  %v3655 = vsel %vm3311, %v2985, 0.0
  %v3656 = vsel %vm3312, %v2985, 0.0
  %v3657 = vsel %vm3313, %v2988, 0.0
  %v3658 = vsel %vm3314, %v2988, 0.0
  %v3659 = vsel %vm3315, %v2988, 0.0
  %v3660 = vsel %vm3316, %v2988, 0.0
  %v3661 = vsel %vm3317, %v2991, 0.0
  %v3662 = vsel %vm3318, %v2991, 0.0
  %v3663 = vsel %vm3319, %v2991, 0.0
  %v3664 = vsel %vm3320, %v2991, 0.0
  %v3665 = vsel %vm3321, %v2994, 0.0
  %v3666 = vsel %vm3322, %v2994, 0.0
  %v3667 = vsel %vm3323, %v2994, 0.0
  %v3668 = vsel %vm3324, %v2994, 0.0
  %v3669 = vsel %vm3325, %v2997, 0.0
  %v3670 = vsel %vm3326, %v2997, 0.0
  %v3671 = vsel %vm3327, %v2997, 0.0
  %v3672 = vsel %vm3328, %v2997, 0.0
  %v3673 = vsel %vm3329, %v3000, 0.0
  %v3674 = vsel %vm3330, %v3000, 0.0
  %v3675 = vsel %vm3331, %v3000, 0.0
  %v3676 = vsel %vm3332, %v3000, 0.0
  %v3677 = vsel %vm3333, %v3003, 0.0
  %v3678 = vsel %vm3334, %v3003, 0.0
  %v3679 = vsel %vm3335, %v3003, 0.0
  %v3680 = vsel %vm3336, %v3003, 0.0
  %v3681 = vsel %vm3337, %v3006, 0.0
  %v3682 = vsel %vm3338, %v3006, 0.0
  %v3683 = vsel %vm3339, %v3006, 0.0
  %v3684 = vsel %vm3340, %v3006, 0.0
  %v3685 = vsel %vm3341, %v3009, 0.0
  %v3686 = vsel %vm3342, %v3009, 0.0
  %v3687 = vsel %vm3343, %v3009, 0.0
  %v3688 = vsel %vm3344, %v3009, 0.0
  %v3689 = vsel %vm3345, %v3012, 0.0
  %v3690 = vsel %vm3346, %v3012, 0.0
  %v3691 = vsel %vm3347, %v3012, 0.0
  %v3692 = vsel %vm3348, %v3012, 0.0
  %v3693 = vsel %vm3349, %v3015, 0.0
  %v3694 = vsel %vm3350, %v3015, 0.0
  %v3695 = vsel %vm3351, %v3015, 0.0
  %v3696 = vsel %vm3352, %v3015, 0.0
  %v3697 = vsel %vm3353, %v3018, 0.0
  %v3698 = vsel %vm3354, %v3018, 0.0
  %v3699 = vsel %vm3355, %v3018, 0.0
  %v3700 = vsel %vm3356, %v3018, 0.0
  %v3701 = vsel %vm3357, %v3021, 0.0
  %v3702 = vsel %vm3358, %v3021, 0.0
  %v3703 = vsel %vm3359, %v3021, 0.0
  %v3704 = vsel %vm3360, %v3021, 0.0
  %v3705 = vsel %vm3361, %v3024, 0.0
  %v3706 = vsel %vm3362, %v3024, 0.0
  %v3707 = vsel %vm3363, %v3024, 0.0
  %v3708 = vsel %vm3364, %v3024, 0.0
  %v3709 = vsel %vm3365, %v3027, 0.0
  %v3710 = vsel %vm3366, %v3027, 0.0
  %v3711 = vsel %vm3367, %v3027, 0.0
  %v3712 = vsel %vm3368, %v3027, 0.0
  %v3713 = vsel %vm3369, %v3030, 0.0
  %v3714 = vsel %vm3370, %v3030, 0.0
  %v3715 = vsel %vm3371, %v3030, 0.0
  %v3716 = vsel %vm3372, %v3030, 0.0
  %v3717 = vsel %vm3373, %v3033, 0.0
  %v3718 = vsel %vm3374, %v3033, 0.0
  %v3719 = vsel %vm3375, %v3033, 0.0
  %v3720 = vsel %vm3376, %v3033, 0.0
  %v3721 = vsel %vm3377, %v3036, 0.0
  %v3722 = vsel %vm3378, %v3036, 0.0
  %v3723 = vsel %vm3379, %v3036, 0.0
  %v3724 = vsel %vm3380, %v3036, 0.0
  %v3725 = vsel %vm3381, %v3039, 0.0
  %v3726 = vsel %vm3382, %v3039, 0.0
  %v3727 = vsel %vm3383, %v3039, 0.0
  %v3728 = vsel %vm3384, %v3039, 0.0
  %v3729 = vsel %vm3385, %v3042, 0.0
  %v3730 = vsel %vm3386, %v3042, 0.0
  %v3731 = vsel %vm3387, %v3042, 0.0
  %v3732 = vsel %vm3388, %v3042, 0.0
  %v3733 = vsel %vm3389, %v3045, 0.0
  %v3734 = vsel %vm3390, %v3045, 0.0
  %v3735 = vsel %vm3391, %v3045, 0.0
  %v3736 = vsel %vm3392, %v3045, 0.0
  %v3737 = vsel %vm3393, %v3048, 0.0
  %v3738 = vsel %vm3394, %v3048, 0.0
  %v3739 = vsel %vm3395, %v3048, 0.0
  %v3740 = vsel %vm3396, %v3048, 0.0
  %v3741 = vsel %vm3397, %v3051, 0.0
  %v3742 = vsel %vm3398, %v3051, 0.0
  %v3743 = vsel %vm3399, %v3051, 0.0
  %v3744 = vsel %vm3400, %v3051, 0.0
  %v3745 = vsel %vm3401, %v3054, 0.0
  %v3746 = vsel %vm3402, %v3054, 0.0
  %v3747 = vsel %vm3403, %v3054, 0.0
  %v3748 = vsel %vm3404, %v3054, 0.0
  %v3749 = vadd.f32 %v3405, %v3409
  %v3750 = vadd.f32 %v3749, %v3413
  %v3751 = vadd.f32 %v3750, %v3417
  %v3752 = vadd.f32 %v3751, %v3421
  %v3753 = vadd.f32 %v3752, %v3425
  %v3754 = vadd.f32 %v3753, %v3429
  %v3755 = vadd.f32 %v3754, %v3433
  %v3756 = vadd.f32 %v3755, %v3437
  %v3757 = vadd.f32 %v3756, %v3441
  %v3758 = vadd.f32 %v3757, %v3445
  %v3759 = vadd.f32 %v3758, %v3449
  %v3760 = vadd.f32 %v3759, %v3453
  %v3761 = vadd.f32 %v3760, %v3457
  %v3762 = vadd.f32 %v3761, %v3461
  %v3763 = vadd.f32 %v3762, %v3465
  %v3764 = vadd.f32 %v3763, %v3469
  %v3765 = vadd.f32 %v3764, %v3473
  %v3766 = vadd.f32 %v3765, %v3477
  %v3767 = vadd.f32 %v3766, %v3481
  %v3768 = vadd.f32 %v3767, %v3485
  %v3769 = vadd.f32 %v3768, %v3489
  %v3770 = vadd.f32 %v3769, %v3493
  %v3771 = vadd.f32 %v3770, %v3497
  %v3772 = vadd.f32 %v3771, %v3501
  %v3773 = vadd.f32 %v3772, %v3505
  %v3774 = vadd.f32 %v3773, %v3509
  %v3775 = vadd.f32 %v3774, %v3513
  %v3776 = vadd.f32 %v3775, %v3517
  %v3777 = vadd.f32 %v3776, %v3521
  %v3778 = vadd.f32 %v3777, %v3525
  %v3779 = vadd.f32 %v3778, %v3529
  %v3780 = vadd.f32 %v3779, %v3533
  %v3781 = vadd.f32 %v3780, %v3537
  %v3782 = vadd.f32 %v3781, %v3541
  %v3783 = vadd.f32 %v3782, %v3545
  %v3784 = vadd.f32 %v3783, %v3549
  %v3785 = vadd.f32 %v3784, %v3553
  %v3786 = vadd.f32 %v3785, %v3557
  %v3787 = vadd.f32 %v3786, %v3561
  %v3788 = vadd.f32 %v3787, %v3565
  %v3789 = vadd.f32 %v3788, %v3569
  %v3790 = vadd.f32 %v3789, %v3573
  %v3791 = vadd.f32 %v3790, %v3577
  %v3792 = vadd.f32 %v3791, %v3581
  %v3793 = vadd.f32 %v3792, %v3585
  %v3794 = vadd.f32 %v3793, %v3589
  %v3795 = vadd.f32 %v3794, %v3593
  %v3796 = vadd.f32 %v3795, %v3597
  %v3797 = vadd.f32 %v3796, %v3601
  %v3798 = vadd.f32 %v3797, %v3605
  %v3799 = vadd.f32 %v3798, %v3609
  %v3800 = vadd.f32 %v3799, %v3613
  %v3801 = vadd.f32 %v3800, %v3617
  %v3802 = vadd.f32 %v3801, %v3621
  %v3803 = vadd.f32 %v3802, %v3625
  %v3804 = vadd.f32 %v3803, %v3629
  %v3805 = vadd.f32 %v3804, %v3633
  %v3806 = vadd.f32 %v3805, %v3637
  %v3807 = vadd.f32 %v3806, %v3641
  %v3808 = vadd.f32 %v3807, %v3645
  %v3809 = vadd.f32 %v3808, %v3649
  %v3810 = vadd.f32 %v3809, %v3653
  %v3811 = vadd.f32 %v3810, %v3657
  %v3812 = vadd.f32 %v3811, %v3661
  %v3813 = vadd.f32 %v3812, %v3665
  %v3814 = vadd.f32 %v3813, %v3669
  %v3815 = vadd.f32 %v3814, %v3673
  %v3816 = vadd.f32 %v3815, %v3677
  %v3817 = vadd.f32 %v3816, %v3681
  %v3818 = vadd.f32 %v3817, %v3685
  %v3819 = vadd.f32 %v3818, %v3689
  %v3820 = vadd.f32 %v3819, %v3693
  %v3821 = vadd.f32 %v3820, %v3697
  %v3822 = vadd.f32 %v3821, %v3701
  %v3823 = vadd.f32 %v3822, %v3705
  %v3824 = vadd.f32 %v3823, %v3709
  %v3825 = vadd.f32 %v3824, %v3713
  %v3826 = vadd.f32 %v3825, %v3717
  %v3827 = vadd.f32 %v3826, %v3721
  %v3828 = vadd.f32 %v3827, %v3725
  %v3829 = vadd.f32 %v3828, %v3729
  %v3830 = vadd.f32 %v3829, %v3733
  %v3831 = vadd.f32 %v3830, %v3737
  %v3832 = vadd.f32 %v3831, %v3741
  %v3833 = vadd.f32 %v3832, %v3745
  %v3834 = vrot.slane %v3833, 4
  %v3835 = vadd.f32 %v3833, %v3834
  %v3836 = vrot.slane %v3835, 2
  %v3837 = vadd.f32 %v3835, %v3836
  %v3838 = vrot.slane %v3837, 1
  %v3839 = vadd.f32 %v3837, %v3838
  %v3840 = vadd.f32 %v3406, %v3410
  %v3841 = vadd.f32 %v3840, %v3414
  %v3842 = vadd.f32 %v3841, %v3418
  %v3843 = vadd.f32 %v3842, %v3422
  %v3844 = vadd.f32 %v3843, %v3426
  %v3845 = vadd.f32 %v3844, %v3430
  %v3846 = vadd.f32 %v3845, %v3434
  %v3847 = vadd.f32 %v3846, %v3438
  %v3848 = vadd.f32 %v3847, %v3442
  %v3849 = vadd.f32 %v3848, %v3446
  %v3850 = vadd.f32 %v3849, %v3450
  %v3851 = vadd.f32 %v3850, %v3454
  %v3852 = vadd.f32 %v3851, %v3458
  %v3853 = vadd.f32 %v3852, %v3462
  %v3854 = vadd.f32 %v3853, %v3466
  %v3855 = vadd.f32 %v3854, %v3470
  %v3856 = vadd.f32 %v3855, %v3474
  %v3857 = vadd.f32 %v3856, %v3478
  %v3858 = vadd.f32 %v3857, %v3482
  %v3859 = vadd.f32 %v3858, %v3486
  %v3860 = vadd.f32 %v3859, %v3490
  %v3861 = vadd.f32 %v3860, %v3494
  %v3862 = vadd.f32 %v3861, %v3498
  %v3863 = vadd.f32 %v3862, %v3502
  %v3864 = vadd.f32 %v3863, %v3506
  %v3865 = vadd.f32 %v3864, %v3510
  %v3866 = vadd.f32 %v3865, %v3514
  %v3867 = vadd.f32 %v3866, %v3518
  %v3868 = vadd.f32 %v3867, %v3522
  %v3869 = vadd.f32 %v3868, %v3526
  %v3870 = vadd.f32 %v3869, %v3530
  %v3871 = vadd.f32 %v3870, %v3534
  %v3872 = vadd.f32 %v3871, %v3538
  %v3873 = vadd.f32 %v3872, %v3542
  %v3874 = vadd.f32 %v3873, %v3546
  %v3875 = vadd.f32 %v3874, %v3550
  %v3876 = vadd.f32 %v3875, %v3554
  %v3877 = vadd.f32 %v3876, %v3558
  %v3878 = vadd.f32 %v3877, %v3562
  %v3879 = vadd.f32 %v3878, %v3566
  %v3880 = vadd.f32 %v3879, %v3570
  %v3881 = vadd.f32 %v3880, %v3574
  %v3882 = vadd.f32 %v3881, %v3578
  %v3883 = vadd.f32 %v3882, %v3582
  %v3884 = vadd.f32 %v3883, %v3586
  %v3885 = vadd.f32 %v3884, %v3590
  %v3886 = vadd.f32 %v3885, %v3594
  %v3887 = vadd.f32 %v3886, %v3598
  %v3888 = vadd.f32 %v3887, %v3602
  %v3889 = vadd.f32 %v3888, %v3606
  %v3890 = vadd.f32 %v3889, %v3610
  %v3891 = vadd.f32 %v3890, %v3614
  %v3892 = vadd.f32 %v3891, %v3618
  %v3893 = vadd.f32 %v3892, %v3622
  %v3894 = vadd.f32 %v3893, %v3626
  %v3895 = vadd.f32 %v3894, %v3630
  %v3896 = vadd.f32 %v3895, %v3634
  %v3897 = vadd.f32 %v3896, %v3638
  %v3898 = vadd.f32 %v3897, %v3642
  %v3899 = vadd.f32 %v3898, %v3646
  %v3900 = vadd.f32 %v3899, %v3650
  %v3901 = vadd.f32 %v3900, %v3654
  %v3902 = vadd.f32 %v3901, %v3658
  %v3903 = vadd.f32 %v3902, %v3662
  %v3904 = vadd.f32 %v3903, %v3666
  %v3905 = vadd.f32 %v3904, %v3670
  %v3906 = vadd.f32 %v3905, %v3674
  %v3907 = vadd.f32 %v3906, %v3678
  %v3908 = vadd.f32 %v3907, %v3682
  %v3909 = vadd.f32 %v3908, %v3686
  %v3910 = vadd.f32 %v3909, %v3690
  %v3911 = vadd.f32 %v3910, %v3694
  %v3912 = vadd.f32 %v3911, %v3698
  %v3913 = vadd.f32 %v3912, %v3702
  %v3914 = vadd.f32 %v3913, %v3706
  %v3915 = vadd.f32 %v3914, %v3710
  %v3916 = vadd.f32 %v3915, %v3714
  %v3917 = vadd.f32 %v3916, %v3718
  %v3918 = vadd.f32 %v3917, %v3722
  %v3919 = vadd.f32 %v3918, %v3726
  %v3920 = vadd.f32 %v3919, %v3730
  %v3921 = vadd.f32 %v3920, %v3734
  %v3922 = vadd.f32 %v3921, %v3738
  %v3923 = vadd.f32 %v3922, %v3742
  %v3924 = vadd.f32 %v3923, %v3746
  %v3925 = vrot.slane %v3924, 4
  %v3926 = vadd.f32 %v3924, %v3925
  %v3927 = vrot.slane %v3926, 2
  %v3928 = vadd.f32 %v3926, %v3927
  %v3929 = vrot.slane %v3928, 1
  %v3930 = vadd.f32 %v3928, %v3929
  %v3931 = vadd.f32 %v3407, %v3411
  %v3932 = vadd.f32 %v3931, %v3415
  %v3933 = vadd.f32 %v3932, %v3419
  %v3934 = vadd.f32 %v3933, %v3423
  %v3935 = vadd.f32 %v3934, %v3427
  %v3936 = vadd.f32 %v3935, %v3431
  %v3937 = vadd.f32 %v3936, %v3435
  %v3938 = vadd.f32 %v3937, %v3439
  %v3939 = vadd.f32 %v3938, %v3443
  %v3940 = vadd.f32 %v3939, %v3447
  %v3941 = vadd.f32 %v3940, %v3451
  %v3942 = vadd.f32 %v3941, %v3455
  %v3943 = vadd.f32 %v3942, %v3459
  %v3944 = vadd.f32 %v3943, %v3463
  %v3945 = vadd.f32 %v3944, %v3467
  %v3946 = vadd.f32 %v3945, %v3471
  %v3947 = vadd.f32 %v3946, %v3475
  %v3948 = vadd.f32 %v3947, %v3479
  %v3949 = vadd.f32 %v3948, %v3483
  %v3950 = vadd.f32 %v3949, %v3487
  %v3951 = vadd.f32 %v3950, %v3491
  %v3952 = vadd.f32 %v3951, %v3495
  %v3953 = vadd.f32 %v3952, %v3499
  %v3954 = vadd.f32 %v3953, %v3503
  %v3955 = vadd.f32 %v3954, %v3507
  %v3956 = vadd.f32 %v3955, %v3511
  %v3957 = vadd.f32 %v3956, %v3515
  %v3958 = vadd.f32 %v3957, %v3519
  %v3959 = vadd.f32 %v3958, %v3523
  %v3960 = vadd.f32 %v3959, %v3527
  %v3961 = vadd.f32 %v3960, %v3531
  %v3962 = vadd.f32 %v3961, %v3535
  %v3963 = vadd.f32 %v3962, %v3539
  %v3964 = vadd.f32 %v3963, %v3543
  %v3965 = vadd.f32 %v3964, %v3547
  %v3966 = vadd.f32 %v3965, %v3551
  %v3967 = vadd.f32 %v3966, %v3555
  %v3968 = vadd.f32 %v3967, %v3559
  %v3969 = vadd.f32 %v3968, %v3563
  %v3970 = vadd.f32 %v3969, %v3567
  %v3971 = vadd.f32 %v3970, %v3571
  %v3972 = vadd.f32 %v3971, %v3575
  %v3973 = vadd.f32 %v3972, %v3579
  %v3974 = vadd.f32 %v3973, %v3583
  %v3975 = vadd.f32 %v3974, %v3587
  %v3976 = vadd.f32 %v3975, %v3591
  %v3977 = vadd.f32 %v3976, %v3595
  %v3978 = vadd.f32 %v3977, %v3599
  %v3979 = vadd.f32 %v3978, %v3603
  %v3980 = vadd.f32 %v3979, %v3607
  %v3981 = vadd.f32 %v3980, %v3611
  %v3982 = vadd.f32 %v3981, %v3615
  %v3983 = vadd.f32 %v3982, %v3619
  %v3984 = vadd.f32 %v3983, %v3623
  %v3985 = vadd.f32 %v3984, %v3627
  %v3986 = vadd.f32 %v3985, %v3631
  %v3987 = vadd.f32 %v3986, %v3635
  %v3988 = vadd.f32 %v3987, %v3639
  %v3989 = vadd.f32 %v3988, %v3643
  %v3990 = vadd.f32 %v3989, %v3647
  %v3991 = vadd.f32 %v3990, %v3651
  %v3992 = vadd.f32 %v3991, %v3655
  %v3993 = vadd.f32 %v3992, %v3659
  %v3994 = vadd.f32 %v3993, %v3663
  %v3995 = vadd.f32 %v3994, %v3667
  %v3996 = vadd.f32 %v3995, %v3671
  %v3997 = vadd.f32 %v3996, %v3675
  %v3998 = vadd.f32 %v3997, %v3679
  %v3999 = vadd.f32 %v3998, %v3683
  %v4000 = vadd.f32 %v3999, %v3687
  %v4001 = vadd.f32 %v4000, %v3691
  %v4002 = vadd.f32 %v4001, %v3695
  %v4003 = vadd.f32 %v4002, %v3699
  %v4004 = vadd.f32 %v4003, %v3703
  %v4005 = vadd.f32 %v4004, %v3707
  %v4006 = vadd.f32 %v4005, %v3711
  %v4007 = vadd.f32 %v4006, %v3715
  %v4008 = vadd.f32 %v4007, %v3719
  %v4009 = vadd.f32 %v4008, %v3723
  %v4010 = vadd.f32 %v4009, %v3727
  %v4011 = vadd.f32 %v4010, %v3731
  %v4012 = vadd.f32 %v4011, %v3735
  %v4013 = vadd.f32 %v4012, %v3739
  %v4014 = vadd.f32 %v4013, %v3743
  %v4015 = vadd.f32 %v4014, %v3747
  %v4016 = vrot.slane %v4015, 4
  %v4017 = vadd.f32 %v4015, %v4016
  %v4018 = vrot.slane %v4017, 2
  %v4019 = vadd.f32 %v4017, %v4018
  %v4020 = vrot.slane %v4019, 1
  %v4021 = vadd.f32 %v4019, %v4020
  %v4022 = vadd.f32 %v3408, %v3412
  %v4023 = vadd.f32 %v4022, %v3416
  %v4024 = vadd.f32 %v4023, %v3420
  %v4025 = vadd.f32 %v4024, %v3424
  %v4026 = vadd.f32 %v4025, %v3428
  %v4027 = vadd.f32 %v4026, %v3432
  %v4028 = vadd.f32 %v4027, %v3436
  %v4029 = vadd.f32 %v4028, %v3440
  %v4030 = vadd.f32 %v4029, %v3444
  %v4031 = vadd.f32 %v4030, %v3448
  %v4032 = vadd.f32 %v4031, %v3452
  %v4033 = vadd.f32 %v4032, %v3456
  %v4034 = vadd.f32 %v4033, %v3460
  %v4035 = vadd.f32 %v4034, %v3464
  %v4036 = vadd.f32 %v4035, %v3468
  %v4037 = vadd.f32 %v4036, %v3472
  %v4038 = vadd.f32 %v4037, %v3476
  %v4039 = vadd.f32 %v4038, %v3480
  %v4040 = vadd.f32 %v4039, %v3484
  %v4041 = vadd.f32 %v4040, %v3488
  %v4042 = vadd.f32 %v4041, %v3492
  %v4043 = vadd.f32 %v4042, %v3496
  %v4044 = vadd.f32 %v4043, %v3500
  %v4045 = vadd.f32 %v4044, %v3504
  %v4046 = vadd.f32 %v4045, %v3508
  %v4047 = vadd.f32 %v4046, %v3512
  %v4048 = vadd.f32 %v4047, %v3516
  %v4049 = vadd.f32 %v4048, %v3520
  %v4050 = vadd.f32 %v4049, %v3524
  %v4051 = vadd.f32 %v4050, %v3528
  %v4052 = vadd.f32 %v4051, %v3532
  %v4053 = vadd.f32 %v4052, %v3536
  %v4054 = vadd.f32 %v4053, %v3540
  %v4055 = vadd.f32 %v4054, %v3544
  %v4056 = vadd.f32 %v4055, %v3548
  %v4057 = vadd.f32 %v4056, %v3552
  %v4058 = vadd.f32 %v4057, %v3556
  %v4059 = vadd.f32 %v4058, %v3560
  %v4060 = vadd.f32 %v4059, %v3564
  %v4061 = vadd.f32 %v4060, %v3568
  %v4062 = vadd.f32 %v4061, %v3572
  %v4063 = vadd.f32 %v4062, %v3576
  %v4064 = vadd.f32 %v4063, %v3580
  %v4065 = vadd.f32 %v4064, %v3584
  %v4066 = vadd.f32 %v4065, %v3588
  %v4067 = vadd.f32 %v4066, %v3592
  %v4068 = vadd.f32 %v4067, %v3596
  %v4069 = vadd.f32 %v4068, %v3600
  %v4070 = vadd.f32 %v4069, %v3604
  %v4071 = vadd.f32 %v4070, %v3608
  %v4072 = vadd.f32 %v4071, %v3612
  %v4073 = vadd.f32 %v4072, %v3616
  %v4074 = vadd.f32 %v4073, %v3620
  %v4075 = vadd.f32 %v4074, %v3624
  %v4076 = vadd.f32 %v4075, %v3628
  %v4077 = vadd.f32 %v4076, %v3632
  %v4078 = vadd.f32 %v4077, %v3636
  %v4079 = vadd.f32 %v4078, %v3640
  %v4080 = vadd.f32 %v4079, %v3644
  %v4081 = vadd.f32 %v4080, %v3648
  %v4082 = vadd.f32 %v4081, %v3652
  %v4083 = vadd.f32 %v4082, %v3656
  %v4084 = vadd.f32 %v4083, %v3660
  %v4085 = vadd.f32 %v4084, %v3664
  %v4086 = vadd.f32 %v4085, %v3668
  %v4087 = vadd.f32 %v4086, %v3672
  %v4088 = vadd.f32 %v4087, %v3676
  %v4089 = vadd.f32 %v4088, %v3680
  %v4090 = vadd.f32 %v4089, %v3684
  %v4091 = vadd.f32 %v4090, %v3688
  %v4092 = vadd.f32 %v4091, %v3692
  %v4093 = vadd.f32 %v4092, %v3696
  %v4094 = vadd.f32 %v4093, %v3700
  %v4095 = vadd.f32 %v4094, %v3704
  %v4096 = vadd.f32 %v4095, %v3708
  %v4097 = vadd.f32 %v4096, %v3712
  %v4098 = vadd.f32 %v4097, %v3716
  %v4099 = vadd.f32 %v4098, %v3720
  %v4100 = vadd.f32 %v4099, %v3724
  %v4101 = vadd.f32 %v4100, %v3728
  %v4102 = vadd.f32 %v4101, %v3732
  %v4103 = vadd.f32 %v4102, %v3736
  %v4104 = vadd.f32 %v4103, %v3740
  %v4105 = vadd.f32 %v4104, %v3744
  %v4106 = vadd.f32 %v4105, %v3748
  %v4107 = vrot.slane %v4106, 4
  %v4108 = vadd.f32 %v4106, %v4107
  %v4109 = vrot.slane %v4108, 2
  %v4110 = vadd.f32 %v4108, %v4109
  %v4111 = vrot.slane %v4110, 1
  %v4112 = vadd.f32 %v4110, %v4111
  %v4117 = vrot.slane %v3930, 7
  %v4118 = vrot.slane %v4021, 6
  %v4119 = vrot.slane %v4112, 5
  %v4120 = vsel %vm2361, %v3839, %v4117
  %v4121 = vsel %vm2363, %v4118, %v4119
  %v4122 = vsel %vm2365, %v4120, %v4121
  %v4124 = vadd.f32 %v2621, %v4122
  %v4125 = vld [vmem:[%s7] sm:$0xff]
  %v4126 = vld [vmem:[%s7 + $0x8] sm:$0xff]
  %v4127 = vld [vmem:[%s7 + $0x10] sm:$0xff]
  %v4128 = vld [vmem:[%s7 + $0x18] sm:$0xff]
  %v4129 = vld [vmem:[%s7 + $0x20] sm:$0xff]
  %v4130 = vld [vmem:[%s7 + $0x28] sm:$0xff]
  %4131 = vrot.lane.b32.xlu0 %v234, 100
  %v4132 = vpop.permute.xlu0 %4131
  %v4134 = vmul.f32 %v4125, %v4132
  %v4135 = vmul.f32 %v4126, %v4132
  %v4136 = vmul.f32 %v4127, %v4132
  %v4137 = vmul.f32 %v4128, %v4132
  %v4138 = vmul.f32 %v4129, %v4132
  %v4139 = vmul.f32 %v4130, %v4132
  %v4140 = vsel %vm359, %v4134, 0.0
  %4141 = vadd.xlane.f32.xlu0 %v4140
  %v4142 = vpop.xlane.xlu0 %4141
  %v4143 = vsel %vm359, %v4135, 0.0
  %4144 = vadd.xlane.f32.xlu0 %v4143
  %v4145 = vpop.xlane.xlu0 %4144
  %v4146 = vsel %vm359, %v4136, 0.0
  %4147 = vadd.xlane.f32.xlu0 %v4146
  %v4148 = vpop.xlane.xlu0 %4147
  %v4149 = vsel %vm359, %v4137, 0.0
  %4150 = vadd.xlane.f32.xlu0 %v4149
  %v4151 = vpop.xlane.xlu0 %4150
  %v4152 = vsel %vm359, %v4138, 0.0
  %4153 = vadd.xlane.f32.xlu0 %v4152
  %v4154 = vpop.xlane.xlu0 %4153
  %v4155 = vsel %vm359, %v4139, 0.0
  %4156 = vadd.xlane.f32.xlu0 %v4155
  %v4157 = vpop.xlane.xlu0 %4156
  %s4158 = scalar_lea.vmem %s0, 4
  %v4159 = vld [vmem:[%s4158] ss:$8 sm:$0xf]
  %v4160 = vperm.slane %v4159, 0
  %v4161 = vperm.slane %v4159, 1
  %v4162 = vperm.slane %v4159, 2
  %v4163 = vperm.slane %v4159, 3
  %vm4164 = vcmp.eq.s32.totalorder %v731, %v4160
  %vm4165 = vcmp.eq.s32.totalorder %v731, %v4161
  %vm4166 = vcmp.eq.s32.totalorder %v731, %v4162
  %vm4167 = vcmp.eq.s32.totalorder %v731, %v4163
  %vm4168 = vcmp.eq.s32.totalorder %v732, %v4160
  %vm4169 = vcmp.eq.s32.totalorder %v732, %v4161
  %vm4170 = vcmp.eq.s32.totalorder %v732, %v4162
  %vm4171 = vcmp.eq.s32.totalorder %v732, %v4163
  %vm4172 = vcmp.eq.s32.totalorder %v733, %v4160
  %vm4173 = vcmp.eq.s32.totalorder %v733, %v4161
  %vm4174 = vcmp.eq.s32.totalorder %v733, %v4162
  %vm4175 = vcmp.eq.s32.totalorder %v733, %v4163
  %vm4176 = vcmp.eq.s32.totalorder %v734, %v4160
  %vm4177 = vcmp.eq.s32.totalorder %v734, %v4161
  %vm4178 = vcmp.eq.s32.totalorder %v734, %v4162
  %vm4179 = vcmp.eq.s32.totalorder %v734, %v4163
  %vm4180 = vcmp.eq.s32.totalorder %v735, %v4160
  %vm4181 = vcmp.eq.s32.totalorder %v735, %v4161
  %vm4182 = vcmp.eq.s32.totalorder %v735, %v4162
  %vm4183 = vcmp.eq.s32.totalorder %v735, %v4163
  %vm4184 = vcmp.eq.s32.totalorder %v736, %v4160
  %vm4185 = vcmp.eq.s32.totalorder %v736, %v4161
  %vm4186 = vcmp.eq.s32.totalorder %v736, %v4162
  %vm4187 = vcmp.eq.s32.totalorder %v736, %v4163
  %v4188 = vsel %vm4164, %v4142, 0.0
  %v4189 = vsel %vm4165, %v4142, 0.0
  %v4190 = vsel %vm4166, %v4142, 0.0
  %v4191 = vsel %vm4167, %v4142, 0.0
  %v4192 = vsel %vm4168, %v4145, 0.0
  %v4193 = vsel %vm4169, %v4145, 0.0
  %v4194 = vsel %vm4170, %v4145, 0.0
  %v4195 = vsel %vm4171, %v4145, 0.0
  %v4196 = vsel %vm4172, %v4148, 0.0
  %v4197 = vsel %vm4173, %v4148, 0.0
  %v4198 = vsel %vm4174, %v4148, 0.0
  %v4199 = vsel %vm4175, %v4148, 0.0
  %v4200 = vsel %vm4176, %v4151, 0.0
  %v4201 = vsel %vm4177, %v4151, 0.0
  %v4202 = vsel %vm4178, %v4151, 0.0
  %v4203 = vsel %vm4179, %v4151, 0.0
  %v4204 = vsel %vm4180, %v4154, 0.0
  %v4205 = vsel %vm4181, %v4154, 0.0
  %v4206 = vsel %vm4182, %v4154, 0.0
  %v4207 = vsel %vm4183, %v4154, 0.0
  %v4208 = vsel %vm4184, %v4157, 0.0
  %v4209 = vsel %vm4185, %v4157, 0.0
  %v4210 = vsel %vm4186, %v4157, 0.0
  %v4211 = vsel %vm4187, %v4157, 0.0
  %v4212 = vadd.f32 %v4188, %v4192
  %v4213 = vadd.f32 %v4212, %v4196
  %v4214 = vadd.f32 %v4213, %v4200
  %v4215 = vadd.f32 %v4214, %v4204
  %v4216 = vadd.f32 %v4215, %v4208
  %v4217 = vrot.slane %v4216, 4
  %v4218 = vadd.f32 %v4216, %v4217
  %v4219 = vrot.slane %v4218, 2
  %v4220 = vadd.f32 %v4218, %v4219
  %v4221 = vrot.slane %v4220, 1
  %v4222 = vadd.f32 %v4220, %v4221
  %v4223 = vadd.f32 %v4189, %v4193
  %v4224 = vadd.f32 %v4223, %v4197
  %v4225 = vadd.f32 %v4224, %v4201
  %v4226 = vadd.f32 %v4225, %v4205
  %v4227 = vadd.f32 %v4226, %v4209
  %v4228 = vrot.slane %v4227, 4
  %v4229 = vadd.f32 %v4227, %v4228
  %v4230 = vrot.slane %v4229, 2
  %v4231 = vadd.f32 %v4229, %v4230
  %v4232 = vrot.slane %v4231, 1
  %v4233 = vadd.f32 %v4231, %v4232
  %v4234 = vadd.f32 %v4190, %v4194
  %v4235 = vadd.f32 %v4234, %v4198
  %v4236 = vadd.f32 %v4235, %v4202
  %v4237 = vadd.f32 %v4236, %v4206
  %v4238 = vadd.f32 %v4237, %v4210
  %v4239 = vrot.slane %v4238, 4
  %v4240 = vadd.f32 %v4238, %v4239
  %v4241 = vrot.slane %v4240, 2
  %v4242 = vadd.f32 %v4240, %v4241
  %v4243 = vrot.slane %v4242, 1
  %v4244 = vadd.f32 %v4242, %v4243
  %v4245 = vadd.f32 %v4191, %v4195
  %v4246 = vadd.f32 %v4245, %v4199
  %v4247 = vadd.f32 %v4246, %v4203
  %v4248 = vadd.f32 %v4247, %v4207
  %v4249 = vadd.f32 %v4248, %v4211
  %v4250 = vrot.slane %v4249, 4
  %v4251 = vadd.f32 %v4249, %v4250
  %v4252 = vrot.slane %v4251, 2
  %v4253 = vadd.f32 %v4251, %v4252
  %v4254 = vrot.slane %v4253, 1
  %v4255 = vadd.f32 %v4253, %v4254
  %v4260 = vrot.slane %v4233, 7
  %v4261 = vrot.slane %v4244, 6
  %v4262 = vrot.slane %v4255, 5
  %v4263 = vsel %vm2361, %v4222, %v4260
  %v4264 = vsel %vm2363, %v4261, %v4262
  %v4265 = vsel %vm2365, %v4263, %v4264
  %v4267 = vadd.f32 %v4124, %v4265
  %v4268 = vld [vmem:[%s8] sm:$0xff]
  %v4269 = vld [vmem:[%s8 + $0x8] sm:$0xff]
  %v4270 = vld [vmem:[%s8 + $0x10] sm:$0xff]
  %v4271 = vld [vmem:[%s8 + $0x18] sm:$0xff]
  %v4272 = vld [vmem:[%s8 + $0x20] sm:$0xff]
  %v4273 = vld [vmem:[%s8 + $0x28] sm:$0xff]
  %v4274 = vld [vmem:[%s8 + $0x30] sm:$0xff]
  %v4275 = vld [vmem:[%s8 + $0x38] sm:$0xff]
  %v4276 = vld [vmem:[%s8 + $0x40] sm:$0xff]
  %v4277 = vld [vmem:[%s8 + $0x48] sm:$0xff]
  %v4278 = vld [vmem:[%s8 + $0x50] sm:$0xff]
  %v4279 = vld [vmem:[%s8 + $0x58] sm:$0xff]
  %v4280 = vld [vmem:[%s8 + $0x60] sm:$0xff]
  %v4281 = vld [vmem:[%s8 + $0x68] sm:$0xff]
  %v4282 = vld [vmem:[%s8 + $0x70] sm:$0xff]
  %v4283 = vld [vmem:[%s8 + $0x78] sm:$0xff]
  %v4284 = vld [vmem:[%s8 + $0x80] sm:$0xff]
  %v4285 = vld [vmem:[%s8 + $0x88] sm:$0xff]
  %v4286 = vld [vmem:[%s8 + $0x90] sm:$0xff]
  %4287 = vrot.lane.b32.xlu0 %v234, 92
  %v4288 = vpop.permute.xlu0 %4287
  %v4290 = vmul.f32 %v4268, %v4288
  %v4291 = vmul.f32 %v4269, %v4288
  %v4292 = vmul.f32 %v4270, %v4288
  %v4293 = vmul.f32 %v4271, %v4288
  %v4294 = vmul.f32 %v4272, %v4288
  %v4295 = vmul.f32 %v4273, %v4288
  %v4296 = vmul.f32 %v4274, %v4288
  %v4297 = vmul.f32 %v4275, %v4288
  %v4298 = vmul.f32 %v4276, %v4288
  %v4299 = vmul.f32 %v4277, %v4288
  %v4300 = vmul.f32 %v4278, %v4288
  %v4301 = vmul.f32 %v4279, %v4288
  %v4302 = vmul.f32 %v4280, %v4288
  %v4303 = vmul.f32 %v4281, %v4288
  %v4304 = vmul.f32 %v4282, %v4288
  %v4305 = vmul.f32 %v4283, %v4288
  %v4306 = vmul.f32 %v4284, %v4288
  %v4307 = vmul.f32 %v4285, %v4288
  %v4308 = vmul.f32 %v4286, %v4288
  %v4309 = vsel %vm359, %v4290, 0.0
  %4310 = vadd.xlane.f32.xlu0 %v4309
  %v4311 = vpop.xlane.xlu0 %4310
  %v4312 = vsel %vm359, %v4291, 0.0
  %4313 = vadd.xlane.f32.xlu0 %v4312
  %v4314 = vpop.xlane.xlu0 %4313
  %v4315 = vsel %vm359, %v4292, 0.0
  %4316 = vadd.xlane.f32.xlu0 %v4315
  %v4317 = vpop.xlane.xlu0 %4316
  %v4318 = vsel %vm359, %v4293, 0.0
  %4319 = vadd.xlane.f32.xlu0 %v4318
  %v4320 = vpop.xlane.xlu0 %4319
  %v4321 = vsel %vm359, %v4294, 0.0
  %4322 = vadd.xlane.f32.xlu0 %v4321
  %v4323 = vpop.xlane.xlu0 %4322
  %v4324 = vsel %vm359, %v4295, 0.0
  %4325 = vadd.xlane.f32.xlu0 %v4324
  %v4326 = vpop.xlane.xlu0 %4325
  %v4327 = vsel %vm359, %v4296, 0.0
  %4328 = vadd.xlane.f32.xlu0 %v4327
  %v4329 = vpop.xlane.xlu0 %4328
  %v4330 = vsel %vm359, %v4297, 0.0
  %4331 = vadd.xlane.f32.xlu0 %v4330
  %v4332 = vpop.xlane.xlu0 %4331
  %v4333 = vsel %vm359, %v4298, 0.0
  %4334 = vadd.xlane.f32.xlu0 %v4333
  %v4335 = vpop.xlane.xlu0 %4334
  %v4336 = vsel %vm359, %v4299, 0.0
  %4337 = vadd.xlane.f32.xlu0 %v4336
  %v4338 = vpop.xlane.xlu0 %4337
  %v4339 = vsel %vm359, %v4300, 0.0
  %4340 = vadd.xlane.f32.xlu0 %v4339
  %v4341 = vpop.xlane.xlu0 %4340
  %v4342 = vsel %vm359, %v4301, 0.0
  %4343 = vadd.xlane.f32.xlu0 %v4342
  %v4344 = vpop.xlane.xlu0 %4343
  %v4345 = vsel %vm359, %v4302, 0.0
  %4346 = vadd.xlane.f32.xlu0 %v4345
  %v4347 = vpop.xlane.xlu0 %4346
  %v4348 = vsel %vm359, %v4303, 0.0
  %4349 = vadd.xlane.f32.xlu0 %v4348
  %v4350 = vpop.xlane.xlu0 %4349
  %v4351 = vsel %vm359, %v4304, 0.0
  %4352 = vadd.xlane.f32.xlu0 %v4351
  %v4353 = vpop.xlane.xlu0 %4352
  %v4354 = vsel %vm359, %v4305, 0.0
  %4355 = vadd.xlane.f32.xlu0 %v4354
  %v4356 = vpop.xlane.xlu0 %4355
  %v4357 = vsel %vm359, %v4306, 0.0
  %4358 = vadd.xlane.f32.xlu0 %v4357
  %v4359 = vpop.xlane.xlu0 %4358
  %v4360 = vsel %vm359, %v4307, 0.0
  %4361 = vadd.xlane.f32.xlu0 %v4360
  %v4362 = vpop.xlane.xlu0 %4361
  %v4363 = vsel %vm359, %v4308, 0.0
  %4364 = vadd.xlane.f32.xlu0 %v4363
  %v4365 = vpop.xlane.xlu0 %4364
  %s4366 = scalar_lea.vmem %s0, 5
  %v4367 = vld [vmem:[%s4366] ss:$8 sm:$0xf]
  %v4368 = vperm.slane %v4367, 0
  %v4369 = vperm.slane %v4367, 1
  %v4370 = vperm.slane %v4367, 2
  %v4371 = vperm.slane %v4367, 3
  %vm4372 = vcmp.eq.s32.totalorder %v731, %v4368
  %vm4373 = vcmp.eq.s32.totalorder %v731, %v4369
  %vm4374 = vcmp.eq.s32.totalorder %v731, %v4370
  %vm4375 = vcmp.eq.s32.totalorder %v731, %v4371
  %vm4376 = vcmp.eq.s32.totalorder %v732, %v4368
  %vm4377 = vcmp.eq.s32.totalorder %v732, %v4369
  %vm4378 = vcmp.eq.s32.totalorder %v732, %v4370
  %vm4379 = vcmp.eq.s32.totalorder %v732, %v4371
  %vm4380 = vcmp.eq.s32.totalorder %v733, %v4368
  %vm4381 = vcmp.eq.s32.totalorder %v733, %v4369
  %vm4382 = vcmp.eq.s32.totalorder %v733, %v4370
  %vm4383 = vcmp.eq.s32.totalorder %v733, %v4371
  %vm4384 = vcmp.eq.s32.totalorder %v734, %v4368
  %vm4385 = vcmp.eq.s32.totalorder %v734, %v4369
  %vm4386 = vcmp.eq.s32.totalorder %v734, %v4370
  %vm4387 = vcmp.eq.s32.totalorder %v734, %v4371
  %vm4388 = vcmp.eq.s32.totalorder %v735, %v4368
  %vm4389 = vcmp.eq.s32.totalorder %v735, %v4369
  %vm4390 = vcmp.eq.s32.totalorder %v735, %v4370
  %vm4391 = vcmp.eq.s32.totalorder %v735, %v4371
  %vm4392 = vcmp.eq.s32.totalorder %v736, %v4368
  %vm4393 = vcmp.eq.s32.totalorder %v736, %v4369
  %vm4394 = vcmp.eq.s32.totalorder %v736, %v4370
  %vm4395 = vcmp.eq.s32.totalorder %v736, %v4371
  %vm4396 = vcmp.eq.s32.totalorder %v737, %v4368
  %vm4397 = vcmp.eq.s32.totalorder %v737, %v4369
  %vm4398 = vcmp.eq.s32.totalorder %v737, %v4370
  %vm4399 = vcmp.eq.s32.totalorder %v737, %v4371
  %vm4400 = vcmp.eq.s32.totalorder %v738, %v4368
  %vm4401 = vcmp.eq.s32.totalorder %v738, %v4369
  %vm4402 = vcmp.eq.s32.totalorder %v738, %v4370
  %vm4403 = vcmp.eq.s32.totalorder %v738, %v4371
  %vm4404 = vcmp.eq.s32.totalorder %v739, %v4368
  %vm4405 = vcmp.eq.s32.totalorder %v739, %v4369
  %vm4406 = vcmp.eq.s32.totalorder %v739, %v4370
  %vm4407 = vcmp.eq.s32.totalorder %v739, %v4371
  %vm4408 = vcmp.eq.s32.totalorder %v740, %v4368
  %vm4409 = vcmp.eq.s32.totalorder %v740, %v4369
  %vm4410 = vcmp.eq.s32.totalorder %v740, %v4370
  %vm4411 = vcmp.eq.s32.totalorder %v740, %v4371
  %vm4412 = vcmp.eq.s32.totalorder %v741, %v4368
  %vm4413 = vcmp.eq.s32.totalorder %v741, %v4369
  %vm4414 = vcmp.eq.s32.totalorder %v741, %v4370
  %vm4415 = vcmp.eq.s32.totalorder %v741, %v4371
  %vm4416 = vcmp.eq.s32.totalorder %v742, %v4368
  %vm4417 = vcmp.eq.s32.totalorder %v742, %v4369
  %vm4418 = vcmp.eq.s32.totalorder %v742, %v4370
  %vm4419 = vcmp.eq.s32.totalorder %v742, %v4371
  %vm4420 = vcmp.eq.s32.totalorder %v743, %v4368
  %vm4421 = vcmp.eq.s32.totalorder %v743, %v4369
  %vm4422 = vcmp.eq.s32.totalorder %v743, %v4370
  %vm4423 = vcmp.eq.s32.totalorder %v743, %v4371
  %vm4424 = vcmp.eq.s32.totalorder %v744, %v4368
  %vm4425 = vcmp.eq.s32.totalorder %v744, %v4369
  %vm4426 = vcmp.eq.s32.totalorder %v744, %v4370
  %vm4427 = vcmp.eq.s32.totalorder %v744, %v4371
  %vm4428 = vcmp.eq.s32.totalorder %v745, %v4368
  %vm4429 = vcmp.eq.s32.totalorder %v745, %v4369
  %vm4430 = vcmp.eq.s32.totalorder %v745, %v4370
  %vm4431 = vcmp.eq.s32.totalorder %v745, %v4371
  %vm4432 = vcmp.eq.s32.totalorder %v746, %v4368
  %vm4433 = vcmp.eq.s32.totalorder %v746, %v4369
  %vm4434 = vcmp.eq.s32.totalorder %v746, %v4370
  %vm4435 = vcmp.eq.s32.totalorder %v746, %v4371
  %vm4436 = vcmp.eq.s32.totalorder %v747, %v4368
  %vm4437 = vcmp.eq.s32.totalorder %v747, %v4369
  %vm4438 = vcmp.eq.s32.totalorder %v747, %v4370
  %vm4439 = vcmp.eq.s32.totalorder %v747, %v4371
  %vm4440 = vcmp.eq.s32.totalorder %v748, %v4368
  %vm4441 = vcmp.eq.s32.totalorder %v748, %v4369
  %vm4442 = vcmp.eq.s32.totalorder %v748, %v4370
  %vm4443 = vcmp.eq.s32.totalorder %v748, %v4371
  %vm4444 = vcmp.eq.s32.totalorder %v749, %v4368
  %vm4445 = vcmp.eq.s32.totalorder %v749, %v4369
  %vm4446 = vcmp.eq.s32.totalorder %v749, %v4370
  %vm4447 = vcmp.eq.s32.totalorder %v749, %v4371
  %v4448 = vsel %vm4372, %v4311, 0.0
  %v4449 = vsel %vm4373, %v4311, 0.0
  %v4450 = vsel %vm4374, %v4311, 0.0
  %v4451 = vsel %vm4375, %v4311, 0.0
  %v4452 = vsel %vm4376, %v4314, 0.0
  %v4453 = vsel %vm4377, %v4314, 0.0
  %v4454 = vsel %vm4378, %v4314, 0.0
  %v4455 = vsel %vm4379, %v4314, 0.0
  %v4456 = vsel %vm4380, %v4317, 0.0
  %v4457 = vsel %vm4381, %v4317, 0.0
  %v4458 = vsel %vm4382, %v4317, 0.0
  %v4459 = vsel %vm4383, %v4317, 0.0
  %v4460 = vsel %vm4384, %v4320, 0.0
  %v4461 = vsel %vm4385, %v4320, 0.0
  %v4462 = vsel %vm4386, %v4320, 0.0
  %v4463 = vsel %vm4387, %v4320, 0.0
  %v4464 = vsel %vm4388, %v4323, 0.0
  %v4465 = vsel %vm4389, %v4323, 0.0
  %v4466 = vsel %vm4390, %v4323, 0.0
  %v4467 = vsel %vm4391, %v4323, 0.0
  %v4468 = vsel %vm4392, %v4326, 0.0
  %v4469 = vsel %vm4393, %v4326, 0.0
  %v4470 = vsel %vm4394, %v4326, 0.0
  %v4471 = vsel %vm4395, %v4326, 0.0
  %v4472 = vsel %vm4396, %v4329, 0.0
  %v4473 = vsel %vm4397, %v4329, 0.0
  %v4474 = vsel %vm4398, %v4329, 0.0
  %v4475 = vsel %vm4399, %v4329, 0.0
  %v4476 = vsel %vm4400, %v4332, 0.0
  %v4477 = vsel %vm4401, %v4332, 0.0
  %v4478 = vsel %vm4402, %v4332, 0.0
  %v4479 = vsel %vm4403, %v4332, 0.0
  %v4480 = vsel %vm4404, %v4335, 0.0
  %v4481 = vsel %vm4405, %v4335, 0.0
  %v4482 = vsel %vm4406, %v4335, 0.0
  %v4483 = vsel %vm4407, %v4335, 0.0
  %v4484 = vsel %vm4408, %v4338, 0.0
  %v4485 = vsel %vm4409, %v4338, 0.0
  %v4486 = vsel %vm4410, %v4338, 0.0
  %v4487 = vsel %vm4411, %v4338, 0.0
  %v4488 = vsel %vm4412, %v4341, 0.0
  %v4489 = vsel %vm4413, %v4341, 0.0
  %v4490 = vsel %vm4414, %v4341, 0.0
  %v4491 = vsel %vm4415, %v4341, 0.0
  %v4492 = vsel %vm4416, %v4344, 0.0
  %v4493 = vsel %vm4417, %v4344, 0.0
  %v4494 = vsel %vm4418, %v4344, 0.0
  %v4495 = vsel %vm4419, %v4344, 0.0
  %v4496 = vsel %vm4420, %v4347, 0.0
  %v4497 = vsel %vm4421, %v4347, 0.0
  %v4498 = vsel %vm4422, %v4347, 0.0
  %v4499 = vsel %vm4423, %v4347, 0.0
  %v4500 = vsel %vm4424, %v4350, 0.0
  %v4501 = vsel %vm4425, %v4350, 0.0
  %v4502 = vsel %vm4426, %v4350, 0.0
  %v4503 = vsel %vm4427, %v4350, 0.0
  %v4504 = vsel %vm4428, %v4353, 0.0
  %v4505 = vsel %vm4429, %v4353, 0.0
  %v4506 = vsel %vm4430, %v4353, 0.0
  %v4507 = vsel %vm4431, %v4353, 0.0
  %v4508 = vsel %vm4432, %v4356, 0.0
  %v4509 = vsel %vm4433, %v4356, 0.0
  %v4510 = vsel %vm4434, %v4356, 0.0
  %v4511 = vsel %vm4435, %v4356, 0.0
  %v4512 = vsel %vm4436, %v4359, 0.0
  %v4513 = vsel %vm4437, %v4359, 0.0
  %v4514 = vsel %vm4438, %v4359, 0.0
  %v4515 = vsel %vm4439, %v4359, 0.0
  %v4516 = vsel %vm4440, %v4362, 0.0
  %v4517 = vsel %vm4441, %v4362, 0.0
  %v4518 = vsel %vm4442, %v4362, 0.0
  %v4519 = vsel %vm4443, %v4362, 0.0
  %v4520 = vsel %vm4444, %v4365, 0.0
  %v4521 = vsel %vm4445, %v4365, 0.0
  %v4522 = vsel %vm4446, %v4365, 0.0
  %v4523 = vsel %vm4447, %v4365, 0.0
  %v4524 = vadd.f32 %v4448, %v4452
  %v4525 = vadd.f32 %v4524, %v4456
  %v4526 = vadd.f32 %v4525, %v4460
  %v4527 = vadd.f32 %v4526, %v4464
  %v4528 = vadd.f32 %v4527, %v4468
  %v4529 = vadd.f32 %v4528, %v4472
  %v4530 = vadd.f32 %v4529, %v4476
  %v4531 = vadd.f32 %v4530, %v4480
  %v4532 = vadd.f32 %v4531, %v4484
  %v4533 = vadd.f32 %v4532, %v4488
  %v4534 = vadd.f32 %v4533, %v4492
  %v4535 = vadd.f32 %v4534, %v4496
  %v4536 = vadd.f32 %v4535, %v4500
  %v4537 = vadd.f32 %v4536, %v4504
  %v4538 = vadd.f32 %v4537, %v4508
  %v4539 = vadd.f32 %v4538, %v4512
  %v4540 = vadd.f32 %v4539, %v4516
  %v4541 = vadd.f32 %v4540, %v4520
  %v4542 = vrot.slane %v4541, 4
  %v4543 = vadd.f32 %v4541, %v4542
  %v4544 = vrot.slane %v4543, 2
  %v4545 = vadd.f32 %v4543, %v4544
  %v4546 = vrot.slane %v4545, 1
  %v4547 = vadd.f32 %v4545, %v4546
  %v4548 = vadd.f32 %v4449, %v4453
  %v4549 = vadd.f32 %v4548, %v4457
  %v4550 = vadd.f32 %v4549, %v4461
  %v4551 = vadd.f32 %v4550, %v4465
  %v4552 = vadd.f32 %v4551, %v4469
  %v4553 = vadd.f32 %v4552, %v4473
  %v4554 = vadd.f32 %v4553, %v4477
  %v4555 = vadd.f32 %v4554, %v4481
  %v4556 = vadd.f32 %v4555, %v4485
  %v4557 = vadd.f32 %v4556, %v4489
  %v4558 = vadd.f32 %v4557, %v4493
  %v4559 = vadd.f32 %v4558, %v4497
  %v4560 = vadd.f32 %v4559, %v4501
  %v4561 = vadd.f32 %v4560, %v4505
  %v4562 = vadd.f32 %v4561, %v4509
  %v4563 = vadd.f32 %v4562, %v4513
  %v4564 = vadd.f32 %v4563, %v4517
  %v4565 = vadd.f32 %v4564, %v4521
  %v4566 = vrot.slane %v4565, 4
  %v4567 = vadd.f32 %v4565, %v4566
  %v4568 = vrot.slane %v4567, 2
  %v4569 = vadd.f32 %v4567, %v4568
  %v4570 = vrot.slane %v4569, 1
  %v4571 = vadd.f32 %v4569, %v4570
  %v4572 = vadd.f32 %v4450, %v4454
  %v4573 = vadd.f32 %v4572, %v4458
  %v4574 = vadd.f32 %v4573, %v4462
  %v4575 = vadd.f32 %v4574, %v4466
  %v4576 = vadd.f32 %v4575, %v4470
  %v4577 = vadd.f32 %v4576, %v4474
  %v4578 = vadd.f32 %v4577, %v4478
  %v4579 = vadd.f32 %v4578, %v4482
  %v4580 = vadd.f32 %v4579, %v4486
  %v4581 = vadd.f32 %v4580, %v4490
  %v4582 = vadd.f32 %v4581, %v4494
  %v4583 = vadd.f32 %v4582, %v4498
  %v4584 = vadd.f32 %v4583, %v4502
  %v4585 = vadd.f32 %v4584, %v4506
  %v4586 = vadd.f32 %v4585, %v4510
  %v4587 = vadd.f32 %v4586, %v4514
  %v4588 = vadd.f32 %v4587, %v4518
  %v4589 = vadd.f32 %v4588, %v4522
  %v4590 = vrot.slane %v4589, 4
  %v4591 = vadd.f32 %v4589, %v4590
  %v4592 = vrot.slane %v4591, 2
  %v4593 = vadd.f32 %v4591, %v4592
  %v4594 = vrot.slane %v4593, 1
  %v4595 = vadd.f32 %v4593, %v4594
  %v4596 = vadd.f32 %v4451, %v4455
  %v4597 = vadd.f32 %v4596, %v4459
  %v4598 = vadd.f32 %v4597, %v4463
  %v4599 = vadd.f32 %v4598, %v4467
  %v4600 = vadd.f32 %v4599, %v4471
  %v4601 = vadd.f32 %v4600, %v4475
  %v4602 = vadd.f32 %v4601, %v4479
  %v4603 = vadd.f32 %v4602, %v4483
  %v4604 = vadd.f32 %v4603, %v4487
  %v4605 = vadd.f32 %v4604, %v4491
  %v4606 = vadd.f32 %v4605, %v4495
  %v4607 = vadd.f32 %v4606, %v4499
  %v4608 = vadd.f32 %v4607, %v4503
  %v4609 = vadd.f32 %v4608, %v4507
  %v4610 = vadd.f32 %v4609, %v4511
  %v4611 = vadd.f32 %v4610, %v4515
  %v4612 = vadd.f32 %v4611, %v4519
  %v4613 = vadd.f32 %v4612, %v4523
  %v4614 = vrot.slane %v4613, 4
  %v4615 = vadd.f32 %v4613, %v4614
  %v4616 = vrot.slane %v4615, 2
  %v4617 = vadd.f32 %v4615, %v4616
  %v4618 = vrot.slane %v4617, 1
  %v4619 = vadd.f32 %v4617, %v4618
  %v4624 = vrot.slane %v4571, 7
  %v4625 = vrot.slane %v4595, 6
  %v4626 = vrot.slane %v4619, 5
  %v4627 = vsel %vm2361, %v4547, %v4624
  %v4628 = vsel %vm2363, %v4625, %v4626
  %v4629 = vsel %vm2365, %v4627, %v4628
  %v4631 = vadd.f32 %v4267, %v4629
  %v4632 = vld [vmem:[%s9] sm:$0xff]
  %v4633 = vld [vmem:[%s9 + $0x8] sm:$0xff]
  %v4634 = vld [vmem:[%s9 + $0x10] sm:$0xff]
  %v4635 = vld [vmem:[%s9 + $0x18] sm:$0xff]
  %v4636 = vld [vmem:[%s9 + $0x20] sm:$0xff]
  %v4637 = vld [vmem:[%s9 + $0x28] sm:$0xff]
  %v4638 = vld [vmem:[%s9 + $0x30] sm:$0xff]
  %v4639 = vld [vmem:[%s9 + $0x38] sm:$0xff]
  %4640 = vrot.lane.b32.xlu0 %v234, 84
  %v4641 = vpop.permute.xlu0 %4640
  %v4643 = vmul.f32 %v4632, %v4641
  %v4644 = vmul.f32 %v4633, %v4641
  %v4645 = vmul.f32 %v4634, %v4641
  %v4646 = vmul.f32 %v4635, %v4641
  %v4647 = vmul.f32 %v4636, %v4641
  %v4648 = vmul.f32 %v4637, %v4641
  %v4649 = vmul.f32 %v4638, %v4641
  %v4650 = vmul.f32 %v4639, %v4641
  %v4651 = vsel %vm359, %v4643, 0.0
  %4652 = vadd.xlane.f32.xlu0 %v4651
  %v4653 = vpop.xlane.xlu0 %4652
  %v4654 = vsel %vm359, %v4644, 0.0
  %4655 = vadd.xlane.f32.xlu0 %v4654
  %v4656 = vpop.xlane.xlu0 %4655
  %v4657 = vsel %vm359, %v4645, 0.0
  %4658 = vadd.xlane.f32.xlu0 %v4657
  %v4659 = vpop.xlane.xlu0 %4658
  %v4660 = vsel %vm359, %v4646, 0.0
  %4661 = vadd.xlane.f32.xlu0 %v4660
  %v4662 = vpop.xlane.xlu0 %4661
  %v4663 = vsel %vm359, %v4647, 0.0
  %4664 = vadd.xlane.f32.xlu0 %v4663
  %v4665 = vpop.xlane.xlu0 %4664
  %v4666 = vsel %vm359, %v4648, 0.0
  %4667 = vadd.xlane.f32.xlu0 %v4666
  %v4668 = vpop.xlane.xlu0 %4667
  %v4669 = vsel %vm359, %v4649, 0.0
  %4670 = vadd.xlane.f32.xlu0 %v4669
  %v4671 = vpop.xlane.xlu0 %4670
  %v4672 = vsel %vm359, %v4650, 0.0
  %4673 = vadd.xlane.f32.xlu0 %v4672
  %v4674 = vpop.xlane.xlu0 %4673
  %s4675 = scalar_lea.vmem %s0, 6
  %v4676 = vld [vmem:[%s4675] ss:$8 sm:$0xf]
  %v4677 = vperm.slane %v4676, 0
  %v4678 = vperm.slane %v4676, 1
  %v4679 = vperm.slane %v4676, 2
  %v4680 = vperm.slane %v4676, 3
  %vm4681 = vcmp.eq.s32.totalorder %v731, %v4677
  %vm4682 = vcmp.eq.s32.totalorder %v731, %v4678
  %vm4683 = vcmp.eq.s32.totalorder %v731, %v4679
  %vm4684 = vcmp.eq.s32.totalorder %v731, %v4680
  %vm4685 = vcmp.eq.s32.totalorder %v732, %v4677
  %vm4686 = vcmp.eq.s32.totalorder %v732, %v4678
  %vm4687 = vcmp.eq.s32.totalorder %v732, %v4679
  %vm4688 = vcmp.eq.s32.totalorder %v732, %v4680
  %vm4689 = vcmp.eq.s32.totalorder %v733, %v4677
  %vm4690 = vcmp.eq.s32.totalorder %v733, %v4678
  %vm4691 = vcmp.eq.s32.totalorder %v733, %v4679
  %vm4692 = vcmp.eq.s32.totalorder %v733, %v4680
  %vm4693 = vcmp.eq.s32.totalorder %v734, %v4677
  %vm4694 = vcmp.eq.s32.totalorder %v734, %v4678
  %vm4695 = vcmp.eq.s32.totalorder %v734, %v4679
  %vm4696 = vcmp.eq.s32.totalorder %v734, %v4680
  %vm4697 = vcmp.eq.s32.totalorder %v735, %v4677
  %vm4698 = vcmp.eq.s32.totalorder %v735, %v4678
  %vm4699 = vcmp.eq.s32.totalorder %v735, %v4679
  %vm4700 = vcmp.eq.s32.totalorder %v735, %v4680
  %vm4701 = vcmp.eq.s32.totalorder %v736, %v4677
  %vm4702 = vcmp.eq.s32.totalorder %v736, %v4678
  %vm4703 = vcmp.eq.s32.totalorder %v736, %v4679
  %vm4704 = vcmp.eq.s32.totalorder %v736, %v4680
  %vm4705 = vcmp.eq.s32.totalorder %v737, %v4677
  %vm4706 = vcmp.eq.s32.totalorder %v737, %v4678
  %vm4707 = vcmp.eq.s32.totalorder %v737, %v4679
  %vm4708 = vcmp.eq.s32.totalorder %v737, %v4680
  %vm4709 = vcmp.eq.s32.totalorder %v738, %v4677
  %vm4710 = vcmp.eq.s32.totalorder %v738, %v4678
  %vm4711 = vcmp.eq.s32.totalorder %v738, %v4679
  %vm4712 = vcmp.eq.s32.totalorder %v738, %v4680
  %v4713 = vsel %vm4681, %v4653, 0.0
  %v4714 = vsel %vm4682, %v4653, 0.0
  %v4715 = vsel %vm4683, %v4653, 0.0
  %v4716 = vsel %vm4684, %v4653, 0.0
  %v4717 = vsel %vm4685, %v4656, 0.0
  %v4718 = vsel %vm4686, %v4656, 0.0
  %v4719 = vsel %vm4687, %v4656, 0.0
  %v4720 = vsel %vm4688, %v4656, 0.0
  %v4721 = vsel %vm4689, %v4659, 0.0
  %v4722 = vsel %vm4690, %v4659, 0.0
  %v4723 = vsel %vm4691, %v4659, 0.0
  %v4724 = vsel %vm4692, %v4659, 0.0
  %v4725 = vsel %vm4693, %v4662, 0.0
  %v4726 = vsel %vm4694, %v4662, 0.0
  %v4727 = vsel %vm4695, %v4662, 0.0
  %v4728 = vsel %vm4696, %v4662, 0.0
  %v4729 = vsel %vm4697, %v4665, 0.0
  %v4730 = vsel %vm4698, %v4665, 0.0
  %v4731 = vsel %vm4699, %v4665, 0.0
  %v4732 = vsel %vm4700, %v4665, 0.0
  %v4733 = vsel %vm4701, %v4668, 0.0
  %v4734 = vsel %vm4702, %v4668, 0.0
  %v4735 = vsel %vm4703, %v4668, 0.0
  %v4736 = vsel %vm4704, %v4668, 0.0
  %v4737 = vsel %vm4705, %v4671, 0.0
  %v4738 = vsel %vm4706, %v4671, 0.0
  %v4739 = vsel %vm4707, %v4671, 0.0
  %v4740 = vsel %vm4708, %v4671, 0.0
  %v4741 = vsel %vm4709, %v4674, 0.0
  %v4742 = vsel %vm4710, %v4674, 0.0
  %v4743 = vsel %vm4711, %v4674, 0.0
  %v4744 = vsel %vm4712, %v4674, 0.0
  %v4745 = vadd.f32 %v4713, %v4717
  %v4746 = vadd.f32 %v4745, %v4721
  %v4747 = vadd.f32 %v4746, %v4725
  %v4748 = vadd.f32 %v4747, %v4729
  %v4749 = vadd.f32 %v4748, %v4733
  %v4750 = vadd.f32 %v4749, %v4737
  %v4751 = vadd.f32 %v4750, %v4741
  %v4752 = vrot.slane %v4751, 4
  %v4753 = vadd.f32 %v4751, %v4752
  %v4754 = vrot.slane %v4753, 2
  %v4755 = vadd.f32 %v4753, %v4754
  %v4756 = vrot.slane %v4755, 1
  %v4757 = vadd.f32 %v4755, %v4756
  %v4758 = vadd.f32 %v4714, %v4718
  %v4759 = vadd.f32 %v4758, %v4722
  %v4760 = vadd.f32 %v4759, %v4726
  %v4761 = vadd.f32 %v4760, %v4730
  %v4762 = vadd.f32 %v4761, %v4734
  %v4763 = vadd.f32 %v4762, %v4738
  %v4764 = vadd.f32 %v4763, %v4742
  %v4765 = vrot.slane %v4764, 4
  %v4766 = vadd.f32 %v4764, %v4765
  %v4767 = vrot.slane %v4766, 2
  %v4768 = vadd.f32 %v4766, %v4767
  %v4769 = vrot.slane %v4768, 1
  %v4770 = vadd.f32 %v4768, %v4769
  %v4771 = vadd.f32 %v4715, %v4719
  %v4772 = vadd.f32 %v4771, %v4723
  %v4773 = vadd.f32 %v4772, %v4727
  %v4774 = vadd.f32 %v4773, %v4731
  %v4775 = vadd.f32 %v4774, %v4735
  %v4776 = vadd.f32 %v4775, %v4739
  %v4777 = vadd.f32 %v4776, %v4743
  %v4778 = vrot.slane %v4777, 4
  %v4779 = vadd.f32 %v4777, %v4778
  %v4780 = vrot.slane %v4779, 2
  %v4781 = vadd.f32 %v4779, %v4780
  %v4782 = vrot.slane %v4781, 1
  %v4783 = vadd.f32 %v4781, %v4782
  %v4784 = vadd.f32 %v4716, %v4720
  %v4785 = vadd.f32 %v4784, %v4724
  %v4786 = vadd.f32 %v4785, %v4728
  %v4787 = vadd.f32 %v4786, %v4732
  %v4788 = vadd.f32 %v4787, %v4736
  %v4789 = vadd.f32 %v4788, %v4740
  %v4790 = vadd.f32 %v4789, %v4744
  %v4791 = vrot.slane %v4790, 4
  %v4792 = vadd.f32 %v4790, %v4791
  %v4793 = vrot.slane %v4792, 2
  %v4794 = vadd.f32 %v4792, %v4793
  %v4795 = vrot.slane %v4794, 1
  %v4796 = vadd.f32 %v4794, %v4795
  %v4801 = vrot.slane %v4770, 7
  %v4802 = vrot.slane %v4783, 6
  %v4803 = vrot.slane %v4796, 5
  %v4804 = vsel %vm2361, %v4757, %v4801
  %v4805 = vsel %vm2363, %v4802, %v4803
  %v4806 = vsel %vm2365, %v4804, %v4805
  %v4808 = vadd.f32 %v4631, %v4806
  %v4809 = vld [vmem:[%s10] sm:$0xff]
  %v4810 = vld [vmem:[%s10 + $0x8] sm:$0xff]
  %4811 = vrot.lane.b32.xlu0 %v234, 76
  %v4812 = vpop.permute.xlu0 %4811
  %v4814 = vmul.f32 %v4809, %v4812
  %v4815 = vmul.f32 %v4810, %v4812
  %v4816 = vsel %vm2376, %v4814, 0.0
  %4817 = vadd.xlane.f32.xlu0 %v4816
  %v4818 = vpop.xlane.xlu0 %4817
  %v4819 = vsel %vm2376, %v4815, 0.0
  %4820 = vadd.xlane.f32.xlu0 %v4819
  %v4821 = vpop.xlane.xlu0 %4820
  %s4822 = scalar_lea.vmem %s0, 7
  %v4823 = vld [vmem:[%s4822] ss:$8 sm:$0xf]
  %v4824 = vperm.slane %v4823, 0
  %v4825 = vperm.slane %v4823, 1
  %v4826 = vperm.slane %v4823, 2
  %v4827 = vperm.slane %v4823, 3
  %vm4828 = vcmp.eq.s32.totalorder %v731, %v4824
  %vm4829 = vcmp.eq.s32.totalorder %v731, %v4825
  %vm4830 = vcmp.eq.s32.totalorder %v731, %v4826
  %vm4831 = vcmp.eq.s32.totalorder %v731, %v4827
  %vm4832 = vcmp.eq.s32.totalorder %v732, %v4824
  %vm4833 = vcmp.eq.s32.totalorder %v732, %v4825
  %vm4834 = vcmp.eq.s32.totalorder %v732, %v4826
  %vm4835 = vcmp.eq.s32.totalorder %v732, %v4827
  %v4836 = vsel %vm4828, %v4818, 0.0
  %v4837 = vsel %vm4829, %v4818, 0.0
  %v4838 = vsel %vm4830, %v4818, 0.0
  %v4839 = vsel %vm4831, %v4818, 0.0
  %v4840 = vsel %vm4832, %v4821, 0.0
  %v4841 = vsel %vm4833, %v4821, 0.0
  %v4842 = vsel %vm4834, %v4821, 0.0
  %v4843 = vsel %vm4835, %v4821, 0.0
  %v4844 = vadd.f32 %v4836, %v4840
  %v4845 = vrot.slane %v4844, 4
  %v4846 = vadd.f32 %v4844, %v4845
  %v4847 = vrot.slane %v4846, 2
  %v4848 = vadd.f32 %v4846, %v4847
  %v4849 = vrot.slane %v4848, 1
  %v4850 = vadd.f32 %v4848, %v4849
  %v4851 = vadd.f32 %v4837, %v4841
  %v4852 = vrot.slane %v4851, 4
  %v4853 = vadd.f32 %v4851, %v4852
  %v4854 = vrot.slane %v4853, 2
  %v4855 = vadd.f32 %v4853, %v4854
  %v4856 = vrot.slane %v4855, 1
  %v4857 = vadd.f32 %v4855, %v4856
  %v4858 = vadd.f32 %v4838, %v4842
  %v4859 = vrot.slane %v4858, 4
  %v4860 = vadd.f32 %v4858, %v4859
  %v4861 = vrot.slane %v4860, 2
  %v4862 = vadd.f32 %v4860, %v4861
  %v4863 = vrot.slane %v4862, 1
  %v4864 = vadd.f32 %v4862, %v4863
  %v4865 = vadd.f32 %v4839, %v4843
  %v4866 = vrot.slane %v4865, 4
  %v4867 = vadd.f32 %v4865, %v4866
  %v4868 = vrot.slane %v4867, 2
  %v4869 = vadd.f32 %v4867, %v4868
  %v4870 = vrot.slane %v4869, 1
  %v4871 = vadd.f32 %v4869, %v4870
  %v4876 = vrot.slane %v4857, 7
  %v4877 = vrot.slane %v4864, 6
  %v4878 = vrot.slane %v4871, 5
  %v4879 = vsel %vm2361, %v4850, %v4876
  %v4880 = vsel %vm2363, %v4877, %v4878
  %v4881 = vsel %vm2365, %v4879, %v4880
  %v4883 = vadd.f32 %v4808, %v4881
  %v4884 = vld [vmem:[%s11] sm:$0xff]
  %v4885 = vld [vmem:[%s11 + $0x8] sm:$0xff]
  %4886 = vrot.lane.b32.xlu0 %v234, 72
  %v4887 = vpop.permute.xlu0 %4886
  %v4889 = vmul.f32 %v4884, %v4887
  %v4890 = vmul.f32 %v4885, %v4887
  %v4891 = vsel %vm2376, %v4889, 0.0
  %4892 = vadd.xlane.f32.xlu0 %v4891
  %v4893 = vpop.xlane.xlu0 %4892
  %v4894 = vsel %vm2376, %v4890, 0.0
  %4895 = vadd.xlane.f32.xlu0 %v4894
  %v4896 = vpop.xlane.xlu0 %4895
  %s4897 = scalar_lea.vmem %s0, 32
  %v4898 = vld [vmem:[%s4897] ss:$8 sm:$0xf]
  %v4899 = vperm.slane %v4898, 0
  %v4900 = vperm.slane %v4898, 1
  %v4901 = vperm.slane %v4898, 2
  %v4902 = vperm.slane %v4898, 3
  %vm4903 = vcmp.eq.s32.totalorder %v731, %v4899
  %vm4904 = vcmp.eq.s32.totalorder %v731, %v4900
  %vm4905 = vcmp.eq.s32.totalorder %v731, %v4901
  %vm4906 = vcmp.eq.s32.totalorder %v731, %v4902
  %vm4907 = vcmp.eq.s32.totalorder %v732, %v4899
  %vm4908 = vcmp.eq.s32.totalorder %v732, %v4900
  %vm4909 = vcmp.eq.s32.totalorder %v732, %v4901
  %vm4910 = vcmp.eq.s32.totalorder %v732, %v4902
  %v4911 = vsel %vm4903, %v4893, 0.0
  %v4912 = vsel %vm4904, %v4893, 0.0
  %v4913 = vsel %vm4905, %v4893, 0.0
  %v4914 = vsel %vm4906, %v4893, 0.0
  %v4915 = vsel %vm4907, %v4896, 0.0
  %v4916 = vsel %vm4908, %v4896, 0.0
  %v4917 = vsel %vm4909, %v4896, 0.0
  %v4918 = vsel %vm4910, %v4896, 0.0
  %v4919 = vadd.f32 %v4911, %v4915
  %v4920 = vrot.slane %v4919, 4
  %v4921 = vadd.f32 %v4919, %v4920
  %v4922 = vrot.slane %v4921, 2
  %v4923 = vadd.f32 %v4921, %v4922
  %v4924 = vrot.slane %v4923, 1
  %v4925 = vadd.f32 %v4923, %v4924
  %v4926 = vadd.f32 %v4912, %v4916
  %v4927 = vrot.slane %v4926, 4
  %v4928 = vadd.f32 %v4926, %v4927
  %v4929 = vrot.slane %v4928, 2
  %v4930 = vadd.f32 %v4928, %v4929
  %v4931 = vrot.slane %v4930, 1
  %v4932 = vadd.f32 %v4930, %v4931
  %v4933 = vadd.f32 %v4913, %v4917
  %v4934 = vrot.slane %v4933, 4
  %v4935 = vadd.f32 %v4933, %v4934
  %v4936 = vrot.slane %v4935, 2
  %v4937 = vadd.f32 %v4935, %v4936
  %v4938 = vrot.slane %v4937, 1
  %v4939 = vadd.f32 %v4937, %v4938
  %v4940 = vadd.f32 %v4914, %v4918
  %v4941 = vrot.slane %v4940, 4
  %v4942 = vadd.f32 %v4940, %v4941
  %v4943 = vrot.slane %v4942, 2
  %v4944 = vadd.f32 %v4942, %v4943
  %v4945 = vrot.slane %v4944, 1
  %v4946 = vadd.f32 %v4944, %v4945
  %v4951 = vrot.slane %v4932, 7
  %v4952 = vrot.slane %v4939, 6
  %v4953 = vrot.slane %v4946, 5
  %v4954 = vsel %vm2361, %v4925, %v4951
  %v4955 = vsel %vm2363, %v4952, %v4953
  %v4956 = vsel %vm2365, %v4954, %v4955
  %v4958 = vadd.f32 %v4883, %v4956
  %v4959 = vld [vmem:[%s12] sm:$0xff]
  %4960 = vrot.lane.b32.xlu0 %v234, 68
  %v4961 = vpop.permute.xlu0 %4960
  %v4963 = vmul.f32 %v4959, %v4961
  %v4964 = vsel %vm2376, %v4963, 0.0
  %4965 = vadd.xlane.f32.xlu0 %v4964
  %v4966 = vpop.xlane.xlu0 %4965
  %s4967 = scalar_lea.vmem %s0, 33
  %v4968 = vld [vmem:[%s4967] ss:$8 sm:$0xf]
  %v4969 = vperm.slane %v4968, 0
  %v4970 = vperm.slane %v4968, 1
  %v4971 = vperm.slane %v4968, 2
  %v4972 = vperm.slane %v4968, 3
  %vm4973 = vcmp.eq.s32.totalorder %v731, %v4969
  %vm4974 = vcmp.eq.s32.totalorder %v731, %v4970
  %vm4975 = vcmp.eq.s32.totalorder %v731, %v4971
  %vm4976 = vcmp.eq.s32.totalorder %v731, %v4972
  %v4977 = vsel %vm4973, %v4966, 0.0
  %v4978 = vsel %vm4974, %v4966, 0.0
  %v4979 = vsel %vm4975, %v4966, 0.0
  %v4980 = vsel %vm4976, %v4966, 0.0
  %v4981 = vrot.slane %v4977, 4
  %v4982 = vadd.f32 %v4977, %v4981
  %v4983 = vrot.slane %v4982, 2
  %v4984 = vadd.f32 %v4982, %v4983
  %v4985 = vrot.slane %v4984, 1
  %v4986 = vadd.f32 %v4984, %v4985
  %v4987 = vrot.slane %v4978, 4
  %v4988 = vadd.f32 %v4978, %v4987
  %v4989 = vrot.slane %v4988, 2
  %v4990 = vadd.f32 %v4988, %v4989
  %v4991 = vrot.slane %v4990, 1
  %v4992 = vadd.f32 %v4990, %v4991
  %v4993 = vrot.slane %v4979, 4
  %v4994 = vadd.f32 %v4979, %v4993
  %v4995 = vrot.slane %v4994, 2
  %v4996 = vadd.f32 %v4994, %v4995
  %v4997 = vrot.slane %v4996, 1
  %v4998 = vadd.f32 %v4996, %v4997
  %v4999 = vrot.slane %v4980, 4
  %v5000 = vadd.f32 %v4980, %v4999
  %v5001 = vrot.slane %v5000, 2
  %v5002 = vadd.f32 %v5000, %v5001
  %v5003 = vrot.slane %v5002, 1
  %v5004 = vadd.f32 %v5002, %v5003
  %v5009 = vrot.slane %v4992, 7
  %v5010 = vrot.slane %v4998, 6
  %v5011 = vrot.slane %v5004, 5
  %v5012 = vsel %vm2361, %v4986, %v5009
  %v5013 = vsel %vm2363, %v5010, %v5011
  %v5014 = vsel %vm2365, %v5012, %v5013
  %v5016 = vadd.f32 %v4958, %v5014
  %v5017 = vld [vmem:[%s13] sm:$0xff]
  %v5018 = vld [vmem:[%s13 + $0x8] sm:$0xff]
  %5019 = vrot.lane.b32.xlu0 %v234, 64
  %v5020 = vpop.permute.xlu0 %5019
  %v5022 = vmul.f32 %v5017, %v5020
  %v5023 = vmul.f32 %v5018, %v5020
  %v5024 = vsel %vm2376, %v5022, 0.0
  %5025 = vadd.xlane.f32.xlu0 %v5024
  %v5026 = vpop.xlane.xlu0 %5025
  %v5027 = vsel %vm2376, %v5023, 0.0
  %5028 = vadd.xlane.f32.xlu0 %v5027
  %v5029 = vpop.xlane.xlu0 %5028
  %s5030 = scalar_lea.vmem %s0, 34
  %v5031 = vld [vmem:[%s5030] ss:$8 sm:$0xf]
  %v5032 = vperm.slane %v5031, 0
  %v5033 = vperm.slane %v5031, 1
  %v5034 = vperm.slane %v5031, 2
  %v5035 = vperm.slane %v5031, 3
  %vm5036 = vcmp.eq.s32.totalorder %v731, %v5032
  %vm5037 = vcmp.eq.s32.totalorder %v731, %v5033
  %vm5038 = vcmp.eq.s32.totalorder %v731, %v5034
  %vm5039 = vcmp.eq.s32.totalorder %v731, %v5035
  %vm5040 = vcmp.eq.s32.totalorder %v732, %v5032
  %vm5041 = vcmp.eq.s32.totalorder %v732, %v5033
  %vm5042 = vcmp.eq.s32.totalorder %v732, %v5034
  %vm5043 = vcmp.eq.s32.totalorder %v732, %v5035
  %v5044 = vsel %vm5036, %v5026, 0.0
  %v5045 = vsel %vm5037, %v5026, 0.0
  %v5046 = vsel %vm5038, %v5026, 0.0
  %v5047 = vsel %vm5039, %v5026, 0.0
  %v5048 = vsel %vm5040, %v5029, 0.0
  %v5049 = vsel %vm5041, %v5029, 0.0
  %v5050 = vsel %vm5042, %v5029, 0.0
  %v5051 = vsel %vm5043, %v5029, 0.0
  %v5052 = vadd.f32 %v5044, %v5048
  %v5053 = vrot.slane %v5052, 4
  %v5054 = vadd.f32 %v5052, %v5053
  %v5055 = vrot.slane %v5054, 2
  %v5056 = vadd.f32 %v5054, %v5055
  %v5057 = vrot.slane %v5056, 1
  %v5058 = vadd.f32 %v5056, %v5057
  %v5059 = vadd.f32 %v5045, %v5049
  %v5060 = vrot.slane %v5059, 4
  %v5061 = vadd.f32 %v5059, %v5060
  %v5062 = vrot.slane %v5061, 2
  %v5063 = vadd.f32 %v5061, %v5062
  %v5064 = vrot.slane %v5063, 1
  %v5065 = vadd.f32 %v5063, %v5064
  %v5066 = vadd.f32 %v5046, %v5050
  %v5067 = vrot.slane %v5066, 4
  %v5068 = vadd.f32 %v5066, %v5067
  %v5069 = vrot.slane %v5068, 2
  %v5070 = vadd.f32 %v5068, %v5069
  %v5071 = vrot.slane %v5070, 1
  %v5072 = vadd.f32 %v5070, %v5071
  %v5073 = vadd.f32 %v5047, %v5051
  %v5074 = vrot.slane %v5073, 4
  %v5075 = vadd.f32 %v5073, %v5074
  %v5076 = vrot.slane %v5075, 2
  %v5077 = vadd.f32 %v5075, %v5076
  %v5078 = vrot.slane %v5077, 1
  %v5079 = vadd.f32 %v5077, %v5078
  %v5084 = vrot.slane %v5065, 7
  %v5085 = vrot.slane %v5072, 6
  %v5086 = vrot.slane %v5079, 5
  %v5087 = vsel %vm2361, %v5058, %v5084
  %v5088 = vsel %vm2363, %v5085, %v5086
  %v5089 = vsel %vm2365, %v5087, %v5088
  %v5091 = vadd.f32 %v5016, %v5089
  %v5092 = vld [vmem:[%s14] sm:$0xff]
  %v5093 = vld [vmem:[%s14 + $0x8] sm:$0xff]
  %v5094 = vld [vmem:[%s14 + $0x10] sm:$0xff]
  %v5095 = vld [vmem:[%s14 + $0x18] sm:$0xff]
  %v5096 = vld [vmem:[%s14 + $0x20] sm:$0xff]
  %v5097 = vld [vmem:[%s14 + $0x28] sm:$0xff]
  %v5098 = vld [vmem:[%s14 + $0x30] sm:$0xff]
  %v5099 = vld [vmem:[%s14 + $0x38] sm:$0xff]
  %v5100 = vld [vmem:[%s14 + $0x40] sm:$0xff]
  %5101 = vrot.lane.b32.xlu0 %v234, 60
  %v5102 = vpop.permute.xlu0 %5101
  %v5104 = vmul.f32 %v5092, %v5102
  %v5105 = vmul.f32 %v5093, %v5102
  %v5106 = vmul.f32 %v5094, %v5102
  %v5107 = vmul.f32 %v5095, %v5102
  %v5108 = vmul.f32 %v5096, %v5102
  %v5109 = vmul.f32 %v5097, %v5102
  %v5110 = vmul.f32 %v5098, %v5102
  %v5111 = vmul.f32 %v5099, %v5102
  %v5112 = vmul.f32 %v5100, %v5102
  %v5113 = vsel %vm359, %v5104, 0.0
  %5114 = vadd.xlane.f32.xlu0 %v5113
  %v5115 = vpop.xlane.xlu0 %5114
  %v5116 = vsel %vm359, %v5105, 0.0
  %5117 = vadd.xlane.f32.xlu0 %v5116
  %v5118 = vpop.xlane.xlu0 %5117
  %v5119 = vsel %vm359, %v5106, 0.0
  %5120 = vadd.xlane.f32.xlu0 %v5119
  %v5121 = vpop.xlane.xlu0 %5120
  %v5122 = vsel %vm359, %v5107, 0.0
  %5123 = vadd.xlane.f32.xlu0 %v5122
  %v5124 = vpop.xlane.xlu0 %5123
  %v5125 = vsel %vm359, %v5108, 0.0
  %5126 = vadd.xlane.f32.xlu0 %v5125
  %v5127 = vpop.xlane.xlu0 %5126
  %v5128 = vsel %vm359, %v5109, 0.0
  %5129 = vadd.xlane.f32.xlu0 %v5128
  %v5130 = vpop.xlane.xlu0 %5129
  %v5131 = vsel %vm359, %v5110, 0.0
  %5132 = vadd.xlane.f32.xlu0 %v5131
  %v5133 = vpop.xlane.xlu0 %5132
  %v5134 = vsel %vm359, %v5111, 0.0
  %5135 = vadd.xlane.f32.xlu0 %v5134
  %v5136 = vpop.xlane.xlu0 %5135
  %v5137 = vsel %vm359, %v5112, 0.0
  %5138 = vadd.xlane.f32.xlu0 %v5137
  %v5139 = vpop.xlane.xlu0 %5138
  %s5140 = scalar_lea.vmem %s0, 35
  %v5141 = vld [vmem:[%s5140] ss:$8 sm:$0xf]
  %v5142 = vperm.slane %v5141, 0
  %v5143 = vperm.slane %v5141, 1
  %v5144 = vperm.slane %v5141, 2
  %v5145 = vperm.slane %v5141, 3
  %vm5146 = vcmp.eq.s32.totalorder %v731, %v5142
  %vm5147 = vcmp.eq.s32.totalorder %v731, %v5143
  %vm5148 = vcmp.eq.s32.totalorder %v731, %v5144
  %vm5149 = vcmp.eq.s32.totalorder %v731, %v5145
  %vm5150 = vcmp.eq.s32.totalorder %v732, %v5142
  %vm5151 = vcmp.eq.s32.totalorder %v732, %v5143
  %vm5152 = vcmp.eq.s32.totalorder %v732, %v5144
  %vm5153 = vcmp.eq.s32.totalorder %v732, %v5145
  %vm5154 = vcmp.eq.s32.totalorder %v733, %v5142
  %vm5155 = vcmp.eq.s32.totalorder %v733, %v5143
  %vm5156 = vcmp.eq.s32.totalorder %v733, %v5144
  %vm5157 = vcmp.eq.s32.totalorder %v733, %v5145
  %vm5158 = vcmp.eq.s32.totalorder %v734, %v5142
  %vm5159 = vcmp.eq.s32.totalorder %v734, %v5143
  %vm5160 = vcmp.eq.s32.totalorder %v734, %v5144
  %vm5161 = vcmp.eq.s32.totalorder %v734, %v5145
  %vm5162 = vcmp.eq.s32.totalorder %v735, %v5142
  %vm5163 = vcmp.eq.s32.totalorder %v735, %v5143
  %vm5164 = vcmp.eq.s32.totalorder %v735, %v5144
  %vm5165 = vcmp.eq.s32.totalorder %v735, %v5145
  %vm5166 = vcmp.eq.s32.totalorder %v736, %v5142
  %vm5167 = vcmp.eq.s32.totalorder %v736, %v5143
  %vm5168 = vcmp.eq.s32.totalorder %v736, %v5144
  %vm5169 = vcmp.eq.s32.totalorder %v736, %v5145
  %vm5170 = vcmp.eq.s32.totalorder %v737, %v5142
  %vm5171 = vcmp.eq.s32.totalorder %v737, %v5143
  %vm5172 = vcmp.eq.s32.totalorder %v737, %v5144
  %vm5173 = vcmp.eq.s32.totalorder %v737, %v5145
  %vm5174 = vcmp.eq.s32.totalorder %v738, %v5142
  %vm5175 = vcmp.eq.s32.totalorder %v738, %v5143
  %vm5176 = vcmp.eq.s32.totalorder %v738, %v5144
  %vm5177 = vcmp.eq.s32.totalorder %v738, %v5145
  %vm5178 = vcmp.eq.s32.totalorder %v739, %v5142
  %vm5179 = vcmp.eq.s32.totalorder %v739, %v5143
  %vm5180 = vcmp.eq.s32.totalorder %v739, %v5144
  %vm5181 = vcmp.eq.s32.totalorder %v739, %v5145
  %v5182 = vsel %vm5146, %v5115, 0.0
  %v5183 = vsel %vm5147, %v5115, 0.0
  %v5184 = vsel %vm5148, %v5115, 0.0
  %v5185 = vsel %vm5149, %v5115, 0.0
  %v5186 = vsel %vm5150, %v5118, 0.0
  %v5187 = vsel %vm5151, %v5118, 0.0
  %v5188 = vsel %vm5152, %v5118, 0.0
  %v5189 = vsel %vm5153, %v5118, 0.0
  %v5190 = vsel %vm5154, %v5121, 0.0
  %v5191 = vsel %vm5155, %v5121, 0.0
  %v5192 = vsel %vm5156, %v5121, 0.0
  %v5193 = vsel %vm5157, %v5121, 0.0
  %v5194 = vsel %vm5158, %v5124, 0.0
  %v5195 = vsel %vm5159, %v5124, 0.0
  %v5196 = vsel %vm5160, %v5124, 0.0
  %v5197 = vsel %vm5161, %v5124, 0.0
  %v5198 = vsel %vm5162, %v5127, 0.0
  %v5199 = vsel %vm5163, %v5127, 0.0
  %v5200 = vsel %vm5164, %v5127, 0.0
  %v5201 = vsel %vm5165, %v5127, 0.0
  %v5202 = vsel %vm5166, %v5130, 0.0
  %v5203 = vsel %vm5167, %v5130, 0.0
  %v5204 = vsel %vm5168, %v5130, 0.0
  %v5205 = vsel %vm5169, %v5130, 0.0
  %v5206 = vsel %vm5170, %v5133, 0.0
  %v5207 = vsel %vm5171, %v5133, 0.0
  %v5208 = vsel %vm5172, %v5133, 0.0
  %v5209 = vsel %vm5173, %v5133, 0.0
  %v5210 = vsel %vm5174, %v5136, 0.0
  %v5211 = vsel %vm5175, %v5136, 0.0
  %v5212 = vsel %vm5176, %v5136, 0.0
  %v5213 = vsel %vm5177, %v5136, 0.0
  %v5214 = vsel %vm5178, %v5139, 0.0
  %v5215 = vsel %vm5179, %v5139, 0.0
  %v5216 = vsel %vm5180, %v5139, 0.0
  %v5217 = vsel %vm5181, %v5139, 0.0
  %v5218 = vadd.f32 %v5182, %v5186
  %v5219 = vadd.f32 %v5218, %v5190
  %v5220 = vadd.f32 %v5219, %v5194
  %v5221 = vadd.f32 %v5220, %v5198
  %v5222 = vadd.f32 %v5221, %v5202
  %v5223 = vadd.f32 %v5222, %v5206
  %v5224 = vadd.f32 %v5223, %v5210
  %v5225 = vadd.f32 %v5224, %v5214
  %v5226 = vrot.slane %v5225, 4
  %v5227 = vadd.f32 %v5225, %v5226
  %v5228 = vrot.slane %v5227, 2
  %v5229 = vadd.f32 %v5227, %v5228
  %v5230 = vrot.slane %v5229, 1
  %v5231 = vadd.f32 %v5229, %v5230
  %v5232 = vadd.f32 %v5183, %v5187
  %v5233 = vadd.f32 %v5232, %v5191
  %v5234 = vadd.f32 %v5233, %v5195
  %v5235 = vadd.f32 %v5234, %v5199
  %v5236 = vadd.f32 %v5235, %v5203
  %v5237 = vadd.f32 %v5236, %v5207
  %v5238 = vadd.f32 %v5237, %v5211
  %v5239 = vadd.f32 %v5238, %v5215
  %v5240 = vrot.slane %v5239, 4
  %v5241 = vadd.f32 %v5239, %v5240
  %v5242 = vrot.slane %v5241, 2
  %v5243 = vadd.f32 %v5241, %v5242
  %v5244 = vrot.slane %v5243, 1
  %v5245 = vadd.f32 %v5243, %v5244
  %v5246 = vadd.f32 %v5184, %v5188
  %v5247 = vadd.f32 %v5246, %v5192
  %v5248 = vadd.f32 %v5247, %v5196
  %v5249 = vadd.f32 %v5248, %v5200
  %v5250 = vadd.f32 %v5249, %v5204
  %v5251 = vadd.f32 %v5250, %v5208
  %v5252 = vadd.f32 %v5251, %v5212
  %v5253 = vadd.f32 %v5252, %v5216
  %v5254 = vrot.slane %v5253, 4
  %v5255 = vadd.f32 %v5253, %v5254
  %v5256 = vrot.slane %v5255, 2
  %v5257 = vadd.f32 %v5255, %v5256
  %v5258 = vrot.slane %v5257, 1
  %v5259 = vadd.f32 %v5257, %v5258
  %v5260 = vadd.f32 %v5185, %v5189
  %v5261 = vadd.f32 %v5260, %v5193
  %v5262 = vadd.f32 %v5261, %v5197
  %v5263 = vadd.f32 %v5262, %v5201
  %v5264 = vadd.f32 %v5263, %v5205
  %v5265 = vadd.f32 %v5264, %v5209
  %v5266 = vadd.f32 %v5265, %v5213
  %v5267 = vadd.f32 %v5266, %v5217
  %v5268 = vrot.slane %v5267, 4
  %v5269 = vadd.f32 %v5267, %v5268
  %v5270 = vrot.slane %v5269, 2
  %v5271 = vadd.f32 %v5269, %v5270
  %v5272 = vrot.slane %v5271, 1
  %v5273 = vadd.f32 %v5271, %v5272
  %v5278 = vrot.slane %v5245, 7
  %v5279 = vrot.slane %v5259, 6
  %v5280 = vrot.slane %v5273, 5
  %v5281 = vsel %vm2361, %v5231, %v5278
  %v5282 = vsel %vm2363, %v5279, %v5280
  %v5283 = vsel %vm2365, %v5281, %v5282
  %v5285 = vadd.f32 %v5091, %v5283
  %v5286 = vld [vmem:[%s15] sm:$0xff]
  %v5287 = vld [vmem:[%s15 + $0x8] sm:$0xff]
  %v5288 = vld [vmem:[%s15 + $0x10] sm:$0xff]
  %v5289 = vld [vmem:[%s15 + $0x18] sm:$0xff]
  %v5290 = vld [vmem:[%s15 + $0x20] sm:$0xff]
  %v5291 = vld [vmem:[%s15 + $0x28] sm:$0xff]
  %v5292 = vld [vmem:[%s15 + $0x30] sm:$0xff]
  %v5293 = vld [vmem:[%s15 + $0x38] sm:$0xff]
  %v5294 = vld [vmem:[%s15 + $0x40] sm:$0xff]
  %5295 = vrot.lane.b32.xlu0 %v234, 52
  %v5296 = vpop.permute.xlu0 %5295
  %v5298 = vmul.f32 %v5286, %v5296
  %v5299 = vmul.f32 %v5287, %v5296
  %v5300 = vmul.f32 %v5288, %v5296
  %v5301 = vmul.f32 %v5289, %v5296
  %v5302 = vmul.f32 %v5290, %v5296
  %v5303 = vmul.f32 %v5291, %v5296
  %v5304 = vmul.f32 %v5292, %v5296
  %v5305 = vmul.f32 %v5293, %v5296
  %v5306 = vmul.f32 %v5294, %v5296
  %v5307 = vsel %vm359, %v5298, 0.0
  %5308 = vadd.xlane.f32.xlu0 %v5307
  %v5309 = vpop.xlane.xlu0 %5308
  %v5310 = vsel %vm359, %v5299, 0.0
  %5311 = vadd.xlane.f32.xlu0 %v5310
  %v5312 = vpop.xlane.xlu0 %5311
  %v5313 = vsel %vm359, %v5300, 0.0
  %5314 = vadd.xlane.f32.xlu0 %v5313
  %v5315 = vpop.xlane.xlu0 %5314
  %v5316 = vsel %vm359, %v5301, 0.0
  %5317 = vadd.xlane.f32.xlu0 %v5316
  %v5318 = vpop.xlane.xlu0 %5317
  %v5319 = vsel %vm359, %v5302, 0.0
  %5320 = vadd.xlane.f32.xlu0 %v5319
  %v5321 = vpop.xlane.xlu0 %5320
  %v5322 = vsel %vm359, %v5303, 0.0
  %5323 = vadd.xlane.f32.xlu0 %v5322
  %v5324 = vpop.xlane.xlu0 %5323
  %v5325 = vsel %vm359, %v5304, 0.0
  %5326 = vadd.xlane.f32.xlu0 %v5325
  %v5327 = vpop.xlane.xlu0 %5326
  %v5328 = vsel %vm359, %v5305, 0.0
  %5329 = vadd.xlane.f32.xlu0 %v5328
  %v5330 = vpop.xlane.xlu0 %5329
  %v5331 = vsel %vm359, %v5306, 0.0
  %5332 = vadd.xlane.f32.xlu0 %v5331
  %v5333 = vpop.xlane.xlu0 %5332
  %s5334 = scalar_lea.vmem %s0, 36
  %v5335 = vld [vmem:[%s5334] ss:$8 sm:$0xf]
  %v5336 = vperm.slane %v5335, 0
  %v5337 = vperm.slane %v5335, 1
  %v5338 = vperm.slane %v5335, 2
  %v5339 = vperm.slane %v5335, 3
  %vm5340 = vcmp.eq.s32.totalorder %v731, %v5336
  %vm5341 = vcmp.eq.s32.totalorder %v731, %v5337
  %vm5342 = vcmp.eq.s32.totalorder %v731, %v5338
  %vm5343 = vcmp.eq.s32.totalorder %v731, %v5339
  %vm5344 = vcmp.eq.s32.totalorder %v732, %v5336
  %vm5345 = vcmp.eq.s32.totalorder %v732, %v5337
  %vm5346 = vcmp.eq.s32.totalorder %v732, %v5338
  %vm5347 = vcmp.eq.s32.totalorder %v732, %v5339
  %vm5348 = vcmp.eq.s32.totalorder %v733, %v5336
  %vm5349 = vcmp.eq.s32.totalorder %v733, %v5337
  %vm5350 = vcmp.eq.s32.totalorder %v733, %v5338
  %vm5351 = vcmp.eq.s32.totalorder %v733, %v5339
  %vm5352 = vcmp.eq.s32.totalorder %v734, %v5336
  %vm5353 = vcmp.eq.s32.totalorder %v734, %v5337
  %vm5354 = vcmp.eq.s32.totalorder %v734, %v5338
  %vm5355 = vcmp.eq.s32.totalorder %v734, %v5339
  %vm5356 = vcmp.eq.s32.totalorder %v735, %v5336
  %vm5357 = vcmp.eq.s32.totalorder %v735, %v5337
  %vm5358 = vcmp.eq.s32.totalorder %v735, %v5338
  %vm5359 = vcmp.eq.s32.totalorder %v735, %v5339
  %vm5360 = vcmp.eq.s32.totalorder %v736, %v5336
  %vm5361 = vcmp.eq.s32.totalorder %v736, %v5337
  %vm5362 = vcmp.eq.s32.totalorder %v736, %v5338
  %vm5363 = vcmp.eq.s32.totalorder %v736, %v5339
  %vm5364 = vcmp.eq.s32.totalorder %v737, %v5336
  %vm5365 = vcmp.eq.s32.totalorder %v737, %v5337
  %vm5366 = vcmp.eq.s32.totalorder %v737, %v5338
  %vm5367 = vcmp.eq.s32.totalorder %v737, %v5339
  %vm5368 = vcmp.eq.s32.totalorder %v738, %v5336
  %vm5369 = vcmp.eq.s32.totalorder %v738, %v5337
  %vm5370 = vcmp.eq.s32.totalorder %v738, %v5338
  %vm5371 = vcmp.eq.s32.totalorder %v738, %v5339
  %vm5372 = vcmp.eq.s32.totalorder %v739, %v5336
  %vm5373 = vcmp.eq.s32.totalorder %v739, %v5337
  %vm5374 = vcmp.eq.s32.totalorder %v739, %v5338
  %vm5375 = vcmp.eq.s32.totalorder %v739, %v5339
  %v5376 = vsel %vm5340, %v5309, 0.0
  %v5377 = vsel %vm5341, %v5309, 0.0
  %v5378 = vsel %vm5342, %v5309, 0.0
  %v5379 = vsel %vm5343, %v5309, 0.0
  %v5380 = vsel %vm5344, %v5312, 0.0
  %v5381 = vsel %vm5345, %v5312, 0.0
  %v5382 = vsel %vm5346, %v5312, 0.0
  %v5383 = vsel %vm5347, %v5312, 0.0
  %v5384 = vsel %vm5348, %v5315, 0.0
  %v5385 = vsel %vm5349, %v5315, 0.0
  %v5386 = vsel %vm5350, %v5315, 0.0
  %v5387 = vsel %vm5351, %v5315, 0.0
  %v5388 = vsel %vm5352, %v5318, 0.0
  %v5389 = vsel %vm5353, %v5318, 0.0
  %v5390 = vsel %vm5354, %v5318, 0.0
  %v5391 = vsel %vm5355, %v5318, 0.0
  %v5392 = vsel %vm5356, %v5321, 0.0
  %v5393 = vsel %vm5357, %v5321, 0.0
  %v5394 = vsel %vm5358, %v5321, 0.0
  %v5395 = vsel %vm5359, %v5321, 0.0
  %v5396 = vsel %vm5360, %v5324, 0.0
  %v5397 = vsel %vm5361, %v5324, 0.0
  %v5398 = vsel %vm5362, %v5324, 0.0
  %v5399 = vsel %vm5363, %v5324, 0.0
  %v5400 = vsel %vm5364, %v5327, 0.0
  %v5401 = vsel %vm5365, %v5327, 0.0
  %v5402 = vsel %vm5366, %v5327, 0.0
  %v5403 = vsel %vm5367, %v5327, 0.0
  %v5404 = vsel %vm5368, %v5330, 0.0
  %v5405 = vsel %vm5369, %v5330, 0.0
  %v5406 = vsel %vm5370, %v5330, 0.0
  %v5407 = vsel %vm5371, %v5330, 0.0
  %v5408 = vsel %vm5372, %v5333, 0.0
  %v5409 = vsel %vm5373, %v5333, 0.0
  %v5410 = vsel %vm5374, %v5333, 0.0
  %v5411 = vsel %vm5375, %v5333, 0.0
  %v5412 = vadd.f32 %v5376, %v5380
  %v5413 = vadd.f32 %v5412, %v5384
  %v5414 = vadd.f32 %v5413, %v5388
  %v5415 = vadd.f32 %v5414, %v5392
  %v5416 = vadd.f32 %v5415, %v5396
  %v5417 = vadd.f32 %v5416, %v5400
  %v5418 = vadd.f32 %v5417, %v5404
  %v5419 = vadd.f32 %v5418, %v5408
  %v5420 = vrot.slane %v5419, 4
  %v5421 = vadd.f32 %v5419, %v5420
  %v5422 = vrot.slane %v5421, 2
  %v5423 = vadd.f32 %v5421, %v5422
  %v5424 = vrot.slane %v5423, 1
  %v5425 = vadd.f32 %v5423, %v5424
  %v5426 = vadd.f32 %v5377, %v5381
  %v5427 = vadd.f32 %v5426, %v5385
  %v5428 = vadd.f32 %v5427, %v5389
  %v5429 = vadd.f32 %v5428, %v5393
  %v5430 = vadd.f32 %v5429, %v5397
  %v5431 = vadd.f32 %v5430, %v5401
  %v5432 = vadd.f32 %v5431, %v5405
  %v5433 = vadd.f32 %v5432, %v5409
  %v5434 = vrot.slane %v5433, 4
  %v5435 = vadd.f32 %v5433, %v5434
  %v5436 = vrot.slane %v5435, 2
  %v5437 = vadd.f32 %v5435, %v5436
  %v5438 = vrot.slane %v5437, 1
  %v5439 = vadd.f32 %v5437, %v5438
  %v5440 = vadd.f32 %v5378, %v5382
  %v5441 = vadd.f32 %v5440, %v5386
  %v5442 = vadd.f32 %v5441, %v5390
  %v5443 = vadd.f32 %v5442, %v5394
  %v5444 = vadd.f32 %v5443, %v5398
  %v5445 = vadd.f32 %v5444, %v5402
  %v5446 = vadd.f32 %v5445, %v5406
  %v5447 = vadd.f32 %v5446, %v5410
  %v5448 = vrot.slane %v5447, 4
  %v5449 = vadd.f32 %v5447, %v5448
  %v5450 = vrot.slane %v5449, 2
  %v5451 = vadd.f32 %v5449, %v5450
  %v5452 = vrot.slane %v5451, 1
  %v5453 = vadd.f32 %v5451, %v5452
  %v5454 = vadd.f32 %v5379, %v5383
  %v5455 = vadd.f32 %v5454, %v5387
  %v5456 = vadd.f32 %v5455, %v5391
  %v5457 = vadd.f32 %v5456, %v5395
  %v5458 = vadd.f32 %v5457, %v5399
  %v5459 = vadd.f32 %v5458, %v5403
  %v5460 = vadd.f32 %v5459, %v5407
  %v5461 = vadd.f32 %v5460, %v5411
  %v5462 = vrot.slane %v5461, 4
  %v5463 = vadd.f32 %v5461, %v5462
  %v5464 = vrot.slane %v5463, 2
  %v5465 = vadd.f32 %v5463, %v5464
  %v5466 = vrot.slane %v5465, 1
  %v5467 = vadd.f32 %v5465, %v5466
  %v5472 = vrot.slane %v5439, 7
  %v5473 = vrot.slane %v5453, 6
  %v5474 = vrot.slane %v5467, 5
  %v5475 = vsel %vm2361, %v5425, %v5472
  %v5476 = vsel %vm2363, %v5473, %v5474
  %v5477 = vsel %vm2365, %v5475, %v5476
  %v5479 = vadd.f32 %v5285, %v5477
  %v5480 = vld [vmem:[%s16] sm:$0xff]
  %v5481 = vld [vmem:[%s16 + $0x8] sm:$0xff]
  %v5482 = vld [vmem:[%s16 + $0x10] sm:$0xff]
  %v5483 = vld [vmem:[%s16 + $0x18] sm:$0xff]
  %v5484 = vld [vmem:[%s16 + $0x20] sm:$0xff]
  %v5485 = vld [vmem:[%s16 + $0x28] sm:$0xff]
  %v5486 = vld [vmem:[%s16 + $0x30] sm:$0xff]
  %v5487 = vld [vmem:[%s16 + $0x38] sm:$0xff]
  %v5488 = vld [vmem:[%s16 + $0x40] sm:$0xff]
  %v5489 = vld [vmem:[%s16 + $0x48] sm:$0xff]
  %v5490 = vld [vmem:[%s16 + $0x50] sm:$0xff]
  %v5491 = vld [vmem:[%s16 + $0x58] sm:$0xff]
  %v5492 = vld [vmem:[%s16 + $0x60] sm:$0xff]
  %v5493 = vld [vmem:[%s16 + $0x68] sm:$0xff]
  %v5494 = vld [vmem:[%s16 + $0x70] sm:$0xff]
  %v5495 = vld [vmem:[%s16 + $0x78] sm:$0xff]
  %v5496 = vld [vmem:[%s16 + $0x80] sm:$0xff]
  %v5497 = vld [vmem:[%s16 + $0x88] sm:$0xff]
  %v5498 = vld [vmem:[%s16 + $0x90] sm:$0xff]
  %v5499 = vld [vmem:[%s16 + $0x98] sm:$0xff]
  %v5500 = vld [vmem:[%s16 + $0xa0] sm:$0xff]
  %v5501 = vld [vmem:[%s16 + $0xa8] sm:$0xff]
  %v5502 = vld [vmem:[%s16 + $0xb0] sm:$0xff]
  %v5503 = vld [vmem:[%s16 + $0xb8] sm:$0xff]
  %v5504 = vld [vmem:[%s16 + $0xc0] sm:$0xff]
  %v5505 = vld [vmem:[%s16 + $0xc8] sm:$0xff]
  %v5506 = vld [vmem:[%s16 + $0xd0] sm:$0xff]
  %v5507 = vld [vmem:[%s16 + $0xd8] sm:$0xff]
  %v5508 = vld [vmem:[%s16 + $0xe0] sm:$0xff]
  %5509 = vrot.lane.b32.xlu0 %v234, 44
  %v5510 = vpop.permute.xlu0 %5509
  %v5512 = vmul.f32 %v5480, %v5510
  %v5513 = vmul.f32 %v5481, %v5510
  %v5514 = vmul.f32 %v5482, %v5510
  %v5515 = vmul.f32 %v5483, %v5510
  %v5516 = vmul.f32 %v5484, %v5510
  %v5517 = vmul.f32 %v5485, %v5510
  %v5518 = vmul.f32 %v5486, %v5510
  %v5519 = vmul.f32 %v5487, %v5510
  %v5520 = vmul.f32 %v5488, %v5510
  %v5521 = vmul.f32 %v5489, %v5510
  %v5522 = vmul.f32 %v5490, %v5510
  %v5523 = vmul.f32 %v5491, %v5510
  %v5524 = vmul.f32 %v5492, %v5510
  %v5525 = vmul.f32 %v5493, %v5510
  %v5526 = vmul.f32 %v5494, %v5510
  %v5527 = vmul.f32 %v5495, %v5510
  %v5528 = vmul.f32 %v5496, %v5510
  %v5529 = vmul.f32 %v5497, %v5510
  %v5530 = vmul.f32 %v5498, %v5510
  %v5531 = vmul.f32 %v5499, %v5510
  %v5532 = vmul.f32 %v5500, %v5510
  %v5533 = vmul.f32 %v5501, %v5510
  %v5534 = vmul.f32 %v5502, %v5510
  %v5535 = vmul.f32 %v5503, %v5510
  %v5536 = vmul.f32 %v5504, %v5510
  %v5537 = vmul.f32 %v5505, %v5510
  %v5538 = vmul.f32 %v5506, %v5510
  %v5539 = vmul.f32 %v5507, %v5510
  %v5540 = vmul.f32 %v5508, %v5510
  %v5541 = vsel %vm359, %v5512, 0.0
  %5542 = vadd.xlane.f32.xlu0 %v5541
  %v5543 = vpop.xlane.xlu0 %5542
  %v5544 = vsel %vm359, %v5513, 0.0
  %5545 = vadd.xlane.f32.xlu0 %v5544
  %v5546 = vpop.xlane.xlu0 %5545
  %v5547 = vsel %vm359, %v5514, 0.0
  %5548 = vadd.xlane.f32.xlu0 %v5547
  %v5549 = vpop.xlane.xlu0 %5548
  %v5550 = vsel %vm359, %v5515, 0.0
  %5551 = vadd.xlane.f32.xlu0 %v5550
  %v5552 = vpop.xlane.xlu0 %5551
  %v5553 = vsel %vm359, %v5516, 0.0
  %5554 = vadd.xlane.f32.xlu0 %v5553
  %v5555 = vpop.xlane.xlu0 %5554
  %v5556 = vsel %vm359, %v5517, 0.0
  %5557 = vadd.xlane.f32.xlu0 %v5556
  %v5558 = vpop.xlane.xlu0 %5557
  %v5559 = vsel %vm359, %v5518, 0.0
  %5560 = vadd.xlane.f32.xlu0 %v5559
  %v5561 = vpop.xlane.xlu0 %5560
  %v5562 = vsel %vm359, %v5519, 0.0
  %5563 = vadd.xlane.f32.xlu0 %v5562
  %v5564 = vpop.xlane.xlu0 %5563
  %v5565 = vsel %vm359, %v5520, 0.0
  %5566 = vadd.xlane.f32.xlu0 %v5565
  %v5567 = vpop.xlane.xlu0 %5566
  %v5568 = vsel %vm359, %v5521, 0.0
  %5569 = vadd.xlane.f32.xlu0 %v5568
  %v5570 = vpop.xlane.xlu0 %5569
  %v5571 = vsel %vm359, %v5522, 0.0
  %5572 = vadd.xlane.f32.xlu0 %v5571
  %v5573 = vpop.xlane.xlu0 %5572
  %v5574 = vsel %vm359, %v5523, 0.0
  %5575 = vadd.xlane.f32.xlu0 %v5574
  %v5576 = vpop.xlane.xlu0 %5575
  %v5577 = vsel %vm359, %v5524, 0.0
  %5578 = vadd.xlane.f32.xlu0 %v5577
  %v5579 = vpop.xlane.xlu0 %5578
  %v5580 = vsel %vm359, %v5525, 0.0
  %5581 = vadd.xlane.f32.xlu0 %v5580
  %v5582 = vpop.xlane.xlu0 %5581
  %v5583 = vsel %vm359, %v5526, 0.0
  %5584 = vadd.xlane.f32.xlu0 %v5583
  %v5585 = vpop.xlane.xlu0 %5584
  %v5586 = vsel %vm359, %v5527, 0.0
  %5587 = vadd.xlane.f32.xlu0 %v5586
  %v5588 = vpop.xlane.xlu0 %5587
  %v5589 = vsel %vm359, %v5528, 0.0
  %5590 = vadd.xlane.f32.xlu0 %v5589
  %v5591 = vpop.xlane.xlu0 %5590
  %v5592 = vsel %vm359, %v5529, 0.0
  %5593 = vadd.xlane.f32.xlu0 %v5592
  %v5594 = vpop.xlane.xlu0 %5593
  %v5595 = vsel %vm359, %v5530, 0.0
  %5596 = vadd.xlane.f32.xlu0 %v5595
  %v5597 = vpop.xlane.xlu0 %5596
  %v5598 = vsel %vm359, %v5531, 0.0
  %5599 = vadd.xlane.f32.xlu0 %v5598
  %v5600 = vpop.xlane.xlu0 %5599
  %v5601 = vsel %vm359, %v5532, 0.0
  %5602 = vadd.xlane.f32.xlu0 %v5601
  %v5603 = vpop.xlane.xlu0 %5602
  %v5604 = vsel %vm359, %v5533, 0.0
  %5605 = vadd.xlane.f32.xlu0 %v5604
  %v5606 = vpop.xlane.xlu0 %5605
  %v5607 = vsel %vm359, %v5534, 0.0
  %5608 = vadd.xlane.f32.xlu0 %v5607
  %v5609 = vpop.xlane.xlu0 %5608
  %v5610 = vsel %vm359, %v5535, 0.0
  %5611 = vadd.xlane.f32.xlu0 %v5610
  %v5612 = vpop.xlane.xlu0 %5611
  %v5613 = vsel %vm359, %v5536, 0.0
  %5614 = vadd.xlane.f32.xlu0 %v5613
  %v5615 = vpop.xlane.xlu0 %5614
  %v5616 = vsel %vm359, %v5537, 0.0
  %5617 = vadd.xlane.f32.xlu0 %v5616
  %v5618 = vpop.xlane.xlu0 %5617
  %v5619 = vsel %vm359, %v5538, 0.0
  %5620 = vadd.xlane.f32.xlu0 %v5619
  %v5621 = vpop.xlane.xlu0 %5620
  %v5622 = vsel %vm359, %v5539, 0.0
  %5623 = vadd.xlane.f32.xlu0 %v5622
  %v5624 = vpop.xlane.xlu0 %5623
  %v5625 = vsel %vm359, %v5540, 0.0
  %5626 = vadd.xlane.f32.xlu0 %v5625
  %v5627 = vpop.xlane.xlu0 %5626
  %s5628 = scalar_lea.vmem %s0, 37
  %v5629 = vld [vmem:[%s5628] ss:$8 sm:$0xf]
  %v5630 = vperm.slane %v5629, 0
  %v5631 = vperm.slane %v5629, 1
  %v5632 = vperm.slane %v5629, 2
  %v5633 = vperm.slane %v5629, 3
  %vm5634 = vcmp.eq.s32.totalorder %v731, %v5630
  %vm5635 = vcmp.eq.s32.totalorder %v731, %v5631
  %vm5636 = vcmp.eq.s32.totalorder %v731, %v5632
  %vm5637 = vcmp.eq.s32.totalorder %v731, %v5633
  %vm5638 = vcmp.eq.s32.totalorder %v732, %v5630
  %vm5639 = vcmp.eq.s32.totalorder %v732, %v5631
  %vm5640 = vcmp.eq.s32.totalorder %v732, %v5632
  %vm5641 = vcmp.eq.s32.totalorder %v732, %v5633
  %vm5642 = vcmp.eq.s32.totalorder %v733, %v5630
  %vm5643 = vcmp.eq.s32.totalorder %v733, %v5631
  %vm5644 = vcmp.eq.s32.totalorder %v733, %v5632
  %vm5645 = vcmp.eq.s32.totalorder %v733, %v5633
  %vm5646 = vcmp.eq.s32.totalorder %v734, %v5630
  %vm5647 = vcmp.eq.s32.totalorder %v734, %v5631
  %vm5648 = vcmp.eq.s32.totalorder %v734, %v5632
  %vm5649 = vcmp.eq.s32.totalorder %v734, %v5633
  %vm5650 = vcmp.eq.s32.totalorder %v735, %v5630
  %vm5651 = vcmp.eq.s32.totalorder %v735, %v5631
  %vm5652 = vcmp.eq.s32.totalorder %v735, %v5632
  %vm5653 = vcmp.eq.s32.totalorder %v735, %v5633
  %vm5654 = vcmp.eq.s32.totalorder %v736, %v5630
  %vm5655 = vcmp.eq.s32.totalorder %v736, %v5631
  %vm5656 = vcmp.eq.s32.totalorder %v736, %v5632
  %vm5657 = vcmp.eq.s32.totalorder %v736, %v5633
  %vm5658 = vcmp.eq.s32.totalorder %v737, %v5630
  %vm5659 = vcmp.eq.s32.totalorder %v737, %v5631
  %vm5660 = vcmp.eq.s32.totalorder %v737, %v5632
  %vm5661 = vcmp.eq.s32.totalorder %v737, %v5633
  %vm5662 = vcmp.eq.s32.totalorder %v738, %v5630
  %vm5663 = vcmp.eq.s32.totalorder %v738, %v5631
  %vm5664 = vcmp.eq.s32.totalorder %v738, %v5632
  %vm5665 = vcmp.eq.s32.totalorder %v738, %v5633
  %vm5666 = vcmp.eq.s32.totalorder %v739, %v5630
  %vm5667 = vcmp.eq.s32.totalorder %v739, %v5631
  %vm5668 = vcmp.eq.s32.totalorder %v739, %v5632
  %vm5669 = vcmp.eq.s32.totalorder %v739, %v5633
  %vm5670 = vcmp.eq.s32.totalorder %v740, %v5630
  %vm5671 = vcmp.eq.s32.totalorder %v740, %v5631
  %vm5672 = vcmp.eq.s32.totalorder %v740, %v5632
  %vm5673 = vcmp.eq.s32.totalorder %v740, %v5633
  %vm5674 = vcmp.eq.s32.totalorder %v741, %v5630
  %vm5675 = vcmp.eq.s32.totalorder %v741, %v5631
  %vm5676 = vcmp.eq.s32.totalorder %v741, %v5632
  %vm5677 = vcmp.eq.s32.totalorder %v741, %v5633
  %vm5678 = vcmp.eq.s32.totalorder %v742, %v5630
  %vm5679 = vcmp.eq.s32.totalorder %v742, %v5631
  %vm5680 = vcmp.eq.s32.totalorder %v742, %v5632
  %vm5681 = vcmp.eq.s32.totalorder %v742, %v5633
  %vm5682 = vcmp.eq.s32.totalorder %v743, %v5630
  %vm5683 = vcmp.eq.s32.totalorder %v743, %v5631
  %vm5684 = vcmp.eq.s32.totalorder %v743, %v5632
  %vm5685 = vcmp.eq.s32.totalorder %v743, %v5633
  %vm5686 = vcmp.eq.s32.totalorder %v744, %v5630
  %vm5687 = vcmp.eq.s32.totalorder %v744, %v5631
  %vm5688 = vcmp.eq.s32.totalorder %v744, %v5632
  %vm5689 = vcmp.eq.s32.totalorder %v744, %v5633
  %vm5690 = vcmp.eq.s32.totalorder %v745, %v5630
  %vm5691 = vcmp.eq.s32.totalorder %v745, %v5631
  %vm5692 = vcmp.eq.s32.totalorder %v745, %v5632
  %vm5693 = vcmp.eq.s32.totalorder %v745, %v5633
  %vm5694 = vcmp.eq.s32.totalorder %v746, %v5630
  %vm5695 = vcmp.eq.s32.totalorder %v746, %v5631
  %vm5696 = vcmp.eq.s32.totalorder %v746, %v5632
  %vm5697 = vcmp.eq.s32.totalorder %v746, %v5633
  %vm5698 = vcmp.eq.s32.totalorder %v747, %v5630
  %vm5699 = vcmp.eq.s32.totalorder %v747, %v5631
  %vm5700 = vcmp.eq.s32.totalorder %v747, %v5632
  %vm5701 = vcmp.eq.s32.totalorder %v747, %v5633
  %vm5702 = vcmp.eq.s32.totalorder %v748, %v5630
  %vm5703 = vcmp.eq.s32.totalorder %v748, %v5631
  %vm5704 = vcmp.eq.s32.totalorder %v748, %v5632
  %vm5705 = vcmp.eq.s32.totalorder %v748, %v5633
  %vm5706 = vcmp.eq.s32.totalorder %v749, %v5630
  %vm5707 = vcmp.eq.s32.totalorder %v749, %v5631
  %vm5708 = vcmp.eq.s32.totalorder %v749, %v5632
  %vm5709 = vcmp.eq.s32.totalorder %v749, %v5633
  %vm5710 = vcmp.eq.s32.totalorder %v750, %v5630
  %vm5711 = vcmp.eq.s32.totalorder %v750, %v5631
  %vm5712 = vcmp.eq.s32.totalorder %v750, %v5632
  %vm5713 = vcmp.eq.s32.totalorder %v750, %v5633
  %vm5714 = vcmp.eq.s32.totalorder %v751, %v5630
  %vm5715 = vcmp.eq.s32.totalorder %v751, %v5631
  %vm5716 = vcmp.eq.s32.totalorder %v751, %v5632
  %vm5717 = vcmp.eq.s32.totalorder %v751, %v5633
  %vm5718 = vcmp.eq.s32.totalorder %v752, %v5630
  %vm5719 = vcmp.eq.s32.totalorder %v752, %v5631
  %vm5720 = vcmp.eq.s32.totalorder %v752, %v5632
  %vm5721 = vcmp.eq.s32.totalorder %v752, %v5633
  %vm5722 = vcmp.eq.s32.totalorder %v753, %v5630
  %vm5723 = vcmp.eq.s32.totalorder %v753, %v5631
  %vm5724 = vcmp.eq.s32.totalorder %v753, %v5632
  %vm5725 = vcmp.eq.s32.totalorder %v753, %v5633
  %vm5726 = vcmp.eq.s32.totalorder %v754, %v5630
  %vm5727 = vcmp.eq.s32.totalorder %v754, %v5631
  %vm5728 = vcmp.eq.s32.totalorder %v754, %v5632
  %vm5729 = vcmp.eq.s32.totalorder %v754, %v5633
  %vm5730 = vcmp.eq.s32.totalorder %v755, %v5630
  %vm5731 = vcmp.eq.s32.totalorder %v755, %v5631
  %vm5732 = vcmp.eq.s32.totalorder %v755, %v5632
  %vm5733 = vcmp.eq.s32.totalorder %v755, %v5633
  %vm5734 = vcmp.eq.s32.totalorder %v756, %v5630
  %vm5735 = vcmp.eq.s32.totalorder %v756, %v5631
  %vm5736 = vcmp.eq.s32.totalorder %v756, %v5632
  %vm5737 = vcmp.eq.s32.totalorder %v756, %v5633
  %vm5738 = vcmp.eq.s32.totalorder %v757, %v5630
  %vm5739 = vcmp.eq.s32.totalorder %v757, %v5631
  %vm5740 = vcmp.eq.s32.totalorder %v757, %v5632
  %vm5741 = vcmp.eq.s32.totalorder %v757, %v5633
  %vm5742 = vcmp.eq.s32.totalorder %v758, %v5630
  %vm5743 = vcmp.eq.s32.totalorder %v758, %v5631
  %vm5744 = vcmp.eq.s32.totalorder %v758, %v5632
  %vm5745 = vcmp.eq.s32.totalorder %v758, %v5633
  %vm5746 = vcmp.eq.s32.totalorder %v759, %v5630
  %vm5747 = vcmp.eq.s32.totalorder %v759, %v5631
  %vm5748 = vcmp.eq.s32.totalorder %v759, %v5632
  %vm5749 = vcmp.eq.s32.totalorder %v759, %v5633
  %v5750 = vsel %vm5634, %v5543, 0.0
  %v5751 = vsel %vm5635, %v5543, 0.0
  %v5752 = vsel %vm5636, %v5543, 0.0
  %v5753 = vsel %vm5637, %v5543, 0.0
  %v5754 = vsel %vm5638, %v5546, 0.0
  %v5755 = vsel %vm5639, %v5546, 0.0
  %v5756 = vsel %vm5640, %v5546, 0.0
  %v5757 = vsel %vm5641, %v5546, 0.0
  %v5758 = vsel %vm5642, %v5549, 0.0
  %v5759 = vsel %vm5643, %v5549, 0.0
  %v5760 = vsel %vm5644, %v5549, 0.0
  %v5761 = vsel %vm5645, %v5549, 0.0
  %v5762 = vsel %vm5646, %v5552, 0.0
  %v5763 = vsel %vm5647, %v5552, 0.0
  %v5764 = vsel %vm5648, %v5552, 0.0
  %v5765 = vsel %vm5649, %v5552, 0.0
  %v5766 = vsel %vm5650, %v5555, 0.0
  %v5767 = vsel %vm5651, %v5555, 0.0
  %v5768 = vsel %vm5652, %v5555, 0.0
  %v5769 = vsel %vm5653, %v5555, 0.0
  %v5770 = vsel %vm5654, %v5558, 0.0
  %v5771 = vsel %vm5655, %v5558, 0.0
  %v5772 = vsel %vm5656, %v5558, 0.0
  %v5773 = vsel %vm5657, %v5558, 0.0
  %v5774 = vsel %vm5658, %v5561, 0.0
  %v5775 = vsel %vm5659, %v5561, 0.0
  %v5776 = vsel %vm5660, %v5561, 0.0
  %v5777 = vsel %vm5661, %v5561, 0.0
  %v5778 = vsel %vm5662, %v5564, 0.0
  %v5779 = vsel %vm5663, %v5564, 0.0
  %v5780 = vsel %vm5664, %v5564, 0.0
  %v5781 = vsel %vm5665, %v5564, 0.0
  %v5782 = vsel %vm5666, %v5567, 0.0
  %v5783 = vsel %vm5667, %v5567, 0.0
  %v5784 = vsel %vm5668, %v5567, 0.0
  %v5785 = vsel %vm5669, %v5567, 0.0
  %v5786 = vsel %vm5670, %v5570, 0.0
  %v5787 = vsel %vm5671, %v5570, 0.0
  %v5788 = vsel %vm5672, %v5570, 0.0
  %v5789 = vsel %vm5673, %v5570, 0.0
  %v5790 = vsel %vm5674, %v5573, 0.0
  %v5791 = vsel %vm5675, %v5573, 0.0
  %v5792 = vsel %vm5676, %v5573, 0.0
  %v5793 = vsel %vm5677, %v5573, 0.0
  %v5794 = vsel %vm5678, %v5576, 0.0
  %v5795 = vsel %vm5679, %v5576, 0.0
  %v5796 = vsel %vm5680, %v5576, 0.0
  %v5797 = vsel %vm5681, %v5576, 0.0
  %v5798 = vsel %vm5682, %v5579, 0.0
  %v5799 = vsel %vm5683, %v5579, 0.0
  %v5800 = vsel %vm5684, %v5579, 0.0
  %v5801 = vsel %vm5685, %v5579, 0.0
  %v5802 = vsel %vm5686, %v5582, 0.0
  %v5803 = vsel %vm5687, %v5582, 0.0
  %v5804 = vsel %vm5688, %v5582, 0.0
  %v5805 = vsel %vm5689, %v5582, 0.0
  %v5806 = vsel %vm5690, %v5585, 0.0
  %v5807 = vsel %vm5691, %v5585, 0.0
  %v5808 = vsel %vm5692, %v5585, 0.0
  %v5809 = vsel %vm5693, %v5585, 0.0
  %v5810 = vsel %vm5694, %v5588, 0.0
  %v5811 = vsel %vm5695, %v5588, 0.0
  %v5812 = vsel %vm5696, %v5588, 0.0
  %v5813 = vsel %vm5697, %v5588, 0.0
  %v5814 = vsel %vm5698, %v5591, 0.0
  %v5815 = vsel %vm5699, %v5591, 0.0
  %v5816 = vsel %vm5700, %v5591, 0.0
  %v5817 = vsel %vm5701, %v5591, 0.0
  %v5818 = vsel %vm5702, %v5594, 0.0
  %v5819 = vsel %vm5703, %v5594, 0.0
  %v5820 = vsel %vm5704, %v5594, 0.0
  %v5821 = vsel %vm5705, %v5594, 0.0
  %v5822 = vsel %vm5706, %v5597, 0.0
  %v5823 = vsel %vm5707, %v5597, 0.0
  %v5824 = vsel %vm5708, %v5597, 0.0
  %v5825 = vsel %vm5709, %v5597, 0.0
  %v5826 = vsel %vm5710, %v5600, 0.0
  %v5827 = vsel %vm5711, %v5600, 0.0
  %v5828 = vsel %vm5712, %v5600, 0.0
  %v5829 = vsel %vm5713, %v5600, 0.0
  %v5830 = vsel %vm5714, %v5603, 0.0
  %v5831 = vsel %vm5715, %v5603, 0.0
  %v5832 = vsel %vm5716, %v5603, 0.0
  %v5833 = vsel %vm5717, %v5603, 0.0
  %v5834 = vsel %vm5718, %v5606, 0.0
  %v5835 = vsel %vm5719, %v5606, 0.0
  %v5836 = vsel %vm5720, %v5606, 0.0
  %v5837 = vsel %vm5721, %v5606, 0.0
  %v5838 = vsel %vm5722, %v5609, 0.0
  %v5839 = vsel %vm5723, %v5609, 0.0
  %v5840 = vsel %vm5724, %v5609, 0.0
  %v5841 = vsel %vm5725, %v5609, 0.0
  %v5842 = vsel %vm5726, %v5612, 0.0
  %v5843 = vsel %vm5727, %v5612, 0.0
  %v5844 = vsel %vm5728, %v5612, 0.0
  %v5845 = vsel %vm5729, %v5612, 0.0
  %v5846 = vsel %vm5730, %v5615, 0.0
  %v5847 = vsel %vm5731, %v5615, 0.0
  %v5848 = vsel %vm5732, %v5615, 0.0
  %v5849 = vsel %vm5733, %v5615, 0.0
  %v5850 = vsel %vm5734, %v5618, 0.0
  %v5851 = vsel %vm5735, %v5618, 0.0
  %v5852 = vsel %vm5736, %v5618, 0.0
  %v5853 = vsel %vm5737, %v5618, 0.0
  %v5854 = vsel %vm5738, %v5621, 0.0
  %v5855 = vsel %vm5739, %v5621, 0.0
  %v5856 = vsel %vm5740, %v5621, 0.0
  %v5857 = vsel %vm5741, %v5621, 0.0
  %v5858 = vsel %vm5742, %v5624, 0.0
  %v5859 = vsel %vm5743, %v5624, 0.0
  %v5860 = vsel %vm5744, %v5624, 0.0
  %v5861 = vsel %vm5745, %v5624, 0.0
  %v5862 = vsel %vm5746, %v5627, 0.0
  %v5863 = vsel %vm5747, %v5627, 0.0
  %v5864 = vsel %vm5748, %v5627, 0.0
  %v5865 = vsel %vm5749, %v5627, 0.0
  %v5866 = vadd.f32 %v5750, %v5754
  %v5867 = vadd.f32 %v5866, %v5758
  %v5868 = vadd.f32 %v5867, %v5762
  %v5869 = vadd.f32 %v5868, %v5766
  %v5870 = vadd.f32 %v5869, %v5770
  %v5871 = vadd.f32 %v5870, %v5774
  %v5872 = vadd.f32 %v5871, %v5778
  %v5873 = vadd.f32 %v5872, %v5782
  %v5874 = vadd.f32 %v5873, %v5786
  %v5875 = vadd.f32 %v5874, %v5790
  %v5876 = vadd.f32 %v5875, %v5794
  %v5877 = vadd.f32 %v5876, %v5798
  %v5878 = vadd.f32 %v5877, %v5802
  %v5879 = vadd.f32 %v5878, %v5806
  %v5880 = vadd.f32 %v5879, %v5810
  %v5881 = vadd.f32 %v5880, %v5814
  %v5882 = vadd.f32 %v5881, %v5818
  %v5883 = vadd.f32 %v5882, %v5822
  %v5884 = vadd.f32 %v5883, %v5826
  %v5885 = vadd.f32 %v5884, %v5830
  %v5886 = vadd.f32 %v5885, %v5834
  %v5887 = vadd.f32 %v5886, %v5838
  %v5888 = vadd.f32 %v5887, %v5842
  %v5889 = vadd.f32 %v5888, %v5846
  %v5890 = vadd.f32 %v5889, %v5850
  %v5891 = vadd.f32 %v5890, %v5854
  %v5892 = vadd.f32 %v5891, %v5858
  %v5893 = vadd.f32 %v5892, %v5862
  %v5894 = vrot.slane %v5893, 4
  %v5895 = vadd.f32 %v5893, %v5894
  %v5896 = vrot.slane %v5895, 2
  %v5897 = vadd.f32 %v5895, %v5896
  %v5898 = vrot.slane %v5897, 1
  %v5899 = vadd.f32 %v5897, %v5898
  %v5900 = vadd.f32 %v5751, %v5755
  %v5901 = vadd.f32 %v5900, %v5759
  %v5902 = vadd.f32 %v5901, %v5763
  %v5903 = vadd.f32 %v5902, %v5767
  %v5904 = vadd.f32 %v5903, %v5771
  %v5905 = vadd.f32 %v5904, %v5775
  %v5906 = vadd.f32 %v5905, %v5779
  %v5907 = vadd.f32 %v5906, %v5783
  %v5908 = vadd.f32 %v5907, %v5787
  %v5909 = vadd.f32 %v5908, %v5791
  %v5910 = vadd.f32 %v5909, %v5795
  %v5911 = vadd.f32 %v5910, %v5799
  %v5912 = vadd.f32 %v5911, %v5803
  %v5913 = vadd.f32 %v5912, %v5807
  %v5914 = vadd.f32 %v5913, %v5811
  %v5915 = vadd.f32 %v5914, %v5815
  %v5916 = vadd.f32 %v5915, %v5819
  %v5917 = vadd.f32 %v5916, %v5823
  %v5918 = vadd.f32 %v5917, %v5827
  %v5919 = vadd.f32 %v5918, %v5831
  %v5920 = vadd.f32 %v5919, %v5835
  %v5921 = vadd.f32 %v5920, %v5839
  %v5922 = vadd.f32 %v5921, %v5843
  %v5923 = vadd.f32 %v5922, %v5847
  %v5924 = vadd.f32 %v5923, %v5851
  %v5925 = vadd.f32 %v5924, %v5855
  %v5926 = vadd.f32 %v5925, %v5859
  %v5927 = vadd.f32 %v5926, %v5863
  %v5928 = vrot.slane %v5927, 4
  %v5929 = vadd.f32 %v5927, %v5928
  %v5930 = vrot.slane %v5929, 2
  %v5931 = vadd.f32 %v5929, %v5930
  %v5932 = vrot.slane %v5931, 1
  %v5933 = vadd.f32 %v5931, %v5932
  %v5934 = vadd.f32 %v5752, %v5756
  %v5935 = vadd.f32 %v5934, %v5760
  %v5936 = vadd.f32 %v5935, %v5764
  %v5937 = vadd.f32 %v5936, %v5768
  %v5938 = vadd.f32 %v5937, %v5772
  %v5939 = vadd.f32 %v5938, %v5776
  %v5940 = vadd.f32 %v5939, %v5780
  %v5941 = vadd.f32 %v5940, %v5784
  %v5942 = vadd.f32 %v5941, %v5788
  %v5943 = vadd.f32 %v5942, %v5792
  %v5944 = vadd.f32 %v5943, %v5796
  %v5945 = vadd.f32 %v5944, %v5800
  %v5946 = vadd.f32 %v5945, %v5804
  %v5947 = vadd.f32 %v5946, %v5808
  %v5948 = vadd.f32 %v5947, %v5812
  %v5949 = vadd.f32 %v5948, %v5816
  %v5950 = vadd.f32 %v5949, %v5820
  %v5951 = vadd.f32 %v5950, %v5824
  %v5952 = vadd.f32 %v5951, %v5828
  %v5953 = vadd.f32 %v5952, %v5832
  %v5954 = vadd.f32 %v5953, %v5836
  %v5955 = vadd.f32 %v5954, %v5840
  %v5956 = vadd.f32 %v5955, %v5844
  %v5957 = vadd.f32 %v5956, %v5848
  %v5958 = vadd.f32 %v5957, %v5852
  %v5959 = vadd.f32 %v5958, %v5856
  %v5960 = vadd.f32 %v5959, %v5860
  %v5961 = vadd.f32 %v5960, %v5864
  %v5962 = vrot.slane %v5961, 4
  %v5963 = vadd.f32 %v5961, %v5962
  %v5964 = vrot.slane %v5963, 2
  %v5965 = vadd.f32 %v5963, %v5964
  %v5966 = vrot.slane %v5965, 1
  %v5967 = vadd.f32 %v5965, %v5966
  %v5968 = vadd.f32 %v5753, %v5757
  %v5969 = vadd.f32 %v5968, %v5761
  %v5970 = vadd.f32 %v5969, %v5765
  %v5971 = vadd.f32 %v5970, %v5769
  %v5972 = vadd.f32 %v5971, %v5773
  %v5973 = vadd.f32 %v5972, %v5777
  %v5974 = vadd.f32 %v5973, %v5781
  %v5975 = vadd.f32 %v5974, %v5785
  %v5976 = vadd.f32 %v5975, %v5789
  %v5977 = vadd.f32 %v5976, %v5793
  %v5978 = vadd.f32 %v5977, %v5797
  %v5979 = vadd.f32 %v5978, %v5801
  %v5980 = vadd.f32 %v5979, %v5805
  %v5981 = vadd.f32 %v5980, %v5809
  %v5982 = vadd.f32 %v5981, %v5813
  %v5983 = vadd.f32 %v5982, %v5817
  %v5984 = vadd.f32 %v5983, %v5821
  %v5985 = vadd.f32 %v5984, %v5825
  %v5986 = vadd.f32 %v5985, %v5829
  %v5987 = vadd.f32 %v5986, %v5833
  %v5988 = vadd.f32 %v5987, %v5837
  %v5989 = vadd.f32 %v5988, %v5841
  %v5990 = vadd.f32 %v5989, %v5845
  %v5991 = vadd.f32 %v5990, %v5849
  %v5992 = vadd.f32 %v5991, %v5853
  %v5993 = vadd.f32 %v5992, %v5857
  %v5994 = vadd.f32 %v5993, %v5861
  %v5995 = vadd.f32 %v5994, %v5865
  %v5996 = vrot.slane %v5995, 4
  %v5997 = vadd.f32 %v5995, %v5996
  %v5998 = vrot.slane %v5997, 2
  %v5999 = vadd.f32 %v5997, %v5998
  %v6000 = vrot.slane %v5999, 1
  %v6001 = vadd.f32 %v5999, %v6000
  %v6006 = vrot.slane %v5933, 7
  %v6007 = vrot.slane %v5967, 6
  %v6008 = vrot.slane %v6001, 5
  %v6009 = vsel %vm2361, %v5899, %v6006
  %v6010 = vsel %vm2363, %v6007, %v6008
  %v6011 = vsel %vm2365, %v6009, %v6010
  %v6013 = vadd.f32 %v5479, %v6011
  %v6014 = vld [vmem:[%s17] sm:$0xff]
  %v6015 = vld [vmem:[%s17 + $0x8] sm:$0xff]
  %v6016 = vld [vmem:[%s17 + $0x10] sm:$0xff]
  %v6017 = vld [vmem:[%s17 + $0x18] sm:$0xff]
  %v6018 = vld [vmem:[%s17 + $0x20] sm:$0xff]
  %v6019 = vld [vmem:[%s17 + $0x28] sm:$0xff]
  %v6020 = vld [vmem:[%s17 + $0x30] sm:$0xff]
  %v6021 = vld [vmem:[%s17 + $0x38] sm:$0xff]
  %v6022 = vld [vmem:[%s17 + $0x40] sm:$0xff]
  %v6023 = vld [vmem:[%s17 + $0x48] sm:$0xff]
  %v6024 = vld [vmem:[%s17 + $0x50] sm:$0xff]
  %v6025 = vld [vmem:[%s17 + $0x58] sm:$0xff]
  %v6026 = vld [vmem:[%s17 + $0x60] sm:$0xff]
  %v6027 = vld [vmem:[%s17 + $0x68] sm:$0xff]
  %v6028 = vld [vmem:[%s17 + $0x70] sm:$0xff]
  %v6029 = vld [vmem:[%s17 + $0x78] sm:$0xff]
  %v6030 = vld [vmem:[%s17 + $0x80] sm:$0xff]
  %v6031 = vld [vmem:[%s17 + $0x88] sm:$0xff]
  %v6032 = vld [vmem:[%s17 + $0x90] sm:$0xff]
  %v6033 = vld [vmem:[%s17 + $0x98] sm:$0xff]
  %v6034 = vld [vmem:[%s17 + $0xa0] sm:$0xff]
  %v6035 = vld [vmem:[%s17 + $0xa8] sm:$0xff]
  %v6036 = vld [vmem:[%s17 + $0xb0] sm:$0xff]
  %v6037 = vld [vmem:[%s17 + $0xb8] sm:$0xff]
  %v6038 = vld [vmem:[%s17 + $0xc0] sm:$0xff]
  %v6039 = vld [vmem:[%s17 + $0xc8] sm:$0xff]
  %v6040 = vld [vmem:[%s17 + $0xd0] sm:$0xff]
  %v6041 = vld [vmem:[%s17 + $0xd8] sm:$0xff]
  %v6042 = vld [vmem:[%s17 + $0xe0] sm:$0xff]
  %v6043 = vld [vmem:[%s17 + $0xe8] sm:$0xff]
  %v6044 = vld [vmem:[%s17 + $0xf0] sm:$0xff]
  %v6045 = vld [vmem:[%s17 + $0xf8] sm:$0xff]
  %v6046 = vld [vmem:[%s17 + $0x100] sm:$0xff]
  %v6047 = vld [vmem:[%s17 + $0x108] sm:$0xff]
  %v6048 = vld [vmem:[%s17 + $0x110] sm:$0xff]
  %v6049 = vld [vmem:[%s17 + $0x118] sm:$0xff]
  %v6050 = vld [vmem:[%s17 + $0x120] sm:$0xff]
  %v6051 = vld [vmem:[%s17 + $0x128] sm:$0xff]
  %v6052 = vld [vmem:[%s17 + $0x130] sm:$0xff]
  %v6053 = vld [vmem:[%s17 + $0x138] sm:$0xff]
  %v6054 = vld [vmem:[%s17 + $0x140] sm:$0xff]
  %v6055 = vld [vmem:[%s17 + $0x148] sm:$0xff]
  %v6056 = vld [vmem:[%s17 + $0x150] sm:$0xff]
  %v6057 = vld [vmem:[%s17 + $0x158] sm:$0xff]
  %v6058 = vld [vmem:[%s17 + $0x160] sm:$0xff]
  %v6059 = vld [vmem:[%s17 + $0x168] sm:$0xff]
  %v6060 = vld [vmem:[%s17 + $0x170] sm:$0xff]
  %v6061 = vld [vmem:[%s17 + $0x178] sm:$0xff]
  %v6062 = vld [vmem:[%s17 + $0x180] sm:$0xff]
  %v6063 = vld [vmem:[%s17 + $0x188] sm:$0xff]
  %v6064 = vld [vmem:[%s17 + $0x190] sm:$0xff]
  %v6065 = vld [vmem:[%s17 + $0x198] sm:$0xff]
  %v6066 = vld [vmem:[%s17 + $0x1a0] sm:$0xff]
  %v6067 = vld [vmem:[%s17 + $0x1a8] sm:$0xff]
  %v6068 = vld [vmem:[%s17 + $0x1b0] sm:$0xff]
  %v6069 = vld [vmem:[%s17 + $0x1b8] sm:$0xff]
  %v6070 = vld [vmem:[%s17 + $0x1c0] sm:$0xff]
  %v6071 = vld [vmem:[%s17 + $0x1c8] sm:$0xff]
  %v6072 = vld [vmem:[%s17 + $0x1d0] sm:$0xff]
  %v6073 = vld [vmem:[%s17 + $0x1d8] sm:$0xff]
  %v6074 = vld [vmem:[%s17 + $0x1e0] sm:$0xff]
  %v6075 = vld [vmem:[%s17 + $0x1e8] sm:$0xff]
  %v6076 = vld [vmem:[%s17 + $0x1f0] sm:$0xff]
  %v6077 = vld [vmem:[%s17 + $0x1f8] sm:$0xff]
  %v6078 = vld [vmem:[%s17 + $0x200] sm:$0xff]
  %6079 = vrot.lane.b32.xlu0 %v234, 36
  %v6080 = vpop.permute.xlu0 %6079
  %v6082 = vmul.f32 %v6014, %v6080
  %v6083 = vmul.f32 %v6015, %v6080
  %v6084 = vmul.f32 %v6016, %v6080
  %v6085 = vmul.f32 %v6017, %v6080
  %v6086 = vmul.f32 %v6018, %v6080
  %v6087 = vmul.f32 %v6019, %v6080
  %v6088 = vmul.f32 %v6020, %v6080
  %v6089 = vmul.f32 %v6021, %v6080
  %v6090 = vmul.f32 %v6022, %v6080
  %v6091 = vmul.f32 %v6023, %v6080
  %v6092 = vmul.f32 %v6024, %v6080
  %v6093 = vmul.f32 %v6025, %v6080
  %v6094 = vmul.f32 %v6026, %v6080
  %v6095 = vmul.f32 %v6027, %v6080
  %v6096 = vmul.f32 %v6028, %v6080
  %v6097 = vmul.f32 %v6029, %v6080
  %v6098 = vmul.f32 %v6030, %v6080
  %v6099 = vmul.f32 %v6031, %v6080
  %v6100 = vmul.f32 %v6032, %v6080
  %v6101 = vmul.f32 %v6033, %v6080
  %v6102 = vmul.f32 %v6034, %v6080
  %v6103 = vmul.f32 %v6035, %v6080
  %v6104 = vmul.f32 %v6036, %v6080
  %v6105 = vmul.f32 %v6037, %v6080
  %v6106 = vmul.f32 %v6038, %v6080
  %v6107 = vmul.f32 %v6039, %v6080
  %v6108 = vmul.f32 %v6040, %v6080
  %v6109 = vmul.f32 %v6041, %v6080
  %v6110 = vmul.f32 %v6042, %v6080
  %v6111 = vmul.f32 %v6043, %v6080
  %v6112 = vmul.f32 %v6044, %v6080
  %v6113 = vmul.f32 %v6045, %v6080
  %v6114 = vmul.f32 %v6046, %v6080
  %v6115 = vmul.f32 %v6047, %v6080
  %v6116 = vmul.f32 %v6048, %v6080
  %v6117 = vmul.f32 %v6049, %v6080
  %v6118 = vmul.f32 %v6050, %v6080
  %v6119 = vmul.f32 %v6051, %v6080
  %v6120 = vmul.f32 %v6052, %v6080
  %v6121 = vmul.f32 %v6053, %v6080
  %v6122 = vmul.f32 %v6054, %v6080
  %v6123 = vmul.f32 %v6055, %v6080
  %v6124 = vmul.f32 %v6056, %v6080
  %v6125 = vmul.f32 %v6057, %v6080
  %v6126 = vmul.f32 %v6058, %v6080
  %v6127 = vmul.f32 %v6059, %v6080
  %v6128 = vmul.f32 %v6060, %v6080
  %v6129 = vmul.f32 %v6061, %v6080
  %v6130 = vmul.f32 %v6062, %v6080
  %v6131 = vmul.f32 %v6063, %v6080
  %v6132 = vmul.f32 %v6064, %v6080
  %v6133 = vmul.f32 %v6065, %v6080
  %v6134 = vmul.f32 %v6066, %v6080
  %v6135 = vmul.f32 %v6067, %v6080
  %v6136 = vmul.f32 %v6068, %v6080
  %v6137 = vmul.f32 %v6069, %v6080
  %v6138 = vmul.f32 %v6070, %v6080
  %v6139 = vmul.f32 %v6071, %v6080
  %v6140 = vmul.f32 %v6072, %v6080
  %v6141 = vmul.f32 %v6073, %v6080
  %v6142 = vmul.f32 %v6074, %v6080
  %v6143 = vmul.f32 %v6075, %v6080
  %v6144 = vmul.f32 %v6076, %v6080
  %v6145 = vmul.f32 %v6077, %v6080
  %v6146 = vmul.f32 %v6078, %v6080
  %v6147 = vsel %vm359, %v6082, 0.0
  %6148 = vadd.xlane.f32.xlu0 %v6147
  %v6149 = vpop.xlane.xlu0 %6148
  %v6150 = vsel %vm359, %v6083, 0.0
  %6151 = vadd.xlane.f32.xlu0 %v6150
  %v6152 = vpop.xlane.xlu0 %6151
  %v6153 = vsel %vm359, %v6084, 0.0
  %6154 = vadd.xlane.f32.xlu0 %v6153
  %v6155 = vpop.xlane.xlu0 %6154
  %v6156 = vsel %vm359, %v6085, 0.0
  %6157 = vadd.xlane.f32.xlu0 %v6156
  %v6158 = vpop.xlane.xlu0 %6157
  %v6159 = vsel %vm359, %v6086, 0.0
  %6160 = vadd.xlane.f32.xlu0 %v6159
  %v6161 = vpop.xlane.xlu0 %6160
  %v6162 = vsel %vm359, %v6087, 0.0
  %6163 = vadd.xlane.f32.xlu0 %v6162
  %v6164 = vpop.xlane.xlu0 %6163
  %v6165 = vsel %vm359, %v6088, 0.0
  %6166 = vadd.xlane.f32.xlu0 %v6165
  %v6167 = vpop.xlane.xlu0 %6166
  %v6168 = vsel %vm359, %v6089, 0.0
  %6169 = vadd.xlane.f32.xlu0 %v6168
  %v6170 = vpop.xlane.xlu0 %6169
  %v6171 = vsel %vm359, %v6090, 0.0
  %6172 = vadd.xlane.f32.xlu0 %v6171
  %v6173 = vpop.xlane.xlu0 %6172
  %v6174 = vsel %vm359, %v6091, 0.0
  %6175 = vadd.xlane.f32.xlu0 %v6174
  %v6176 = vpop.xlane.xlu0 %6175
  %v6177 = vsel %vm359, %v6092, 0.0
  %6178 = vadd.xlane.f32.xlu0 %v6177
  %v6179 = vpop.xlane.xlu0 %6178
  %v6180 = vsel %vm359, %v6093, 0.0
  %6181 = vadd.xlane.f32.xlu0 %v6180
  %v6182 = vpop.xlane.xlu0 %6181
  %v6183 = vsel %vm359, %v6094, 0.0
  %6184 = vadd.xlane.f32.xlu0 %v6183
  %v6185 = vpop.xlane.xlu0 %6184
  %v6186 = vsel %vm359, %v6095, 0.0
  %6187 = vadd.xlane.f32.xlu0 %v6186
  %v6188 = vpop.xlane.xlu0 %6187
  %v6189 = vsel %vm359, %v6096, 0.0
  %6190 = vadd.xlane.f32.xlu0 %v6189
  %v6191 = vpop.xlane.xlu0 %6190
  %v6192 = vsel %vm359, %v6097, 0.0
  %6193 = vadd.xlane.f32.xlu0 %v6192
  %v6194 = vpop.xlane.xlu0 %6193
  %v6195 = vsel %vm359, %v6098, 0.0
  %6196 = vadd.xlane.f32.xlu0 %v6195
  %v6197 = vpop.xlane.xlu0 %6196
  %v6198 = vsel %vm359, %v6099, 0.0
  %6199 = vadd.xlane.f32.xlu0 %v6198
  %v6200 = vpop.xlane.xlu0 %6199
  %v6201 = vsel %vm359, %v6100, 0.0
  %6202 = vadd.xlane.f32.xlu0 %v6201
  %v6203 = vpop.xlane.xlu0 %6202
  %v6204 = vsel %vm359, %v6101, 0.0
  %6205 = vadd.xlane.f32.xlu0 %v6204
  %v6206 = vpop.xlane.xlu0 %6205
  %v6207 = vsel %vm359, %v6102, 0.0
  %6208 = vadd.xlane.f32.xlu0 %v6207
  %v6209 = vpop.xlane.xlu0 %6208
  %v6210 = vsel %vm359, %v6103, 0.0
  %6211 = vadd.xlane.f32.xlu0 %v6210
  %v6212 = vpop.xlane.xlu0 %6211
  %v6213 = vsel %vm359, %v6104, 0.0
  %6214 = vadd.xlane.f32.xlu0 %v6213
  %v6215 = vpop.xlane.xlu0 %6214
  %v6216 = vsel %vm359, %v6105, 0.0
  %6217 = vadd.xlane.f32.xlu0 %v6216
  %v6218 = vpop.xlane.xlu0 %6217
  %v6219 = vsel %vm359, %v6106, 0.0
  %6220 = vadd.xlane.f32.xlu0 %v6219
  %v6221 = vpop.xlane.xlu0 %6220
  %v6222 = vsel %vm359, %v6107, 0.0
  %6223 = vadd.xlane.f32.xlu0 %v6222
  %v6224 = vpop.xlane.xlu0 %6223
  %v6225 = vsel %vm359, %v6108, 0.0
  %6226 = vadd.xlane.f32.xlu0 %v6225
  %v6227 = vpop.xlane.xlu0 %6226
  %v6228 = vsel %vm359, %v6109, 0.0
  %6229 = vadd.xlane.f32.xlu0 %v6228
  %v6230 = vpop.xlane.xlu0 %6229
  %v6231 = vsel %vm359, %v6110, 0.0
  %6232 = vadd.xlane.f32.xlu0 %v6231
  %v6233 = vpop.xlane.xlu0 %6232
  %v6234 = vsel %vm359, %v6111, 0.0
  %6235 = vadd.xlane.f32.xlu0 %v6234
  %v6236 = vpop.xlane.xlu0 %6235
  %v6237 = vsel %vm359, %v6112, 0.0
  %6238 = vadd.xlane.f32.xlu0 %v6237
  %v6239 = vpop.xlane.xlu0 %6238
  %v6240 = vsel %vm359, %v6113, 0.0
  %6241 = vadd.xlane.f32.xlu0 %v6240
  %v6242 = vpop.xlane.xlu0 %6241
  %v6243 = vsel %vm359, %v6114, 0.0
  %6244 = vadd.xlane.f32.xlu0 %v6243
  %v6245 = vpop.xlane.xlu0 %6244
  %v6246 = vsel %vm359, %v6115, 0.0
  %6247 = vadd.xlane.f32.xlu0 %v6246
  %v6248 = vpop.xlane.xlu0 %6247
  %v6249 = vsel %vm359, %v6116, 0.0
  %6250 = vadd.xlane.f32.xlu0 %v6249
  %v6251 = vpop.xlane.xlu0 %6250
  %v6252 = vsel %vm359, %v6117, 0.0
  %6253 = vadd.xlane.f32.xlu0 %v6252
  %v6254 = vpop.xlane.xlu0 %6253
  %v6255 = vsel %vm359, %v6118, 0.0
  %6256 = vadd.xlane.f32.xlu0 %v6255
  %v6257 = vpop.xlane.xlu0 %6256
  %v6258 = vsel %vm359, %v6119, 0.0
  %6259 = vadd.xlane.f32.xlu0 %v6258
  %v6260 = vpop.xlane.xlu0 %6259
  %v6261 = vsel %vm359, %v6120, 0.0
  %6262 = vadd.xlane.f32.xlu0 %v6261
  %v6263 = vpop.xlane.xlu0 %6262
  %v6264 = vsel %vm359, %v6121, 0.0
  %6265 = vadd.xlane.f32.xlu0 %v6264
  %v6266 = vpop.xlane.xlu0 %6265
  %v6267 = vsel %vm359, %v6122, 0.0
  %6268 = vadd.xlane.f32.xlu0 %v6267
  %v6269 = vpop.xlane.xlu0 %6268
  %v6270 = vsel %vm359, %v6123, 0.0
  %6271 = vadd.xlane.f32.xlu0 %v6270
  %v6272 = vpop.xlane.xlu0 %6271
  %v6273 = vsel %vm359, %v6124, 0.0
  %6274 = vadd.xlane.f32.xlu0 %v6273
  %v6275 = vpop.xlane.xlu0 %6274
  %v6276 = vsel %vm359, %v6125, 0.0
  %6277 = vadd.xlane.f32.xlu0 %v6276
  %v6278 = vpop.xlane.xlu0 %6277
  %v6279 = vsel %vm359, %v6126, 0.0
  %6280 = vadd.xlane.f32.xlu0 %v6279
  %v6281 = vpop.xlane.xlu0 %6280
  %v6282 = vsel %vm359, %v6127, 0.0
  %6283 = vadd.xlane.f32.xlu0 %v6282
  %v6284 = vpop.xlane.xlu0 %6283
  %v6285 = vsel %vm359, %v6128, 0.0
  %6286 = vadd.xlane.f32.xlu0 %v6285
  %v6287 = vpop.xlane.xlu0 %6286
  %v6288 = vsel %vm359, %v6129, 0.0
  %6289 = vadd.xlane.f32.xlu0 %v6288
  %v6290 = vpop.xlane.xlu0 %6289
  %v6291 = vsel %vm359, %v6130, 0.0
  %6292 = vadd.xlane.f32.xlu0 %v6291
  %v6293 = vpop.xlane.xlu0 %6292
  %v6294 = vsel %vm359, %v6131, 0.0
  %6295 = vadd.xlane.f32.xlu0 %v6294
  %v6296 = vpop.xlane.xlu0 %6295
  %v6297 = vsel %vm359, %v6132, 0.0
  %6298 = vadd.xlane.f32.xlu0 %v6297
  %v6299 = vpop.xlane.xlu0 %6298
  %v6300 = vsel %vm359, %v6133, 0.0
  %6301 = vadd.xlane.f32.xlu0 %v6300
  %v6302 = vpop.xlane.xlu0 %6301
  %v6303 = vsel %vm359, %v6134, 0.0
  %6304 = vadd.xlane.f32.xlu0 %v6303
  %v6305 = vpop.xlane.xlu0 %6304
  %v6306 = vsel %vm359, %v6135, 0.0
  %6307 = vadd.xlane.f32.xlu0 %v6306
  %v6308 = vpop.xlane.xlu0 %6307
  %v6309 = vsel %vm359, %v6136, 0.0
  %6310 = vadd.xlane.f32.xlu0 %v6309
  %v6311 = vpop.xlane.xlu0 %6310
  %v6312 = vsel %vm359, %v6137, 0.0
  %6313 = vadd.xlane.f32.xlu0 %v6312
  %v6314 = vpop.xlane.xlu0 %6313
  %v6315 = vsel %vm359, %v6138, 0.0
  %6316 = vadd.xlane.f32.xlu0 %v6315
  %v6317 = vpop.xlane.xlu0 %6316
  %v6318 = vsel %vm359, %v6139, 0.0
  %6319 = vadd.xlane.f32.xlu0 %v6318
  %v6320 = vpop.xlane.xlu0 %6319
  %v6321 = vsel %vm359, %v6140, 0.0
  %6322 = vadd.xlane.f32.xlu0 %v6321
  %v6323 = vpop.xlane.xlu0 %6322
  %v6324 = vsel %vm359, %v6141, 0.0
  %6325 = vadd.xlane.f32.xlu0 %v6324
  %v6326 = vpop.xlane.xlu0 %6325
  %v6327 = vsel %vm359, %v6142, 0.0
  %6328 = vadd.xlane.f32.xlu0 %v6327
  %v6329 = vpop.xlane.xlu0 %6328
  %v6330 = vsel %vm359, %v6143, 0.0
  %6331 = vadd.xlane.f32.xlu0 %v6330
  %v6332 = vpop.xlane.xlu0 %6331
  %v6333 = vsel %vm359, %v6144, 0.0
  %6334 = vadd.xlane.f32.xlu0 %v6333
  %v6335 = vpop.xlane.xlu0 %6334
  %v6336 = vsel %vm359, %v6145, 0.0
  %6337 = vadd.xlane.f32.xlu0 %v6336
  %v6338 = vpop.xlane.xlu0 %6337
  %v6339 = vsel %vm359, %v6146, 0.0
  %6340 = vadd.xlane.f32.xlu0 %v6339
  %v6341 = vpop.xlane.xlu0 %6340
  %s6342 = scalar_lea.vmem %s0, 38
  %v6343 = vld [vmem:[%s6342] ss:$8 sm:$0xf]
  %v6344 = vperm.slane %v6343, 0
  %v6345 = vperm.slane %v6343, 1
  %v6346 = vperm.slane %v6343, 2
  %v6347 = vperm.slane %v6343, 3
  %vm6348 = vcmp.eq.s32.totalorder %v731, %v6344
  %vm6349 = vcmp.eq.s32.totalorder %v731, %v6345
  %vm6350 = vcmp.eq.s32.totalorder %v731, %v6346
  %vm6351 = vcmp.eq.s32.totalorder %v731, %v6347
  %vm6352 = vcmp.eq.s32.totalorder %v732, %v6344
  %vm6353 = vcmp.eq.s32.totalorder %v732, %v6345
  %vm6354 = vcmp.eq.s32.totalorder %v732, %v6346
  %vm6355 = vcmp.eq.s32.totalorder %v732, %v6347
  %vm6356 = vcmp.eq.s32.totalorder %v733, %v6344
  %vm6357 = vcmp.eq.s32.totalorder %v733, %v6345
  %vm6358 = vcmp.eq.s32.totalorder %v733, %v6346
  %vm6359 = vcmp.eq.s32.totalorder %v733, %v6347
  %vm6360 = vcmp.eq.s32.totalorder %v734, %v6344
  %vm6361 = vcmp.eq.s32.totalorder %v734, %v6345
  %vm6362 = vcmp.eq.s32.totalorder %v734, %v6346
  %vm6363 = vcmp.eq.s32.totalorder %v734, %v6347
  %vm6364 = vcmp.eq.s32.totalorder %v735, %v6344
  %vm6365 = vcmp.eq.s32.totalorder %v735, %v6345
  %vm6366 = vcmp.eq.s32.totalorder %v735, %v6346
  %vm6367 = vcmp.eq.s32.totalorder %v735, %v6347
  %vm6368 = vcmp.eq.s32.totalorder %v736, %v6344
  %vm6369 = vcmp.eq.s32.totalorder %v736, %v6345
  %vm6370 = vcmp.eq.s32.totalorder %v736, %v6346
  %vm6371 = vcmp.eq.s32.totalorder %v736, %v6347
  %vm6372 = vcmp.eq.s32.totalorder %v737, %v6344
  %vm6373 = vcmp.eq.s32.totalorder %v737, %v6345
  %vm6374 = vcmp.eq.s32.totalorder %v737, %v6346
  %vm6375 = vcmp.eq.s32.totalorder %v737, %v6347
  %vm6376 = vcmp.eq.s32.totalorder %v738, %v6344
  %vm6377 = vcmp.eq.s32.totalorder %v738, %v6345
  %vm6378 = vcmp.eq.s32.totalorder %v738, %v6346
  %vm6379 = vcmp.eq.s32.totalorder %v738, %v6347
  %vm6380 = vcmp.eq.s32.totalorder %v739, %v6344
  %vm6381 = vcmp.eq.s32.totalorder %v739, %v6345
  %vm6382 = vcmp.eq.s32.totalorder %v739, %v6346
  %vm6383 = vcmp.eq.s32.totalorder %v739, %v6347
  %vm6384 = vcmp.eq.s32.totalorder %v740, %v6344
  %vm6385 = vcmp.eq.s32.totalorder %v740, %v6345
  %vm6386 = vcmp.eq.s32.totalorder %v740, %v6346
  %vm6387 = vcmp.eq.s32.totalorder %v740, %v6347
  %vm6388 = vcmp.eq.s32.totalorder %v741, %v6344
  %vm6389 = vcmp.eq.s32.totalorder %v741, %v6345
  %vm6390 = vcmp.eq.s32.totalorder %v741, %v6346
  %vm6391 = vcmp.eq.s32.totalorder %v741, %v6347
  %vm6392 = vcmp.eq.s32.totalorder %v742, %v6344
  %vm6393 = vcmp.eq.s32.totalorder %v742, %v6345
  %vm6394 = vcmp.eq.s32.totalorder %v742, %v6346
  %vm6395 = vcmp.eq.s32.totalorder %v742, %v6347
  %vm6396 = vcmp.eq.s32.totalorder %v743, %v6344
  %vm6397 = vcmp.eq.s32.totalorder %v743, %v6345
  %vm6398 = vcmp.eq.s32.totalorder %v743, %v6346
  %vm6399 = vcmp.eq.s32.totalorder %v743, %v6347
  %vm6400 = vcmp.eq.s32.totalorder %v744, %v6344
  %vm6401 = vcmp.eq.s32.totalorder %v744, %v6345
  %vm6402 = vcmp.eq.s32.totalorder %v744, %v6346
  %vm6403 = vcmp.eq.s32.totalorder %v744, %v6347
  %vm6404 = vcmp.eq.s32.totalorder %v745, %v6344
  %vm6405 = vcmp.eq.s32.totalorder %v745, %v6345
  %vm6406 = vcmp.eq.s32.totalorder %v745, %v6346
  %vm6407 = vcmp.eq.s32.totalorder %v745, %v6347
  %vm6408 = vcmp.eq.s32.totalorder %v746, %v6344
  %vm6409 = vcmp.eq.s32.totalorder %v746, %v6345
  %vm6410 = vcmp.eq.s32.totalorder %v746, %v6346
  %vm6411 = vcmp.eq.s32.totalorder %v746, %v6347
  %vm6412 = vcmp.eq.s32.totalorder %v747, %v6344
  %vm6413 = vcmp.eq.s32.totalorder %v747, %v6345
  %vm6414 = vcmp.eq.s32.totalorder %v747, %v6346
  %vm6415 = vcmp.eq.s32.totalorder %v747, %v6347
  %vm6416 = vcmp.eq.s32.totalorder %v748, %v6344
  %vm6417 = vcmp.eq.s32.totalorder %v748, %v6345
  %vm6418 = vcmp.eq.s32.totalorder %v748, %v6346
  %vm6419 = vcmp.eq.s32.totalorder %v748, %v6347
  %vm6420 = vcmp.eq.s32.totalorder %v749, %v6344
  %vm6421 = vcmp.eq.s32.totalorder %v749, %v6345
  %vm6422 = vcmp.eq.s32.totalorder %v749, %v6346
  %vm6423 = vcmp.eq.s32.totalorder %v749, %v6347
  %vm6424 = vcmp.eq.s32.totalorder %v750, %v6344
  %vm6425 = vcmp.eq.s32.totalorder %v750, %v6345
  %vm6426 = vcmp.eq.s32.totalorder %v750, %v6346
  %vm6427 = vcmp.eq.s32.totalorder %v750, %v6347
  %vm6428 = vcmp.eq.s32.totalorder %v751, %v6344
  %vm6429 = vcmp.eq.s32.totalorder %v751, %v6345
  %vm6430 = vcmp.eq.s32.totalorder %v751, %v6346
  %vm6431 = vcmp.eq.s32.totalorder %v751, %v6347
  %vm6432 = vcmp.eq.s32.totalorder %v752, %v6344
  %vm6433 = vcmp.eq.s32.totalorder %v752, %v6345
  %vm6434 = vcmp.eq.s32.totalorder %v752, %v6346
  %vm6435 = vcmp.eq.s32.totalorder %v752, %v6347
  %vm6436 = vcmp.eq.s32.totalorder %v753, %v6344
  %vm6437 = vcmp.eq.s32.totalorder %v753, %v6345
  %vm6438 = vcmp.eq.s32.totalorder %v753, %v6346
  %vm6439 = vcmp.eq.s32.totalorder %v753, %v6347
  %vm6440 = vcmp.eq.s32.totalorder %v754, %v6344
  %vm6441 = vcmp.eq.s32.totalorder %v754, %v6345
  %vm6442 = vcmp.eq.s32.totalorder %v754, %v6346
  %vm6443 = vcmp.eq.s32.totalorder %v754, %v6347
  %vm6444 = vcmp.eq.s32.totalorder %v755, %v6344
  %vm6445 = vcmp.eq.s32.totalorder %v755, %v6345
  %vm6446 = vcmp.eq.s32.totalorder %v755, %v6346
  %vm6447 = vcmp.eq.s32.totalorder %v755, %v6347
  %vm6448 = vcmp.eq.s32.totalorder %v756, %v6344
  %vm6449 = vcmp.eq.s32.totalorder %v756, %v6345
  %vm6450 = vcmp.eq.s32.totalorder %v756, %v6346
  %vm6451 = vcmp.eq.s32.totalorder %v756, %v6347
  %vm6452 = vcmp.eq.s32.totalorder %v757, %v6344
  %vm6453 = vcmp.eq.s32.totalorder %v757, %v6345
  %vm6454 = vcmp.eq.s32.totalorder %v757, %v6346
  %vm6455 = vcmp.eq.s32.totalorder %v757, %v6347
  %vm6456 = vcmp.eq.s32.totalorder %v758, %v6344
  %vm6457 = vcmp.eq.s32.totalorder %v758, %v6345
  %vm6458 = vcmp.eq.s32.totalorder %v758, %v6346
  %vm6459 = vcmp.eq.s32.totalorder %v758, %v6347
  %vm6460 = vcmp.eq.s32.totalorder %v759, %v6344
  %vm6461 = vcmp.eq.s32.totalorder %v759, %v6345
  %vm6462 = vcmp.eq.s32.totalorder %v759, %v6346
  %vm6463 = vcmp.eq.s32.totalorder %v759, %v6347
  %vm6464 = vcmp.eq.s32.totalorder %v760, %v6344
  %vm6465 = vcmp.eq.s32.totalorder %v760, %v6345
  %vm6466 = vcmp.eq.s32.totalorder %v760, %v6346
  %vm6467 = vcmp.eq.s32.totalorder %v760, %v6347
  %vm6468 = vcmp.eq.s32.totalorder %v761, %v6344
  %vm6469 = vcmp.eq.s32.totalorder %v761, %v6345
  %vm6470 = vcmp.eq.s32.totalorder %v761, %v6346
  %vm6471 = vcmp.eq.s32.totalorder %v761, %v6347
  %vm6472 = vcmp.eq.s32.totalorder %v762, %v6344
  %vm6473 = vcmp.eq.s32.totalorder %v762, %v6345
  %vm6474 = vcmp.eq.s32.totalorder %v762, %v6346
  %vm6475 = vcmp.eq.s32.totalorder %v762, %v6347
  %vm6476 = vcmp.eq.s32.totalorder %v763, %v6344
  %vm6477 = vcmp.eq.s32.totalorder %v763, %v6345
  %vm6478 = vcmp.eq.s32.totalorder %v763, %v6346
  %vm6479 = vcmp.eq.s32.totalorder %v763, %v6347
  %vm6480 = vcmp.eq.s32.totalorder %v764, %v6344
  %vm6481 = vcmp.eq.s32.totalorder %v764, %v6345
  %vm6482 = vcmp.eq.s32.totalorder %v764, %v6346
  %vm6483 = vcmp.eq.s32.totalorder %v764, %v6347
  %vm6484 = vcmp.eq.s32.totalorder %v765, %v6344
  %vm6485 = vcmp.eq.s32.totalorder %v765, %v6345
  %vm6486 = vcmp.eq.s32.totalorder %v765, %v6346
  %vm6487 = vcmp.eq.s32.totalorder %v765, %v6347
  %vm6488 = vcmp.eq.s32.totalorder %v766, %v6344
  %vm6489 = vcmp.eq.s32.totalorder %v766, %v6345
  %vm6490 = vcmp.eq.s32.totalorder %v766, %v6346
  %vm6491 = vcmp.eq.s32.totalorder %v766, %v6347
  %vm6492 = vcmp.eq.s32.totalorder %v767, %v6344
  %vm6493 = vcmp.eq.s32.totalorder %v767, %v6345
  %vm6494 = vcmp.eq.s32.totalorder %v767, %v6346
  %vm6495 = vcmp.eq.s32.totalorder %v767, %v6347
  %vm6496 = vcmp.eq.s32.totalorder %v768, %v6344
  %vm6497 = vcmp.eq.s32.totalorder %v768, %v6345
  %vm6498 = vcmp.eq.s32.totalorder %v768, %v6346
  %vm6499 = vcmp.eq.s32.totalorder %v768, %v6347
  %vm6500 = vcmp.eq.s32.totalorder %v769, %v6344
  %vm6501 = vcmp.eq.s32.totalorder %v769, %v6345
  %vm6502 = vcmp.eq.s32.totalorder %v769, %v6346
  %vm6503 = vcmp.eq.s32.totalorder %v769, %v6347
  %vm6504 = vcmp.eq.s32.totalorder %v770, %v6344
  %vm6505 = vcmp.eq.s32.totalorder %v770, %v6345
  %vm6506 = vcmp.eq.s32.totalorder %v770, %v6346
  %vm6507 = vcmp.eq.s32.totalorder %v770, %v6347
  %vm6508 = vcmp.eq.s32.totalorder %v771, %v6344
  %vm6509 = vcmp.eq.s32.totalorder %v771, %v6345
  %vm6510 = vcmp.eq.s32.totalorder %v771, %v6346
  %vm6511 = vcmp.eq.s32.totalorder %v771, %v6347
  %vm6512 = vcmp.eq.s32.totalorder %v772, %v6344
  %vm6513 = vcmp.eq.s32.totalorder %v772, %v6345
  %vm6514 = vcmp.eq.s32.totalorder %v772, %v6346
  %vm6515 = vcmp.eq.s32.totalorder %v772, %v6347
  %vm6516 = vcmp.eq.s32.totalorder %v773, %v6344
  %vm6517 = vcmp.eq.s32.totalorder %v773, %v6345
  %vm6518 = vcmp.eq.s32.totalorder %v773, %v6346
  %vm6519 = vcmp.eq.s32.totalorder %v773, %v6347
  %vm6520 = vcmp.eq.s32.totalorder %v774, %v6344
  %vm6521 = vcmp.eq.s32.totalorder %v774, %v6345
  %vm6522 = vcmp.eq.s32.totalorder %v774, %v6346
  %vm6523 = vcmp.eq.s32.totalorder %v774, %v6347
  %vm6524 = vcmp.eq.s32.totalorder %v775, %v6344
  %vm6525 = vcmp.eq.s32.totalorder %v775, %v6345
  %vm6526 = vcmp.eq.s32.totalorder %v775, %v6346
  %vm6527 = vcmp.eq.s32.totalorder %v775, %v6347
  %vm6528 = vcmp.eq.s32.totalorder %v776, %v6344
  %vm6529 = vcmp.eq.s32.totalorder %v776, %v6345
  %vm6530 = vcmp.eq.s32.totalorder %v776, %v6346
  %vm6531 = vcmp.eq.s32.totalorder %v776, %v6347
  %vm6532 = vcmp.eq.s32.totalorder %v777, %v6344
  %vm6533 = vcmp.eq.s32.totalorder %v777, %v6345
  %vm6534 = vcmp.eq.s32.totalorder %v777, %v6346
  %vm6535 = vcmp.eq.s32.totalorder %v777, %v6347
  %vm6536 = vcmp.eq.s32.totalorder %v778, %v6344
  %vm6537 = vcmp.eq.s32.totalorder %v778, %v6345
  %vm6538 = vcmp.eq.s32.totalorder %v778, %v6346
  %vm6539 = vcmp.eq.s32.totalorder %v778, %v6347
  %vm6540 = vcmp.eq.s32.totalorder %v779, %v6344
  %vm6541 = vcmp.eq.s32.totalorder %v779, %v6345
  %vm6542 = vcmp.eq.s32.totalorder %v779, %v6346
  %vm6543 = vcmp.eq.s32.totalorder %v779, %v6347
  %vm6544 = vcmp.eq.s32.totalorder %v780, %v6344
  %vm6545 = vcmp.eq.s32.totalorder %v780, %v6345
  %vm6546 = vcmp.eq.s32.totalorder %v780, %v6346
  %vm6547 = vcmp.eq.s32.totalorder %v780, %v6347
  %vm6548 = vcmp.eq.s32.totalorder %v781, %v6344
  %vm6549 = vcmp.eq.s32.totalorder %v781, %v6345
  %vm6550 = vcmp.eq.s32.totalorder %v781, %v6346
  %vm6551 = vcmp.eq.s32.totalorder %v781, %v6347
  %vm6552 = vcmp.eq.s32.totalorder %v782, %v6344
  %vm6553 = vcmp.eq.s32.totalorder %v782, %v6345
  %vm6554 = vcmp.eq.s32.totalorder %v782, %v6346
  %vm6555 = vcmp.eq.s32.totalorder %v782, %v6347
  %vm6556 = vcmp.eq.s32.totalorder %v783, %v6344
  %vm6557 = vcmp.eq.s32.totalorder %v783, %v6345
  %vm6558 = vcmp.eq.s32.totalorder %v783, %v6346
  %vm6559 = vcmp.eq.s32.totalorder %v783, %v6347
  %vm6560 = vcmp.eq.s32.totalorder %v784, %v6344
  %vm6561 = vcmp.eq.s32.totalorder %v784, %v6345
  %vm6562 = vcmp.eq.s32.totalorder %v784, %v6346
  %vm6563 = vcmp.eq.s32.totalorder %v784, %v6347
  %vm6564 = vcmp.eq.s32.totalorder %v785, %v6344
  %vm6565 = vcmp.eq.s32.totalorder %v785, %v6345
  %vm6566 = vcmp.eq.s32.totalorder %v785, %v6346
  %vm6567 = vcmp.eq.s32.totalorder %v785, %v6347
  %vm6568 = vcmp.eq.s32.totalorder %v786, %v6344
  %vm6569 = vcmp.eq.s32.totalorder %v786, %v6345
  %vm6570 = vcmp.eq.s32.totalorder %v786, %v6346
  %vm6571 = vcmp.eq.s32.totalorder %v786, %v6347
  %vm6572 = vcmp.eq.s32.totalorder %v787, %v6344
  %vm6573 = vcmp.eq.s32.totalorder %v787, %v6345
  %vm6574 = vcmp.eq.s32.totalorder %v787, %v6346
  %vm6575 = vcmp.eq.s32.totalorder %v787, %v6347
  %vm6576 = vcmp.eq.s32.totalorder %v788, %v6344
  %vm6577 = vcmp.eq.s32.totalorder %v788, %v6345
  %vm6578 = vcmp.eq.s32.totalorder %v788, %v6346
  %vm6579 = vcmp.eq.s32.totalorder %v788, %v6347
  %vm6580 = vcmp.eq.s32.totalorder %v789, %v6344
  %vm6581 = vcmp.eq.s32.totalorder %v789, %v6345
  %vm6582 = vcmp.eq.s32.totalorder %v789, %v6346
  %vm6583 = vcmp.eq.s32.totalorder %v789, %v6347
  %vm6584 = vcmp.eq.s32.totalorder %v790, %v6344
  %vm6585 = vcmp.eq.s32.totalorder %v790, %v6345
  %vm6586 = vcmp.eq.s32.totalorder %v790, %v6346
  %vm6587 = vcmp.eq.s32.totalorder %v790, %v6347
  %vm6588 = vcmp.eq.s32.totalorder %v791, %v6344
  %vm6589 = vcmp.eq.s32.totalorder %v791, %v6345
  %vm6590 = vcmp.eq.s32.totalorder %v791, %v6346
  %vm6591 = vcmp.eq.s32.totalorder %v791, %v6347
  %vm6592 = vcmp.eq.s32.totalorder %v792, %v6344
  %vm6593 = vcmp.eq.s32.totalorder %v792, %v6345
  %vm6594 = vcmp.eq.s32.totalorder %v792, %v6346
  %vm6595 = vcmp.eq.s32.totalorder %v792, %v6347
  %vm6596 = vcmp.eq.s32.totalorder %v793, %v6344
  %vm6597 = vcmp.eq.s32.totalorder %v793, %v6345
  %vm6598 = vcmp.eq.s32.totalorder %v793, %v6346
  %vm6599 = vcmp.eq.s32.totalorder %v793, %v6347
  %vm6600 = vcmp.eq.s32.totalorder %v794, %v6344
  %vm6601 = vcmp.eq.s32.totalorder %v794, %v6345
  %vm6602 = vcmp.eq.s32.totalorder %v794, %v6346
  %vm6603 = vcmp.eq.s32.totalorder %v794, %v6347
  %vm6604 = vcmp.eq.s32.totalorder %v795, %v6344
  %vm6605 = vcmp.eq.s32.totalorder %v795, %v6345
  %vm6606 = vcmp.eq.s32.totalorder %v795, %v6346
  %vm6607 = vcmp.eq.s32.totalorder %v795, %v6347
  %v6608 = vsel %vm6348, %v6149, 0.0
  %v6609 = vsel %vm6349, %v6149, 0.0
  %v6610 = vsel %vm6350, %v6149, 0.0
  %v6611 = vsel %vm6351, %v6149, 0.0
  %v6612 = vsel %vm6352, %v6152, 0.0
  %v6613 = vsel %vm6353, %v6152, 0.0
  %v6614 = vsel %vm6354, %v6152, 0.0
  %v6615 = vsel %vm6355, %v6152, 0.0
  %v6616 = vsel %vm6356, %v6155, 0.0
  %v6617 = vsel %vm6357, %v6155, 0.0
  %v6618 = vsel %vm6358, %v6155, 0.0
  %v6619 = vsel %vm6359, %v6155, 0.0
  %v6620 = vsel %vm6360, %v6158, 0.0
  %v6621 = vsel %vm6361, %v6158, 0.0
  %v6622 = vsel %vm6362, %v6158, 0.0
  %v6623 = vsel %vm6363, %v6158, 0.0
  %v6624 = vsel %vm6364, %v6161, 0.0
  %v6625 = vsel %vm6365, %v6161, 0.0
  %v6626 = vsel %vm6366, %v6161, 0.0
  %v6627 = vsel %vm6367, %v6161, 0.0
  %v6628 = vsel %vm6368, %v6164, 0.0
  %v6629 = vsel %vm6369, %v6164, 0.0
  %v6630 = vsel %vm6370, %v6164, 0.0
  %v6631 = vsel %vm6371, %v6164, 0.0
  %v6632 = vsel %vm6372, %v6167, 0.0
  %v6633 = vsel %vm6373, %v6167, 0.0
  %v6634 = vsel %vm6374, %v6167, 0.0
  %v6635 = vsel %vm6375, %v6167, 0.0
  %v6636 = vsel %vm6376, %v6170, 0.0
  %v6637 = vsel %vm6377, %v6170, 0.0
  %v6638 = vsel %vm6378, %v6170, 0.0
  %v6639 = vsel %vm6379, %v6170, 0.0
  %v6640 = vsel %vm6380, %v6173, 0.0
  %v6641 = vsel %vm6381, %v6173, 0.0
  %v6642 = vsel %vm6382, %v6173, 0.0
  %v6643 = vsel %vm6383, %v6173, 0.0
  %v6644 = vsel %vm6384, %v6176, 0.0
  %v6645 = vsel %vm6385, %v6176, 0.0
  %v6646 = vsel %vm6386, %v6176, 0.0
  %v6647 = vsel %vm6387, %v6176, 0.0
  %v6648 = vsel %vm6388, %v6179, 0.0
  %v6649 = vsel %vm6389, %v6179, 0.0
  %v6650 = vsel %vm6390, %v6179, 0.0
  %v6651 = vsel %vm6391, %v6179, 0.0
  %v6652 = vsel %vm6392, %v6182, 0.0
  %v6653 = vsel %vm6393, %v6182, 0.0
  %v6654 = vsel %vm6394, %v6182, 0.0
  %v6655 = vsel %vm6395, %v6182, 0.0
  %v6656 = vsel %vm6396, %v6185, 0.0
  %v6657 = vsel %vm6397, %v6185, 0.0
  %v6658 = vsel %vm6398, %v6185, 0.0
  %v6659 = vsel %vm6399, %v6185, 0.0
  %v6660 = vsel %vm6400, %v6188, 0.0
  %v6661 = vsel %vm6401, %v6188, 0.0
  %v6662 = vsel %vm6402, %v6188, 0.0
  %v6663 = vsel %vm6403, %v6188, 0.0
  %v6664 = vsel %vm6404, %v6191, 0.0
  %v6665 = vsel %vm6405, %v6191, 0.0
  %v6666 = vsel %vm6406, %v6191, 0.0
  %v6667 = vsel %vm6407, %v6191, 0.0
  %v6668 = vsel %vm6408, %v6194, 0.0
  %v6669 = vsel %vm6409, %v6194, 0.0
  %v6670 = vsel %vm6410, %v6194, 0.0
  %v6671 = vsel %vm6411, %v6194, 0.0
  %v6672 = vsel %vm6412, %v6197, 0.0
  %v6673 = vsel %vm6413, %v6197, 0.0
  %v6674 = vsel %vm6414, %v6197, 0.0
  %v6675 = vsel %vm6415, %v6197, 0.0
  %v6676 = vsel %vm6416, %v6200, 0.0
  %v6677 = vsel %vm6417, %v6200, 0.0
  %v6678 = vsel %vm6418, %v6200, 0.0
  %v6679 = vsel %vm6419, %v6200, 0.0
  %v6680 = vsel %vm6420, %v6203, 0.0
  %v6681 = vsel %vm6421, %v6203, 0.0
  %v6682 = vsel %vm6422, %v6203, 0.0
  %v6683 = vsel %vm6423, %v6203, 0.0
  %v6684 = vsel %vm6424, %v6206, 0.0
  %v6685 = vsel %vm6425, %v6206, 0.0
  %v6686 = vsel %vm6426, %v6206, 0.0
  %v6687 = vsel %vm6427, %v6206, 0.0
  %v6688 = vsel %vm6428, %v6209, 0.0
  %v6689 = vsel %vm6429, %v6209, 0.0
  %v6690 = vsel %vm6430, %v6209, 0.0
  %v6691 = vsel %vm6431, %v6209, 0.0
  %v6692 = vsel %vm6432, %v6212, 0.0
  %v6693 = vsel %vm6433, %v6212, 0.0
  %v6694 = vsel %vm6434, %v6212, 0.0
  %v6695 = vsel %vm6435, %v6212, 0.0
  %v6696 = vsel %vm6436, %v6215, 0.0
  %v6697 = vsel %vm6437, %v6215, 0.0
  %v6698 = vsel %vm6438, %v6215, 0.0
  %v6699 = vsel %vm6439, %v6215, 0.0
  %v6700 = vsel %vm6440, %v6218, 0.0
  %v6701 = vsel %vm6441, %v6218, 0.0
  %v6702 = vsel %vm6442, %v6218, 0.0
  %v6703 = vsel %vm6443, %v6218, 0.0
  %v6704 = vsel %vm6444, %v6221, 0.0
  %v6705 = vsel %vm6445, %v6221, 0.0
  %v6706 = vsel %vm6446, %v6221, 0.0
  %v6707 = vsel %vm6447, %v6221, 0.0
  %v6708 = vsel %vm6448, %v6224, 0.0
  %v6709 = vsel %vm6449, %v6224, 0.0
  %v6710 = vsel %vm6450, %v6224, 0.0
  %v6711 = vsel %vm6451, %v6224, 0.0
  %v6712 = vsel %vm6452, %v6227, 0.0
  %v6713 = vsel %vm6453, %v6227, 0.0
  %v6714 = vsel %vm6454, %v6227, 0.0
  %v6715 = vsel %vm6455, %v6227, 0.0
  %v6716 = vsel %vm6456, %v6230, 0.0
  %v6717 = vsel %vm6457, %v6230, 0.0
  %v6718 = vsel %vm6458, %v6230, 0.0
  %v6719 = vsel %vm6459, %v6230, 0.0
  %v6720 = vsel %vm6460, %v6233, 0.0
  %v6721 = vsel %vm6461, %v6233, 0.0
  %v6722 = vsel %vm6462, %v6233, 0.0
  %v6723 = vsel %vm6463, %v6233, 0.0
  %v6724 = vsel %vm6464, %v6236, 0.0
  %v6725 = vsel %vm6465, %v6236, 0.0
  %v6726 = vsel %vm6466, %v6236, 0.0
  %v6727 = vsel %vm6467, %v6236, 0.0
  %v6728 = vsel %vm6468, %v6239, 0.0
  %v6729 = vsel %vm6469, %v6239, 0.0
  %v6730 = vsel %vm6470, %v6239, 0.0
  %v6731 = vsel %vm6471, %v6239, 0.0
  %v6732 = vsel %vm6472, %v6242, 0.0
  %v6733 = vsel %vm6473, %v6242, 0.0
  %v6734 = vsel %vm6474, %v6242, 0.0
  %v6735 = vsel %vm6475, %v6242, 0.0
  %v6736 = vsel %vm6476, %v6245, 0.0
  %v6737 = vsel %vm6477, %v6245, 0.0
  %v6738 = vsel %vm6478, %v6245, 0.0
  %v6739 = vsel %vm6479, %v6245, 0.0
  %v6740 = vsel %vm6480, %v6248, 0.0
  %v6741 = vsel %vm6481, %v6248, 0.0
  %v6742 = vsel %vm6482, %v6248, 0.0
  %v6743 = vsel %vm6483, %v6248, 0.0
  %v6744 = vsel %vm6484, %v6251, 0.0
  %v6745 = vsel %vm6485, %v6251, 0.0
  %v6746 = vsel %vm6486, %v6251, 0.0
  %v6747 = vsel %vm6487, %v6251, 0.0
  %v6748 = vsel %vm6488, %v6254, 0.0
  %v6749 = vsel %vm6489, %v6254, 0.0
  %v6750 = vsel %vm6490, %v6254, 0.0
  %v6751 = vsel %vm6491, %v6254, 0.0
  %v6752 = vsel %vm6492, %v6257, 0.0
  %v6753 = vsel %vm6493, %v6257, 0.0
  %v6754 = vsel %vm6494, %v6257, 0.0
  %v6755 = vsel %vm6495, %v6257, 0.0
  %v6756 = vsel %vm6496, %v6260, 0.0
  %v6757 = vsel %vm6497, %v6260, 0.0
  %v6758 = vsel %vm6498, %v6260, 0.0
  %v6759 = vsel %vm6499, %v6260, 0.0
  %v6760 = vsel %vm6500, %v6263, 0.0
  %v6761 = vsel %vm6501, %v6263, 0.0
  %v6762 = vsel %vm6502, %v6263, 0.0
  %v6763 = vsel %vm6503, %v6263, 0.0
  %v6764 = vsel %vm6504, %v6266, 0.0
  %v6765 = vsel %vm6505, %v6266, 0.0
  %v6766 = vsel %vm6506, %v6266, 0.0
  %v6767 = vsel %vm6507, %v6266, 0.0
  %v6768 = vsel %vm6508, %v6269, 0.0
  %v6769 = vsel %vm6509, %v6269, 0.0
  %v6770 = vsel %vm6510, %v6269, 0.0
  %v6771 = vsel %vm6511, %v6269, 0.0
  %v6772 = vsel %vm6512, %v6272, 0.0
  %v6773 = vsel %vm6513, %v6272, 0.0
  %v6774 = vsel %vm6514, %v6272, 0.0
  %v6775 = vsel %vm6515, %v6272, 0.0
  %v6776 = vsel %vm6516, %v6275, 0.0
  %v6777 = vsel %vm6517, %v6275, 0.0
  %v6778 = vsel %vm6518, %v6275, 0.0
  %v6779 = vsel %vm6519, %v6275, 0.0
  %v6780 = vsel %vm6520, %v6278, 0.0
  %v6781 = vsel %vm6521, %v6278, 0.0
  %v6782 = vsel %vm6522, %v6278, 0.0
  %v6783 = vsel %vm6523, %v6278, 0.0
  %v6784 = vsel %vm6524, %v6281, 0.0
  %v6785 = vsel %vm6525, %v6281, 0.0
  %v6786 = vsel %vm6526, %v6281, 0.0
  %v6787 = vsel %vm6527, %v6281, 0.0
  %v6788 = vsel %vm6528, %v6284, 0.0
  %v6789 = vsel %vm6529, %v6284, 0.0
  %v6790 = vsel %vm6530, %v6284, 0.0
  %v6791 = vsel %vm6531, %v6284, 0.0
  %v6792 = vsel %vm6532, %v6287, 0.0
  %v6793 = vsel %vm6533, %v6287, 0.0
  %v6794 = vsel %vm6534, %v6287, 0.0
  %v6795 = vsel %vm6535, %v6287, 0.0
  %v6796 = vsel %vm6536, %v6290, 0.0
  %v6797 = vsel %vm6537, %v6290, 0.0
  %v6798 = vsel %vm6538, %v6290, 0.0
  %v6799 = vsel %vm6539, %v6290, 0.0
  %v6800 = vsel %vm6540, %v6293, 0.0
  %v6801 = vsel %vm6541, %v6293, 0.0
  %v6802 = vsel %vm6542, %v6293, 0.0
  %v6803 = vsel %vm6543, %v6293, 0.0
  %v6804 = vsel %vm6544, %v6296, 0.0
  %v6805 = vsel %vm6545, %v6296, 0.0
  %v6806 = vsel %vm6546, %v6296, 0.0
  %v6807 = vsel %vm6547, %v6296, 0.0
  %v6808 = vsel %vm6548, %v6299, 0.0
  %v6809 = vsel %vm6549, %v6299, 0.0
  %v6810 = vsel %vm6550, %v6299, 0.0
  %v6811 = vsel %vm6551, %v6299, 0.0
  %v6812 = vsel %vm6552, %v6302, 0.0
  %v6813 = vsel %vm6553, %v6302, 0.0
  %v6814 = vsel %vm6554, %v6302, 0.0
  %v6815 = vsel %vm6555, %v6302, 0.0
  %v6816 = vsel %vm6556, %v6305, 0.0
  %v6817 = vsel %vm6557, %v6305, 0.0
  %v6818 = vsel %vm6558, %v6305, 0.0
  %v6819 = vsel %vm6559, %v6305, 0.0
  %v6820 = vsel %vm6560, %v6308, 0.0
  %v6821 = vsel %vm6561, %v6308, 0.0
  %v6822 = vsel %vm6562, %v6308, 0.0
  %v6823 = vsel %vm6563, %v6308, 0.0
  %v6824 = vsel %vm6564, %v6311, 0.0
  %v6825 = vsel %vm6565, %v6311, 0.0
  %v6826 = vsel %vm6566, %v6311, 0.0
  %v6827 = vsel %vm6567, %v6311, 0.0
  %v6828 = vsel %vm6568, %v6314, 0.0
  %v6829 = vsel %vm6569, %v6314, 0.0
  %v6830 = vsel %vm6570, %v6314, 0.0
  %v6831 = vsel %vm6571, %v6314, 0.0
  %v6832 = vsel %vm6572, %v6317, 0.0
  %v6833 = vsel %vm6573, %v6317, 0.0
  %v6834 = vsel %vm6574, %v6317, 0.0
  %v6835 = vsel %vm6575, %v6317, 0.0
  %v6836 = vsel %vm6576, %v6320, 0.0
  %v6837 = vsel %vm6577, %v6320, 0.0
  %v6838 = vsel %vm6578, %v6320, 0.0
  %v6839 = vsel %vm6579, %v6320, 0.0
  %v6840 = vsel %vm6580, %v6323, 0.0
  %v6841 = vsel %vm6581, %v6323, 0.0
  %v6842 = vsel %vm6582, %v6323, 0.0
  %v6843 = vsel %vm6583, %v6323, 0.0
  %v6844 = vsel %vm6584, %v6326, 0.0
  %v6845 = vsel %vm6585, %v6326, 0.0
  %v6846 = vsel %vm6586, %v6326, 0.0
  %v6847 = vsel %vm6587, %v6326, 0.0
  %v6848 = vsel %vm6588, %v6329, 0.0
  %v6849 = vsel %vm6589, %v6329, 0.0
  %v6850 = vsel %vm6590, %v6329, 0.0
  %v6851 = vsel %vm6591, %v6329, 0.0
  %v6852 = vsel %vm6592, %v6332, 0.0
  %v6853 = vsel %vm6593, %v6332, 0.0
  %v6854 = vsel %vm6594, %v6332, 0.0
  %v6855 = vsel %vm6595, %v6332, 0.0
  %v6856 = vsel %vm6596, %v6335, 0.0
  %v6857 = vsel %vm6597, %v6335, 0.0
  %v6858 = vsel %vm6598, %v6335, 0.0
  %v6859 = vsel %vm6599, %v6335, 0.0
  %v6860 = vsel %vm6600, %v6338, 0.0
  %v6861 = vsel %vm6601, %v6338, 0.0
  %v6862 = vsel %vm6602, %v6338, 0.0
  %v6863 = vsel %vm6603, %v6338, 0.0
  %v6864 = vsel %vm6604, %v6341, 0.0
  %v6865 = vsel %vm6605, %v6341, 0.0
  %v6866 = vsel %vm6606, %v6341, 0.0
  %v6867 = vsel %vm6607, %v6341, 0.0
  %v6868 = vadd.f32 %v6608, %v6612
  %v6869 = vadd.f32 %v6868, %v6616
  %v6870 = vadd.f32 %v6869, %v6620
  %v6871 = vadd.f32 %v6870, %v6624
  %v6872 = vadd.f32 %v6871, %v6628
  %v6873 = vadd.f32 %v6872, %v6632
  %v6874 = vadd.f32 %v6873, %v6636
  %v6875 = vadd.f32 %v6874, %v6640
  %v6876 = vadd.f32 %v6875, %v6644
  %v6877 = vadd.f32 %v6876, %v6648
  %v6878 = vadd.f32 %v6877, %v6652
  %v6879 = vadd.f32 %v6878, %v6656
  %v6880 = vadd.f32 %v6879, %v6660
  %v6881 = vadd.f32 %v6880, %v6664
  %v6882 = vadd.f32 %v6881, %v6668
  %v6883 = vadd.f32 %v6882, %v6672
  %v6884 = vadd.f32 %v6883, %v6676
  %v6885 = vadd.f32 %v6884, %v6680
  %v6886 = vadd.f32 %v6885, %v6684
  %v6887 = vadd.f32 %v6886, %v6688
  %v6888 = vadd.f32 %v6887, %v6692
  %v6889 = vadd.f32 %v6888, %v6696
  %v6890 = vadd.f32 %v6889, %v6700
  %v6891 = vadd.f32 %v6890, %v6704
  %v6892 = vadd.f32 %v6891, %v6708
  %v6893 = vadd.f32 %v6892, %v6712
  %v6894 = vadd.f32 %v6893, %v6716
  %v6895 = vadd.f32 %v6894, %v6720
  %v6896 = vadd.f32 %v6895, %v6724
  %v6897 = vadd.f32 %v6896, %v6728
  %v6898 = vadd.f32 %v6897, %v6732
  %v6899 = vadd.f32 %v6898, %v6736
  %v6900 = vadd.f32 %v6899, %v6740
  %v6901 = vadd.f32 %v6900, %v6744
  %v6902 = vadd.f32 %v6901, %v6748
  %v6903 = vadd.f32 %v6902, %v6752
  %v6904 = vadd.f32 %v6903, %v6756
  %v6905 = vadd.f32 %v6904, %v6760
  %v6906 = vadd.f32 %v6905, %v6764
  %v6907 = vadd.f32 %v6906, %v6768
  %v6908 = vadd.f32 %v6907, %v6772
  %v6909 = vadd.f32 %v6908, %v6776
  %v6910 = vadd.f32 %v6909, %v6780
  %v6911 = vadd.f32 %v6910, %v6784
  %v6912 = vadd.f32 %v6911, %v6788
  %v6913 = vadd.f32 %v6912, %v6792
  %v6914 = vadd.f32 %v6913, %v6796
  %v6915 = vadd.f32 %v6914, %v6800
  %v6916 = vadd.f32 %v6915, %v6804
  %v6917 = vadd.f32 %v6916, %v6808
  %v6918 = vadd.f32 %v6917, %v6812
  %v6919 = vadd.f32 %v6918, %v6816
  %v6920 = vadd.f32 %v6919, %v6820
  %v6921 = vadd.f32 %v6920, %v6824
  %v6922 = vadd.f32 %v6921, %v6828
  %v6923 = vadd.f32 %v6922, %v6832
  %v6924 = vadd.f32 %v6923, %v6836
  %v6925 = vadd.f32 %v6924, %v6840
  %v6926 = vadd.f32 %v6925, %v6844
  %v6927 = vadd.f32 %v6926, %v6848
  %v6928 = vadd.f32 %v6927, %v6852
  %v6929 = vadd.f32 %v6928, %v6856
  %v6930 = vadd.f32 %v6929, %v6860
  %v6931 = vadd.f32 %v6930, %v6864
  %v6932 = vrot.slane %v6931, 4
  %v6933 = vadd.f32 %v6931, %v6932
  %v6934 = vrot.slane %v6933, 2
  %v6935 = vadd.f32 %v6933, %v6934
  %v6936 = vrot.slane %v6935, 1
  %v6937 = vadd.f32 %v6935, %v6936
  %v6938 = vadd.f32 %v6609, %v6613
  %v6939 = vadd.f32 %v6938, %v6617
  %v6940 = vadd.f32 %v6939, %v6621
  %v6941 = vadd.f32 %v6940, %v6625
  %v6942 = vadd.f32 %v6941, %v6629
  %v6943 = vadd.f32 %v6942, %v6633
  %v6944 = vadd.f32 %v6943, %v6637
  %v6945 = vadd.f32 %v6944, %v6641
  %v6946 = vadd.f32 %v6945, %v6645
  %v6947 = vadd.f32 %v6946, %v6649
  %v6948 = vadd.f32 %v6947, %v6653
  %v6949 = vadd.f32 %v6948, %v6657
  %v6950 = vadd.f32 %v6949, %v6661
  %v6951 = vadd.f32 %v6950, %v6665
  %v6952 = vadd.f32 %v6951, %v6669
  %v6953 = vadd.f32 %v6952, %v6673
  %v6954 = vadd.f32 %v6953, %v6677
  %v6955 = vadd.f32 %v6954, %v6681
  %v6956 = vadd.f32 %v6955, %v6685
  %v6957 = vadd.f32 %v6956, %v6689
  %v6958 = vadd.f32 %v6957, %v6693
  %v6959 = vadd.f32 %v6958, %v6697
  %v6960 = vadd.f32 %v6959, %v6701
  %v6961 = vadd.f32 %v6960, %v6705
  %v6962 = vadd.f32 %v6961, %v6709
  %v6963 = vadd.f32 %v6962, %v6713
  %v6964 = vadd.f32 %v6963, %v6717
  %v6965 = vadd.f32 %v6964, %v6721
  %v6966 = vadd.f32 %v6965, %v6725
  %v6967 = vadd.f32 %v6966, %v6729
  %v6968 = vadd.f32 %v6967, %v6733
  %v6969 = vadd.f32 %v6968, %v6737
  %v6970 = vadd.f32 %v6969, %v6741
  %v6971 = vadd.f32 %v6970, %v6745
  %v6972 = vadd.f32 %v6971, %v6749
  %v6973 = vadd.f32 %v6972, %v6753
  %v6974 = vadd.f32 %v6973, %v6757
  %v6975 = vadd.f32 %v6974, %v6761
  %v6976 = vadd.f32 %v6975, %v6765
  %v6977 = vadd.f32 %v6976, %v6769
  %v6978 = vadd.f32 %v6977, %v6773
  %v6979 = vadd.f32 %v6978, %v6777
  %v6980 = vadd.f32 %v6979, %v6781
  %v6981 = vadd.f32 %v6980, %v6785
  %v6982 = vadd.f32 %v6981, %v6789
  %v6983 = vadd.f32 %v6982, %v6793
  %v6984 = vadd.f32 %v6983, %v6797
  %v6985 = vadd.f32 %v6984, %v6801
  %v6986 = vadd.f32 %v6985, %v6805
  %v6987 = vadd.f32 %v6986, %v6809
  %v6988 = vadd.f32 %v6987, %v6813
  %v6989 = vadd.f32 %v6988, %v6817
  %v6990 = vadd.f32 %v6989, %v6821
  %v6991 = vadd.f32 %v6990, %v6825
  %v6992 = vadd.f32 %v6991, %v6829
  %v6993 = vadd.f32 %v6992, %v6833
  %v6994 = vadd.f32 %v6993, %v6837
  %v6995 = vadd.f32 %v6994, %v6841
  %v6996 = vadd.f32 %v6995, %v6845
  %v6997 = vadd.f32 %v6996, %v6849
  %v6998 = vadd.f32 %v6997, %v6853
  %v6999 = vadd.f32 %v6998, %v6857
  %v7000 = vadd.f32 %v6999, %v6861
  %v7001 = vadd.f32 %v7000, %v6865
  %v7002 = vrot.slane %v7001, 4
  %v7003 = vadd.f32 %v7001, %v7002
  %v7004 = vrot.slane %v7003, 2
  %v7005 = vadd.f32 %v7003, %v7004
  %v7006 = vrot.slane %v7005, 1
  %v7007 = vadd.f32 %v7005, %v7006
  %v7008 = vadd.f32 %v6610, %v6614
  %v7009 = vadd.f32 %v7008, %v6618
  %v7010 = vadd.f32 %v7009, %v6622
  %v7011 = vadd.f32 %v7010, %v6626
  %v7012 = vadd.f32 %v7011, %v6630
  %v7013 = vadd.f32 %v7012, %v6634
  %v7014 = vadd.f32 %v7013, %v6638
  %v7015 = vadd.f32 %v7014, %v6642
  %v7016 = vadd.f32 %v7015, %v6646
  %v7017 = vadd.f32 %v7016, %v6650
  %v7018 = vadd.f32 %v7017, %v6654
  %v7019 = vadd.f32 %v7018, %v6658
  %v7020 = vadd.f32 %v7019, %v6662
  %v7021 = vadd.f32 %v7020, %v6666
  %v7022 = vadd.f32 %v7021, %v6670
  %v7023 = vadd.f32 %v7022, %v6674
  %v7024 = vadd.f32 %v7023, %v6678
  %v7025 = vadd.f32 %v7024, %v6682
  %v7026 = vadd.f32 %v7025, %v6686
  %v7027 = vadd.f32 %v7026, %v6690
  %v7028 = vadd.f32 %v7027, %v6694
  %v7029 = vadd.f32 %v7028, %v6698
  %v7030 = vadd.f32 %v7029, %v6702
  %v7031 = vadd.f32 %v7030, %v6706
  %v7032 = vadd.f32 %v7031, %v6710
  %v7033 = vadd.f32 %v7032, %v6714
  %v7034 = vadd.f32 %v7033, %v6718
  %v7035 = vadd.f32 %v7034, %v6722
  %v7036 = vadd.f32 %v7035, %v6726
  %v7037 = vadd.f32 %v7036, %v6730
  %v7038 = vadd.f32 %v7037, %v6734
  %v7039 = vadd.f32 %v7038, %v6738
  %v7040 = vadd.f32 %v7039, %v6742
  %v7041 = vadd.f32 %v7040, %v6746
  %v7042 = vadd.f32 %v7041, %v6750
  %v7043 = vadd.f32 %v7042, %v6754
  %v7044 = vadd.f32 %v7043, %v6758
  %v7045 = vadd.f32 %v7044, %v6762
  %v7046 = vadd.f32 %v7045, %v6766
  %v7047 = vadd.f32 %v7046, %v6770
  %v7048 = vadd.f32 %v7047, %v6774
  %v7049 = vadd.f32 %v7048, %v6778
  %v7050 = vadd.f32 %v7049, %v6782
  %v7051 = vadd.f32 %v7050, %v6786
  %v7052 = vadd.f32 %v7051, %v6790
  %v7053 = vadd.f32 %v7052, %v6794
  %v7054 = vadd.f32 %v7053, %v6798
  %v7055 = vadd.f32 %v7054, %v6802
  %v7056 = vadd.f32 %v7055, %v6806
  %v7057 = vadd.f32 %v7056, %v6810
  %v7058 = vadd.f32 %v7057, %v6814
  %v7059 = vadd.f32 %v7058, %v6818
  %v7060 = vadd.f32 %v7059, %v6822
  %v7061 = vadd.f32 %v7060, %v6826
  %v7062 = vadd.f32 %v7061, %v6830
  %v7063 = vadd.f32 %v7062, %v6834
  %v7064 = vadd.f32 %v7063, %v6838
  %v7065 = vadd.f32 %v7064, %v6842
  %v7066 = vadd.f32 %v7065, %v6846
  %v7067 = vadd.f32 %v7066, %v6850
  %v7068 = vadd.f32 %v7067, %v6854
  %v7069 = vadd.f32 %v7068, %v6858
  %v7070 = vadd.f32 %v7069, %v6862
  %v7071 = vadd.f32 %v7070, %v6866
  %v7072 = vrot.slane %v7071, 4
  %v7073 = vadd.f32 %v7071, %v7072
  %v7074 = vrot.slane %v7073, 2
  %v7075 = vadd.f32 %v7073, %v7074
  %v7076 = vrot.slane %v7075, 1
  %v7077 = vadd.f32 %v7075, %v7076
  %v7078 = vadd.f32 %v6611, %v6615
  %v7079 = vadd.f32 %v7078, %v6619
  %v7080 = vadd.f32 %v7079, %v6623
  %v7081 = vadd.f32 %v7080, %v6627
  %v7082 = vadd.f32 %v7081, %v6631
  %v7083 = vadd.f32 %v7082, %v6635
  %v7084 = vadd.f32 %v7083, %v6639
  %v7085 = vadd.f32 %v7084, %v6643
  %v7086 = vadd.f32 %v7085, %v6647
  %v7087 = vadd.f32 %v7086, %v6651
  %v7088 = vadd.f32 %v7087, %v6655
  %v7089 = vadd.f32 %v7088, %v6659
  %v7090 = vadd.f32 %v7089, %v6663
  %v7091 = vadd.f32 %v7090, %v6667
  %v7092 = vadd.f32 %v7091, %v6671
  %v7093 = vadd.f32 %v7092, %v6675
  %v7094 = vadd.f32 %v7093, %v6679
  %v7095 = vadd.f32 %v7094, %v6683
  %v7096 = vadd.f32 %v7095, %v6687
  %v7097 = vadd.f32 %v7096, %v6691
  %v7098 = vadd.f32 %v7097, %v6695
  %v7099 = vadd.f32 %v7098, %v6699
  %v7100 = vadd.f32 %v7099, %v6703
  %v7101 = vadd.f32 %v7100, %v6707
  %v7102 = vadd.f32 %v7101, %v6711
  %v7103 = vadd.f32 %v7102, %v6715
  %v7104 = vadd.f32 %v7103, %v6719
  %v7105 = vadd.f32 %v7104, %v6723
  %v7106 = vadd.f32 %v7105, %v6727
  %v7107 = vadd.f32 %v7106, %v6731
  %v7108 = vadd.f32 %v7107, %v6735
  %v7109 = vadd.f32 %v7108, %v6739
  %v7110 = vadd.f32 %v7109, %v6743
  %v7111 = vadd.f32 %v7110, %v6747
  %v7112 = vadd.f32 %v7111, %v6751
  %v7113 = vadd.f32 %v7112, %v6755
  %v7114 = vadd.f32 %v7113, %v6759
  %v7115 = vadd.f32 %v7114, %v6763
  %v7116 = vadd.f32 %v7115, %v6767
  %v7117 = vadd.f32 %v7116, %v6771
  %v7118 = vadd.f32 %v7117, %v6775
  %v7119 = vadd.f32 %v7118, %v6779
  %v7120 = vadd.f32 %v7119, %v6783
  %v7121 = vadd.f32 %v7120, %v6787
  %v7122 = vadd.f32 %v7121, %v6791
  %v7123 = vadd.f32 %v7122, %v6795
  %v7124 = vadd.f32 %v7123, %v6799
  %v7125 = vadd.f32 %v7124, %v6803
  %v7126 = vadd.f32 %v7125, %v6807
  %v7127 = vadd.f32 %v7126, %v6811
  %v7128 = vadd.f32 %v7127, %v6815
  %v7129 = vadd.f32 %v7128, %v6819
  %v7130 = vadd.f32 %v7129, %v6823
  %v7131 = vadd.f32 %v7130, %v6827
  %v7132 = vadd.f32 %v7131, %v6831
  %v7133 = vadd.f32 %v7132, %v6835
  %v7134 = vadd.f32 %v7133, %v6839
  %v7135 = vadd.f32 %v7134, %v6843
  %v7136 = vadd.f32 %v7135, %v6847
  %v7137 = vadd.f32 %v7136, %v6851
  %v7138 = vadd.f32 %v7137, %v6855
  %v7139 = vadd.f32 %v7138, %v6859
  %v7140 = vadd.f32 %v7139, %v6863
  %v7141 = vadd.f32 %v7140, %v6867
  %v7142 = vrot.slane %v7141, 4
  %v7143 = vadd.f32 %v7141, %v7142
  %v7144 = vrot.slane %v7143, 2
  %v7145 = vadd.f32 %v7143, %v7144
  %v7146 = vrot.slane %v7145, 1
  %v7147 = vadd.f32 %v7145, %v7146
  %v7152 = vrot.slane %v7007, 7
  %v7153 = vrot.slane %v7077, 6
  %v7154 = vrot.slane %v7147, 5
  %v7155 = vsel %vm2361, %v6937, %v7152
  %v7156 = vsel %vm2363, %v7153, %v7154
  %v7157 = vsel %vm2365, %v7155, %v7156
  %v7159 = vadd.f32 %v6013, %v7157
  %v7160 = vlaneseq
  %vm7161 = vcmp.ge.s32.totalorder %v7160, 0
  %vm7162 = vcmp.lt.s32.totalorder %v7160, 512
  %vm7163 = vmand %vm7161, %vm7162
  %7164 = vst.msk [vmem:[%s18] sm:$0xf] %vm7163, %v7159
  // Predicated region
  $region74: #{cvr_forward.1} parent=0 // pred_check
    _
  $region75: #{cvr_forward.1} parent=0 // pred_check_branch
    %7166 = sbr.rel (0) target = $region77
  $region76: #{cvr_forward.1} parent=0 // pred_region
    _
  $region77: #{cvr_forward.1} parent=0 // pred_fallthru
    _
  // Predicated region
  $region78: #{cvr_forward.1} parent=0 // pred_check
    _
  $region79: #{cvr_forward.1} parent=0 // pred_check_branch
    %7168 = sbr.rel (0) target = $region81
  $region80: #{cvr_forward.1} parent=0 // pred_region
    _
  $region81: #{cvr_forward.1} parent=0 // pred_fallthru
    _

</llo_original>
